<compile_context>
chip_gen: v5e
topology: v5e:2x2
jax: 0.10.0
libtpu: 0.0.40
codegen_flags: <defaults>
</compile_context>

<pallas_src>
import random
from functools import partial

import jax
import jax.numpy as jnp
from jax.experimental import pallas as pl
from jax.experimental.pallas import tpu as pltpu


# ----------------------------- in-kernel helpers -----------------------------

def _lstm_gates(gates, c, H):
    """Gate columns packed [i, f, o, g]; gates: (B, 4H) f32, c: (B, H) f32.

    Returns h (bf16, for the next MXU matmul) and c (f32)."""
    ifo = jax.nn.sigmoid(gates[:, :3 * H])        # one contiguous EUP group
    g = jnp.tanh(gates[:, 3 * H:])                # one tanh group
    i = ifo[:, 0 * H:1 * H]
    f = ifo[:, 1 * H:2 * H]
    o = ifo[:, 2 * H:3 * H]
    c_new = f * c + i * g
    h_new = o * jnp.tanh(c_new)
    return h_new.astype(jnp.bfloat16), c_new


# ----------------------------- fused Seq2Seq kernel -----------------------------

def _seq2seq_kernel(tf_ref, trg_ref, src_emb_ref,
                    enc_wih0_ref, enc_whh0_ref, enc_b0_ref, enc_w1_ref, enc_b1_ref,
                    dec_emb_ref, dec_w0_ref, dec_b0_ref, dec_w1_ref, dec_b1_ref,
                    fcw_ref, fcb_ref,
                    out_ref, xg_ref):
    """Fused encoder + decoder forward.

    tf_ref:      (Tt,)        int32 SMEM teacher-forcing flags (entry 0 unused)
    trg_ref:     (Tt, B, 1)   int32 target token ids
    src_emb_ref: (Ts*B, E)    bf16  flattened source embeddings
    enc_wih0:    (E, 4H) bf16   enc_whh0: (H, 4H) bf16   enc_b0/b1: (1, 4H) f32
    enc_w1:      (2H, 4H) bf16  stacked [W_ih1; W_hh1]
    dec_emb:     (Vp, E) bf16   (pad rows zero)
    dec_w0:      (E+H, 4H) bf16 stacked [W_ih0; W_hh0]   dec_b0/b1: (1, 4H) f32
    dec_w1:      (2H, 4H) bf16  stacked [W_ih1; W_hh1]
    fcw:         (H, Vp) bf16   fcb: (1, Vp) f32 (pad cols: weight 0, bias -1e30)
    out_ref:     (Tt, B, Vp) f32 logits; row 0 stays zero (matches reference)
    xg_ref:      (Ts*B, 4H) f32 VMEM scratch (hoisted layer-0 projection)
    """
    Tt, B, Vp = out_ref.shape
    H = enc_whh0_ref.shape[0]
    Ts = src_emb_ref.shape[0] // B

    # ---------------- encoder ----------------
    # Hoisted layer-0 input projection for ALL timesteps: one big MXU matmul.
    xg_ref[...] = (jnp.dot(src_emb_ref[...], enc_wih0_ref[...],
                           preferred_element_type=jnp.float32) + enc_b0_ref[...])

    enc_b1 = jnp.broadcast_to(enc_b1_ref[...], (B, 4 * H))   # hoisted broadcast

    def enc_body(t, carry):
        h0, c0, h1, c1 = carry
        row = pl.multiple_of(t * B, B)
        g0 = xg_ref[pl.ds(row, B), :] + jnp.dot(
            h0, enc_whh0_ref[...], preferred_element_type=jnp.float32)
        h0, c0 = _lstm_gates(g0, c0, H)
        g1 = jnp.dot(jnp.concatenate([h0, h1], axis=1), enc_w1_ref[...],
                     preferred_element_type=jnp.float32) + enc_b1
        h1, c1 = _lstm_gates(g1, c1, H)
        return h0, c0, h1, c1

    hz = jnp.zeros((B, H), jnp.bfloat16)
    cz = jnp.zeros((B, H), jnp.float32)
    h0, c0, h1, c1 = jax.lax.fori_loop(0, Ts, enc_body, (hz, cz, hz, cz),
                                       unroll=True)

    # ---------------- decoder ----------------
    dec_b0 = jnp.broadcast_to(dec_b0_ref[...], (B, 4 * H))
    dec_b1 = jnp.broadcast_to(dec_b1_ref[...], (B, 4 * H))
    fcb = jnp.broadcast_to(fcb_ref[...], (B, Vp))
    idx_i = jax.lax.broadcasted_iota(jnp.int32, (B, Vp), 1)
    idx_f = idx_i.astype(jnp.float32)

    def to_onehot(tok_b1):                     # tok_b1: (B, 1) int32
        return (idx_i == tok_b1).astype(jnp.bfloat16)

    # Only outputs[0] needs zeroing; rows 1..Tt-1 are written inside the loop.
    out_ref[0] = jnp.zeros((B, Vp), jnp.float32)

    def dec_body(t, carry):
        h0, c0, h1, c1, inp_oh = carry
        # embedding lookup as a (B,Vp)x(Vp,E) one-hot bf16 matmul (MXU, exact)
        x = jnp.dot(inp_oh, dec_emb_ref[...],
                    preferred_element_type=jnp.float32).astype(jnp.bfloat16)
        g0 = jnp.dot(jnp.concatenate([x, h0], axis=1), dec_w0_ref[...],
                     preferred_element_type=jnp.float32) + dec_b0
        h0, c0 = _lstm_gates(g0, c0, H)
        g1 = jnp.dot(jnp.concatenate([h0, h1], axis=1), dec_w1_ref[...],
                     preferred_element_type=jnp.float32) + dec_b1
        h1, c1 = _lstm_gates(g1, c1, H)
        logits = jnp.dot(h1, fcw_ref[...],
                         preferred_element_type=jnp.float32) + fcb
        out_ref[t] = logits

        trg_oh_t = to_onehot(trg_ref[t])       # cheap VPU compare, always done

        def use_trg(_):
            return trg_oh_t

        def use_gen(lg):
            # greedy argmax (first-index tie-break), lane-friendly; pad columns
            # carry -1e30 bias so they are never selected.
            m = jnp.max(lg, axis=1, keepdims=True)
            cand = jnp.where(lg == m, idx_f, float(Vp))
            first = jnp.min(cand, axis=1, keepdims=True)
            return (idx_f == first).astype(jnp.bfloat16)

        # Skip the XLU argmax path entirely when teacher forcing is on.
        inp_next = jax.lax.cond(tf_ref[t] > 0, use_trg, use_gen, logits)
        return h0, c0, h1, c1, inp_next

    init = (h0, c0, h1, c1, to_onehot(trg_ref[0]))
    jax.lax.fori_loop(1, Tt, dec_body, init, unroll=True)


# ----------------------------- pallas_call wrapper -----------------------------

@partial(jax.jit, static_argnums=(4,))
def seq2seq_forward(params, src, trg, tf_flags, output_dim):
    """src: (src_len, B) int32, trg: (trg_len, B) int32.
    Returns outputs (trg_len, B, output_dim); outputs[0] is all zero."""
    Ts, B = src.shape
    Tt = trg.shape[0]
    E = params["enc_embedding"].shape[1]
    H = params["enc_w_hh0"].shape[0]
    Vp = params["fc_out_w"].shape[1]

    src_emb = jnp.take(params["enc_embedding"], src, axis=0)       # (Ts,B,E) bf16
    src_emb = src_emb.reshape(Ts * B, E)
    trg_ids = trg.astype(jnp.int32).reshape(Tt, B, 1)

    vmem = pl.BlockSpec(memory_space=pltpu.MemorySpace.VMEM)
    smem = pl.BlockSpec(memory_space=pltpu.MemorySpace.SMEM)

    logits = pl.pallas_call(
        _seq2seq_kernel,
        out_shape=jax.ShapeDtypeStruct((Tt, B, Vp), jnp.float32),
        in_specs=[smem] + [vmem] * 14,
        out_specs=vmem,
        scratch_shapes=[pltpu.VMEM((Ts * B, 4 * H), jnp.float32)],
    )(tf_flags, trg_ids, src_emb,
      params["enc_w_ih0"], params["enc_w_hh0"], params["enc_b0"],
      params["enc_w_cat1"], params["enc_b1"],
      params["dec_embedding"], params["dec_w_cat0"], params["dec_b0"],
      params["dec_w_cat1"], params["dec_b1"],
      params["fc_out_w"], params["fc_out_b"])

    return logits[:, :, :output_dim]


# ----------------------------- Params -----------------------------

def init_params(key, input_dim, output_dim, emb_dim, hidden_dim, vpad):
    """uniform(-0.1, 0.1); gate columns packed [i,f,o,g]; bias = b_ih + b_hh.
    Matmul weights stored bf16 (f32 MXU accumulation in-kernel); biases f32."""
    def u(k, shape):
        return jax.random.uniform(k, shape, jnp.float32, -0.1, 0.1)

    def bf(x):
        return x.astype(jnp.bfloat16)

    keys = iter(jax.random.split(key, 32))
    H4 = 4 * hidden_dim
    p = {}

    # Encoder
    p["enc_embedding"] = bf(u(next(keys), (input_dim, emb_dim)))
    p["enc_w_ih0"] = bf(u(next(keys), (emb_dim, H4)))
    p["enc_w_hh0"] = bf(u(next(keys), (hidden_dim, H4)))
    p["enc_b0"] = u(next(keys), (1, H4)) + u(next(keys), (1, H4))
    p["enc_w_cat1"] = bf(jnp.concatenate(
        [u(next(keys), (hidden_dim, H4)), u(next(keys), (hidden_dim, H4))],
        axis=0))
    p["enc_b1"] = u(next(keys), (1, H4)) + u(next(keys), (1, H4))

    # Decoder (embedding rows & fc_out cols padded to vpad lanes)
    dec_emb = u(next(keys), (output_dim, emb_dim))
    p["dec_embedding"] = bf(jnp.zeros((vpad, emb_dim), jnp.float32)
                            .at[:output_dim].set(dec_emb))
    p["dec_w_cat0"] = bf(jnp.concatenate(
        [u(next(keys), (emb_dim, H4)), u(next(keys), (hidden_dim, H4))], axis=0))
    p["dec_b0"] = u(next(keys), (1, H4)) + u(next(keys), (1, H4))
    p["dec_w_cat1"] = bf(jnp.concatenate(
        [u(next(keys), (hidden_dim, H4)), u(next(keys), (hidden_dim, H4))],
        axis=0))
    p["dec_b1"] = u(next(keys), (1, H4)) + u(next(keys), (1, H4))
    fw = u(next(keys), (hidden_dim, output_dim))
    fb = u(next(keys), (1, output_dim))
    p["fc_out_w"] = bf(jnp.zeros((hidden_dim, vpad), jnp.float32)
                       .at[:, :output_dim].set(fw))
    p["fc_out_b"] = (jnp.full((1, vpad), -1e30, jnp.float32)
                     .at[:, :output_dim].set(fb))
    return p


# ----------------------------- Main -----------------------------

if __name__ == "__main__":
    # Small but sublane/lane-aligned shapes (B multiple of 8, E/H multiple of 128).
    input_dim = 20       # de vocab size
    output_dim = 24      # en vocab size
    emb_dim = 128
    hidden_dim = 128
    n_layers = 2         # kernel hard-codes the module's 2-layer LSTM structure
    src_len = 8
    trg_len = 6
    batch = 8
    vpad = 128           # fc_out / decoder-embedding vocab padded to one lane tile
    teacher_forcing_ratio = 0.5
    assert n_layers == 2

    key = jax.random.PRNGKey(0)
    k_params, k_src, k_trg = jax.random.split(key, 3)
    params = init_params(k_params, input_dim, output_dim, emb_dim, hidden_dim, vpad)
    src = jax.random.randint(k_src, (src_len, batch), 0, input_dim, dtype=jnp.int32)
    trg = jax.random.randint(k_trg, (trg_len, batch), 0, output_dim, dtype=jnp.int32)

    # Teacher-forcing coin flips drawn host-side (deterministic stand-in for
    # random.random()); entry 0 is unused, flag[t] selects the input of step t+1.
    rng = random.Random(0)
    tf_flags = jnp.array(
        [0] + [int(rng.random() < teacher_forcing_ratio) for _ in range(1, trg_len)],
        dtype=jnp.int32)

    outputs = seq2seq_forward(params, src, trg, tf_flags, output_dim)
    outputs = jax.block_until_ready(outputs)

    assert outputs.shape == (trg_len, batch, output_dim)
    assert bool(jnp.all(outputs[0] == 0.0))
    assert bool(jnp.all(jnp.isfinite(outputs)))
    print("KERNEL_OK")
</pallas_src>

<mosaic_0001>
module attributes {stable_mosaic.version = 11 : i64} {
  func.func @_seq2seq_kernel(%arg0: memref<6xi32, #tpu.memory_space<smem>>, %arg1: memref<6x8x1xi32, #tpu.memory_space<vmem>>, %arg2: memref<64x128xbf16, #tpu.memory_space<vmem>>, %arg3: memref<128x512xbf16, #tpu.memory_space<vmem>>, %arg4: memref<128x512xbf16, #tpu.memory_space<vmem>>, %arg5: memref<1x512xf32, #tpu.memory_space<vmem>>, %arg6: memref<256x512xbf16, #tpu.memory_space<vmem>>, %arg7: memref<1x512xf32, #tpu.memory_space<vmem>>, %arg8: memref<128x128xbf16, #tpu.memory_space<vmem>>, %arg9: memref<256x512xbf16, #tpu.memory_space<vmem>>, %arg10: memref<1x512xf32, #tpu.memory_space<vmem>>, %arg11: memref<256x512xbf16, #tpu.memory_space<vmem>>, %arg12: memref<1x512xf32, #tpu.memory_space<vmem>>, %arg13: memref<128x128xbf16, #tpu.memory_space<vmem>>, %arg14: memref<1x128xf32, #tpu.memory_space<vmem>>, %arg15: memref<6x8x128xf32, #tpu.memory_space<vmem>>, %arg16: memref<64x512xf32, #tpu.memory_space<vmem>>) attributes {dimension_semantics = [], scalar_prefetch = 0 : i64, scratch_operands = 1 : i64, tpu.core_type = #tpu.core_type<tc>} {
    %c0 = arith.constant 0 : index
    %c0_0 = arith.constant 0 : index
    %0 = vector.load %arg2[%c0, %c0_0] : memref<64x128xbf16, #tpu.memory_space<vmem>>, vector<64x128xbf16>
    %c0_1 = arith.constant 0 : index
    %c0_2 = arith.constant 0 : index
    %1 = vector.load %arg3[%c0_1, %c0_2] : memref<128x512xbf16, #tpu.memory_space<vmem>>, vector<128x512xbf16>
    %cst = arith.constant dense<0.000000e+00> : vector<64x512xf32>
    %2 = tpu.matmul %0, %1, %cst {dimension_numbers = #tpu.dot_dimension_numbers<[1], [0], [0], [1], [0, 0, 1, 1], [], []>} : vector<64x128xbf16>, vector<128x512xbf16>, vector<64x512xf32> -> vector<64x512xf32>
    %c0_3 = arith.constant 0 : index
    %c0_4 = arith.constant 0 : index
    %3 = vector.load %arg5[%c0_3, %c0_4] : memref<1x512xf32, #tpu.memory_space<vmem>>, vector<1x512xf32>
    %4 = vector.broadcast %3 : vector<1x512xf32> to vector<64x512xf32>
    %5 = arith.addf %2, %4 : vector<64x512xf32>
    %c0_5 = arith.constant 0 : index
    %c0_6 = arith.constant 0 : index
    %6 = vector.load %arg16[%c0_5, %c0_6] : memref<64x512xf32, #tpu.memory_space<vmem>>, vector<64x512xf32>
    tpu.vector_store %arg16[%c0_5, %c0_6], %5 {strides = array<i32>} : memref<64x512xf32, #tpu.memory_space<vmem>>, vector<64x512xf32>,
    %c0_7 = arith.constant 0 : index
    %c0_8 = arith.constant 0 : index
    %7 = vector.load %arg7[%c0_7, %c0_8] : memref<1x512xf32, #tpu.memory_space<vmem>>, vector<1x512xf32>
    %8 = vector.shape_cast %7 : vector<1x512xf32> to vector<1x512xf32>
    %9 = vector.broadcast %8 : vector<1x512xf32> to vector<8x512xf32>
    %cst_9 = arith.constant 0.000000e+00 : bf16
    %10 = vector.broadcast %cst_9 : bf16 to vector<8x128xbf16>
    %cst_10 = arith.constant 0.000000e+00 : f32
    %11 = vector.broadcast %cst_10 : f32 to vector<8x128xf32>
    %c0_i32 = arith.constant 0 : i32
    %c8_i32 = arith.constant 8 : i32
    %12 = arith.muli %c0_i32, %c8_i32 : i32
    %13 = tpu.assume_multiple %12, 8 : i32
    %14 = arith.index_cast %13 : i32 to index
    %c0_11 = arith.constant 0 : index
    %15 = vector.load %arg16[%14, %c0_11] : memref<64x512xf32, #tpu.memory_space<vmem>>, vector<8x512xf32>
    %c0_12 = arith.constant 0 : index
    %c0_13 = arith.constant 0 : index
    %16 = vector.load %arg4[%c0_12, %c0_13] : memref<128x512xbf16, #tpu.memory_space<vmem>>, vector<128x512xbf16>
    %cst_14 = arith.constant dense<0.000000e+00> : vector<8x512xf32>
    %17 = tpu.matmul %10, %16, %cst_14 {dimension_numbers = #tpu.dot_dimension_numbers<[1], [0], [0], [1], [0, 0, 1, 1], [], []>} : vector<8x128xbf16>, vector<128x512xbf16>, vector<8x512xf32> -> vector<8x512xf32>
    %18 = arith.addf %15, %17 : vector<8x512xf32>
    %19 = vector.extract_strided_slice %18 {offsets = [0, 0], sizes = [8, 384], strides = [1, 1]} : vector<8x512xf32> to vector<8x384xf32>
    %20 = arith.negf %19 : vector<8x384xf32>
    %21 = math.exp %20 : vector<8x384xf32>
    %cst_15 = arith.constant 1.000000e+00 : f32
    %22 = vector.broadcast %cst_15 : f32 to vector<8x384xf32>
    %23 = arith.addf %22, %21 : vector<8x384xf32>
    %24 = arith.divf %22, %23 : vector<8x384xf32>
    %25 = vector.extract_strided_slice %18 {offsets = [0, 384], sizes = [8, 128], strides = [1, 1]} : vector<8x512xf32> to vector<8x128xf32>
    %26 = math.tanh %25 : vector<8x128xf32>
    %27 = vector.extract_strided_slice %24 {offsets = [0, 0], sizes = [8, 128], strides = [1, 1]} : vector<8x384xf32> to vector<8x128xf32>
    %28 = vector.extract_strided_slice %24 {offsets = [0, 128], sizes = [8, 128], strides = [1, 1]} : vector<8x384xf32> to vector<8x128xf32>
    %29 = vector.extract_strided_slice %24 {offsets = [0, 256], sizes = [8, 128], strides = [1, 1]} : vector<8x384xf32> to vector<8x128xf32>
    %30 = arith.mulf %28, %11 : vector<8x128xf32>
    %31 = arith.mulf %27, %26 : vector<8x128xf32>
    %32 = arith.addf %30, %31 : vector<8x128xf32>
    %33 = math.tanh %32 : vector<8x128xf32>
    %34 = arith.mulf %29, %33 : vector<8x128xf32>
    %35 = arith.truncf %34 : vector<8x128xf32> to vector<8x128xbf16>
    %36 = tpu.concatenate %35, %10 in 1 : vector<8x128xbf16>, vector<8x128xbf16> -> vector<8x256xbf16>
    %c0_16 = arith.constant 0 : index
    %c0_17 = arith.constant 0 : index
    %37 = vector.load %arg6[%c0_16, %c0_17] : memref<256x512xbf16, #tpu.memory_space<vmem>>, vector<256x512xbf16>
    %cst_18 = arith.constant dense<0.000000e+00> : vector<8x512xf32>
    %38 = tpu.matmul %36, %37, %cst_18 {dimension_numbers = #tpu.dot_dimension_numbers<[1], [0], [0], [1], [0, 0, 1, 1], [], []>} : vector<8x256xbf16>, vector<256x512xbf16>, vector<8x512xf32> -> vector<8x512xf32>
    %39 = arith.addf %38, %9 : vector<8x512xf32>
    %40 = vector.extract_strided_slice %39 {offsets = [0, 0], sizes = [8, 384], strides = [1, 1]} : vector<8x512xf32> to vector<8x384xf32>
    %41 = arith.negf %40 : vector<8x384xf32>
    %42 = math.exp %41 : vector<8x384xf32>
    %cst_19 = arith.constant 1.000000e+00 : f32
    %43 = vector.broadcast %cst_19 : f32 to vector<8x384xf32>
    %44 = arith.addf %43, %42 : vector<8x384xf32>
    %45 = arith.divf %43, %44 : vector<8x384xf32>
    %46 = vector.extract_strided_slice %39 {offsets = [0, 384], sizes = [8, 128], strides = [1, 1]} : vector<8x512xf32> to vector<8x128xf32>
    %47 = math.tanh %46 : vector<8x128xf32>
    %48 = vector.extract_strided_slice %45 {offsets = [0, 0], sizes = [8, 128], strides = [1, 1]} : vector<8x384xf32> to vector<8x128xf32>
    %49 = vector.extract_strided_slice %45 {offsets = [0, 128], sizes = [8, 128], strides = [1, 1]} : vector<8x384xf32> to vector<8x128xf32>
    %50 = vector.extract_strided_slice %45 {offsets = [0, 256], sizes = [8, 128], strides = [1, 1]} : vector<8x384xf32> to vector<8x128xf32>
    %51 = arith.mulf %49, %11 : vector<8x128xf32>
    %52 = arith.mulf %48, %47 : vector<8x128xf32>
    %53 = arith.addf %51, %52 : vector<8x128xf32>
    %54 = math.tanh %53 : vector<8x128xf32>
    %55 = arith.mulf %50, %54 : vector<8x128xf32>
    %56 = arith.truncf %55 : vector<8x128xf32> to vector<8x128xbf16>
    %c1_i32 = arith.constant 1 : i32
    %c8_i32_20 = arith.constant 8 : i32
    %57 = arith.muli %c1_i32, %c8_i32_20 : i32
    %58 = tpu.assume_multiple %57, 8 : i32
    %59 = arith.index_cast %58 : i32 to index
    %c0_21 = arith.constant 0 : index
    %60 = vector.load %arg16[%59, %c0_21] : memref<64x512xf32, #tpu.memory_space<vmem>>, vector<8x512xf32>
    %c0_22 = arith.constant 0 : index
    %c0_23 = arith.constant 0 : index
    %61 = vector.load %arg4[%c0_22, %c0_23] : memref<128x512xbf16, #tpu.memory_space<vmem>>, vector<128x512xbf16>
    %cst_24 = arith.constant dense<0.000000e+00> : vector<8x512xf32>
    %62 = tpu.matmul %35, %61, %cst_24 {dimension_numbers = #tpu.dot_dimension_numbers<[1], [0], [0], [1], [0, 0, 1, 1], [], []>} : vector<8x128xbf16>, vector<128x512xbf16>, vector<8x512xf32> -> vector<8x512xf32>
    %63 = arith.addf %60, %62 : vector<8x512xf32>
    %64 = vector.extract_strided_slice %63 {offsets = [0, 0], sizes = [8, 384], strides = [1, 1]} : vector<8x512xf32> to vector<8x384xf32>
    %65 = arith.negf %64 : vector<8x384xf32>
    %66 = math.exp %65 : vector<8x384xf32>
    %cst_25 = arith.constant 1.000000e+00 : f32
    %67 = vector.broadcast %cst_25 : f32 to vector<8x384xf32>
    %68 = arith.addf %67, %66 : vector<8x384xf32>
    %69 = arith.divf %67, %68 : vector<8x384xf32>
    %70 = vector.extract_strided_slice %63 {offsets = [0, 384], sizes = [8, 128], strides = [1, 1]} : vector<8x512xf32> to vector<8x128xf32>
    %71 = math.tanh %70 : vector<8x128xf32>
    %72 = vector.extract_strided_slice %69 {offsets = [0, 0], sizes = [8, 128], strides = [1, 1]} : vector<8x384xf32> to vector<8x128xf32>
    %73 = vector.extract_strided_slice %69 {offsets = [0, 128], sizes = [8, 128], strides = [1, 1]} : vector<8x384xf32> to vector<8x128xf32>
    %74 = vector.extract_strided_slice %69 {offsets = [0, 256], sizes = [8, 128], strides = [1, 1]} : vector<8x384xf32> to vector<8x128xf32>
    %75 = arith.mulf %73, %32 : vector<8x128xf32>
    %76 = arith.mulf %72, %71 : vector<8x128xf32>
    %77 = arith.addf %75, %76 : vector<8x128xf32>
    %78 = math.tanh %77 : vector<8x128xf32>
    %79 = arith.mulf %74, %78 : vector<8x128xf32>
    %80 = arith.truncf %79 : vector<8x128xf32> to vector<8x128xbf16>
    %81 = tpu.concatenate %80, %56 in 1 : vector<8x128xbf16>, vector<8x128xbf16> -> vector<8x256xbf16>
    %c0_26 = arith.constant 0 : index
    %c0_27 = arith.constant 0 : index
    %82 = vector.load %arg6[%c0_26, %c0_27] : memref<256x512xbf16, #tpu.memory_space<vmem>>, vector<256x512xbf16>
    %cst_28 = arith.constant dense<0.000000e+00> : vector<8x512xf32>
    %83 = tpu.matmul %81, %82, %cst_28 {dimension_numbers = #tpu.dot_dimension_numbers<[1], [0], [0], [1], [0, 0, 1, 1], [], []>} : vector<8x256xbf16>, vector<256x512xbf16>, vector<8x512xf32> -> vector<8x512xf32>
    %84 = arith.addf %83, %9 : vector<8x512xf32>
    %85 = vector.extract_strided_slice %84 {offsets = [0, 0], sizes = [8, 384], strides = [1, 1]} : vector<8x512xf32> to vector<8x384xf32>
    %86 = arith.negf %85 : vector<8x384xf32>
    %87 = math.exp %86 : vector<8x384xf32>
    %cst_29 = arith.constant 1.000000e+00 : f32
    %88 = vector.broadcast %cst_29 : f32 to vector<8x384xf32>
    %89 = arith.addf %88, %87 : vector<8x384xf32>
    %90 = arith.divf %88, %89 : vector<8x384xf32>
    %91 = vector.extract_strided_slice %84 {offsets = [0, 384], sizes = [8, 128], strides = [1, 1]} : vector<8x512xf32> to vector<8x128xf32>
    %92 = math.tanh %91 : vector<8x128xf32>
    %93 = vector.extract_strided_slice %90 {offsets = [0, 0], sizes = [8, 128], strides = [1, 1]} : vector<8x384xf32> to vector<8x128xf32>
    %94 = vector.extract_strided_slice %90 {offsets = [0, 128], sizes = [8, 128], strides = [1, 1]} : vector<8x384xf32> to vector<8x128xf32>
    %95 = vector.extract_strided_slice %90 {offsets = [0, 256], sizes = [8, 128], strides = [1, 1]} : vector<8x384xf32> to vector<8x128xf32>
    %96 = arith.mulf %94, %53 : vector<8x128xf32>
    %97 = arith.mulf %93, %92 : vector<8x128xf32>
    %98 = arith.addf %96, %97 : vector<8x128xf32>
    %99 = math.tanh %98 : vector<8x128xf32>
    %100 = arith.mulf %95, %99 : vector<8x128xf32>
    %101 = arith.truncf %100 : vector<8x128xf32> to vector<8x128xbf16>
    %c2_i32 = arith.constant 2 : i32
    %c8_i32_30 = arith.constant 8 : i32
    %102 = arith.muli %c2_i32, %c8_i32_30 : i32
    %103 = tpu.assume_multiple %102, 8 : i32
    %104 = arith.index_cast %103 : i32 to index
    %c0_31 = arith.constant 0 : index
    %105 = vector.load %arg16[%104, %c0_31] : memref<64x512xf32, #tpu.memory_space<vmem>>, vector<8x512xf32>
    %c0_32 = arith.constant 0 : index
    %c0_33 = arith.constant 0 : index
    %106 = vector.load %arg4[%c0_32, %c0_33] : memref<128x512xbf16, #tpu.memory_space<vmem>>, vector<128x512xbf16>
    %cst_34 = arith.constant dense<0.000000e+00> : vector<8x512xf32>
    %107 = tpu.matmul %80, %106, %cst_34 {dimension_numbers = #tpu.dot_dimension_numbers<[1], [0], [0], [1], [0, 0, 1, 1], [], []>} : vector<8x128xbf16>, vector<128x512xbf16>, vector<8x512xf32> -> vector<8x512xf32>
    %108 = arith.addf %105, %107 : vector<8x512xf32>
    %109 = vector.extract_strided_slice %108 {offsets = [0, 0], sizes = [8, 384], strides = [1, 1]} : vector<8x512xf32> to vector<8x384xf32>
    %110 = arith.negf %109 : vector<8x384xf32>
    %111 = math.exp %110 : vector<8x384xf32>
    %cst_35 = arith.constant 1.000000e+00 : f32
    %112 = vector.broadcast %cst_35 : f32 to vector<8x384xf32>
    %113 = arith.addf %112, %111 : vector<8x384xf32>
    %114 = arith.divf %112, %113 : vector<8x384xf32>
    %115 = vector.extract_strided_slice %108 {offsets = [0, 384], sizes = [8, 128], strides = [1, 1]} : vector<8x512xf32> to vector<8x128xf32>
    %116 = math.tanh %115 : vector<8x128xf32>
    %117 = vector.extract_strided_slice %114 {offsets = [0, 0], sizes = [8, 128], strides = [1, 1]} : vector<8x384xf32> to vector<8x128xf32>
    %118 = vector.extract_strided_slice %114 {offsets = [0, 128], sizes = [8, 128], strides = [1, 1]} : vector<8x384xf32> to vector<8x128xf32>
    %119 = vector.extract_strided_slice %114 {offsets = [0, 256], sizes = [8, 128], strides = [1, 1]} : vector<8x384xf32> to vector<8x128xf32>
    %120 = arith.mulf %118, %77 : vector<8x128xf32>
    %121 = arith.mulf %117, %116 : vector<8x128xf32>
    %122 = arith.addf %120, %121 : vector<8x128xf32>
    %123 = math.tanh %122 : vector<8x128xf32>
    %124 = arith.mulf %119, %123 : vector<8x128xf32>
    %125 = arith.truncf %124 : vector<8x128xf32> to vector<8x128xbf16>
    %126 = tpu.concatenate %125, %101 in 1 : vector<8x128xbf16>, vector<8x128xbf16> -> vector<8x256xbf16>
    %c0_36 = arith.constant 0 : index
    %c0_37 = arith.constant 0 : index
    %127 = vector.load %arg6[%c0_36, %c0_37] : memref<256x512xbf16, #tpu.memory_space<vmem>>, vector<256x512xbf16>
    %cst_38 = arith.constant dense<0.000000e+00> : vector<8x512xf32>
    %128 = tpu.matmul %126, %127, %cst_38 {dimension_numbers = #tpu.dot_dimension_numbers<[1], [0], [0], [1], [0, 0, 1, 1], [], []>} : vector<8x256xbf16>, vector<256x512xbf16>, vector<8x512xf32> -> vector<8x512xf32>
    %129 = arith.addf %128, %9 : vector<8x512xf32>
    %130 = vector.extract_strided_slice %129 {offsets = [0, 0], sizes = [8, 384], strides = [1, 1]} : vector<8x512xf32> to vector<8x384xf32>
    %131 = arith.negf %130 : vector<8x384xf32>
    %132 = math.exp %131 : vector<8x384xf32>
    %cst_39 = arith.constant 1.000000e+00 : f32
    %133 = vector.broadcast %cst_39 : f32 to vector<8x384xf32>
    %134 = arith.addf %133, %132 : vector<8x384xf32>
    %135 = arith.divf %133, %134 : vector<8x384xf32>
    %136 = vector.extract_strided_slice %129 {offsets = [0, 384], sizes = [8, 128], strides = [1, 1]} : vector<8x512xf32> to vector<8x128xf32>
    %137 = math.tanh %136 : vector<8x128xf32>
    %138 = vector.extract_strided_slice %135 {offsets = [0, 0], sizes = [8, 128], strides = [1, 1]} : vector<8x384xf32> to vector<8x128xf32>
    %139 = vector.extract_strided_slice %135 {offsets = [0, 128], sizes = [8, 128], strides = [1, 1]} : vector<8x384xf32> to vector<8x128xf32>
    %140 = vector.extract_strided_slice %135 {offsets = [0, 256], sizes = [8, 128], strides = [1, 1]} : vector<8x384xf32> to vector<8x128xf32>
    %141 = arith.mulf %139, %98 : vector<8x128xf32>
    %142 = arith.mulf %138, %137 : vector<8x128xf32>
    %143 = arith.addf %141, %142 : vector<8x128xf32>
    %144 = math.tanh %143 : vector<8x128xf32>
    %145 = arith.mulf %140, %144 : vector<8x128xf32>
    %146 = arith.truncf %145 : vector<8x128xf32> to vector<8x128xbf16>
    %c3_i32 = arith.constant 3 : i32
    %c8_i32_40 = arith.constant 8 : i32
    %147 = arith.muli %c3_i32, %c8_i32_40 : i32
    %148 = tpu.assume_multiple %147, 8 : i32
    %149 = arith.index_cast %148 : i32 to index
    %c0_41 = arith.constant 0 : index
    %150 = vector.load %arg16[%149, %c0_41] : memref<64x512xf32, #tpu.memory_space<vmem>>, vector<8x512xf32>
    %c0_42 = arith.constant 0 : index
    %c0_43 = arith.constant 0 : index
    %151 = vector.load %arg4[%c0_42, %c0_43] : memref<128x512xbf16, #tpu.memory_space<vmem>>, vector<128x512xbf16>
    %cst_44 = arith.constant dense<0.000000e+00> : vector<8x512xf32>
    %152 = tpu.matmul %125, %151, %cst_44 {dimension_numbers = #tpu.dot_dimension_numbers<[1], [0], [0], [1], [0, 0, 1, 1], [], []>} : vector<8x128xbf16>, vector<128x512xbf16>, vector<8x512xf32> -> vector<8x512xf32>
    %153 = arith.addf %150, %152 : vector<8x512xf32>
    %154 = vector.extract_strided_slice %153 {offsets = [0, 0], sizes = [8, 384], strides = [1, 1]} : vector<8x512xf32> to vector<8x384xf32>
    %155 = arith.negf %154 : vector<8x384xf32>
    %156 = math.exp %155 : vector<8x384xf32>
    %cst_45 = arith.constant 1.000000e+00 : f32
    %157 = vector.broadcast %cst_45 : f32 to vector<8x384xf32>
    %158 = arith.addf %157, %156 : vector<8x384xf32>
    %159 = arith.divf %157, %158 : vector<8x384xf32>
    %160 = vector.extract_strided_slice %153 {offsets = [0, 384], sizes = [8, 128], strides = [1, 1]} : vector<8x512xf32> to vector<8x128xf32>
    %161 = math.tanh %160 : vector<8x128xf32>
    %162 = vector.extract_strided_slice %159 {offsets = [0, 0], sizes = [8, 128], strides = [1, 1]} : vector<8x384xf32> to vector<8x128xf32>
    %163 = vector.extract_strided_slice %159 {offsets = [0, 128], sizes = [8, 128], strides = [1, 1]} : vector<8x384xf32> to vector<8x128xf32>
    %164 = vector.extract_strided_slice %159 {offsets = [0, 256], sizes = [8, 128], strides = [1, 1]} : vector<8x384xf32> to vector<8x128xf32>
    %165 = arith.mulf %163, %122 : vector<8x128xf32>
    %166 = arith.mulf %162, %161 : vector<8x128xf32>
    %167 = arith.addf %165, %166 : vector<8x128xf32>
    %168 = math.tanh %167 : vector<8x128xf32>
    %169 = arith.mulf %164, %168 : vector<8x128xf32>
    %170 = arith.truncf %169 : vector<8x128xf32> to vector<8x128xbf16>
    %171 = tpu.concatenate %170, %146 in 1 : vector<8x128xbf16>, vector<8x128xbf16> -> vector<8x256xbf16>
    %c0_46 = arith.constant 0 : index
    %c0_47 = arith.constant 0 : index
    %172 = vector.load %arg6[%c0_46, %c0_47] : memref<256x512xbf16, #tpu.memory_space<vmem>>, vector<256x512xbf16>
    %cst_48 = arith.constant dense<0.000000e+00> : vector<8x512xf32>
    %173 = tpu.matmul %171, %172, %cst_48 {dimension_numbers = #tpu.dot_dimension_numbers<[1], [0], [0], [1], [0, 0, 1, 1], [], []>} : vector<8x256xbf16>, vector<256x512xbf16>, vector<8x512xf32> -> vector<8x512xf32>
    %174 = arith.addf %173, %9 : vector<8x512xf32>
    %175 = vector.extract_strided_slice %174 {offsets = [0, 0], sizes = [8, 384], strides = [1, 1]} : vector<8x512xf32> to vector<8x384xf32>
    %176 = arith.negf %175 : vector<8x384xf32>
    %177 = math.exp %176 : vector<8x384xf32>
    %cst_49 = arith.constant 1.000000e+00 : f32
    %178 = vector.broadcast %cst_49 : f32 to vector<8x384xf32>
    %179 = arith.addf %178, %177 : vector<8x384xf32>
    %180 = arith.divf %178, %179 : vector<8x384xf32>
    %181 = vector.extract_strided_slice %174 {offsets = [0, 384], sizes = [8, 128], strides = [1, 1]} : vector<8x512xf32> to vector<8x128xf32>
    %182 = math.tanh %181 : vector<8x128xf32>
    %183 = vector.extract_strided_slice %180 {offsets = [0, 0], sizes = [8, 128], strides = [1, 1]} : vector<8x384xf32> to vector<8x128xf32>
    %184 = vector.extract_strided_slice %180 {offsets = [0, 128], sizes = [8, 128], strides = [1, 1]} : vector<8x384xf32> to vector<8x128xf32>
    %185 = vector.extract_strided_slice %180 {offsets = [0, 256], sizes = [8, 128], strides = [1, 1]} : vector<8x384xf32> to vector<8x128xf32>
    %186 = arith.mulf %184, %143 : vector<8x128xf32>
    %187 = arith.mulf %183, %182 : vector<8x128xf32>
    %188 = arith.addf %186, %187 : vector<8x128xf32>
    %189 = math.tanh %188 : vector<8x128xf32>
    %190 = arith.mulf %185, %189 : vector<8x128xf32>
    %191 = arith.truncf %190 : vector<8x128xf32> to vector<8x128xbf16>
    %c4_i32 = arith.constant 4 : i32
    %c8_i32_50 = arith.constant 8 : i32
    %192 = arith.muli %c4_i32, %c8_i32_50 : i32
    %193 = tpu.assume_multiple %192, 8 : i32
    %194 = arith.index_cast %193 : i32 to index
    %c0_51 = arith.constant 0 : index
    %195 = vector.load %arg16[%194, %c0_51] : memref<64x512xf32, #tpu.memory_space<vmem>>, vector<8x512xf32>
    %c0_52 = arith.constant 0 : index
    %c0_53 = arith.constant 0 : index
    %196 = vector.load %arg4[%c0_52, %c0_53] : memref<128x512xbf16, #tpu.memory_space<vmem>>, vector<128x512xbf16>
    %cst_54 = arith.constant dense<0.000000e+00> : vector<8x512xf32>
    %197 = tpu.matmul %170, %196, %cst_54 {dimension_numbers = #tpu.dot_dimension_numbers<[1], [0], [0], [1], [0, 0, 1, 1], [], []>} : vector<8x128xbf16>, vector<128x512xbf16>, vector<8x512xf32> -> vector<8x512xf32>
    %198 = arith.addf %195, %197 : vector<8x512xf32>
    %199 = vector.extract_strided_slice %198 {offsets = [0, 0], sizes = [8, 384], strides = [1, 1]} : vector<8x512xf32> to vector<8x384xf32>
    %200 = arith.negf %199 : vector<8x384xf32>
    %201 = math.exp %200 : vector<8x384xf32>
    %cst_55 = arith.constant 1.000000e+00 : f32
    %202 = vector.broadcast %cst_55 : f32 to vector<8x384xf32>
    %203 = arith.addf %202, %201 : vector<8x384xf32>
    %204 = arith.divf %202, %203 : vector<8x384xf32>
    %205 = vector.extract_strided_slice %198 {offsets = [0, 384], sizes = [8, 128], strides = [1, 1]} : vector<8x512xf32> to vector<8x128xf32>
    %206 = math.tanh %205 : vector<8x128xf32>
    %207 = vector.extract_strided_slice %204 {offsets = [0, 0], sizes = [8, 128], strides = [1, 1]} : vector<8x384xf32> to vector<8x128xf32>
    %208 = vector.extract_strided_slice %204 {offsets = [0, 128], sizes = [8, 128], strides = [1, 1]} : vector<8x384xf32> to vector<8x128xf32>
    %209 = vector.extract_strided_slice %204 {offsets = [0, 256], sizes = [8, 128], strides = [1, 1]} : vector<8x384xf32> to vector<8x128xf32>
    %210 = arith.mulf %208, %167 : vector<8x128xf32>
    %211 = arith.mulf %207, %206 : vector<8x128xf32>
    %212 = arith.addf %210, %211 : vector<8x128xf32>
    %213 = math.tanh %212 : vector<8x128xf32>
    %214 = arith.mulf %209, %213 : vector<8x128xf32>
    %215 = arith.truncf %214 : vector<8x128xf32> to vector<8x128xbf16>
    %216 = tpu.concatenate %215, %191 in 1 : vector<8x128xbf16>, vector<8x128xbf16> -> vector<8x256xbf16>
    %c0_56 = arith.constant 0 : index
    %c0_57 = arith.constant 0 : index
    %217 = vector.load %arg6[%c0_56, %c0_57] : memref<256x512xbf16, #tpu.memory_space<vmem>>, vector<256x512xbf16>
    %cst_58 = arith.constant dense<0.000000e+00> : vector<8x512xf32>
    %218 = tpu.matmul %216, %217, %cst_58 {dimension_numbers = #tpu.dot_dimension_numbers<[1], [0], [0], [1], [0, 0, 1, 1], [], []>} : vector<8x256xbf16>, vector<256x512xbf16>, vector<8x512xf32> -> vector<8x512xf32>
    %219 = arith.addf %218, %9 : vector<8x512xf32>
    %220 = vector.extract_strided_slice %219 {offsets = [0, 0], sizes = [8, 384], strides = [1, 1]} : vector<8x512xf32> to vector<8x384xf32>
    %221 = arith.negf %220 : vector<8x384xf32>
    %222 = math.exp %221 : vector<8x384xf32>
    %cst_59 = arith.constant 1.000000e+00 : f32
    %223 = vector.broadcast %cst_59 : f32 to vector<8x384xf32>
    %224 = arith.addf %223, %222 : vector<8x384xf32>
    %225 = arith.divf %223, %224 : vector<8x384xf32>
    %226 = vector.extract_strided_slice %219 {offsets = [0, 384], sizes = [8, 128], strides = [1, 1]} : vector<8x512xf32> to vector<8x128xf32>
    %227 = math.tanh %226 : vector<8x128xf32>
    %228 = vector.extract_strided_slice %225 {offsets = [0, 0], sizes = [8, 128], strides = [1, 1]} : vector<8x384xf32> to vector<8x128xf32>
    %229 = vector.extract_strided_slice %225 {offsets = [0, 128], sizes = [8, 128], strides = [1, 1]} : vector<8x384xf32> to vector<8x128xf32>
    %230 = vector.extract_strided_slice %225 {offsets = [0, 256], sizes = [8, 128], strides = [1, 1]} : vector<8x384xf32> to vector<8x128xf32>
    %231 = arith.mulf %229, %188 : vector<8x128xf32>
    %232 = arith.mulf %228, %227 : vector<8x128xf32>
    %233 = arith.addf %231, %232 : vector<8x128xf32>
    %234 = math.tanh %233 : vector<8x128xf32>
    %235 = arith.mulf %230, %234 : vector<8x128xf32>
    %236 = arith.truncf %235 : vector<8x128xf32> to vector<8x128xbf16>
    %c5_i32 = arith.constant 5 : i32
    %c8_i32_60 = arith.constant 8 : i32
    %237 = arith.muli %c5_i32, %c8_i32_60 : i32
    %238 = tpu.assume_multiple %237, 8 : i32
    %239 = arith.index_cast %238 : i32 to index
    %c0_61 = arith.constant 0 : index
    %240 = vector.load %arg16[%239, %c0_61] : memref<64x512xf32, #tpu.memory_space<vmem>>, vector<8x512xf32>
    %c0_62 = arith.constant 0 : index
    %c0_63 = arith.constant 0 : index
    %241 = vector.load %arg4[%c0_62, %c0_63] : memref<128x512xbf16, #tpu.memory_space<vmem>>, vector<128x512xbf16>
    %cst_64 = arith.constant dense<0.000000e+00> : vector<8x512xf32>
    %242 = tpu.matmul %215, %241, %cst_64 {dimension_numbers = #tpu.dot_dimension_numbers<[1], [0], [0], [1], [0, 0, 1, 1], [], []>} : vector<8x128xbf16>, vector<128x512xbf16>, vector<8x512xf32> -> vector<8x512xf32>
    %243 = arith.addf %240, %242 : vector<8x512xf32>
    %244 = vector.extract_strided_slice %243 {offsets = [0, 0], sizes = [8, 384], strides = [1, 1]} : vector<8x512xf32> to vector<8x384xf32>
    %245 = arith.negf %244 : vector<8x384xf32>
    %246 = math.exp %245 : vector<8x384xf32>
    %cst_65 = arith.constant 1.000000e+00 : f32
    %247 = vector.broadcast %cst_65 : f32 to vector<8x384xf32>
    %248 = arith.addf %247, %246 : vector<8x384xf32>
    %249 = arith.divf %247, %248 : vector<8x384xf32>
    %250 = vector.extract_strided_slice %243 {offsets = [0, 384], sizes = [8, 128], strides = [1, 1]} : vector<8x512xf32> to vector<8x128xf32>
    %251 = math.tanh %250 : vector<8x128xf32>
    %252 = vector.extract_strided_slice %249 {offsets = [0, 0], sizes = [8, 128], strides = [1, 1]} : vector<8x384xf32> to vector<8x128xf32>
    %253 = vector.extract_strided_slice %249 {offsets = [0, 128], sizes = [8, 128], strides = [1, 1]} : vector<8x384xf32> to vector<8x128xf32>
    %254 = vector.extract_strided_slice %249 {offsets = [0, 256], sizes = [8, 128], strides = [1, 1]} : vector<8x384xf32> to vector<8x128xf32>
    %255 = arith.mulf %253, %212 : vector<8x128xf32>
    %256 = arith.mulf %252, %251 : vector<8x128xf32>
    %257 = arith.addf %255, %256 : vector<8x128xf32>
    %258 = math.tanh %257 : vector<8x128xf32>
    %259 = arith.mulf %254, %258 : vector<8x128xf32>
    %260 = arith.truncf %259 : vector<8x128xf32> to vector<8x128xbf16>
    %261 = tpu.concatenate %260, %236 in 1 : vector<8x128xbf16>, vector<8x128xbf16> -> vector<8x256xbf16>
    %c0_66 = arith.constant 0 : index
    %c0_67 = arith.constant 0 : index
    %262 = vector.load %arg6[%c0_66, %c0_67] : memref<256x512xbf16, #tpu.memory_space<vmem>>, vector<256x512xbf16>
    %cst_68 = arith.constant dense<0.000000e+00> : vector<8x512xf32>
    %263 = tpu.matmul %261, %262, %cst_68 {dimension_numbers = #tpu.dot_dimension_numbers<[1], [0], [0], [1], [0, 0, 1, 1], [], []>} : vector<8x256xbf16>, vector<256x512xbf16>, vector<8x512xf32> -> vector<8x512xf32>
    %264 = arith.addf %263, %9 : vector<8x512xf32>
    %265 = vector.extract_strided_slice %264 {offsets = [0, 0], sizes = [8, 384], strides = [1, 1]} : vector<8x512xf32> to vector<8x384xf32>
    %266 = arith.negf %265 : vector<8x384xf32>
    %267 = math.exp %266 : vector<8x384xf32>
    %cst_69 = arith.constant 1.000000e+00 : f32
    %268 = vector.broadcast %cst_69 : f32 to vector<8x384xf32>
    %269 = arith.addf %268, %267 : vector<8x384xf32>
    %270 = arith.divf %268, %269 : vector<8x384xf32>
    %271 = vector.extract_strided_slice %264 {offsets = [0, 384], sizes = [8, 128], strides = [1, 1]} : vector<8x512xf32> to vector<8x128xf32>
    %272 = math.tanh %271 : vector<8x128xf32>
    %273 = vector.extract_strided_slice %270 {offsets = [0, 0], sizes = [8, 128], strides = [1, 1]} : vector<8x384xf32> to vector<8x128xf32>
    %274 = vector.extract_strided_slice %270 {offsets = [0, 128], sizes = [8, 128], strides = [1, 1]} : vector<8x384xf32> to vector<8x128xf32>
    %275 = vector.extract_strided_slice %270 {offsets = [0, 256], sizes = [8, 128], strides = [1, 1]} : vector<8x384xf32> to vector<8x128xf32>
    %276 = arith.mulf %274, %233 : vector<8x128xf32>
    %277 = arith.mulf %273, %272 : vector<8x128xf32>
    %278 = arith.addf %276, %277 : vector<8x128xf32>
    %279 = math.tanh %278 : vector<8x128xf32>
    %280 = arith.mulf %275, %279 : vector<8x128xf32>
    %281 = arith.truncf %280 : vector<8x128xf32> to vector<8x128xbf16>
    %c6_i32 = arith.constant 6 : i32
    %c8_i32_70 = arith.constant 8 : i32
    %282 = arith.muli %c6_i32, %c8_i32_70 : i32
    %283 = tpu.assume_multiple %282, 8 : i32
    %284 = arith.index_cast %283 : i32 to index
    %c0_71 = arith.constant 0 : index
    %285 = vector.load %arg16[%284, %c0_71] : memref<64x512xf32, #tpu.memory_space<vmem>>, vector<8x512xf32>
    %c0_72 = arith.constant 0 : index
    %c0_73 = arith.constant 0 : index
    %286 = vector.load %arg4[%c0_72, %c0_73] : memref<128x512xbf16, #tpu.memory_space<vmem>>, vector<128x512xbf16>
    %cst_74 = arith.constant dense<0.000000e+00> : vector<8x512xf32>
    %287 = tpu.matmul %260, %286, %cst_74 {dimension_numbers = #tpu.dot_dimension_numbers<[1], [0], [0], [1], [0, 0, 1, 1], [], []>} : vector<8x128xbf16>, vector<128x512xbf16>, vector<8x512xf32> -> vector<8x512xf32>
    %288 = arith.addf %285, %287 : vector<8x512xf32>
    %289 = vector.extract_strided_slice %288 {offsets = [0, 0], sizes = [8, 384], strides = [1, 1]} : vector<8x512xf32> to vector<8x384xf32>
    %290 = arith.negf %289 : vector<8x384xf32>
    %291 = math.exp %290 : vector<8x384xf32>
    %cst_75 = arith.constant 1.000000e+00 : f32
    %292 = vector.broadcast %cst_75 : f32 to vector<8x384xf32>
    %293 = arith.addf %292, %291 : vector<8x384xf32>
    %294 = arith.divf %292, %293 : vector<8x384xf32>
    %295 = vector.extract_strided_slice %288 {offsets = [0, 384], sizes = [8, 128], strides = [1, 1]} : vector<8x512xf32> to vector<8x128xf32>
    %296 = math.tanh %295 : vector<8x128xf32>
    %297 = vector.extract_strided_slice %294 {offsets = [0, 0], sizes = [8, 128], strides = [1, 1]} : vector<8x384xf32> to vector<8x128xf32>
    %298 = vector.extract_strided_slice %294 {offsets = [0, 128], sizes = [8, 128], strides = [1, 1]} : vector<8x384xf32> to vector<8x128xf32>
    %299 = vector.extract_strided_slice %294 {offsets = [0, 256], sizes = [8, 128], strides = [1, 1]} : vector<8x384xf32> to vector<8x128xf32>
    %300 = arith.mulf %298, %257 : vector<8x128xf32>
    %301 = arith.mulf %297, %296 : vector<8x128xf32>
    %302 = arith.addf %300, %301 : vector<8x128xf32>
    %303 = math.tanh %302 : vector<8x128xf32>
    %304 = arith.mulf %299, %303 : vector<8x128xf32>
    %305 = arith.truncf %304 : vector<8x128xf32> to vector<8x128xbf16>
    %306 = tpu.concatenate %305, %281 in 1 : vector<8x128xbf16>, vector<8x128xbf16> -> vector<8x256xbf16>
    %c0_76 = arith.constant 0 : index
    %c0_77 = arith.constant 0 : index
    %307 = vector.load %arg6[%c0_76, %c0_77] : memref<256x512xbf16, #tpu.memory_space<vmem>>, vector<256x512xbf16>
    %cst_78 = arith.constant dense<0.000000e+00> : vector<8x512xf32>
    %308 = tpu.matmul %306, %307, %cst_78 {dimension_numbers = #tpu.dot_dimension_numbers<[1], [0], [0], [1], [0, 0, 1, 1], [], []>} : vector<8x256xbf16>, vector<256x512xbf16>, vector<8x512xf32> -> vector<8x512xf32>
    %309 = arith.addf %308, %9 : vector<8x512xf32>
    %310 = vector.extract_strided_slice %309 {offsets = [0, 0], sizes = [8, 384], strides = [1, 1]} : vector<8x512xf32> to vector<8x384xf32>
    %311 = arith.negf %310 : vector<8x384xf32>
    %312 = math.exp %311 : vector<8x384xf32>
    %cst_79 = arith.constant 1.000000e+00 : f32
    %313 = vector.broadcast %cst_79 : f32 to vector<8x384xf32>
    %314 = arith.addf %313, %312 : vector<8x384xf32>
    %315 = arith.divf %313, %314 : vector<8x384xf32>
    %316 = vector.extract_strided_slice %309 {offsets = [0, 384], sizes = [8, 128], strides = [1, 1]} : vector<8x512xf32> to vector<8x128xf32>
    %317 = math.tanh %316 : vector<8x128xf32>
    %318 = vector.extract_strided_slice %315 {offsets = [0, 0], sizes = [8, 128], strides = [1, 1]} : vector<8x384xf32> to vector<8x128xf32>
    %319 = vector.extract_strided_slice %315 {offsets = [0, 128], sizes = [8, 128], strides = [1, 1]} : vector<8x384xf32> to vector<8x128xf32>
    %320 = vector.extract_strided_slice %315 {offsets = [0, 256], sizes = [8, 128], strides = [1, 1]} : vector<8x384xf32> to vector<8x128xf32>
    %321 = arith.mulf %319, %278 : vector<8x128xf32>
    %322 = arith.mulf %318, %317 : vector<8x128xf32>
    %323 = arith.addf %321, %322 : vector<8x128xf32>
    %324 = math.tanh %323 : vector<8x128xf32>
    %325 = arith.mulf %320, %324 : vector<8x128xf32>
    %326 = arith.truncf %325 : vector<8x128xf32> to vector<8x128xbf16>
    %c7_i32 = arith.constant 7 : i32
    %c8_i32_80 = arith.constant 8 : i32
    %327 = arith.muli %c7_i32, %c8_i32_80 : i32
    %328 = tpu.assume_multiple %327, 8 : i32
    %329 = arith.index_cast %328 : i32 to index
    %c0_81 = arith.constant 0 : index
    %330 = vector.load %arg16[%329, %c0_81] : memref<64x512xf32, #tpu.memory_space<vmem>>, vector<8x512xf32>
    %c0_82 = arith.constant 0 : index
    %c0_83 = arith.constant 0 : index
    %331 = vector.load %arg4[%c0_82, %c0_83] : memref<128x512xbf16, #tpu.memory_space<vmem>>, vector<128x512xbf16>
    %cst_84 = arith.constant dense<0.000000e+00> : vector<8x512xf32>
    %332 = tpu.matmul %305, %331, %cst_84 {dimension_numbers = #tpu.dot_dimension_numbers<[1], [0], [0], [1], [0, 0, 1, 1], [], []>} : vector<8x128xbf16>, vector<128x512xbf16>, vector<8x512xf32> -> vector<8x512xf32>
    %333 = arith.addf %330, %332 : vector<8x512xf32>
    %334 = vector.extract_strided_slice %333 {offsets = [0, 0], sizes = [8, 384], strides = [1, 1]} : vector<8x512xf32> to vector<8x384xf32>
    %335 = arith.negf %334 : vector<8x384xf32>
    %336 = math.exp %335 : vector<8x384xf32>
    %cst_85 = arith.constant 1.000000e+00 : f32
    %337 = vector.broadcast %cst_85 : f32 to vector<8x384xf32>
    %338 = arith.addf %337, %336 : vector<8x384xf32>
    %339 = arith.divf %337, %338 : vector<8x384xf32>
    %340 = vector.extract_strided_slice %333 {offsets = [0, 384], sizes = [8, 128], strides = [1, 1]} : vector<8x512xf32> to vector<8x128xf32>
    %341 = math.tanh %340 : vector<8x128xf32>
    %342 = vector.extract_strided_slice %339 {offsets = [0, 0], sizes = [8, 128], strides = [1, 1]} : vector<8x384xf32> to vector<8x128xf32>
    %343 = vector.extract_strided_slice %339 {offsets = [0, 128], sizes = [8, 128], strides = [1, 1]} : vector<8x384xf32> to vector<8x128xf32>
    %344 = vector.extract_strided_slice %339 {offsets = [0, 256], sizes = [8, 128], strides = [1, 1]} : vector<8x384xf32> to vector<8x128xf32>
    %345 = arith.mulf %343, %302 : vector<8x128xf32>
    %346 = arith.mulf %342, %341 : vector<8x128xf32>
    %347 = arith.addf %345, %346 : vector<8x128xf32>
    %348 = math.tanh %347 : vector<8x128xf32>
    %349 = arith.mulf %344, %348 : vector<8x128xf32>
    %350 = arith.truncf %349 : vector<8x128xf32> to vector<8x128xbf16>
    %351 = tpu.concatenate %350, %326 in 1 : vector<8x128xbf16>, vector<8x128xbf16> -> vector<8x256xbf16>
    %c0_86 = arith.constant 0 : index
    %c0_87 = arith.constant 0 : index
    %352 = vector.load %arg6[%c0_86, %c0_87] : memref<256x512xbf16, #tpu.memory_space<vmem>>, vector<256x512xbf16>
    %cst_88 = arith.constant dense<0.000000e+00> : vector<8x512xf32>
    %353 = tpu.matmul %351, %352, %cst_88 {dimension_numbers = #tpu.dot_dimension_numbers<[1], [0], [0], [1], [0, 0, 1, 1], [], []>} : vector<8x256xbf16>, vector<256x512xbf16>, vector<8x512xf32> -> vector<8x512xf32>
    %354 = arith.addf %353, %9 : vector<8x512xf32>
    %355 = vector.extract_strided_slice %354 {offsets = [0, 0], sizes = [8, 384], strides = [1, 1]} : vector<8x512xf32> to vector<8x384xf32>
    %356 = arith.negf %355 : vector<8x384xf32>
    %357 = math.exp %356 : vector<8x384xf32>
    %cst_89 = arith.constant 1.000000e+00 : f32
    %358 = vector.broadcast %cst_89 : f32 to vector<8x384xf32>
    %359 = arith.addf %358, %357 : vector<8x384xf32>
    %360 = arith.divf %358, %359 : vector<8x384xf32>
    %361 = vector.extract_strided_slice %354 {offsets = [0, 384], sizes = [8, 128], strides = [1, 1]} : vector<8x512xf32> to vector<8x128xf32>
    %362 = math.tanh %361 : vector<8x128xf32>
    %363 = vector.extract_strided_slice %360 {offsets = [0, 0], sizes = [8, 128], strides = [1, 1]} : vector<8x384xf32> to vector<8x128xf32>
    %364 = vector.extract_strided_slice %360 {offsets = [0, 128], sizes = [8, 128], strides = [1, 1]} : vector<8x384xf32> to vector<8x128xf32>
    %365 = vector.extract_strided_slice %360 {offsets = [0, 256], sizes = [8, 128], strides = [1, 1]} : vector<8x384xf32> to vector<8x128xf32>
    %366 = arith.mulf %364, %323 : vector<8x128xf32>
    %367 = arith.mulf %363, %362 : vector<8x128xf32>
    %368 = arith.addf %366, %367 : vector<8x128xf32>
    %369 = math.tanh %368 : vector<8x128xf32>
    %370 = arith.mulf %365, %369 : vector<8x128xf32>
    %371 = arith.truncf %370 : vector<8x128xf32> to vector<8x128xbf16>
    %c8_i32_90 = arith.constant 8 : i32
    %c0_91 = arith.constant 0 : index
    %c0_92 = arith.constant 0 : index
    %372 = vector.load %arg10[%c0_91, %c0_92] : memref<1x512xf32, #tpu.memory_space<vmem>>, vector<1x512xf32>
    %373 = vector.shape_cast %372 : vector<1x512xf32> to vector<1x512xf32>
    %374 = vector.broadcast %373 : vector<1x512xf32> to vector<8x512xf32>
    %c0_93 = arith.constant 0 : index
    %c0_94 = arith.constant 0 : index
    %375 = vector.load %arg12[%c0_93, %c0_94] : memref<1x512xf32, #tpu.memory_space<vmem>>, vector<1x512xf32>
    %376 = vector.shape_cast %375 : vector<1x512xf32> to vector<1x512xf32>
    %377 = vector.broadcast %376 : vector<1x512xf32> to vector<8x512xf32>
    %c0_95 = arith.constant 0 : index
    %c0_96 = arith.constant 0 : index
    %378 = vector.load %arg14[%c0_95, %c0_96] : memref<1x128xf32, #tpu.memory_space<vmem>>, vector<1x128xf32>
    %379 = vector.shape_cast %378 : vector<1x128xf32> to vector<1x128xf32>
    %380 = vector.broadcast %379 : vector<1x128xf32> to vector<8x128xf32>
    %381 = tpu.iota {dimensions = array<i32: 1>} : vector<8x128xi32>
    %382 = arith.sitofp %381 : vector<8x128xi32> to vector<8x128xf32>
    %cst_97 = arith.constant 0.000000e+00 : f32
    %383 = vector.broadcast %cst_97 : f32 to vector<8x128xf32>
    %c0_98 = arith.constant 0 : index
    %c0_99 = arith.constant 0 : index
    %c0_100 = arith.constant 0 : index
    %384 = vector.load %arg15[%c0_98, %c0_99, %c0_100] : memref<6x8x128xf32, #tpu.memory_space<vmem>>, vector<1x8x128xf32>
    %385 = vector.shape_cast %384 : vector<1x8x128xf32> to vector<8x128xf32>
    %386 = vector.shape_cast %383 : vector<8x128xf32> to vector<1x8x128xf32>
    tpu.vector_store %arg15[%c0_98, %c0_99, %c0_100], %386 {strides = array<i32>} : memref<6x8x128xf32, #tpu.memory_space<vmem>>, vector<1x8x128xf32>,
    %c0_101 = arith.constant 0 : index
    %c0_102 = arith.constant 0 : index
    %c0_103 = arith.constant 0 : index
    %387 = vector.load %arg1[%c0_101, %c0_102, %c0_103] : memref<6x8x1xi32, #tpu.memory_space<vmem>>, vector<1x8x1xi32>
    %388 = vector.shape_cast %387 : vector<1x8x1xi32> to vector<8x1xi32>
    %389 = vector.broadcast %388 : vector<8x1xi32> to vector<8x128xi32>
    %390 = arith.cmpi eq, %381, %389 : vector<8x128xi32>
    %391 = arith.extui %390 : vector<8x128xi1> to vector<8x128xi32>
    %392 = arith.sitofp %391 : vector<8x128xi32> to vector<8x128xf32>
    %393 = arith.truncf %392 : vector<8x128xf32> to vector<8x128xbf16>
    %c1_i32_104 = arith.constant 1 : i32
    %c0_105 = arith.constant 0 : index
    %c0_106 = arith.constant 0 : index
    %394 = vector.load %arg8[%c0_105, %c0_106] : memref<128x128xbf16, #tpu.memory_space<vmem>>, vector<128x128xbf16>
    %cst_107 = arith.constant dense<0.000000e+00> : vector<8x128xf32>
    %395 = tpu.matmul %393, %394, %cst_107 {dimension_numbers = #tpu.dot_dimension_numbers<[1], [0], [0], [1], [0, 0, 1, 1], [], []>} : vector<8x128xbf16>, vector<128x128xbf16>, vector<8x128xf32> -> vector<8x128xf32>
    %396 = arith.truncf %395 : vector<8x128xf32> to vector<8x128xbf16>
    %397 = tpu.concatenate %396, %350 in 1 : vector<8x128xbf16>, vector<8x128xbf16> -> vector<8x256xbf16>
    %c0_108 = arith.constant 0 : index
    %c0_109 = arith.constant 0 : index
    %398 = vector.load %arg9[%c0_108, %c0_109] : memref<256x512xbf16, #tpu.memory_space<vmem>>, vector<256x512xbf16>
    %cst_110 = arith.constant dense<0.000000e+00> : vector<8x512xf32>
    %399 = tpu.matmul %397, %398, %cst_110 {dimension_numbers = #tpu.dot_dimension_numbers<[1], [0], [0], [1], [0, 0, 1, 1], [], []>} : vector<8x256xbf16>, vector<256x512xbf16>, vector<8x512xf32> -> vector<8x512xf32>
    %400 = arith.addf %399, %374 : vector<8x512xf32>
    %401 = vector.extract_strided_slice %400 {offsets = [0, 0], sizes = [8, 384], strides = [1, 1]} : vector<8x512xf32> to vector<8x384xf32>
    %402 = arith.negf %401 : vector<8x384xf32>
    %403 = math.exp %402 : vector<8x384xf32>
    %cst_111 = arith.constant 1.000000e+00 : f32
    %404 = vector.broadcast %cst_111 : f32 to vector<8x384xf32>
    %405 = arith.addf %404, %403 : vector<8x384xf32>
    %406 = arith.divf %404, %405 : vector<8x384xf32>
    %407 = vector.extract_strided_slice %400 {offsets = [0, 384], sizes = [8, 128], strides = [1, 1]} : vector<8x512xf32> to vector<8x128xf32>
    %408 = math.tanh %407 : vector<8x128xf32>
    %409 = vector.extract_strided_slice %406 {offsets = [0, 0], sizes = [8, 128], strides = [1, 1]} : vector<8x384xf32> to vector<8x128xf32>
    %410 = vector.extract_strided_slice %406 {offsets = [0, 128], sizes = [8, 128], strides = [1, 1]} : vector<8x384xf32> to vector<8x128xf32>
    %411 = vector.extract_strided_slice %406 {offsets = [0, 256], sizes = [8, 128], strides = [1, 1]} : vector<8x384xf32> to vector<8x128xf32>
    %412 = arith.mulf %410, %347 : vector<8x128xf32>
    %413 = arith.mulf %409, %408 : vector<8x128xf32>
    %414 = arith.addf %412, %413 : vector<8x128xf32>
    %415 = math.tanh %414 : vector<8x128xf32>
    %416 = arith.mulf %411, %415 : vector<8x128xf32>
    %417 = arith.truncf %416 : vector<8x128xf32> to vector<8x128xbf16>
    %418 = tpu.concatenate %417, %371 in 1 : vector<8x128xbf16>, vector<8x128xbf16> -> vector<8x256xbf16>
    %c0_112 = arith.constant 0 : index
    %c0_113 = arith.constant 0 : index
    %419 = vector.load %arg11[%c0_112, %c0_113] : memref<256x512xbf16, #tpu.memory_space<vmem>>, vector<256x512xbf16>
    %cst_114 = arith.constant dense<0.000000e+00> : vector<8x512xf32>
    %420 = tpu.matmul %418, %419, %cst_114 {dimension_numbers = #tpu.dot_dimension_numbers<[1], [0], [0], [1], [0, 0, 1, 1], [], []>} : vector<8x256xbf16>, vector<256x512xbf16>, vector<8x512xf32> -> vector<8x512xf32>
    %421 = arith.addf %420, %377 : vector<8x512xf32>
    %422 = vector.extract_strided_slice %421 {offsets = [0, 0], sizes = [8, 384], strides = [1, 1]} : vector<8x512xf32> to vector<8x384xf32>
    %423 = arith.negf %422 : vector<8x384xf32>
    %424 = math.exp %423 : vector<8x384xf32>
    %cst_115 = arith.constant 1.000000e+00 : f32
    %425 = vector.broadcast %cst_115 : f32 to vector<8x384xf32>
    %426 = arith.addf %425, %424 : vector<8x384xf32>
    %427 = arith.divf %425, %426 : vector<8x384xf32>
    %428 = vector.extract_strided_slice %421 {offsets = [0, 384], sizes = [8, 128], strides = [1, 1]} : vector<8x512xf32> to vector<8x128xf32>
    %429 = math.tanh %428 : vector<8x128xf32>
    %430 = vector.extract_strided_slice %427 {offsets = [0, 0], sizes = [8, 128], strides = [1, 1]} : vector<8x384xf32> to vector<8x128xf32>
    %431 = vector.extract_strided_slice %427 {offsets = [0, 128], sizes = [8, 128], strides = [1, 1]} : vector<8x384xf32> to vector<8x128xf32>
    %432 = vector.extract_strided_slice %427 {offsets = [0, 256], sizes = [8, 128], strides = [1, 1]} : vector<8x384xf32> to vector<8x128xf32>
    %433 = arith.mulf %431, %368 : vector<8x128xf32>
    %434 = arith.mulf %430, %429 : vector<8x128xf32>
    %435 = arith.addf %433, %434 : vector<8x128xf32>
    %436 = math.tanh %435 : vector<8x128xf32>
    %437 = arith.mulf %432, %436 : vector<8x128xf32>
    %438 = arith.truncf %437 : vector<8x128xf32> to vector<8x128xbf16>
    %c0_116 = arith.constant 0 : index
    %c0_117 = arith.constant 0 : index
    %439 = vector.load %arg13[%c0_116, %c0_117] : memref<128x128xbf16, #tpu.memory_space<vmem>>, vector<128x128xbf16>
    %cst_118 = arith.constant dense<0.000000e+00> : vector<8x128xf32>
    %440 = tpu.matmul %438, %439, %cst_118 {dimension_numbers = #tpu.dot_dimension_numbers<[1], [0], [0], [1], [0, 0, 1, 1], [], []>} : vector<8x128xbf16>, vector<128x128xbf16>, vector<8x128xf32> -> vector<8x128xf32>
    %441 = arith.addf %440, %380 : vector<8x128xf32>
    %442 = arith.index_cast %c1_i32_104 : i32 to index
    %c0_119 = arith.constant 0 : index
    %c0_120 = arith.constant 0 : index
    %443 = vector.load %arg15[%442, %c0_119, %c0_120] : memref<6x8x128xf32, #tpu.memory_space<vmem>>, vector<1x8x128xf32>
    %444 = vector.shape_cast %443 : vector<1x8x128xf32> to vector<8x128xf32>
    %445 = vector.shape_cast %441 : vector<8x128xf32> to vector<1x8x128xf32>
    tpu.vector_store %arg15[%442, %c0_119, %c0_120], %445 {strides = array<i32>} : memref<6x8x128xf32, #tpu.memory_space<vmem>>, vector<1x8x128xf32>,
    %446 = arith.index_cast %c1_i32_104 : i32 to index
    %c0_121 = arith.constant 0 : index
    %c0_122 = arith.constant 0 : index
    %447 = vector.load %arg1[%446, %c0_121, %c0_122] : memref<6x8x1xi32, #tpu.memory_space<vmem>>, vector<1x8x1xi32>
    %448 = vector.shape_cast %447 : vector<1x8x1xi32> to vector<8x1xi32>
    %449 = vector.broadcast %448 : vector<8x1xi32> to vector<8x128xi32>
    %450 = arith.cmpi eq, %381, %449 : vector<8x128xi32>
    %451 = arith.extui %450 : vector<8x128xi1> to vector<8x128xi32>
    %452 = arith.sitofp %451 : vector<8x128xi32> to vector<8x128xf32>
    %453 = arith.truncf %452 : vector<8x128xf32> to vector<8x128xbf16>
    %454 = arith.index_cast %c1_i32_104 : i32 to index
    %455 = memref.load %arg0[%454] : memref<6xi32, #tpu.memory_space<smem>>
    %c0_i32_123 = arith.constant 0 : i32
    %456 = arith.cmpi sgt, %455, %c0_i32_123 : i32
    %457 = arith.extui %456 : i1 to i32
    %c0_i32_124 = arith.constant 0 : i32
    %458 = arith.cmpi ne, %457, %c0_i32_124 : i32
    %459 = scf.if %458 -> (vector<8x128xbf16>) {
      scf.yield %453 : vector<8x128xbf16>
    } else {
      %cst_210 = arith.constant dense<0xFF800000> : vector<8xf32>
      %724 = vector.multi_reduction <maximumf>, %441, %cst_210 [1] : vector<8x128xf32> to vector<8xf32>
      %725 = vector.shape_cast %724 : vector<8xf32> to vector<8x1xf32>
      %726 = vector.broadcast %725 : vector<8x1xf32> to vector<8x128xf32>
      %727 = arith.cmpf oeq, %441, %726 : vector<8x128xf32>
      %cst_211 = arith.constant 1.280000e+02 : f32
      %728 = vector.broadcast %cst_211 : f32 to vector<8x128xf32>
      %729 = arith.select %727, %382, %728 : vector<8x128xi1>, vector<8x128xf32>
      %cst_212 = arith.constant dense<0x7F800000> : vector<8xf32>
      %730 = vector.multi_reduction <minimumf>, %729, %cst_212 [1] : vector<8x128xf32> to vector<8xf32>
      %731 = vector.shape_cast %730 : vector<8xf32> to vector<8x1xf32>
      %732 = vector.broadcast %731 : vector<8x1xf32> to vector<8x128xf32>
      %733 = arith.cmpf oeq, %382, %732 : vector<8x128xf32>
      %734 = arith.extui %733 : vector<8x128xi1> to vector<8x128xi32>
      %735 = arith.sitofp %734 : vector<8x128xi32> to vector<8x128xf32>
      %736 = arith.truncf %735 : vector<8x128xf32> to vector<8x128xbf16>
      scf.yield %736 : vector<8x128xbf16>
    }
    %c2_i32_125 = arith.constant 2 : i32
    %c0_126 = arith.constant 0 : index
    %c0_127 = arith.constant 0 : index
    %460 = vector.load %arg8[%c0_126, %c0_127] : memref<128x128xbf16, #tpu.memory_space<vmem>>, vector<128x128xbf16>
    %cst_128 = arith.constant dense<0.000000e+00> : vector<8x128xf32>
    %461 = tpu.matmul %459, %460, %cst_128 {dimension_numbers = #tpu.dot_dimension_numbers<[1], [0], [0], [1], [0, 0, 1, 1], [], []>} : vector<8x128xbf16>, vector<128x128xbf16>, vector<8x128xf32> -> vector<8x128xf32>
    %462 = arith.truncf %461 : vector<8x128xf32> to vector<8x128xbf16>
    %463 = tpu.concatenate %462, %417 in 1 : vector<8x128xbf16>, vector<8x128xbf16> -> vector<8x256xbf16>
    %c0_129 = arith.constant 0 : index
    %c0_130 = arith.constant 0 : index
    %464 = vector.load %arg9[%c0_129, %c0_130] : memref<256x512xbf16, #tpu.memory_space<vmem>>, vector<256x512xbf16>
    %cst_131 = arith.constant dense<0.000000e+00> : vector<8x512xf32>
    %465 = tpu.matmul %463, %464, %cst_131 {dimension_numbers = #tpu.dot_dimension_numbers<[1], [0], [0], [1], [0, 0, 1, 1], [], []>} : vector<8x256xbf16>, vector<256x512xbf16>, vector<8x512xf32> -> vector<8x512xf32>
    %466 = arith.addf %465, %374 : vector<8x512xf32>
    %467 = vector.extract_strided_slice %466 {offsets = [0, 0], sizes = [8, 384], strides = [1, 1]} : vector<8x512xf32> to vector<8x384xf32>
    %468 = arith.negf %467 : vector<8x384xf32>
    %469 = math.exp %468 : vector<8x384xf32>
    %cst_132 = arith.constant 1.000000e+00 : f32
    %470 = vector.broadcast %cst_132 : f32 to vector<8x384xf32>
    %471 = arith.addf %470, %469 : vector<8x384xf32>
    %472 = arith.divf %470, %471 : vector<8x384xf32>
    %473 = vector.extract_strided_slice %466 {offsets = [0, 384], sizes = [8, 128], strides = [1, 1]} : vector<8x512xf32> to vector<8x128xf32>
    %474 = math.tanh %473 : vector<8x128xf32>
    %475 = vector.extract_strided_slice %472 {offsets = [0, 0], sizes = [8, 128], strides = [1, 1]} : vector<8x384xf32> to vector<8x128xf32>
    %476 = vector.extract_strided_slice %472 {offsets = [0, 128], sizes = [8, 128], strides = [1, 1]} : vector<8x384xf32> to vector<8x128xf32>
    %477 = vector.extract_strided_slice %472 {offsets = [0, 256], sizes = [8, 128], strides = [1, 1]} : vector<8x384xf32> to vector<8x128xf32>
    %478 = arith.mulf %476, %414 : vector<8x128xf32>
    %479 = arith.mulf %475, %474 : vector<8x128xf32>
    %480 = arith.addf %478, %479 : vector<8x128xf32>
    %481 = math.tanh %480 : vector<8x128xf32>
    %482 = arith.mulf %477, %481 : vector<8x128xf32>
    %483 = arith.truncf %482 : vector<8x128xf32> to vector<8x128xbf16>
    %484 = tpu.concatenate %483, %438 in 1 : vector<8x128xbf16>, vector<8x128xbf16> -> vector<8x256xbf16>
    %c0_133 = arith.constant 0 : index
    %c0_134 = arith.constant 0 : index
    %485 = vector.load %arg11[%c0_133, %c0_134] : memref<256x512xbf16, #tpu.memory_space<vmem>>, vector<256x512xbf16>
    %cst_135 = arith.constant dense<0.000000e+00> : vector<8x512xf32>
    %486 = tpu.matmul %484, %485, %cst_135 {dimension_numbers = #tpu.dot_dimension_numbers<[1], [0], [0], [1], [0, 0, 1, 1], [], []>} : vector<8x256xbf16>, vector<256x512xbf16>, vector<8x512xf32> -> vector<8x512xf32>
    %487 = arith.addf %486, %377 : vector<8x512xf32>
    %488 = vector.extract_strided_slice %487 {offsets = [0, 0], sizes = [8, 384], strides = [1, 1]} : vector<8x512xf32> to vector<8x384xf32>
    %489 = arith.negf %488 : vector<8x384xf32>
    %490 = math.exp %489 : vector<8x384xf32>
    %cst_136 = arith.constant 1.000000e+00 : f32
    %491 = vector.broadcast %cst_136 : f32 to vector<8x384xf32>
    %492 = arith.addf %491, %490 : vector<8x384xf32>
    %493 = arith.divf %491, %492 : vector<8x384xf32>
    %494 = vector.extract_strided_slice %487 {offsets = [0, 384], sizes = [8, 128], strides = [1, 1]} : vector<8x512xf32> to vector<8x128xf32>
    %495 = math.tanh %494 : vector<8x128xf32>
    %496 = vector.extract_strided_slice %493 {offsets = [0, 0], sizes = [8, 128], strides = [1, 1]} : vector<8x384xf32> to vector<8x128xf32>
    %497 = vector.extract_strided_slice %493 {offsets = [0, 128], sizes = [8, 128], strides = [1, 1]} : vector<8x384xf32> to vector<8x128xf32>
    %498 = vector.extract_strided_slice %493 {offsets = [0, 256], sizes = [8, 128], strides = [1, 1]} : vector<8x384xf32> to vector<8x128xf32>
    %499 = arith.mulf %497, %435 : vector<8x128xf32>
    %500 = arith.mulf %496, %495 : vector<8x128xf32>
    %501 = arith.addf %499, %500 : vector<8x128xf32>
    %502 = math.tanh %501 : vector<8x128xf32>
    %503 = arith.mulf %498, %502 : vector<8x128xf32>
    %504 = arith.truncf %503 : vector<8x128xf32> to vector<8x128xbf16>
    %c0_137 = arith.constant 0 : index
    %c0_138 = arith.constant 0 : index
    %505 = vector.load %arg13[%c0_137, %c0_138] : memref<128x128xbf16, #tpu.memory_space<vmem>>, vector<128x128xbf16>
    %cst_139 = arith.constant dense<0.000000e+00> : vector<8x128xf32>
    %506 = tpu.matmul %504, %505, %cst_139 {dimension_numbers = #tpu.dot_dimension_numbers<[1], [0], [0], [1], [0, 0, 1, 1], [], []>} : vector<8x128xbf16>, vector<128x128xbf16>, vector<8x128xf32> -> vector<8x128xf32>
    %507 = arith.addf %506, %380 : vector<8x128xf32>
    %508 = arith.index_cast %c2_i32_125 : i32 to index
    %c0_140 = arith.constant 0 : index
    %c0_141 = arith.constant 0 : index
    %509 = vector.load %arg15[%508, %c0_140, %c0_141] : memref<6x8x128xf32, #tpu.memory_space<vmem>>, vector<1x8x128xf32>
    %510 = vector.shape_cast %509 : vector<1x8x128xf32> to vector<8x128xf32>
    %511 = vector.shape_cast %507 : vector<8x128xf32> to vector<1x8x128xf32>
    tpu.vector_store %arg15[%508, %c0_140, %c0_141], %511 {strides = array<i32>} : memref<6x8x128xf32, #tpu.memory_space<vmem>>, vector<1x8x128xf32>,
    %512 = arith.index_cast %c2_i32_125 : i32 to index
    %c0_142 = arith.constant 0 : index
    %c0_143 = arith.constant 0 : index
    %513 = vector.load %arg1[%512, %c0_142, %c0_143] : memref<6x8x1xi32, #tpu.memory_space<vmem>>, vector<1x8x1xi32>
    %514 = vector.shape_cast %513 : vector<1x8x1xi32> to vector<8x1xi32>
    %515 = vector.broadcast %514 : vector<8x1xi32> to vector<8x128xi32>
    %516 = arith.cmpi eq, %381, %515 : vector<8x128xi32>
    %517 = arith.extui %516 : vector<8x128xi1> to vector<8x128xi32>
    %518 = arith.sitofp %517 : vector<8x128xi32> to vector<8x128xf32>
    %519 = arith.truncf %518 : vector<8x128xf32> to vector<8x128xbf16>
    %520 = arith.index_cast %c2_i32_125 : i32 to index
    %521 = memref.load %arg0[%520] : memref<6xi32, #tpu.memory_space<smem>>
    %c0_i32_144 = arith.constant 0 : i32
    %522 = arith.cmpi sgt, %521, %c0_i32_144 : i32
    %523 = arith.extui %522 : i1 to i32
    %c0_i32_145 = arith.constant 0 : i32
    %524 = arith.cmpi ne, %523, %c0_i32_145 : i32
    %525 = scf.if %524 -> (vector<8x128xbf16>) {
      scf.yield %519 : vector<8x128xbf16>
    } else {
      %cst_210 = arith.constant dense<0xFF800000> : vector<8xf32>
      %724 = vector.multi_reduction <maximumf>, %507, %cst_210 [1] : vector<8x128xf32> to vector<8xf32>
      %725 = vector.shape_cast %724 : vector<8xf32> to vector<8x1xf32>
      %726 = vector.broadcast %725 : vector<8x1xf32> to vector<8x128xf32>
      %727 = arith.cmpf oeq, %507, %726 : vector<8x128xf32>
      %cst_211 = arith.constant 1.280000e+02 : f32
      %728 = vector.broadcast %cst_211 : f32 to vector<8x128xf32>
      %729 = arith.select %727, %382, %728 : vector<8x128xi1>, vector<8x128xf32>
      %cst_212 = arith.constant dense<0x7F800000> : vector<8xf32>
      %730 = vector.multi_reduction <minimumf>, %729, %cst_212 [1] : vector<8x128xf32> to vector<8xf32>
      %731 = vector.shape_cast %730 : vector<8xf32> to vector<8x1xf32>
      %732 = vector.broadcast %731 : vector<8x1xf32> to vector<8x128xf32>
      %733 = arith.cmpf oeq, %382, %732 : vector<8x128xf32>
      %734 = arith.extui %733 : vector<8x128xi1> to vector<8x128xi32>
      %735 = arith.sitofp %734 : vector<8x128xi32> to vector<8x128xf32>
      %736 = arith.truncf %735 : vector<8x128xf32> to vector<8x128xbf16>
      scf.yield %736 : vector<8x128xbf16>
    }
    %c3_i32_146 = arith.constant 3 : i32
    %c0_147 = arith.constant 0 : index
    %c0_148 = arith.constant 0 : index
    %526 = vector.load %arg8[%c0_147, %c0_148] : memref<128x128xbf16, #tpu.memory_space<vmem>>, vector<128x128xbf16>
    %cst_149 = arith.constant dense<0.000000e+00> : vector<8x128xf32>
    %527 = tpu.matmul %525, %526, %cst_149 {dimension_numbers = #tpu.dot_dimension_numbers<[1], [0], [0], [1], [0, 0, 1, 1], [], []>} : vector<8x128xbf16>, vector<128x128xbf16>, vector<8x128xf32> -> vector<8x128xf32>
    %528 = arith.truncf %527 : vector<8x128xf32> to vector<8x128xbf16>
    %529 = tpu.concatenate %528, %483 in 1 : vector<8x128xbf16>, vector<8x128xbf16> -> vector<8x256xbf16>
    %c0_150 = arith.constant 0 : index
    %c0_151 = arith.constant 0 : index
    %530 = vector.load %arg9[%c0_150, %c0_151] : memref<256x512xbf16, #tpu.memory_space<vmem>>, vector<256x512xbf16>
    %cst_152 = arith.constant dense<0.000000e+00> : vector<8x512xf32>
    %531 = tpu.matmul %529, %530, %cst_152 {dimension_numbers = #tpu.dot_dimension_numbers<[1], [0], [0], [1], [0, 0, 1, 1], [], []>} : vector<8x256xbf16>, vector<256x512xbf16>, vector<8x512xf32> -> vector<8x512xf32>
    %532 = arith.addf %531, %374 : vector<8x512xf32>
    %533 = vector.extract_strided_slice %532 {offsets = [0, 0], sizes = [8, 384], strides = [1, 1]} : vector<8x512xf32> to vector<8x384xf32>
    %534 = arith.negf %533 : vector<8x384xf32>
    %535 = math.exp %534 : vector<8x384xf32>
    %cst_153 = arith.constant 1.000000e+00 : f32
    %536 = vector.broadcast %cst_153 : f32 to vector<8x384xf32>
    %537 = arith.addf %536, %535 : vector<8x384xf32>
    %538 = arith.divf %536, %537 : vector<8x384xf32>
    %539 = vector.extract_strided_slice %532 {offsets = [0, 384], sizes = [8, 128], strides = [1, 1]} : vector<8x512xf32> to vector<8x128xf32>
    %540 = math.tanh %539 : vector<8x128xf32>
    %541 = vector.extract_strided_slice %538 {offsets = [0, 0], sizes = [8, 128], strides = [1, 1]} : vector<8x384xf32> to vector<8x128xf32>
    %542 = vector.extract_strided_slice %538 {offsets = [0, 128], sizes = [8, 128], strides = [1, 1]} : vector<8x384xf32> to vector<8x128xf32>
    %543 = vector.extract_strided_slice %538 {offsets = [0, 256], sizes = [8, 128], strides = [1, 1]} : vector<8x384xf32> to vector<8x128xf32>
    %544 = arith.mulf %542, %480 : vector<8x128xf32>
    %545 = arith.mulf %541, %540 : vector<8x128xf32>
    %546 = arith.addf %544, %545 : vector<8x128xf32>
    %547 = math.tanh %546 : vector<8x128xf32>
    %548 = arith.mulf %543, %547 : vector<8x128xf32>
    %549 = arith.truncf %548 : vector<8x128xf32> to vector<8x128xbf16>
    %550 = tpu.concatenate %549, %504 in 1 : vector<8x128xbf16>, vector<8x128xbf16> -> vector<8x256xbf16>
    %c0_154 = arith.constant 0 : index
    %c0_155 = arith.constant 0 : index
    %551 = vector.load %arg11[%c0_154, %c0_155] : memref<256x512xbf16, #tpu.memory_space<vmem>>, vector<256x512xbf16>
    %cst_156 = arith.constant dense<0.000000e+00> : vector<8x512xf32>
    %552 = tpu.matmul %550, %551, %cst_156 {dimension_numbers = #tpu.dot_dimension_numbers<[1], [0], [0], [1], [0, 0, 1, 1], [], []>} : vector<8x256xbf16>, vector<256x512xbf16>, vector<8x512xf32> -> vector<8x512xf32>
    %553 = arith.addf %552, %377 : vector<8x512xf32>
    %554 = vector.extract_strided_slice %553 {offsets = [0, 0], sizes = [8, 384], strides = [1, 1]} : vector<8x512xf32> to vector<8x384xf32>
    %555 = arith.negf %554 : vector<8x384xf32>
    %556 = math.exp %555 : vector<8x384xf32>
    %cst_157 = arith.constant 1.000000e+00 : f32
    %557 = vector.broadcast %cst_157 : f32 to vector<8x384xf32>
    %558 = arith.addf %557, %556 : vector<8x384xf32>
    %559 = arith.divf %557, %558 : vector<8x384xf32>
    %560 = vector.extract_strided_slice %553 {offsets = [0, 384], sizes = [8, 128], strides = [1, 1]} : vector<8x512xf32> to vector<8x128xf32>
    %561 = math.tanh %560 : vector<8x128xf32>
    %562 = vector.extract_strided_slice %559 {offsets = [0, 0], sizes = [8, 128], strides = [1, 1]} : vector<8x384xf32> to vector<8x128xf32>
    %563 = vector.extract_strided_slice %559 {offsets = [0, 128], sizes = [8, 128], strides = [1, 1]} : vector<8x384xf32> to vector<8x128xf32>
    %564 = vector.extract_strided_slice %559 {offsets = [0, 256], sizes = [8, 128], strides = [1, 1]} : vector<8x384xf32> to vector<8x128xf32>
    %565 = arith.mulf %563, %501 : vector<8x128xf32>
    %566 = arith.mulf %562, %561 : vector<8x128xf32>
    %567 = arith.addf %565, %566 : vector<8x128xf32>
    %568 = math.tanh %567 : vector<8x128xf32>
    %569 = arith.mulf %564, %568 : vector<8x128xf32>
    %570 = arith.truncf %569 : vector<8x128xf32> to vector<8x128xbf16>
    %c0_158 = arith.constant 0 : index
    %c0_159 = arith.constant 0 : index
    %571 = vector.load %arg13[%c0_158, %c0_159] : memref<128x128xbf16, #tpu.memory_space<vmem>>, vector<128x128xbf16>
    %cst_160 = arith.constant dense<0.000000e+00> : vector<8x128xf32>
    %572 = tpu.matmul %570, %571, %cst_160 {dimension_numbers = #tpu.dot_dimension_numbers<[1], [0], [0], [1], [0, 0, 1, 1], [], []>} : vector<8x128xbf16>, vector<128x128xbf16>, vector<8x128xf32> -> vector<8x128xf32>
    %573 = arith.addf %572, %380 : vector<8x128xf32>
    %574 = arith.index_cast %c3_i32_146 : i32 to index
    %c0_161 = arith.constant 0 : index
    %c0_162 = arith.constant 0 : index
    %575 = vector.load %arg15[%574, %c0_161, %c0_162] : memref<6x8x128xf32, #tpu.memory_space<vmem>>, vector<1x8x128xf32>
    %576 = vector.shape_cast %575 : vector<1x8x128xf32> to vector<8x128xf32>
    %577 = vector.shape_cast %573 : vector<8x128xf32> to vector<1x8x128xf32>
    tpu.vector_store %arg15[%574, %c0_161, %c0_162], %577 {strides = array<i32>} : memref<6x8x128xf32, #tpu.memory_space<vmem>>, vector<1x8x128xf32>,
    %578 = arith.index_cast %c3_i32_146 : i32 to index
    %c0_163 = arith.constant 0 : index
    %c0_164 = arith.constant 0 : index
    %579 = vector.load %arg1[%578, %c0_163, %c0_164] : memref<6x8x1xi32, #tpu.memory_space<vmem>>, vector<1x8x1xi32>
    %580 = vector.shape_cast %579 : vector<1x8x1xi32> to vector<8x1xi32>
    %581 = vector.broadcast %580 : vector<8x1xi32> to vector<8x128xi32>
    %582 = arith.cmpi eq, %381, %581 : vector<8x128xi32>
    %583 = arith.extui %582 : vector<8x128xi1> to vector<8x128xi32>
    %584 = arith.sitofp %583 : vector<8x128xi32> to vector<8x128xf32>
    %585 = arith.truncf %584 : vector<8x128xf32> to vector<8x128xbf16>
    %586 = arith.index_cast %c3_i32_146 : i32 to index
    %587 = memref.load %arg0[%586] : memref<6xi32, #tpu.memory_space<smem>>
    %c0_i32_165 = arith.constant 0 : i32
    %588 = arith.cmpi sgt, %587, %c0_i32_165 : i32
    %589 = arith.extui %588 : i1 to i32
    %c0_i32_166 = arith.constant 0 : i32
    %590 = arith.cmpi ne, %589, %c0_i32_166 : i32
    %591 = scf.if %590 -> (vector<8x128xbf16>) {
      scf.yield %585 : vector<8x128xbf16>
    } else {
      %cst_210 = arith.constant dense<0xFF800000> : vector<8xf32>
      %724 = vector.multi_reduction <maximumf>, %573, %cst_210 [1] : vector<8x128xf32> to vector<8xf32>
      %725 = vector.shape_cast %724 : vector<8xf32> to vector<8x1xf32>
      %726 = vector.broadcast %725 : vector<8x1xf32> to vector<8x128xf32>
      %727 = arith.cmpf oeq, %573, %726 : vector<8x128xf32>
      %cst_211 = arith.constant 1.280000e+02 : f32
      %728 = vector.broadcast %cst_211 : f32 to vector<8x128xf32>
      %729 = arith.select %727, %382, %728 : vector<8x128xi1>, vector<8x128xf32>
      %cst_212 = arith.constant dense<0x7F800000> : vector<8xf32>
      %730 = vector.multi_reduction <minimumf>, %729, %cst_212 [1] : vector<8x128xf32> to vector<8xf32>
      %731 = vector.shape_cast %730 : vector<8xf32> to vector<8x1xf32>
      %732 = vector.broadcast %731 : vector<8x1xf32> to vector<8x128xf32>
      %733 = arith.cmpf oeq, %382, %732 : vector<8x128xf32>
      %734 = arith.extui %733 : vector<8x128xi1> to vector<8x128xi32>
      %735 = arith.sitofp %734 : vector<8x128xi32> to vector<8x128xf32>
      %736 = arith.truncf %735 : vector<8x128xf32> to vector<8x128xbf16>
      scf.yield %736 : vector<8x128xbf16>
    }
    %c4_i32_167 = arith.constant 4 : i32
    %c0_168 = arith.constant 0 : index
    %c0_169 = arith.constant 0 : index
    %592 = vector.load %arg8[%c0_168, %c0_169] : memref<128x128xbf16, #tpu.memory_space<vmem>>, vector<128x128xbf16>
    %cst_170 = arith.constant dense<0.000000e+00> : vector<8x128xf32>
    %593 = tpu.matmul %591, %592, %cst_170 {dimension_numbers = #tpu.dot_dimension_numbers<[1], [0], [0], [1], [0, 0, 1, 1], [], []>} : vector<8x128xbf16>, vector<128x128xbf16>, vector<8x128xf32> -> vector<8x128xf32>
    %594 = arith.truncf %593 : vector<8x128xf32> to vector<8x128xbf16>
    %595 = tpu.concatenate %594, %549 in 1 : vector<8x128xbf16>, vector<8x128xbf16> -> vector<8x256xbf16>
    %c0_171 = arith.constant 0 : index
    %c0_172 = arith.constant 0 : index
    %596 = vector.load %arg9[%c0_171, %c0_172] : memref<256x512xbf16, #tpu.memory_space<vmem>>, vector<256x512xbf16>
    %cst_173 = arith.constant dense<0.000000e+00> : vector<8x512xf32>
    %597 = tpu.matmul %595, %596, %cst_173 {dimension_numbers = #tpu.dot_dimension_numbers<[1], [0], [0], [1], [0, 0, 1, 1], [], []>} : vector<8x256xbf16>, vector<256x512xbf16>, vector<8x512xf32> -> vector<8x512xf32>
    %598 = arith.addf %597, %374 : vector<8x512xf32>
    %599 = vector.extract_strided_slice %598 {offsets = [0, 0], sizes = [8, 384], strides = [1, 1]} : vector<8x512xf32> to vector<8x384xf32>
    %600 = arith.negf %599 : vector<8x384xf32>
    %601 = math.exp %600 : vector<8x384xf32>
    %cst_174 = arith.constant 1.000000e+00 : f32
    %602 = vector.broadcast %cst_174 : f32 to vector<8x384xf32>
    %603 = arith.addf %602, %601 : vector<8x384xf32>
    %604 = arith.divf %602, %603 : vector<8x384xf32>
    %605 = vector.extract_strided_slice %598 {offsets = [0, 384], sizes = [8, 128], strides = [1, 1]} : vector<8x512xf32> to vector<8x128xf32>
    %606 = math.tanh %605 : vector<8x128xf32>
    %607 = vector.extract_strided_slice %604 {offsets = [0, 0], sizes = [8, 128], strides = [1, 1]} : vector<8x384xf32> to vector<8x128xf32>
    %608 = vector.extract_strided_slice %604 {offsets = [0, 128], sizes = [8, 128], strides = [1, 1]} : vector<8x384xf32> to vector<8x128xf32>
    %609 = vector.extract_strided_slice %604 {offsets = [0, 256], sizes = [8, 128], strides = [1, 1]} : vector<8x384xf32> to vector<8x128xf32>
    %610 = arith.mulf %608, %546 : vector<8x128xf32>
    %611 = arith.mulf %607, %606 : vector<8x128xf32>
    %612 = arith.addf %610, %611 : vector<8x128xf32>
    %613 = math.tanh %612 : vector<8x128xf32>
    %614 = arith.mulf %609, %613 : vector<8x128xf32>
    %615 = arith.truncf %614 : vector<8x128xf32> to vector<8x128xbf16>
    %616 = tpu.concatenate %615, %570 in 1 : vector<8x128xbf16>, vector<8x128xbf16> -> vector<8x256xbf16>
    %c0_175 = arith.constant 0 : index
    %c0_176 = arith.constant 0 : index
    %617 = vector.load %arg11[%c0_175, %c0_176] : memref<256x512xbf16, #tpu.memory_space<vmem>>, vector<256x512xbf16>
    %cst_177 = arith.constant dense<0.000000e+00> : vector<8x512xf32>
    %618 = tpu.matmul %616, %617, %cst_177 {dimension_numbers = #tpu.dot_dimension_numbers<[1], [0], [0], [1], [0, 0, 1, 1], [], []>} : vector<8x256xbf16>, vector<256x512xbf16>, vector<8x512xf32> -> vector<8x512xf32>
    %619 = arith.addf %618, %377 : vector<8x512xf32>
    %620 = vector.extract_strided_slice %619 {offsets = [0, 0], sizes = [8, 384], strides = [1, 1]} : vector<8x512xf32> to vector<8x384xf32>
    %621 = arith.negf %620 : vector<8x384xf32>
    %622 = math.exp %621 : vector<8x384xf32>
    %cst_178 = arith.constant 1.000000e+00 : f32
    %623 = vector.broadcast %cst_178 : f32 to vector<8x384xf32>
    %624 = arith.addf %623, %622 : vector<8x384xf32>
    %625 = arith.divf %623, %624 : vector<8x384xf32>
    %626 = vector.extract_strided_slice %619 {offsets = [0, 384], sizes = [8, 128], strides = [1, 1]} : vector<8x512xf32> to vector<8x128xf32>
    %627 = math.tanh %626 : vector<8x128xf32>
    %628 = vector.extract_strided_slice %625 {offsets = [0, 0], sizes = [8, 128], strides = [1, 1]} : vector<8x384xf32> to vector<8x128xf32>
    %629 = vector.extract_strided_slice %625 {offsets = [0, 128], sizes = [8, 128], strides = [1, 1]} : vector<8x384xf32> to vector<8x128xf32>
    %630 = vector.extract_strided_slice %625 {offsets = [0, 256], sizes = [8, 128], strides = [1, 1]} : vector<8x384xf32> to vector<8x128xf32>
    %631 = arith.mulf %629, %567 : vector<8x128xf32>
    %632 = arith.mulf %628, %627 : vector<8x128xf32>
    %633 = arith.addf %631, %632 : vector<8x128xf32>
    %634 = math.tanh %633 : vector<8x128xf32>
    %635 = arith.mulf %630, %634 : vector<8x128xf32>
    %636 = arith.truncf %635 : vector<8x128xf32> to vector<8x128xbf16>
    %c0_179 = arith.constant 0 : index
    %c0_180 = arith.constant 0 : index
    %637 = vector.load %arg13[%c0_179, %c0_180] : memref<128x128xbf16, #tpu.memory_space<vmem>>, vector<128x128xbf16>
    %cst_181 = arith.constant dense<0.000000e+00> : vector<8x128xf32>
    %638 = tpu.matmul %636, %637, %cst_181 {dimension_numbers = #tpu.dot_dimension_numbers<[1], [0], [0], [1], [0, 0, 1, 1], [], []>} : vector<8x128xbf16>, vector<128x128xbf16>, vector<8x128xf32> -> vector<8x128xf32>
    %639 = arith.addf %638, %380 : vector<8x128xf32>
    %640 = arith.index_cast %c4_i32_167 : i32 to index
    %c0_182 = arith.constant 0 : index
    %c0_183 = arith.constant 0 : index
    %641 = vector.load %arg15[%640, %c0_182, %c0_183] : memref<6x8x128xf32, #tpu.memory_space<vmem>>, vector<1x8x128xf32>
    %642 = vector.shape_cast %641 : vector<1x8x128xf32> to vector<8x128xf32>
    %643 = vector.shape_cast %639 : vector<8x128xf32> to vector<1x8x128xf32>
    tpu.vector_store %arg15[%640, %c0_182, %c0_183], %643 {strides = array<i32>} : memref<6x8x128xf32, #tpu.memory_space<vmem>>, vector<1x8x128xf32>,
    %644 = arith.index_cast %c4_i32_167 : i32 to index
    %c0_184 = arith.constant 0 : index
    %c0_185 = arith.constant 0 : index
    %645 = vector.load %arg1[%644, %c0_184, %c0_185] : memref<6x8x1xi32, #tpu.memory_space<vmem>>, vector<1x8x1xi32>
    %646 = vector.shape_cast %645 : vector<1x8x1xi32> to vector<8x1xi32>
    %647 = vector.broadcast %646 : vector<8x1xi32> to vector<8x128xi32>
    %648 = arith.cmpi eq, %381, %647 : vector<8x128xi32>
    %649 = arith.extui %648 : vector<8x128xi1> to vector<8x128xi32>
    %650 = arith.sitofp %649 : vector<8x128xi32> to vector<8x128xf32>
    %651 = arith.truncf %650 : vector<8x128xf32> to vector<8x128xbf16>
    %652 = arith.index_cast %c4_i32_167 : i32 to index
    %653 = memref.load %arg0[%652] : memref<6xi32, #tpu.memory_space<smem>>
    %c0_i32_186 = arith.constant 0 : i32
    %654 = arith.cmpi sgt, %653, %c0_i32_186 : i32
    %655 = arith.extui %654 : i1 to i32
    %c0_i32_187 = arith.constant 0 : i32
    %656 = arith.cmpi ne, %655, %c0_i32_187 : i32
    %657 = scf.if %656 -> (vector<8x128xbf16>) {
      scf.yield %651 : vector<8x128xbf16>
    } else {
      %cst_210 = arith.constant dense<0xFF800000> : vector<8xf32>
      %724 = vector.multi_reduction <maximumf>, %639, %cst_210 [1] : vector<8x128xf32> to vector<8xf32>
      %725 = vector.shape_cast %724 : vector<8xf32> to vector<8x1xf32>
      %726 = vector.broadcast %725 : vector<8x1xf32> to vector<8x128xf32>
      %727 = arith.cmpf oeq, %639, %726 : vector<8x128xf32>
      %cst_211 = arith.constant 1.280000e+02 : f32
      %728 = vector.broadcast %cst_211 : f32 to vector<8x128xf32>
      %729 = arith.select %727, %382, %728 : vector<8x128xi1>, vector<8x128xf32>
      %cst_212 = arith.constant dense<0x7F800000> : vector<8xf32>
      %730 = vector.multi_reduction <minimumf>, %729, %cst_212 [1] : vector<8x128xf32> to vector<8xf32>
      %731 = vector.shape_cast %730 : vector<8xf32> to vector<8x1xf32>
      %732 = vector.broadcast %731 : vector<8x1xf32> to vector<8x128xf32>
      %733 = arith.cmpf oeq, %382, %732 : vector<8x128xf32>
      %734 = arith.extui %733 : vector<8x128xi1> to vector<8x128xi32>
      %735 = arith.sitofp %734 : vector<8x128xi32> to vector<8x128xf32>
      %736 = arith.truncf %735 : vector<8x128xf32> to vector<8x128xbf16>
      scf.yield %736 : vector<8x128xbf16>
    }
    %c5_i32_188 = arith.constant 5 : i32
    %c0_189 = arith.constant 0 : index
    %c0_190 = arith.constant 0 : index
    %658 = vector.load %arg8[%c0_189, %c0_190] : memref<128x128xbf16, #tpu.memory_space<vmem>>, vector<128x128xbf16>
    %cst_191 = arith.constant dense<0.000000e+00> : vector<8x128xf32>
    %659 = tpu.matmul %657, %658, %cst_191 {dimension_numbers = #tpu.dot_dimension_numbers<[1], [0], [0], [1], [0, 0, 1, 1], [], []>} : vector<8x128xbf16>, vector<128x128xbf16>, vector<8x128xf32> -> vector<8x128xf32>
    %660 = arith.truncf %659 : vector<8x128xf32> to vector<8x128xbf16>
    %661 = tpu.concatenate %660, %615 in 1 : vector<8x128xbf16>, vector<8x128xbf16> -> vector<8x256xbf16>
    %c0_192 = arith.constant 0 : index
    %c0_193 = arith.constant 0 : index
    %662 = vector.load %arg9[%c0_192, %c0_193] : memref<256x512xbf16, #tpu.memory_space<vmem>>, vector<256x512xbf16>
    %cst_194 = arith.constant dense<0.000000e+00> : vector<8x512xf32>
    %663 = tpu.matmul %661, %662, %cst_194 {dimension_numbers = #tpu.dot_dimension_numbers<[1], [0], [0], [1], [0, 0, 1, 1], [], []>} : vector<8x256xbf16>, vector<256x512xbf16>, vector<8x512xf32> -> vector<8x512xf32>
    %664 = arith.addf %663, %374 : vector<8x512xf32>
    %665 = vector.extract_strided_slice %664 {offsets = [0, 0], sizes = [8, 384], strides = [1, 1]} : vector<8x512xf32> to vector<8x384xf32>
    %666 = arith.negf %665 : vector<8x384xf32>
    %667 = math.exp %666 : vector<8x384xf32>
    %cst_195 = arith.constant 1.000000e+00 : f32
    %668 = vector.broadcast %cst_195 : f32 to vector<8x384xf32>
    %669 = arith.addf %668, %667 : vector<8x384xf32>
    %670 = arith.divf %668, %669 : vector<8x384xf32>
    %671 = vector.extract_strided_slice %664 {offsets = [0, 384], sizes = [8, 128], strides = [1, 1]} : vector<8x512xf32> to vector<8x128xf32>
    %672 = math.tanh %671 : vector<8x128xf32>
    %673 = vector.extract_strided_slice %670 {offsets = [0, 0], sizes = [8, 128], strides = [1, 1]} : vector<8x384xf32> to vector<8x128xf32>
    %674 = vector.extract_strided_slice %670 {offsets = [0, 128], sizes = [8, 128], strides = [1, 1]} : vector<8x384xf32> to vector<8x128xf32>
    %675 = vector.extract_strided_slice %670 {offsets = [0, 256], sizes = [8, 128], strides = [1, 1]} : vector<8x384xf32> to vector<8x128xf32>
    %676 = arith.mulf %674, %612 : vector<8x128xf32>
    %677 = arith.mulf %673, %672 : vector<8x128xf32>
    %678 = arith.addf %676, %677 : vector<8x128xf32>
    %679 = math.tanh %678 : vector<8x128xf32>
    %680 = arith.mulf %675, %679 : vector<8x128xf32>
    %681 = arith.truncf %680 : vector<8x128xf32> to vector<8x128xbf16>
    %682 = tpu.concatenate %681, %636 in 1 : vector<8x128xbf16>, vector<8x128xbf16> -> vector<8x256xbf16>
    %c0_196 = arith.constant 0 : index
    %c0_197 = arith.constant 0 : index
    %683 = vector.load %arg11[%c0_196, %c0_197] : memref<256x512xbf16, #tpu.memory_space<vmem>>, vector<256x512xbf16>
    %cst_198 = arith.constant dense<0.000000e+00> : vector<8x512xf32>
    %684 = tpu.matmul %682, %683, %cst_198 {dimension_numbers = #tpu.dot_dimension_numbers<[1], [0], [0], [1], [0, 0, 1, 1], [], []>} : vector<8x256xbf16>, vector<256x512xbf16>, vector<8x512xf32> -> vector<8x512xf32>
    %685 = arith.addf %684, %377 : vector<8x512xf32>
    %686 = vector.extract_strided_slice %685 {offsets = [0, 0], sizes = [8, 384], strides = [1, 1]} : vector<8x512xf32> to vector<8x384xf32>
    %687 = arith.negf %686 : vector<8x384xf32>
    %688 = math.exp %687 : vector<8x384xf32>
    %cst_199 = arith.constant 1.000000e+00 : f32
    %689 = vector.broadcast %cst_199 : f32 to vector<8x384xf32>
    %690 = arith.addf %689, %688 : vector<8x384xf32>
    %691 = arith.divf %689, %690 : vector<8x384xf32>
    %692 = vector.extract_strided_slice %685 {offsets = [0, 384], sizes = [8, 128], strides = [1, 1]} : vector<8x512xf32> to vector<8x128xf32>
    %693 = math.tanh %692 : vector<8x128xf32>
    %694 = vector.extract_strided_slice %691 {offsets = [0, 0], sizes = [8, 128], strides = [1, 1]} : vector<8x384xf32> to vector<8x128xf32>
    %695 = vector.extract_strided_slice %691 {offsets = [0, 128], sizes = [8, 128], strides = [1, 1]} : vector<8x384xf32> to vector<8x128xf32>
    %696 = vector.extract_strided_slice %691 {offsets = [0, 256], sizes = [8, 128], strides = [1, 1]} : vector<8x384xf32> to vector<8x128xf32>
    %697 = arith.mulf %695, %633 : vector<8x128xf32>
    %698 = arith.mulf %694, %693 : vector<8x128xf32>
    %699 = arith.addf %697, %698 : vector<8x128xf32>
    %700 = math.tanh %699 : vector<8x128xf32>
    %701 = arith.mulf %696, %700 : vector<8x128xf32>
    %702 = arith.truncf %701 : vector<8x128xf32> to vector<8x128xbf16>
    %c0_200 = arith.constant 0 : index
    %c0_201 = arith.constant 0 : index
    %703 = vector.load %arg13[%c0_200, %c0_201] : memref<128x128xbf16, #tpu.memory_space<vmem>>, vector<128x128xbf16>
    %cst_202 = arith.constant dense<0.000000e+00> : vector<8x128xf32>
    %704 = tpu.matmul %702, %703, %cst_202 {dimension_numbers = #tpu.dot_dimension_numbers<[1], [0], [0], [1], [0, 0, 1, 1], [], []>} : vector<8x128xbf16>, vector<128x128xbf16>, vector<8x128xf32> -> vector<8x128xf32>
    %705 = arith.addf %704, %380 : vector<8x128xf32>
    %706 = arith.index_cast %c5_i32_188 : i32 to index
    %c0_203 = arith.constant 0 : index
    %c0_204 = arith.constant 0 : index
    %707 = vector.load %arg15[%706, %c0_203, %c0_204] : memref<6x8x128xf32, #tpu.memory_space<vmem>>, vector<1x8x128xf32>
    %708 = vector.shape_cast %707 : vector<1x8x128xf32> to vector<8x128xf32>
    %709 = vector.shape_cast %705 : vector<8x128xf32> to vector<1x8x128xf32>
    tpu.vector_store %arg15[%706, %c0_203, %c0_204], %709 {strides = array<i32>} : memref<6x8x128xf32, #tpu.memory_space<vmem>>, vector<1x8x128xf32>,
    %710 = arith.index_cast %c5_i32_188 : i32 to index
    %c0_205 = arith.constant 0 : index
    %c0_206 = arith.constant 0 : index
    %711 = vector.load %arg1[%710, %c0_205, %c0_206] : memref<6x8x1xi32, #tpu.memory_space<vmem>>, vector<1x8x1xi32>
    %712 = vector.shape_cast %711 : vector<1x8x1xi32> to vector<8x1xi32>
    %713 = vector.broadcast %712 : vector<8x1xi32> to vector<8x128xi32>
    %714 = arith.cmpi eq, %381, %713 : vector<8x128xi32>
    %715 = arith.extui %714 : vector<8x128xi1> to vector<8x128xi32>
    %716 = arith.sitofp %715 : vector<8x128xi32> to vector<8x128xf32>
    %717 = arith.truncf %716 : vector<8x128xf32> to vector<8x128xbf16>
    %718 = arith.index_cast %c5_i32_188 : i32 to index
    %719 = memref.load %arg0[%718] : memref<6xi32, #tpu.memory_space<smem>>
    %c0_i32_207 = arith.constant 0 : i32
    %720 = arith.cmpi sgt, %719, %c0_i32_207 : i32
    %721 = arith.extui %720 : i1 to i32
    %c0_i32_208 = arith.constant 0 : i32
    %722 = arith.cmpi ne, %721, %c0_i32_208 : i32
    %723 = scf.if %722 -> (vector<8x128xbf16>) {
      scf.yield %717 : vector<8x128xbf16>
    } else {
      %cst_210 = arith.constant dense<0xFF800000> : vector<8xf32>
      %724 = vector.multi_reduction <maximumf>, %705, %cst_210 [1] : vector<8x128xf32> to vector<8xf32>
      %725 = vector.shape_cast %724 : vector<8xf32> to vector<8x1xf32>
      %726 = vector.broadcast %725 : vector<8x1xf32> to vector<8x128xf32>
      %727 = arith.cmpf oeq, %705, %726 : vector<8x128xf32>
      %cst_211 = arith.constant 1.280000e+02 : f32
      %728 = vector.broadcast %cst_211 : f32 to vector<8x128xf32>
      %729 = arith.select %727, %382, %728 : vector<8x128xi1>, vector<8x128xf32>
      %cst_212 = arith.constant dense<0x7F800000> : vector<8xf32>
      %730 = vector.multi_reduction <minimumf>, %729, %cst_212 [1] : vector<8x128xf32> to vector<8xf32>
      %731 = vector.shape_cast %730 : vector<8xf32> to vector<8x1xf32>
      %732 = vector.broadcast %731 : vector<8x1xf32> to vector<8x128xf32>
      %733 = arith.cmpf oeq, %382, %732 : vector<8x128xf32>
      %734 = arith.extui %733 : vector<8x128xi1> to vector<8x128xi32>
      %735 = arith.sitofp %734 : vector<8x128xi32> to vector<8x128xf32>
      %736 = arith.truncf %735 : vector<8x128xf32> to vector<8x128xbf16>
      scf.yield %736 : vector<8x128xbf16>
    }
    %c5_i32_209 = arith.constant 5 : i32
    return
  }
}

</mosaic_0001>

<llo_original>
// kernel: seq2seq_forward.1
$region0: #{seq2seq_forward.1}
  #allocation0 [shape = 'u32[]', space=smem, size = 0x4, offset = 0x4, fixed_abs, tag = 'smem constant byte address 0x4 - core index']
  #allocation1 [shape = 'u32[72,128]{1,0:T(1,128)}', space=vmem, size = 0x9000, scoped, tag = 'internal scratch']
  #allocation2 [shape = 'f32[64,512]{1,0:T(8,128)}', space=vmem, size = 0x20000, scoped, tag = 'scratch operand']
  %s0 = inlined_call_operand.vmem [shape: s32[6], index: 0, kind: input, shape index: {}]
  %s1 = inlined_call_operand.vmem [shape: s32[6,8,1], index: 1, kind: input, shape index: {}]
  %s2 = inlined_call_operand.vmem [shape: bf16[64,128], index: 2, kind: input, shape index: {}]
  %s3 = inlined_call_operand.vmem [shape: bf16[128,512], index: 3, kind: input, shape index: {}]
  %s4 = inlined_call_operand.hbm [shape: bf16[128,512], index: 4, kind: input, shape index: {}]
  %s5 = inlined_call_operand.vmem [shape: f32[1,512], index: 5, kind: input, shape index: {}]
  %s6 = inlined_call_operand.hbm [shape: bf16[256,512], index: 6, kind: input, shape index: {}]
  %s7 = inlined_call_operand.vmem [shape: f32[1,512], index: 7, kind: input, shape index: {}]
  %s8 = inlined_call_operand.vmem [shape: bf16[128,128], index: 8, kind: input, shape index: {}]
  %s9 = inlined_call_operand.hbm [shape: bf16[256,512], index: 9, kind: input, shape index: {}]
  %s10 = inlined_call_operand.vmem [shape: f32[1,512], index: 10, kind: input, shape index: {}]
  %s11 = inlined_call_operand.hbm [shape: bf16[256,512], index: 11, kind: input, shape index: {}]
  %s12 = inlined_call_operand.vmem [shape: f32[1,512], index: 12, kind: input, shape index: {}]
  %s13 = inlined_call_operand.vmem [shape: bf16[128,128], index: 13, kind: input, shape index: {}]
  %s14 = inlined_call_operand.vmem [shape: f32[1,128], index: 14, kind: input, shape index: {}]
  %s15 = inlined_call_operand.hbm [shape: f32[6,8,128], index: 15, kind: output, shape index: {}]
  %s16 = sld [smem:[#allocation0]]
  $region122: #{seq2seq_forward.1} parent=0
    _
  %s18 = ssub.s32 1, %s16
  %s19 = scalar_select 0, %s18, %s16
  $region1: #{seq2seq_forward.1} parent=0
    #allocation3 [shape = 'u8[512]{0}', space=smem, size = 0x200, scoped, tag = 'input window, operand 0, single buffered']
    #allocation4 [shape = 's32[1]{0}', space=sflag, size = 0x4, scoped, tag = 'scoped memory for seq2seq_forward.1']
    #allocation5 [shape = 's32[1]{0}', space=sflag, size = 0x4, scoped, tag = 'scoped memory for seq2seq_forward.1']
    #allocation6 [shape = 's32[1]{0}', space=sflag, size = 0x4, scoped, tag = 'scoped memory for seq2seq_forward.1']
    #allocation7 [shape = 'u8[131072]{0}', space=vmem, size = 0x20000, scoped, tag = 'input window, operand 4, single buffered']
    #allocation8 [shape = 'u8[262144]{0}', space=vmem, size = 0x40000, scoped, tag = 'input window, operand 6, single buffered']
    #allocation9 [shape = 's32[1]{0}', space=sflag, size = 0x4, scoped, tag = 'scoped memory for seq2seq_forward.1']
    #allocation10 [shape = 'u8[262144]{0}', space=vmem, size = 0x40000, scoped, tag = 'input window, operand 9, single buffered']
    #allocation11 [shape = 'u8[262144]{0}', space=vmem, size = 0x40000, scoped, tag = 'input window, operand 11, single buffered']
    #allocation12 [shape = 's32[1]{0}', space=sflag, size = 0x4, scoped, tag = 'scoped memory for seq2seq_forward.1']
    #allocation13 [shape = 'u8[24576]{0}', space=vmem, size = 0x6000, scoped, tag = 'output window, operand 0, single buffered']
    %20 = vsyncpa [#allocation6], 0
    %21 = vsyncpa [#allocation4], 0
    %22 = vsyncpa [#allocation9], 0
    %23 = vsyncpa [#allocation12], 0
    %24 = vsyncpa [#allocation5], 0
    // Predicated region
    $region2: #{seq2seq_forward.1} parent=1 // pred_check
      _
    $region3: #{seq2seq_forward.1} parent=1 // pred_check_branch
      %26 = sbr.rel (0) target = $region5
    $region4: #{seq2seq_forward.1} parent=1 // pred_region
      %28 = vsyncadd [#allocation6], 0
      %s30 = sshll.u32 %s0, 4
      %s31 = int_to_ptr.vmem [resolvable:$true] %s30
      %33 = dma.vmem_to_smem %s31, 16, [#allocation3], [#allocation6]
    $region5: #{seq2seq_forward.1} parent=1 // pred_fallthru
      _
    // Predicated region
    $region6: #{seq2seq_forward.1} parent=1 // pred_check
      _
    $region7: #{seq2seq_forward.1} parent=1 // pred_check_branch
      %35 = sbr.rel (0) target = $region9
    $region8: #{seq2seq_forward.1} parent=1 // pred_region
      _
    $region9: #{seq2seq_forward.1} parent=1 // pred_fallthru
      _
    // Predicated region
    $region10: #{seq2seq_forward.1} parent=1 // pred_check
      _
    $region11: #{seq2seq_forward.1} parent=1 // pred_check_branch
      %37 = sbr.rel (0) target = $region13
    $region12: #{seq2seq_forward.1} parent=1 // pred_region
      _
    $region13: #{seq2seq_forward.1} parent=1 // pred_fallthru
      _
    // Predicated region
    $region14: #{seq2seq_forward.1} parent=1 // pred_check
      _
    $region15: #{seq2seq_forward.1} parent=1 // pred_check_branch
      %39 = sbr.rel (0) target = $region17
    $region16: #{seq2seq_forward.1} parent=1 // pred_region
      _
    $region17: #{seq2seq_forward.1} parent=1 // pred_fallthru
      _
    // Predicated region
    $region18: #{seq2seq_forward.1} parent=1 // pred_check
      _
    $region19: #{seq2seq_forward.1} parent=1 // pred_check_branch
      %41 = sbr.rel (0) target = $region21
    $region20: #{seq2seq_forward.1} parent=1 // pred_region
      %43 = vsyncadd [#allocation4], 0
      %s44 = sshll.u32 %s4, 4
      %s45 = int_to_ptr.hbm [resolvable:$true] %s44
      %s46 = sshll.u32 [#allocation7], 4
      %s47 = int_to_ptr.vmem [resolvable:$true] %s46
      %52 = dma.hbm_to_vmem [thread:$0]  %s45, 4096, %s47, [#allocation4], 256, 256, 16
    $region21: #{seq2seq_forward.1} parent=1 // pred_fallthru
      _
    // Predicated region
    $region22: #{seq2seq_forward.1} parent=1 // pred_check
      _
    $region23: #{seq2seq_forward.1} parent=1 // pred_check_branch
      %54 = sbr.rel (0) target = $region25
    $region24: #{seq2seq_forward.1} parent=1 // pred_region
      _
    $region25: #{seq2seq_forward.1} parent=1 // pred_fallthru
      _
    // Predicated region
    $region26: #{seq2seq_forward.1} parent=1 // pred_check
      _
    $region27: #{seq2seq_forward.1} parent=1 // pred_check_branch
      %56 = sbr.rel (0) target = $region29
    $region28: #{seq2seq_forward.1} parent=1 // pred_region
      %58 = vsyncadd [#allocation9], 0
      %s59 = sshll.u32 %s6, 4
      %s60 = int_to_ptr.hbm [resolvable:$true] %s59
      %s61 = sshll.u32 [#allocation8], 4
      %s62 = int_to_ptr.vmem [resolvable:$true] %s61
      %67 = dma.hbm_to_vmem [thread:$0]  %s60, 8192, %s62, [#allocation9], 256, 256, 16
    $region29: #{seq2seq_forward.1} parent=1 // pred_fallthru
      _
    // Predicated region
    $region30: #{seq2seq_forward.1} parent=1 // pred_check
      _
    $region31: #{seq2seq_forward.1} parent=1 // pred_check_branch
      %69 = sbr.rel (0) target = $region33
    $region32: #{seq2seq_forward.1} parent=1 // pred_region
      _
    $region33: #{seq2seq_forward.1} parent=1 // pred_fallthru
      _
    // Predicated region
    $region34: #{seq2seq_forward.1} parent=1 // pred_check
      _
    $region35: #{seq2seq_forward.1} parent=1 // pred_check_branch
      %71 = sbr.rel (0) target = $region37
    $region36: #{seq2seq_forward.1} parent=1 // pred_region
      _
    $region37: #{seq2seq_forward.1} parent=1 // pred_fallthru
      _
    // Predicated region
    $region38: #{seq2seq_forward.1} parent=1 // pred_check
      _
    $region39: #{seq2seq_forward.1} parent=1 // pred_check_branch
      %73 = sbr.rel (0) target = $region41
    $region40: #{seq2seq_forward.1} parent=1 // pred_region
      %75 = vsyncadd [#allocation9], 0
      %s76 = sshll.u32 %s9, 4
      %s77 = int_to_ptr.hbm [resolvable:$true] %s76
      %s78 = sshll.u32 [#allocation10], 4
      %s79 = int_to_ptr.vmem [resolvable:$true] %s78
      %84 = dma.hbm_to_vmem [thread:$0]  %s77, 8192, %s79, [#allocation9], 256, 256, 16
    $region41: #{seq2seq_forward.1} parent=1 // pred_fallthru
      _
    // Predicated region
    $region42: #{seq2seq_forward.1} parent=1 // pred_check
      _
    $region43: #{seq2seq_forward.1} parent=1 // pred_check_branch
      %86 = sbr.rel (0) target = $region45
    $region44: #{seq2seq_forward.1} parent=1 // pred_region
      _
    $region45: #{seq2seq_forward.1} parent=1 // pred_fallthru
      _
    // Predicated region
    $region46: #{seq2seq_forward.1} parent=1 // pred_check
      _
    $region47: #{seq2seq_forward.1} parent=1 // pred_check_branch
      %88 = sbr.rel (0) target = $region49
    $region48: #{seq2seq_forward.1} parent=1 // pred_region
      %90 = vsyncadd [#allocation12], 0
      %s91 = sshll.u32 %s11, 4
      %s92 = int_to_ptr.hbm [resolvable:$true] %s91
      %s93 = sshll.u32 [#allocation11], 4
      %s94 = int_to_ptr.vmem [resolvable:$true] %s93
      %99 = dma.hbm_to_vmem [thread:$0]  %s92, 8192, %s94, [#allocation12], 256, 256, 16
    $region49: #{seq2seq_forward.1} parent=1 // pred_fallthru
      _
    // Predicated region
    $region50: #{seq2seq_forward.1} parent=1 // pred_check
      _
    $region51: #{seq2seq_forward.1} parent=1 // pred_check_branch
      %101 = sbr.rel (0) target = $region53
    $region52: #{seq2seq_forward.1} parent=1 // pred_region
      _
    $region53: #{seq2seq_forward.1} parent=1 // pred_fallthru
      _
    // Predicated region
    $region54: #{seq2seq_forward.1} parent=1 // pred_check
      _
    $region55: #{seq2seq_forward.1} parent=1 // pred_check_branch
      %103 = sbr.rel (0) target = $region57
    $region56: #{seq2seq_forward.1} parent=1 // pred_region
      _
    $region57: #{seq2seq_forward.1} parent=1 // pred_fallthru
      _
    // Predicated region
    $region58: #{seq2seq_forward.1} parent=1 // pred_check
      _
    $region59: #{seq2seq_forward.1} parent=1 // pred_check_branch
      %105 = sbr.rel (0) target = $region61
    $region60: #{seq2seq_forward.1} parent=1 // pred_region
      _
    $region61: #{seq2seq_forward.1} parent=1 // pred_fallthru
      _
    // Predicated region
    $region62: #{seq2seq_forward.1} parent=1 // pred_check
      _
    $region63: #{seq2seq_forward.1} parent=1 // pred_check_branch
      %107 = sbr.rel (0) target = $region65
    $region64: #{seq2seq_forward.1} parent=1 // pred_region
      %109 = dma.done [#allocation6], 16
    $region65: #{seq2seq_forward.1} parent=1 // pred_fallthru
      _
    // Predicated region
    $region66: #{seq2seq_forward.1} parent=1 // pred_check
      _
    $region67: #{seq2seq_forward.1} parent=1 // pred_check_branch
      %111 = sbr.rel (0) target = $region69
    $region68: #{seq2seq_forward.1} parent=1 // pred_region
      %113 = dma.done [#allocation4], 4096
    $region69: #{seq2seq_forward.1} parent=1 // pred_fallthru
      _
    // Predicated region
    $region70: #{seq2seq_forward.1} parent=1 // pred_check
      _
    $region71: #{seq2seq_forward.1} parent=1 // pred_check_branch
      %115 = sbr.rel (0) target = $region73
    $region72: #{seq2seq_forward.1} parent=1 // pred_region
      %117 = dma.done [#allocation9], 8192
    $region73: #{seq2seq_forward.1} parent=1 // pred_fallthru
      _
    // Predicated region
    $region74: #{seq2seq_forward.1} parent=1 // pred_check
      _
    $region75: #{seq2seq_forward.1} parent=1 // pred_check_branch
      %119 = sbr.rel (0) target = $region77
    $region76: #{seq2seq_forward.1} parent=1 // pred_region
      %121 = dma.done [#allocation9], 8192
    $region77: #{seq2seq_forward.1} parent=1 // pred_fallthru
      _
    // Predicated region
    $region78: #{seq2seq_forward.1} parent=1 // pred_check
      _
    $region79: #{seq2seq_forward.1} parent=1 // pred_check_branch
      %123 = sbr.rel (0) target = $region81
    $region80: #{seq2seq_forward.1} parent=1 // pred_region
      %125 = dma.done [#allocation12], 8192
    $region81: #{seq2seq_forward.1} parent=1 // pred_fallthru
      _
    %126 = sfence
    %v128 = vld [vmem:[%s2] sm:$0xf]
    %v129 = vld [vmem:[%s2 + $0x4] sm:$0xf]
    %v130 = vld [vmem:[%s2 + $0x8] sm:$0xf]
    %v131 = vld [vmem:[%s2 + $0xc] sm:$0xf]
    %v132 = vld [vmem:[%s2 + $0x10] sm:$0xf]
    %v133 = vld [vmem:[%s2 + $0x14] sm:$0xf]
    %v134 = vld [vmem:[%s2 + $0x18] sm:$0xf]
    %v135 = vld [vmem:[%s2 + $0x1c] sm:$0xf]
    %v136 = vld [vmem:[%s3] sm:$0xff]
    %v137 = vld [vmem:[%s3 + $0x8] sm:$0xff]
    %v138 = vld [vmem:[%s3 + $0x10] sm:$0xff]
    %v139 = vld [vmem:[%s3 + $0x18] sm:$0xff]
    %v140 = vld [vmem:[%s3 + $0x20] sm:$0xff]
    %v141 = vld [vmem:[%s3 + $0x28] sm:$0xff]
    %v142 = vld [vmem:[%s3 + $0x30] sm:$0xff]
    %v143 = vld [vmem:[%s3 + $0x38] sm:$0xff]
    %v144 = vld [vmem:[%s3 + $0x40] sm:$0xff]
    %v145 = vld [vmem:[%s3 + $0x48] sm:$0xff]
    %v146 = vld [vmem:[%s3 + $0x50] sm:$0xff]
    %v147 = vld [vmem:[%s3 + $0x58] sm:$0xff]
    %v148 = vld [vmem:[%s3 + $0x60] sm:$0xff]
    %v149 = vld [vmem:[%s3 + $0x68] sm:$0xff]
    %v150 = vld [vmem:[%s3 + $0x70] sm:$0xff]
    %v151 = vld [vmem:[%s3 + $0x78] sm:$0xff]
    %v152 = vld [vmem:[%s3 + $0x80] sm:$0xff]
    %v153 = vld [vmem:[%s3 + $0x88] sm:$0xff]
    %v154 = vld [vmem:[%s3 + $0x90] sm:$0xff]
    %v155 = vld [vmem:[%s3 + $0x98] sm:$0xff]
    %v156 = vld [vmem:[%s3 + $0xa0] sm:$0xff]
    %v157 = vld [vmem:[%s3 + $0xa8] sm:$0xff]
    %v158 = vld [vmem:[%s3 + $0xb0] sm:$0xff]
    %v159 = vld [vmem:[%s3 + $0xb8] sm:$0xff]
    %v160 = vld [vmem:[%s3 + $0xc0] sm:$0xff]
    %v161 = vld [vmem:[%s3 + $0xc8] sm:$0xff]
    %v162 = vld [vmem:[%s3 + $0xd0] sm:$0xff]
    %v163 = vld [vmem:[%s3 + $0xd8] sm:$0xff]
    %v164 = vld [vmem:[%s3 + $0xe0] sm:$0xff]
    %v165 = vld [vmem:[%s3 + $0xe8] sm:$0xff]
    %v166 = vld [vmem:[%s3 + $0xf0] sm:$0xff]
    %v167 = vld [vmem:[%s3 + $0xf8] sm:$0xff]
    %v168 = vld [vmem:[%s5] sm:$0xf]
    %v170 = vperm.slane %v168, 0
    %v171 = vperm.slane %v168, 1
    %v172 = vperm.slane %v168, 2
    %v173 = vperm.slane %v168, 3
    %v186 = vunpack.c.l.b16 %v128
    %v187 = vunpack.c.l.b16 %v129
    %v188 = vunpack.c.l.b16 %v130
    %v189 = vunpack.c.l.b16 %v131
    %v190 = vunpack.c.l.b16 %v132
    %v191 = vunpack.c.l.b16 %v133
    %v192 = vunpack.c.l.b16 %v134
    %v193 = vunpack.c.l.b16 %v135
    %v194 = vpack.c.b16 %v187, %v186
    %v195 = vpack.c.b16 %v189, %v188
    %v196 = vpack.c.b16 %v191, %v190
    %v197 = vpack.c.b16 %v193, %v192
    %v234 = vunpack.c.l.b16 %v136
    %v235 = vunpack.c.h.b16 %v136
    %v236 = vunpack.c.l.b16 %v137
    %v237 = vunpack.c.h.b16 %v137
    %v238 = vunpack.c.l.b16 %v138
    %v239 = vunpack.c.h.b16 %v138
    %v240 = vunpack.c.l.b16 %v139
    %v241 = vunpack.c.h.b16 %v139
    %v242 = vunpack.c.l.b16 %v140
    %v243 = vunpack.c.h.b16 %v140
    %v244 = vunpack.c.l.b16 %v141
    %v245 = vunpack.c.h.b16 %v141
    %v246 = vunpack.c.l.b16 %v142
    %v247 = vunpack.c.h.b16 %v142
    %v248 = vunpack.c.l.b16 %v143
    %v249 = vunpack.c.h.b16 %v143
    %v250 = vunpack.c.l.b16 %v144
    %v251 = vunpack.c.h.b16 %v144
    %v252 = vunpack.c.l.b16 %v145
    %v253 = vunpack.c.h.b16 %v145
    %v254 = vunpack.c.l.b16 %v146
    %v255 = vunpack.c.h.b16 %v146
    %v256 = vunpack.c.l.b16 %v147
    %v257 = vunpack.c.h.b16 %v147
    %v258 = vunpack.c.l.b16 %v148
    %v259 = vunpack.c.h.b16 %v148
    %v260 = vunpack.c.l.b16 %v149
    %v261 = vunpack.c.h.b16 %v149
    %v262 = vunpack.c.l.b16 %v150
    %v263 = vunpack.c.h.b16 %v150
    %v264 = vunpack.c.l.b16 %v151
    %v265 = vunpack.c.h.b16 %v151
    %v266 = vunpack.c.l.b16 %v152
    %v267 = vunpack.c.h.b16 %v152
    %v268 = vunpack.c.l.b16 %v153
    %v269 = vunpack.c.h.b16 %v153
    %v270 = vunpack.c.l.b16 %v154
    %v271 = vunpack.c.h.b16 %v154
    %v272 = vunpack.c.l.b16 %v155
    %v273 = vunpack.c.h.b16 %v155
    %v274 = vunpack.c.l.b16 %v156
    %v275 = vunpack.c.h.b16 %v156
    %v276 = vunpack.c.l.b16 %v157
    %v277 = vunpack.c.h.b16 %v157
    %v278 = vunpack.c.l.b16 %v158
    %v279 = vunpack.c.h.b16 %v158
    %v280 = vunpack.c.l.b16 %v159
    %v281 = vunpack.c.h.b16 %v159
    %v282 = vunpack.c.l.b16 %v160
    %v283 = vunpack.c.h.b16 %v160
    %v284 = vunpack.c.l.b16 %v161
    %v285 = vunpack.c.h.b16 %v161
    %v286 = vunpack.c.l.b16 %v162
    %v287 = vunpack.c.h.b16 %v162
    %v288 = vunpack.c.l.b16 %v163
    %v289 = vunpack.c.h.b16 %v163
    %v290 = vunpack.c.l.b16 %v164
    %v291 = vunpack.c.h.b16 %v164
    %v292 = vunpack.c.l.b16 %v165
    %v293 = vunpack.c.h.b16 %v165
    %v294 = vunpack.c.l.b16 %v166
    %v295 = vunpack.c.h.b16 %v166
    %v296 = vunpack.c.l.b16 %v167
    %v297 = vunpack.c.h.b16 %v167
    %v298 = vpack.c.b16 %v238, %v234
    %v299 = vpack.c.b16 %v239, %v235
    %v300 = vpack.c.b16 %v240, %v236
    %v301 = vpack.c.b16 %v241, %v237
    %v302 = vpack.c.b16 %v246, %v242
    %v303 = vpack.c.b16 %v247, %v243
    %v304 = vpack.c.b16 %v248, %v244
    %v305 = vpack.c.b16 %v249, %v245
    %v306 = vpack.c.b16 %v254, %v250
    %v307 = vpack.c.b16 %v255, %v251
    %v308 = vpack.c.b16 %v256, %v252
    %v309 = vpack.c.b16 %v257, %v253
    %v310 = vpack.c.b16 %v262, %v258
    %v311 = vpack.c.b16 %v263, %v259
    %v312 = vpack.c.b16 %v264, %v260
    %v313 = vpack.c.b16 %v265, %v261
    %v314 = vpack.c.b16 %v270, %v266
    %v315 = vpack.c.b16 %v271, %v267
    %v316 = vpack.c.b16 %v272, %v268
    %v317 = vpack.c.b16 %v273, %v269
    %v318 = vpack.c.b16 %v278, %v274
    %v319 = vpack.c.b16 %v279, %v275
    %v320 = vpack.c.b16 %v280, %v276
    %v321 = vpack.c.b16 %v281, %v277
    %v322 = vpack.c.b16 %v286, %v282
    %v323 = vpack.c.b16 %v287, %v283
    %v324 = vpack.c.b16 %v288, %v284
    %v325 = vpack.c.b16 %v289, %v285
    %v326 = vpack.c.b16 %v294, %v290
    %v327 = vpack.c.b16 %v295, %v291
    %v328 = vpack.c.b16 %v296, %v292
    %v329 = vpack.c.b16 %v297, %v293
    %362 = vmatpush.bf16.msra.mxu0 %v326
    %363 = vmatpush.bf16.msra.mxu0 %v322
    %364 = vmatpush.bf16.msra.mxu0 %v318
    %365 = vmatpush.bf16.msra.mxu0 %v314
    %366 = vmatpush.bf16.msra.mxu0 %v310
    %367 = vmatpush.bf16.msra.mxu0 %v306
    %368 = vmatpush.bf16.msra.mxu0 %v302
    %369 = vmatpush.bf16.msra.mxu0 %v298
    %370 = vmatmul.bf16.gmra.mxu0 %v194
    %v371 = vpop.f32.mrf.mxu0
    %v372 = vadd.f32 %v170, %v371
    %v373 = vpop.f32.mrf.mxu0
    %v374 = vadd.f32 %v170, %v373
    %375 = vmatmul.bf16.gmra.mxu0 %v195
    %v376 = vpop.f32.mrf.mxu0
    %v377 = vadd.f32 %v170, %v376
    %v378 = vpop.f32.mrf.mxu0
    %v379 = vadd.f32 %v170, %v378
    %380 = vmatmul.bf16.gmra.mxu0 %v196
    %v381 = vpop.f32.mrf.mxu0
    %v382 = vadd.f32 %v170, %v381
    %v383 = vpop.f32.mrf.mxu0
    %v384 = vadd.f32 %v170, %v383
    %385 = vmatmul.bf16.gmra.mxu0 %v197
    %v386 = vpop.f32.mrf.mxu0
    %v387 = vadd.f32 %v170, %v386
    %v388 = vpop.f32.mrf.mxu0
    %v389 = vadd.f32 %v170, %v388
    %390 = vdwg.mxu0
    %391 = vmatpush.bf16.msra.mxu0 %v327
    %392 = vmatpush.bf16.msra.mxu0 %v323
    %393 = vmatpush.bf16.msra.mxu0 %v319
    %394 = vmatpush.bf16.msra.mxu0 %v315
    %395 = vmatpush.bf16.msra.mxu0 %v311
    %396 = vmatpush.bf16.msra.mxu0 %v307
    %397 = vmatpush.bf16.msra.mxu0 %v303
    %398 = vmatpush.bf16.msra.mxu0 %v299
    %399 = vmatmul.bf16.gmra.mxu0 %v194
    %v400 = vpop.f32.mrf.mxu0
    %v401 = vadd.f32 %v171, %v400
    %v402 = vpop.f32.mrf.mxu0
    %v403 = vadd.f32 %v171, %v402
    %404 = vmatmul.bf16.gmra.mxu0 %v195
    %v405 = vpop.f32.mrf.mxu0
    %v406 = vadd.f32 %v171, %v405
    %v407 = vpop.f32.mrf.mxu0
    %v408 = vadd.f32 %v171, %v407
    %409 = vmatmul.bf16.gmra.mxu0 %v196
    %v410 = vpop.f32.mrf.mxu0
    %v411 = vadd.f32 %v171, %v410
    %v412 = vpop.f32.mrf.mxu0
    %v413 = vadd.f32 %v171, %v412
    %414 = vmatmul.bf16.gmra.mxu0 %v197
    %v415 = vpop.f32.mrf.mxu0
    %v416 = vadd.f32 %v171, %v415
    %v417 = vpop.f32.mrf.mxu0
    %v418 = vadd.f32 %v171, %v417
    %419 = vdwg.mxu0
    %420 = vmatpush.bf16.msra.mxu0 %v328
    %421 = vmatpush.bf16.msra.mxu0 %v324
    %422 = vmatpush.bf16.msra.mxu0 %v320
    %423 = vmatpush.bf16.msra.mxu0 %v316
    %424 = vmatpush.bf16.msra.mxu0 %v312
    %425 = vmatpush.bf16.msra.mxu0 %v308
    %426 = vmatpush.bf16.msra.mxu0 %v304
    %427 = vmatpush.bf16.msra.mxu0 %v300
    %428 = vmatmul.bf16.gmra.mxu0 %v194
    %v429 = vpop.f32.mrf.mxu0
    %v430 = vadd.f32 %v172, %v429
    %v431 = vpop.f32.mrf.mxu0
    %v432 = vadd.f32 %v172, %v431
    %433 = vmatmul.bf16.gmra.mxu0 %v195
    %v434 = vpop.f32.mrf.mxu0
    %v435 = vadd.f32 %v172, %v434
    %v436 = vpop.f32.mrf.mxu0
    %v437 = vadd.f32 %v172, %v436
    %438 = vmatmul.bf16.gmra.mxu0 %v196
    %v439 = vpop.f32.mrf.mxu0
    %v440 = vadd.f32 %v172, %v439
    %v441 = vpop.f32.mrf.mxu0
    %v442 = vadd.f32 %v172, %v441
    %443 = vmatmul.bf16.gmra.mxu0 %v197
    %v444 = vpop.f32.mrf.mxu0
    %v445 = vadd.f32 %v172, %v444
    %v446 = vpop.f32.mrf.mxu0
    %v447 = vadd.f32 %v172, %v446
    %448 = vdwg.mxu0
    %449 = vmatpush.bf16.msra.mxu0 %v329
    %450 = vmatpush.bf16.msra.mxu0 %v325
    %451 = vmatpush.bf16.msra.mxu0 %v321
    %452 = vmatpush.bf16.msra.mxu0 %v317
    %453 = vmatpush.bf16.msra.mxu0 %v313
    %454 = vmatpush.bf16.msra.mxu0 %v309
    %455 = vmatpush.bf16.msra.mxu0 %v305
    %456 = vmatpush.bf16.msra.mxu0 %v301
    %457 = vmatmul.bf16.gmra.mxu0 %v194
    %v458 = vpop.f32.mrf.mxu0
    %v459 = vadd.f32 %v173, %v458
    %v460 = vpop.f32.mrf.mxu0
    %v461 = vadd.f32 %v173, %v460
    %462 = vmatmul.bf16.gmra.mxu0 %v195
    %v463 = vpop.f32.mrf.mxu0
    %v464 = vadd.f32 %v173, %v463
    %v465 = vpop.f32.mrf.mxu0
    %v466 = vadd.f32 %v173, %v465
    %467 = vmatmul.bf16.gmra.mxu0 %v196
    %v468 = vpop.f32.mrf.mxu0
    %v469 = vadd.f32 %v173, %v468
    %v470 = vpop.f32.mrf.mxu0
    %v471 = vadd.f32 %v173, %v470
    %472 = vmatmul.bf16.gmra.mxu0 %v197
    %v473 = vpop.f32.mrf.mxu0
    %v474 = vadd.f32 %v173, %v473
    %v475 = vpop.f32.mrf.mxu0
    %v476 = vadd.f32 %v173, %v475
    %477 = vdwg.mxu0
    %478 = vst [vmem:[#allocation2] sm:$0xff] %v372
    %479 = vst [vmem:[#allocation2 + $0x8] sm:$0xff] %v401
    %480 = vst [vmem:[#allocation2 + $0x10] sm:$0xff] %v430
    %481 = vst [vmem:[#allocation2 + $0x18] sm:$0xff] %v459
    %482 = vst [vmem:[#allocation2 + $0x20] sm:$0xff] %v374
    %483 = vst [vmem:[#allocation2 + $0x28] sm:$0xff] %v403
    %484 = vst [vmem:[#allocation2 + $0x30] sm:$0xff] %v432
    %485 = vst [vmem:[#allocation2 + $0x38] sm:$0xff] %v461
    %486 = vst [vmem:[#allocation2 + $0x40] sm:$0xff] %v377
    %487 = vst [vmem:[#allocation2 + $0x48] sm:$0xff] %v406
    %488 = vst [vmem:[#allocation2 + $0x50] sm:$0xff] %v435
    %489 = vst [vmem:[#allocation2 + $0x58] sm:$0xff] %v464
    %490 = vst [vmem:[#allocation2 + $0x60] sm:$0xff] %v379
    %491 = vst [vmem:[#allocation2 + $0x68] sm:$0xff] %v408
    %492 = vst [vmem:[#allocation2 + $0x70] sm:$0xff] %v437
    %493 = vst [vmem:[#allocation2 + $0x78] sm:$0xff] %v466
    %494 = vst [vmem:[#allocation2 + $0x80] sm:$0xff] %v382
    %495 = vst [vmem:[#allocation2 + $0x88] sm:$0xff] %v411
    %496 = vst [vmem:[#allocation2 + $0x90] sm:$0xff] %v440
    %497 = vst [vmem:[#allocation2 + $0x98] sm:$0xff] %v469
    %498 = vst [vmem:[#allocation2 + $0xa0] sm:$0xff] %v384
    %499 = vst [vmem:[#allocation2 + $0xa8] sm:$0xff] %v413
    %500 = vst [vmem:[#allocation2 + $0xb0] sm:$0xff] %v442
    %501 = vst [vmem:[#allocation2 + $0xb8] sm:$0xff] %v471
    %502 = vst [vmem:[#allocation2 + $0xc0] sm:$0xff] %v387
    %503 = vst [vmem:[#allocation2 + $0xc8] sm:$0xff] %v416
    %504 = vst [vmem:[#allocation2 + $0xd0] sm:$0xff] %v445
    %505 = vst [vmem:[#allocation2 + $0xd8] sm:$0xff] %v474
    %506 = vst [vmem:[#allocation2 + $0xe0] sm:$0xff] %v389
    %507 = vst [vmem:[#allocation2 + $0xe8] sm:$0xff] %v418
    %508 = vst [vmem:[#allocation2 + $0xf0] sm:$0xff] %v447
    %509 = vst [vmem:[#allocation2 + $0xf8] sm:$0xff] %v476
    %v510 = vld [vmem:[%s7] sm:$0xf]
    %v512 = vperm.slane %v510, 0
    %v513 = vperm.slane %v510, 1
    %v514 = vperm.slane %v510, 2
    %v515 = vperm.slane %v510, 3
    %s520 = smul.u32 0, 4
    %s521 = smul.addr %s520, 8
    %s522 = scalar_lea.vmem [#allocation2], %s521
    %v523 = vld [vmem:[%s522] sm:$0xff]
    %v524 = vld [vmem:[%s522 + $0x8] sm:$0xff]
    %v525 = vld [vmem:[%s522 + $0x10] sm:$0xff]
    %v526 = vld [vmem:[%s522 + $0x18] sm:$0xff]
    %v527 = vld [vmem:[#allocation7] sm:$0xff]
    %v528 = vld [vmem:[#allocation7 + $0x8] sm:$0xff]
    %v529 = vld [vmem:[#allocation7 + $0x10] sm:$0xff]
    %v530 = vld [vmem:[#allocation7 + $0x18] sm:$0xff]
    %v531 = vld [vmem:[#allocation7 + $0x20] sm:$0xff]
    %v532 = vld [vmem:[#allocation7 + $0x28] sm:$0xff]
    %v533 = vld [vmem:[#allocation7 + $0x30] sm:$0xff]
    %v534 = vld [vmem:[#allocation7 + $0x38] sm:$0xff]
    %v535 = vld [vmem:[#allocation7 + $0x40] sm:$0xff]
    %v536 = vld [vmem:[#allocation7 + $0x48] sm:$0xff]
    %v537 = vld [vmem:[#allocation7 + $0x50] sm:$0xff]
    %v538 = vld [vmem:[#allocation7 + $0x58] sm:$0xff]
    %v539 = vld [vmem:[#allocation7 + $0x60] sm:$0xff]
    %v540 = vld [vmem:[#allocation7 + $0x68] sm:$0xff]
    %v541 = vld [vmem:[#allocation7 + $0x70] sm:$0xff]
    %v542 = vld [vmem:[#allocation7 + $0x78] sm:$0xff]
    %v543 = vld [vmem:[#allocation7 + $0x80] sm:$0xff]
    %v544 = vld [vmem:[#allocation7 + $0x88] sm:$0xff]
    %v545 = vld [vmem:[#allocation7 + $0x90] sm:$0xff]
    %v546 = vld [vmem:[#allocation7 + $0x98] sm:$0xff]
    %v547 = vld [vmem:[#allocation7 + $0xa0] sm:$0xff]
    %v548 = vld [vmem:[#allocation7 + $0xa8] sm:$0xff]
    %v549 = vld [vmem:[#allocation7 + $0xb0] sm:$0xff]
    %v550 = vld [vmem:[#allocation7 + $0xb8] sm:$0xff]
    %v551 = vld [vmem:[#allocation7 + $0xc0] sm:$0xff]
    %v552 = vld [vmem:[#allocation7 + $0xc8] sm:$0xff]
    %v553 = vld [vmem:[#allocation7 + $0xd0] sm:$0xff]
    %v554 = vld [vmem:[#allocation7 + $0xd8] sm:$0xff]
    %v555 = vld [vmem:[#allocation7 + $0xe0] sm:$0xff]
    %v556 = vld [vmem:[#allocation7 + $0xe8] sm:$0xff]
    %v557 = vld [vmem:[#allocation7 + $0xf0] sm:$0xff]
    %v558 = vld [vmem:[#allocation7 + $0xf8] sm:$0xff]
    %v591 = vunpack.c.l.b16 %v527
    %v592 = vunpack.c.h.b16 %v527
    %v593 = vunpack.c.l.b16 %v528
    %v594 = vunpack.c.h.b16 %v528
    %v595 = vunpack.c.l.b16 %v529
    %v596 = vunpack.c.h.b16 %v529
    %v597 = vunpack.c.l.b16 %v530
    %v598 = vunpack.c.h.b16 %v530
    %v599 = vunpack.c.l.b16 %v531
    %v600 = vunpack.c.h.b16 %v531
    %v601 = vunpack.c.l.b16 %v532
    %v602 = vunpack.c.h.b16 %v532
    %v603 = vunpack.c.l.b16 %v533
    %v604 = vunpack.c.h.b16 %v533
    %v605 = vunpack.c.l.b16 %v534
    %v606 = vunpack.c.h.b16 %v534
    %v607 = vunpack.c.l.b16 %v535
    %v608 = vunpack.c.h.b16 %v535
    %v609 = vunpack.c.l.b16 %v536
    %v610 = vunpack.c.h.b16 %v536
    %v611 = vunpack.c.l.b16 %v537
    %v612 = vunpack.c.h.b16 %v537
    %v613 = vunpack.c.l.b16 %v538
    %v614 = vunpack.c.h.b16 %v538
    %v615 = vunpack.c.l.b16 %v539
    %v616 = vunpack.c.h.b16 %v539
    %v617 = vunpack.c.l.b16 %v540
    %v618 = vunpack.c.h.b16 %v540
    %v619 = vunpack.c.l.b16 %v541
    %v620 = vunpack.c.h.b16 %v541
    %v621 = vunpack.c.l.b16 %v542
    %v622 = vunpack.c.h.b16 %v542
    %v623 = vunpack.c.l.b16 %v543
    %v624 = vunpack.c.h.b16 %v543
    %v625 = vunpack.c.l.b16 %v544
    %v626 = vunpack.c.h.b16 %v544
    %v627 = vunpack.c.l.b16 %v545
    %v628 = vunpack.c.h.b16 %v545
    %v629 = vunpack.c.l.b16 %v546
    %v630 = vunpack.c.h.b16 %v546
    %v631 = vunpack.c.l.b16 %v547
    %v632 = vunpack.c.h.b16 %v547
    %v633 = vunpack.c.l.b16 %v548
    %v634 = vunpack.c.h.b16 %v548
    %v635 = vunpack.c.l.b16 %v549
    %v636 = vunpack.c.h.b16 %v549
    %v637 = vunpack.c.l.b16 %v550
    %v638 = vunpack.c.h.b16 %v550
    %v639 = vunpack.c.l.b16 %v551
    %v640 = vunpack.c.h.b16 %v551
    %v641 = vunpack.c.l.b16 %v552
    %v642 = vunpack.c.h.b16 %v552
    %v643 = vunpack.c.l.b16 %v553
    %v644 = vunpack.c.h.b16 %v553
    %v645 = vunpack.c.l.b16 %v554
    %v646 = vunpack.c.h.b16 %v554
    %v647 = vunpack.c.l.b16 %v555
    %v648 = vunpack.c.h.b16 %v555
    %v649 = vunpack.c.l.b16 %v556
    %v650 = vunpack.c.h.b16 %v556
    %v651 = vunpack.c.l.b16 %v557
    %v652 = vunpack.c.h.b16 %v557
    %v653 = vunpack.c.l.b16 %v558
    %v654 = vunpack.c.h.b16 %v558
    %v655 = vpack.c.b16 %v595, %v591
    %v656 = vpack.c.b16 %v596, %v592
    %v657 = vpack.c.b16 %v597, %v593
    %v658 = vpack.c.b16 %v598, %v594
    %v659 = vpack.c.b16 %v603, %v599
    %v660 = vpack.c.b16 %v604, %v600
    %v661 = vpack.c.b16 %v605, %v601
    %v662 = vpack.c.b16 %v606, %v602
    %v663 = vpack.c.b16 %v611, %v607
    %v664 = vpack.c.b16 %v612, %v608
    %v665 = vpack.c.b16 %v613, %v609
    %v666 = vpack.c.b16 %v614, %v610
    %v667 = vpack.c.b16 %v619, %v615
    %v668 = vpack.c.b16 %v620, %v616
    %v669 = vpack.c.b16 %v621, %v617
    %v670 = vpack.c.b16 %v622, %v618
    %v671 = vpack.c.b16 %v627, %v623
    %v672 = vpack.c.b16 %v628, %v624
    %v673 = vpack.c.b16 %v629, %v625
    %v674 = vpack.c.b16 %v630, %v626
    %v675 = vpack.c.b16 %v635, %v631
    %v676 = vpack.c.b16 %v636, %v632
    %v677 = vpack.c.b16 %v637, %v633
    %v678 = vpack.c.b16 %v638, %v634
    %v679 = vpack.c.b16 %v643, %v639
    %v680 = vpack.c.b16 %v644, %v640
    %v681 = vpack.c.b16 %v645, %v641
    %v682 = vpack.c.b16 %v646, %v642
    %v683 = vpack.c.b16 %v651, %v647
    %v684 = vpack.c.b16 %v652, %v648
    %v685 = vpack.c.b16 %v653, %v649
    %v686 = vpack.c.b16 %v654, %v650
    %719 = vmatpush.bf16.msra.mxu0 %v683
    %720 = vmatpush.bf16.msra.mxu0 %v679
    %721 = vmatpush.bf16.msra.mxu0 %v675
    %722 = vmatpush.bf16.msra.mxu0 %v671
    %723 = vmatpush.bf16.msra.mxu0 %v667
    %724 = vmatpush.bf16.msra.mxu0 %v663
    %725 = vmatpush.bf16.msra.mxu0 %v659
    %726 = vmatpush.bf16.msra.mxu0 %v655
    %727 = vmatmul.bf16.gmra.mxu0 0
    %v728 = vpop.f32.mrf.mxu0
    %v729 = vadd.f32 0.0, %v728
    %v730 = vpop.f32.mrf.mxu0
    %731 = vdwg.mxu0
    %732 = vmatpush.bf16.msra.mxu0 %v684
    %733 = vmatpush.bf16.msra.mxu0 %v680
    %734 = vmatpush.bf16.msra.mxu0 %v676
    %735 = vmatpush.bf16.msra.mxu0 %v672
    %736 = vmatpush.bf16.msra.mxu0 %v668
    %737 = vmatpush.bf16.msra.mxu0 %v664
    %738 = vmatpush.bf16.msra.mxu0 %v660
    %739 = vmatpush.bf16.msra.mxu0 %v656
    %740 = vmatmul.bf16.gmra.mxu0 0
    %v741 = vpop.f32.mrf.mxu0
    %v742 = vadd.f32 0.0, %v741
    %v743 = vpop.f32.mrf.mxu0
    %744 = vdwg.mxu0
    %745 = vmatpush.bf16.msra.mxu0 %v685
    %746 = vmatpush.bf16.msra.mxu0 %v681
    %747 = vmatpush.bf16.msra.mxu0 %v677
    %748 = vmatpush.bf16.msra.mxu0 %v673
    %749 = vmatpush.bf16.msra.mxu0 %v669
    %750 = vmatpush.bf16.msra.mxu0 %v665
    %751 = vmatpush.bf16.msra.mxu0 %v661
    %752 = vmatpush.bf16.msra.mxu0 %v657
    %753 = vmatmul.bf16.gmra.mxu0 0
    %v754 = vpop.f32.mrf.mxu0
    %v755 = vadd.f32 0.0, %v754
    %v756 = vpop.f32.mrf.mxu0
    %757 = vdwg.mxu0
    %758 = vmatpush.bf16.msra.mxu0 %v686
    %759 = vmatpush.bf16.msra.mxu0 %v682
    %760 = vmatpush.bf16.msra.mxu0 %v678
    %761 = vmatpush.bf16.msra.mxu0 %v674
    %762 = vmatpush.bf16.msra.mxu0 %v670
    %763 = vmatpush.bf16.msra.mxu0 %v666
    %764 = vmatpush.bf16.msra.mxu0 %v662
    %765 = vmatpush.bf16.msra.mxu0 %v658
    %766 = vmatmul.bf16.gmra.mxu0 0
    %v767 = vpop.f32.mrf.mxu0
    %v768 = vadd.f32 0.0, %v767
    %v769 = vpop.f32.mrf.mxu0
    %770 = vdwg.mxu0
    %v771 = vadd.f32 %v523, %v729
    %v772 = vadd.f32 %v524, %v742
    %v773 = vadd.f32 %v525, %v755
    %v774 = vadd.f32 %v526, %v768
    %v775 = vxor.u32 %v771, 2147483648
    %v776 = vxor.u32 %v772, 2147483648
    %v777 = vxor.u32 %v773, 2147483648
    %v778 = vmul.f32 %v775, 1.442695
    %v779 = vpow.pop %v778
    %v780 = vmul.f32 %v776, 1.442695
    %v781 = vpow.pop %v780
    %v782 = vmul.f32 %v777, 1.442695
    %v783 = vpow.pop %v782
    %v784 = vadd.f32 %v779, 1.0
    %v785 = vadd.f32 %v781, 1.0
    %v786 = vadd.f32 %v783, 1.0
    %v787 = vrcp.pop %v784
    %v788 = vmul.f32 %v784, %v787
    %v789 = vsub.f32 1.0, %v788
    %v790 = vmul.f32 %v787, %v789
    %v791 = vadd.f32 %v787, %v790
    %vm792 = vweird.f32 %v784
    %vm793 = vweird.f32 %v787
    %vm794 = vmor %vm792, %vm793
    %v795 = vsel %vm794, %v787, %v791
    %v796 = vand.u32 2147483647, %v784
    %vm797 = vcmp.eq.f32.partialorder %v796, 8.507059e+37
    %v798 = vand.u32 %v784, 2147483648
    %v799 = vor.u32 1.1754944e-38, %v798
    %v800 = vsel %vm797, %v799, %v795
    %v801 = vmul.f32 1.0, %v800
    %v802 = vrcp.pop %v785
    %v803 = vmul.f32 %v785, %v802
    %v804 = vsub.f32 1.0, %v803
    %v805 = vmul.f32 %v802, %v804
    %v806 = vadd.f32 %v802, %v805
    %vm807 = vweird.f32 %v785
    %vm808 = vweird.f32 %v802
    %vm809 = vmor %vm807, %vm808
    %v810 = vsel %vm809, %v802, %v806
    %v811 = vand.u32 2147483647, %v785
    %vm812 = vcmp.eq.f32.partialorder %v811, 8.507059e+37
    %v813 = vand.u32 %v785, 2147483648
    %v814 = vor.u32 1.1754944e-38, %v813
    %v815 = vsel %vm812, %v814, %v810
    %v816 = vmul.f32 1.0, %v815
    %v817 = vrcp.pop %v786
    %v818 = vmul.f32 %v786, %v817
    %v819 = vsub.f32 1.0, %v818
    %v820 = vmul.f32 %v817, %v819
    %v821 = vadd.f32 %v817, %v820
    %vm822 = vweird.f32 %v786
    %vm823 = vweird.f32 %v817
    %vm824 = vmor %vm822, %vm823
    %v825 = vsel %vm824, %v817, %v821
    %v826 = vand.u32 2147483647, %v786
    %vm827 = vcmp.eq.f32.partialorder %v826, 8.507059e+37
    %v828 = vand.u32 %v786, 2147483648
    %v829 = vor.u32 1.1754944e-38, %v828
    %v830 = vsel %vm827, %v829, %v825
    %v831 = vmul.f32 1.0, %v830
    %v832 = vtanh.pop %v774
    %v833 = vmul.f32 %v816, 0.0
    %v834 = vmul.f32 %v801, %v832
    %v835 = vadd.f32 %v833, %v834
    %v836 = vtanh.pop %v835
    %v837 = vmul.f32 %v831, %v836
    %v838 = vpack.c.bf16 %v837, %v837
    %v839 = vld [vmem:[#allocation8] sm:$0xff]
    %v840 = vld [vmem:[#allocation8 + $0x8] sm:$0xff]
    %v841 = vld [vmem:[#allocation8 + $0x10] sm:$0xff]
    %v842 = vld [vmem:[#allocation8 + $0x18] sm:$0xff]
    %v843 = vld [vmem:[#allocation8 + $0x20] sm:$0xff]
    %v844 = vld [vmem:[#allocation8 + $0x28] sm:$0xff]
    %v845 = vld [vmem:[#allocation8 + $0x30] sm:$0xff]
    %v846 = vld [vmem:[#allocation8 + $0x38] sm:$0xff]
    %v847 = vld [vmem:[#allocation8 + $0x40] sm:$0xff]
    %v848 = vld [vmem:[#allocation8 + $0x48] sm:$0xff]
    %v849 = vld [vmem:[#allocation8 + $0x50] sm:$0xff]
    %v850 = vld [vmem:[#allocation8 + $0x58] sm:$0xff]
    %v851 = vld [vmem:[#allocation8 + $0x60] sm:$0xff]
    %v852 = vld [vmem:[#allocation8 + $0x68] sm:$0xff]
    %v853 = vld [vmem:[#allocation8 + $0x70] sm:$0xff]
    %v854 = vld [vmem:[#allocation8 + $0x78] sm:$0xff]
    %v855 = vld [vmem:[#allocation8 + $0x80] sm:$0xff]
    %v856 = vld [vmem:[#allocation8 + $0x88] sm:$0xff]
    %v857 = vld [vmem:[#allocation8 + $0x90] sm:$0xff]
    %v858 = vld [vmem:[#allocation8 + $0x98] sm:$0xff]
    %v859 = vld [vmem:[#allocation8 + $0xa0] sm:$0xff]
    %v860 = vld [vmem:[#allocation8 + $0xa8] sm:$0xff]
    %v861 = vld [vmem:[#allocation8 + $0xb0] sm:$0xff]
    %v862 = vld [vmem:[#allocation8 + $0xb8] sm:$0xff]
    %v863 = vld [vmem:[#allocation8 + $0xc0] sm:$0xff]
    %v864 = vld [vmem:[#allocation8 + $0xc8] sm:$0xff]
    %v865 = vld [vmem:[#allocation8 + $0xd0] sm:$0xff]
    %v866 = vld [vmem:[#allocation8 + $0xd8] sm:$0xff]
    %v867 = vld [vmem:[#allocation8 + $0xe0] sm:$0xff]
    %v868 = vld [vmem:[#allocation8 + $0xe8] sm:$0xff]
    %v869 = vld [vmem:[#allocation8 + $0xf0] sm:$0xff]
    %v870 = vld [vmem:[#allocation8 + $0xf8] sm:$0xff]
    %v871 = vld [vmem:[#allocation8 + $0x100] sm:$0xff]
    %v872 = vld [vmem:[#allocation8 + $0x108] sm:$0xff]
    %v873 = vld [vmem:[#allocation8 + $0x110] sm:$0xff]
    %v874 = vld [vmem:[#allocation8 + $0x118] sm:$0xff]
    %v875 = vld [vmem:[#allocation8 + $0x120] sm:$0xff]
    %v876 = vld [vmem:[#allocation8 + $0x128] sm:$0xff]
    %v877 = vld [vmem:[#allocation8 + $0x130] sm:$0xff]
    %v878 = vld [vmem:[#allocation8 + $0x138] sm:$0xff]
    %v879 = vld [vmem:[#allocation8 + $0x140] sm:$0xff]
    %v880 = vld [vmem:[#allocation8 + $0x148] sm:$0xff]
    %v881 = vld [vmem:[#allocation8 + $0x150] sm:$0xff]
    %v882 = vld [vmem:[#allocation8 + $0x158] sm:$0xff]
    %v883 = vld [vmem:[#allocation8 + $0x160] sm:$0xff]
    %v884 = vld [vmem:[#allocation8 + $0x168] sm:$0xff]
    %v885 = vld [vmem:[#allocation8 + $0x170] sm:$0xff]
    %v886 = vld [vmem:[#allocation8 + $0x178] sm:$0xff]
    %v887 = vld [vmem:[#allocation8 + $0x180] sm:$0xff]
    %v888 = vld [vmem:[#allocation8 + $0x188] sm:$0xff]
    %v889 = vld [vmem:[#allocation8 + $0x190] sm:$0xff]
    %v890 = vld [vmem:[#allocation8 + $0x198] sm:$0xff]
    %v891 = vld [vmem:[#allocation8 + $0x1a0] sm:$0xff]
    %v892 = vld [vmem:[#allocation8 + $0x1a8] sm:$0xff]
    %v893 = vld [vmem:[#allocation8 + $0x1b0] sm:$0xff]
    %v894 = vld [vmem:[#allocation8 + $0x1b8] sm:$0xff]
    %v895 = vld [vmem:[#allocation8 + $0x1c0] sm:$0xff]
    %v896 = vld [vmem:[#allocation8 + $0x1c8] sm:$0xff]
    %v897 = vld [vmem:[#allocation8 + $0x1d0] sm:$0xff]
    %v898 = vld [vmem:[#allocation8 + $0x1d8] sm:$0xff]
    %v899 = vld [vmem:[#allocation8 + $0x1e0] sm:$0xff]
    %v900 = vld [vmem:[#allocation8 + $0x1e8] sm:$0xff]
    %v901 = vld [vmem:[#allocation8 + $0x1f0] sm:$0xff]
    %v902 = vld [vmem:[#allocation8 + $0x1f8] sm:$0xff]
    %v967 = vunpack.c.l.b16 %v839
    %v968 = vunpack.c.h.b16 %v839
    %v969 = vunpack.c.l.b16 %v840
    %v970 = vunpack.c.h.b16 %v840
    %v971 = vunpack.c.l.b16 %v841
    %v972 = vunpack.c.h.b16 %v841
    %v973 = vunpack.c.l.b16 %v842
    %v974 = vunpack.c.h.b16 %v842
    %v975 = vunpack.c.l.b16 %v843
    %v976 = vunpack.c.h.b16 %v843
    %v977 = vunpack.c.l.b16 %v844
    %v978 = vunpack.c.h.b16 %v844
    %v979 = vunpack.c.l.b16 %v845
    %v980 = vunpack.c.h.b16 %v845
    %v981 = vunpack.c.l.b16 %v846
    %v982 = vunpack.c.h.b16 %v846
    %v983 = vunpack.c.l.b16 %v847
    %v984 = vunpack.c.h.b16 %v847
    %v985 = vunpack.c.l.b16 %v848
    %v986 = vunpack.c.h.b16 %v848
    %v987 = vunpack.c.l.b16 %v849
    %v988 = vunpack.c.h.b16 %v849
    %v989 = vunpack.c.l.b16 %v850
    %v990 = vunpack.c.h.b16 %v850
    %v991 = vunpack.c.l.b16 %v851
    %v992 = vunpack.c.h.b16 %v851
    %v993 = vunpack.c.l.b16 %v852
    %v994 = vunpack.c.h.b16 %v852
    %v995 = vunpack.c.l.b16 %v853
    %v996 = vunpack.c.h.b16 %v853
    %v997 = vunpack.c.l.b16 %v854
    %v998 = vunpack.c.h.b16 %v854
    %v999 = vunpack.c.l.b16 %v855
    %v1000 = vunpack.c.h.b16 %v855
    %v1001 = vunpack.c.l.b16 %v856
    %v1002 = vunpack.c.h.b16 %v856
    %v1003 = vunpack.c.l.b16 %v857
    %v1004 = vunpack.c.h.b16 %v857
    %v1005 = vunpack.c.l.b16 %v858
    %v1006 = vunpack.c.h.b16 %v858
    %v1007 = vunpack.c.l.b16 %v859
    %v1008 = vunpack.c.h.b16 %v859
    %v1009 = vunpack.c.l.b16 %v860
    %v1010 = vunpack.c.h.b16 %v860
    %v1011 = vunpack.c.l.b16 %v861
    %v1012 = vunpack.c.h.b16 %v861
    %v1013 = vunpack.c.l.b16 %v862
    %v1014 = vunpack.c.h.b16 %v862
    %v1015 = vunpack.c.l.b16 %v863
    %v1016 = vunpack.c.h.b16 %v863
    %v1017 = vunpack.c.l.b16 %v864
    %v1018 = vunpack.c.h.b16 %v864
    %v1019 = vunpack.c.l.b16 %v865
    %v1020 = vunpack.c.h.b16 %v865
    %v1021 = vunpack.c.l.b16 %v866
    %v1022 = vunpack.c.h.b16 %v866
    %v1023 = vunpack.c.l.b16 %v867
    %v1024 = vunpack.c.h.b16 %v867
    %v1025 = vunpack.c.l.b16 %v868
    %v1026 = vunpack.c.h.b16 %v868
    %v1027 = vunpack.c.l.b16 %v869
    %v1028 = vunpack.c.h.b16 %v869
    %v1029 = vunpack.c.l.b16 %v870
    %v1030 = vunpack.c.h.b16 %v870
    %v1031 = vunpack.c.l.b16 %v871
    %v1032 = vunpack.c.h.b16 %v871
    %v1033 = vunpack.c.l.b16 %v872
    %v1034 = vunpack.c.h.b16 %v872
    %v1035 = vunpack.c.l.b16 %v873
    %v1036 = vunpack.c.h.b16 %v873
    %v1037 = vunpack.c.l.b16 %v874
    %v1038 = vunpack.c.h.b16 %v874
    %v1039 = vunpack.c.l.b16 %v875
    %v1040 = vunpack.c.h.b16 %v875
    %v1041 = vunpack.c.l.b16 %v876
    %v1042 = vunpack.c.h.b16 %v876
    %v1043 = vunpack.c.l.b16 %v877
    %v1044 = vunpack.c.h.b16 %v877
    %v1045 = vunpack.c.l.b16 %v878
    %v1046 = vunpack.c.h.b16 %v878
    %v1047 = vunpack.c.l.b16 %v879
    %v1048 = vunpack.c.h.b16 %v879
    %v1049 = vunpack.c.l.b16 %v880
    %v1050 = vunpack.c.h.b16 %v880
    %v1051 = vunpack.c.l.b16 %v881
    %v1052 = vunpack.c.h.b16 %v881
    %v1053 = vunpack.c.l.b16 %v882
    %v1054 = vunpack.c.h.b16 %v882
    %v1055 = vunpack.c.l.b16 %v883
    %v1056 = vunpack.c.h.b16 %v883
    %v1057 = vunpack.c.l.b16 %v884
    %v1058 = vunpack.c.h.b16 %v884
    %v1059 = vunpack.c.l.b16 %v885
    %v1060 = vunpack.c.h.b16 %v885
    %v1061 = vunpack.c.l.b16 %v886
    %v1062 = vunpack.c.h.b16 %v886
    %v1063 = vunpack.c.l.b16 %v887
    %v1064 = vunpack.c.h.b16 %v887
    %v1065 = vunpack.c.l.b16 %v888
    %v1066 = vunpack.c.h.b16 %v888
    %v1067 = vunpack.c.l.b16 %v889
    %v1068 = vunpack.c.h.b16 %v889
    %v1069 = vunpack.c.l.b16 %v890
    %v1070 = vunpack.c.h.b16 %v890
    %v1071 = vunpack.c.l.b16 %v891
    %v1072 = vunpack.c.h.b16 %v891
    %v1073 = vunpack.c.l.b16 %v892
    %v1074 = vunpack.c.h.b16 %v892
    %v1075 = vunpack.c.l.b16 %v893
    %v1076 = vunpack.c.h.b16 %v893
    %v1077 = vunpack.c.l.b16 %v894
    %v1078 = vunpack.c.h.b16 %v894
    %v1079 = vunpack.c.l.b16 %v895
    %v1080 = vunpack.c.h.b16 %v895
    %v1081 = vunpack.c.l.b16 %v896
    %v1082 = vunpack.c.h.b16 %v896
    %v1083 = vunpack.c.l.b16 %v897
    %v1084 = vunpack.c.h.b16 %v897
    %v1085 = vunpack.c.l.b16 %v898
    %v1086 = vunpack.c.h.b16 %v898
    %v1087 = vunpack.c.l.b16 %v899
    %v1088 = vunpack.c.h.b16 %v899
    %v1089 = vunpack.c.l.b16 %v900
    %v1090 = vunpack.c.h.b16 %v900
    %v1091 = vunpack.c.l.b16 %v901
    %v1092 = vunpack.c.h.b16 %v901
    %v1093 = vunpack.c.l.b16 %v902
    %v1094 = vunpack.c.h.b16 %v902
    %v1095 = vpack.c.b16 %v971, %v967
    %v1096 = vpack.c.b16 %v972, %v968
    %v1097 = vpack.c.b16 %v973, %v969
    %v1098 = vpack.c.b16 %v974, %v970
    %v1099 = vpack.c.b16 %v979, %v975
    %v1100 = vpack.c.b16 %v980, %v976
    %v1101 = vpack.c.b16 %v981, %v977
    %v1102 = vpack.c.b16 %v982, %v978
    %v1103 = vpack.c.b16 %v987, %v983
    %v1104 = vpack.c.b16 %v988, %v984
    %v1105 = vpack.c.b16 %v989, %v985
    %v1106 = vpack.c.b16 %v990, %v986
    %v1107 = vpack.c.b16 %v995, %v991
    %v1108 = vpack.c.b16 %v996, %v992
    %v1109 = vpack.c.b16 %v997, %v993
    %v1110 = vpack.c.b16 %v998, %v994
    %v1111 = vpack.c.b16 %v1003, %v999
    %v1112 = vpack.c.b16 %v1004, %v1000
    %v1113 = vpack.c.b16 %v1005, %v1001
    %v1114 = vpack.c.b16 %v1006, %v1002
    %v1115 = vpack.c.b16 %v1011, %v1007
    %v1116 = vpack.c.b16 %v1012, %v1008
    %v1117 = vpack.c.b16 %v1013, %v1009
    %v1118 = vpack.c.b16 %v1014, %v1010
    %v1119 = vpack.c.b16 %v1019, %v1015
    %v1120 = vpack.c.b16 %v1020, %v1016
    %v1121 = vpack.c.b16 %v1021, %v1017
    %v1122 = vpack.c.b16 %v1022, %v1018
    %v1123 = vpack.c.b16 %v1027, %v1023
    %v1124 = vpack.c.b16 %v1028, %v1024
    %v1125 = vpack.c.b16 %v1029, %v1025
    %v1126 = vpack.c.b16 %v1030, %v1026
    %v1127 = vpack.c.b16 %v1035, %v1031
    %v1128 = vpack.c.b16 %v1036, %v1032
    %v1129 = vpack.c.b16 %v1037, %v1033
    %v1130 = vpack.c.b16 %v1038, %v1034
    %v1131 = vpack.c.b16 %v1043, %v1039
    %v1132 = vpack.c.b16 %v1044, %v1040
    %v1133 = vpack.c.b16 %v1045, %v1041
    %v1134 = vpack.c.b16 %v1046, %v1042
    %v1135 = vpack.c.b16 %v1051, %v1047
    %v1136 = vpack.c.b16 %v1052, %v1048
    %v1137 = vpack.c.b16 %v1053, %v1049
    %v1138 = vpack.c.b16 %v1054, %v1050
    %v1139 = vpack.c.b16 %v1059, %v1055
    %v1140 = vpack.c.b16 %v1060, %v1056
    %v1141 = vpack.c.b16 %v1061, %v1057
    %v1142 = vpack.c.b16 %v1062, %v1058
    %v1143 = vpack.c.b16 %v1067, %v1063
    %v1144 = vpack.c.b16 %v1068, %v1064
    %v1145 = vpack.c.b16 %v1069, %v1065
    %v1146 = vpack.c.b16 %v1070, %v1066
    %v1147 = vpack.c.b16 %v1075, %v1071
    %v1148 = vpack.c.b16 %v1076, %v1072
    %v1149 = vpack.c.b16 %v1077, %v1073
    %v1150 = vpack.c.b16 %v1078, %v1074
    %v1151 = vpack.c.b16 %v1083, %v1079
    %v1152 = vpack.c.b16 %v1084, %v1080
    %v1153 = vpack.c.b16 %v1085, %v1081
    %v1154 = vpack.c.b16 %v1086, %v1082
    %v1155 = vpack.c.b16 %v1091, %v1087
    %v1156 = vpack.c.b16 %v1092, %v1088
    %v1157 = vpack.c.b16 %v1093, %v1089
    %v1158 = vpack.c.b16 %v1094, %v1090
    %1223 = vmatpush.bf16.msra.mxu0 %v1123
    %1224 = vmatpush.bf16.msra.mxu0 %v1119
    %1225 = vmatpush.bf16.msra.mxu0 %v1115
    %1226 = vmatpush.bf16.msra.mxu0 %v1111
    %1227 = vmatpush.bf16.msra.mxu0 %v1107
    %1228 = vmatpush.bf16.msra.mxu0 %v1103
    %1229 = vmatpush.bf16.msra.mxu0 %v1099
    %1230 = vmatpush.bf16.msra.mxu0 %v1095
    %1231 = vmatmul.bf16.gmra.mxu0 %v838
    %v1232 = vpop.f32.mrf.mxu0
    %v1233 = vadd.f32 %v512, %v1232
    %v1234 = vpop.f32.mrf.mxu0
    %1235 = vdwg.mxu0
    %1236 = vmatpush.bf16.msra.mxu0 %v1155
    %1237 = vmatpush.bf16.msra.mxu0 %v1151
    %1238 = vmatpush.bf16.msra.mxu0 %v1147
    %1239 = vmatpush.bf16.msra.mxu0 %v1143
    %1240 = vmatpush.bf16.msra.mxu0 %v1139
    %1241 = vmatpush.bf16.msra.mxu0 %v1135
    %1242 = vmatpush.bf16.msra.mxu0 %v1131
    %1243 = vmatpush.bf16.msra.mxu0 %v1127
    %1244 = vmatmul.bf16.gmra.mxu0 0
    %v1245 = vpop.f32.mrf.mxu0
    %v1246 = vadd.f32 %v1233, %v1245
    %v1247 = vpop.f32.mrf.mxu0
    %1248 = vdwg.mxu0
    %1249 = vmatpush.bf16.msra.mxu0 %v1124
    %1250 = vmatpush.bf16.msra.mxu0 %v1120
    %1251 = vmatpush.bf16.msra.mxu0 %v1116
    %1252 = vmatpush.bf16.msra.mxu0 %v1112
    %1253 = vmatpush.bf16.msra.mxu0 %v1108
    %1254 = vmatpush.bf16.msra.mxu0 %v1104
    %1255 = vmatpush.bf16.msra.mxu0 %v1100
    %1256 = vmatpush.bf16.msra.mxu0 %v1096
    %1257 = vmatmul.bf16.gmra.mxu0 %v838
    %v1258 = vpop.f32.mrf.mxu0
    %v1259 = vadd.f32 %v513, %v1258
    %v1260 = vpop.f32.mrf.mxu0
    %1261 = vdwg.mxu0
    %1262 = vmatpush.bf16.msra.mxu0 %v1156
    %1263 = vmatpush.bf16.msra.mxu0 %v1152
    %1264 = vmatpush.bf16.msra.mxu0 %v1148
    %1265 = vmatpush.bf16.msra.mxu0 %v1144
    %1266 = vmatpush.bf16.msra.mxu0 %v1140
    %1267 = vmatpush.bf16.msra.mxu0 %v1136
    %1268 = vmatpush.bf16.msra.mxu0 %v1132
    %1269 = vmatpush.bf16.msra.mxu0 %v1128
    %1270 = vmatmul.bf16.gmra.mxu0 0
    %v1271 = vpop.f32.mrf.mxu0
    %v1272 = vadd.f32 %v1259, %v1271
    %v1273 = vpop.f32.mrf.mxu0
    %1274 = vdwg.mxu0
    %1275 = vmatpush.bf16.msra.mxu0 %v1125
    %1276 = vmatpush.bf16.msra.mxu0 %v1121
    %1277 = vmatpush.bf16.msra.mxu0 %v1117
    %1278 = vmatpush.bf16.msra.mxu0 %v1113
    %1279 = vmatpush.bf16.msra.mxu0 %v1109
    %1280 = vmatpush.bf16.msra.mxu0 %v1105
    %1281 = vmatpush.bf16.msra.mxu0 %v1101
    %1282 = vmatpush.bf16.msra.mxu0 %v1097
    %1283 = vmatmul.bf16.gmra.mxu0 %v838
    %v1284 = vpop.f32.mrf.mxu0
    %v1285 = vadd.f32 %v514, %v1284
    %v1286 = vpop.f32.mrf.mxu0
    %1287 = vdwg.mxu0
    %1288 = vmatpush.bf16.msra.mxu0 %v1157
    %1289 = vmatpush.bf16.msra.mxu0 %v1153
    %1290 = vmatpush.bf16.msra.mxu0 %v1149
    %1291 = vmatpush.bf16.msra.mxu0 %v1145
    %1292 = vmatpush.bf16.msra.mxu0 %v1141
    %1293 = vmatpush.bf16.msra.mxu0 %v1137
    %1294 = vmatpush.bf16.msra.mxu0 %v1133
    %1295 = vmatpush.bf16.msra.mxu0 %v1129
    %1296 = vmatmul.bf16.gmra.mxu0 0
    %v1297 = vpop.f32.mrf.mxu0
    %v1298 = vadd.f32 %v1285, %v1297
    %v1299 = vpop.f32.mrf.mxu0
    %1300 = vdwg.mxu0
    %1301 = vmatpush.bf16.msra.mxu0 %v1126
    %1302 = vmatpush.bf16.msra.mxu0 %v1122
    %1303 = vmatpush.bf16.msra.mxu0 %v1118
    %1304 = vmatpush.bf16.msra.mxu0 %v1114
    %1305 = vmatpush.bf16.msra.mxu0 %v1110
    %1306 = vmatpush.bf16.msra.mxu0 %v1106
    %1307 = vmatpush.bf16.msra.mxu0 %v1102
    %1308 = vmatpush.bf16.msra.mxu0 %v1098
    %1309 = vmatmul.bf16.gmra.mxu0 %v838
    %v1310 = vpop.f32.mrf.mxu0
    %v1311 = vadd.f32 %v515, %v1310
    %v1312 = vpop.f32.mrf.mxu0
    %1313 = vdwg.mxu0
    %1314 = vmatpush.bf16.msra.mxu0 %v1158
    %1315 = vmatpush.bf16.msra.mxu0 %v1154
    %1316 = vmatpush.bf16.msra.mxu0 %v1150
    %1317 = vmatpush.bf16.msra.mxu0 %v1146
    %1318 = vmatpush.bf16.msra.mxu0 %v1142
    %1319 = vmatpush.bf16.msra.mxu0 %v1138
    %1320 = vmatpush.bf16.msra.mxu0 %v1134
    %1321 = vmatpush.bf16.msra.mxu0 %v1130
    %1322 = vmatmul.bf16.gmra.mxu0 0
    %v1323 = vpop.f32.mrf.mxu0
    %v1324 = vadd.f32 %v1311, %v1323
    %v1325 = vpop.f32.mrf.mxu0
    %1326 = vdwg.mxu0
    %v1327 = vxor.u32 %v1246, 2147483648
    %v1328 = vxor.u32 %v1272, 2147483648
    %v1329 = vxor.u32 %v1298, 2147483648
    %v1330 = vmul.f32 %v1327, 1.442695
    %v1331 = vpow.pop %v1330
    %v1332 = vmul.f32 %v1328, 1.442695
    %v1333 = vpow.pop %v1332
    %v1334 = vmul.f32 %v1329, 1.442695
    %v1335 = vpow.pop %v1334
    %v1336 = vadd.f32 %v1331, 1.0
    %v1337 = vadd.f32 %v1333, 1.0
    %v1338 = vadd.f32 %v1335, 1.0
    %v1339 = vrcp.pop %v1336
    %v1340 = vmul.f32 %v1336, %v1339
    %v1341 = vsub.f32 1.0, %v1340
    %v1342 = vmul.f32 %v1339, %v1341
    %v1343 = vadd.f32 %v1339, %v1342
    %vm1344 = vweird.f32 %v1336
    %vm1345 = vweird.f32 %v1339
    %vm1346 = vmor %vm1344, %vm1345
    %v1347 = vsel %vm1346, %v1339, %v1343
    %v1348 = vand.u32 2147483647, %v1336
    %vm1349 = vcmp.eq.f32.partialorder %v1348, 8.507059e+37
    %v1350 = vand.u32 %v1336, 2147483648
    %v1351 = vor.u32 1.1754944e-38, %v1350
    %v1352 = vsel %vm1349, %v1351, %v1347
    %v1353 = vmul.f32 1.0, %v1352
    %v1354 = vrcp.pop %v1337
    %v1355 = vmul.f32 %v1337, %v1354
    %v1356 = vsub.f32 1.0, %v1355
    %v1357 = vmul.f32 %v1354, %v1356
    %v1358 = vadd.f32 %v1354, %v1357
    %vm1359 = vweird.f32 %v1337
    %vm1360 = vweird.f32 %v1354
    %vm1361 = vmor %vm1359, %vm1360
    %v1362 = vsel %vm1361, %v1354, %v1358
    %v1363 = vand.u32 2147483647, %v1337
    %vm1364 = vcmp.eq.f32.partialorder %v1363, 8.507059e+37
    %v1365 = vand.u32 %v1337, 2147483648
    %v1366 = vor.u32 1.1754944e-38, %v1365
    %v1367 = vsel %vm1364, %v1366, %v1362
    %v1368 = vmul.f32 1.0, %v1367
    %v1369 = vrcp.pop %v1338
    %v1370 = vmul.f32 %v1338, %v1369
    %v1371 = vsub.f32 1.0, %v1370
    %v1372 = vmul.f32 %v1369, %v1371
    %v1373 = vadd.f32 %v1369, %v1372
    %vm1374 = vweird.f32 %v1338
    %vm1375 = vweird.f32 %v1369
    %vm1376 = vmor %vm1374, %vm1375
    %v1377 = vsel %vm1376, %v1369, %v1373
    %v1378 = vand.u32 2147483647, %v1338
    %vm1379 = vcmp.eq.f32.partialorder %v1378, 8.507059e+37
    %v1380 = vand.u32 %v1338, 2147483648
    %v1381 = vor.u32 1.1754944e-38, %v1380
    %v1382 = vsel %vm1379, %v1381, %v1377
    %v1383 = vmul.f32 1.0, %v1382
    %v1384 = vtanh.pop %v1324
    %v1385 = vmul.f32 %v1368, 0.0
    %v1386 = vmul.f32 %v1353, %v1384
    %v1387 = vadd.f32 %v1385, %v1386
    %v1388 = vtanh.pop %v1387
    %v1389 = vmul.f32 %v1383, %v1388
    %v1390 = vpack.c.bf16 %v1389, %v1389
    %s1391 = smul.u32 1, 4
    %s1392 = smul.addr %s1391, 8
    %s1393 = scalar_lea.vmem [#allocation2], %s1392
    %v1394 = vld [vmem:[%s1393] sm:$0xff]
    %v1395 = vld [vmem:[%s1393 + $0x8] sm:$0xff]
    %v1396 = vld [vmem:[%s1393 + $0x10] sm:$0xff]
    %v1397 = vld [vmem:[%s1393 + $0x18] sm:$0xff]
    %1398 = vmatpush.bf16.msra.mxu0 %v683
    %1399 = vmatpush.bf16.msra.mxu0 %v679
    %1400 = vmatpush.bf16.msra.mxu0 %v675
    %1401 = vmatpush.bf16.msra.mxu0 %v671
    %1402 = vmatpush.bf16.msra.mxu0 %v667
    %1403 = vmatpush.bf16.msra.mxu0 %v663
    %1404 = vmatpush.bf16.msra.mxu0 %v659
    %1405 = vmatpush.bf16.msra.mxu0 %v655
    %1406 = vmatmul.bf16.gmra.mxu0 %v838
    %v1407 = vpop.f32.mrf.mxu0
    %v1408 = vadd.f32 0.0, %v1407
    %v1409 = vpop.f32.mrf.mxu0
    %1410 = vdwg.mxu0
    %1411 = vmatpush.bf16.msra.mxu0 %v684
    %1412 = vmatpush.bf16.msra.mxu0 %v680
    %1413 = vmatpush.bf16.msra.mxu0 %v676
    %1414 = vmatpush.bf16.msra.mxu0 %v672
    %1415 = vmatpush.bf16.msra.mxu0 %v668
    %1416 = vmatpush.bf16.msra.mxu0 %v664
    %1417 = vmatpush.bf16.msra.mxu0 %v660
    %1418 = vmatpush.bf16.msra.mxu0 %v656
    %1419 = vmatmul.bf16.gmra.mxu0 %v838
    %v1420 = vpop.f32.mrf.mxu0
    %v1421 = vadd.f32 0.0, %v1420
    %v1422 = vpop.f32.mrf.mxu0
    %1423 = vdwg.mxu0
    %1424 = vmatpush.bf16.msra.mxu0 %v685
    %1425 = vmatpush.bf16.msra.mxu0 %v681
    %1426 = vmatpush.bf16.msra.mxu0 %v677
    %1427 = vmatpush.bf16.msra.mxu0 %v673
    %1428 = vmatpush.bf16.msra.mxu0 %v669
    %1429 = vmatpush.bf16.msra.mxu0 %v665
    %1430 = vmatpush.bf16.msra.mxu0 %v661
    %1431 = vmatpush.bf16.msra.mxu0 %v657
    %1432 = vmatmul.bf16.gmra.mxu0 %v838
    %v1433 = vpop.f32.mrf.mxu0
    %v1434 = vadd.f32 0.0, %v1433
    %v1435 = vpop.f32.mrf.mxu0
    %1436 = vdwg.mxu0
    %1437 = vmatpush.bf16.msra.mxu0 %v686
    %1438 = vmatpush.bf16.msra.mxu0 %v682
    %1439 = vmatpush.bf16.msra.mxu0 %v678
    %1440 = vmatpush.bf16.msra.mxu0 %v674
    %1441 = vmatpush.bf16.msra.mxu0 %v670
    %1442 = vmatpush.bf16.msra.mxu0 %v666
    %1443 = vmatpush.bf16.msra.mxu0 %v662
    %1444 = vmatpush.bf16.msra.mxu0 %v658
    %1445 = vmatmul.bf16.gmra.mxu0 %v838
    %v1446 = vpop.f32.mrf.mxu0
    %v1447 = vadd.f32 0.0, %v1446
    %v1448 = vpop.f32.mrf.mxu0
    %1449 = vdwg.mxu0
    %v1450 = vadd.f32 %v1394, %v1408
    %v1451 = vadd.f32 %v1395, %v1421
    %v1452 = vadd.f32 %v1396, %v1434
    %v1453 = vadd.f32 %v1397, %v1447
    %v1454 = vxor.u32 %v1450, 2147483648
    %v1455 = vxor.u32 %v1451, 2147483648
    %v1456 = vxor.u32 %v1452, 2147483648
    %v1457 = vmul.f32 %v1454, 1.442695
    %v1458 = vpow.pop %v1457
    %v1459 = vmul.f32 %v1455, 1.442695
    %v1460 = vpow.pop %v1459
    %v1461 = vmul.f32 %v1456, 1.442695
    %v1462 = vpow.pop %v1461
    %v1463 = vadd.f32 %v1458, 1.0
    %v1464 = vadd.f32 %v1460, 1.0
    %v1465 = vadd.f32 %v1462, 1.0
    %v1466 = vrcp.pop %v1463
    %v1467 = vmul.f32 %v1463, %v1466
    %v1468 = vsub.f32 1.0, %v1467
    %v1469 = vmul.f32 %v1466, %v1468
    %v1470 = vadd.f32 %v1466, %v1469
    %vm1471 = vweird.f32 %v1463
    %vm1472 = vweird.f32 %v1466
    %vm1473 = vmor %vm1471, %vm1472
    %v1474 = vsel %vm1473, %v1466, %v1470
    %v1475 = vand.u32 2147483647, %v1463
    %vm1476 = vcmp.eq.f32.partialorder %v1475, 8.507059e+37
    %v1477 = vand.u32 %v1463, 2147483648
    %v1478 = vor.u32 1.1754944e-38, %v1477
    %v1479 = vsel %vm1476, %v1478, %v1474
    %v1480 = vmul.f32 1.0, %v1479
    %v1481 = vrcp.pop %v1464
    %v1482 = vmul.f32 %v1464, %v1481
    %v1483 = vsub.f32 1.0, %v1482
    %v1484 = vmul.f32 %v1481, %v1483
    %v1485 = vadd.f32 %v1481, %v1484
    %vm1486 = vweird.f32 %v1464
    %vm1487 = vweird.f32 %v1481
    %vm1488 = vmor %vm1486, %vm1487
    %v1489 = vsel %vm1488, %v1481, %v1485
    %v1490 = vand.u32 2147483647, %v1464
    %vm1491 = vcmp.eq.f32.partialorder %v1490, 8.507059e+37
    %v1492 = vand.u32 %v1464, 2147483648
    %v1493 = vor.u32 1.1754944e-38, %v1492
    %v1494 = vsel %vm1491, %v1493, %v1489
    %v1495 = vmul.f32 1.0, %v1494
    %v1496 = vrcp.pop %v1465
    %v1497 = vmul.f32 %v1465, %v1496
    %v1498 = vsub.f32 1.0, %v1497
    %v1499 = vmul.f32 %v1496, %v1498
    %v1500 = vadd.f32 %v1496, %v1499
    %vm1501 = vweird.f32 %v1465
    %vm1502 = vweird.f32 %v1496
    %vm1503 = vmor %vm1501, %vm1502
    %v1504 = vsel %vm1503, %v1496, %v1500
    %v1505 = vand.u32 2147483647, %v1465
    %vm1506 = vcmp.eq.f32.partialorder %v1505, 8.507059e+37
    %v1507 = vand.u32 %v1465, 2147483648
    %v1508 = vor.u32 1.1754944e-38, %v1507
    %v1509 = vsel %vm1506, %v1508, %v1504
    %v1510 = vmul.f32 1.0, %v1509
    %v1511 = vtanh.pop %v1453
    %v1512 = vmul.f32 %v1495, %v835
    %v1513 = vmul.f32 %v1480, %v1511
    %v1514 = vadd.f32 %v1512, %v1513
    %v1515 = vtanh.pop %v1514
    %v1516 = vmul.f32 %v1510, %v1515
    %v1517 = vpack.c.bf16 %v1516, %v1516
    %1518 = vmatpush.bf16.msra.mxu0 %v1123
    %1519 = vmatpush.bf16.msra.mxu0 %v1119
    %1520 = vmatpush.bf16.msra.mxu0 %v1115
    %1521 = vmatpush.bf16.msra.mxu0 %v1111
    %1522 = vmatpush.bf16.msra.mxu0 %v1107
    %1523 = vmatpush.bf16.msra.mxu0 %v1103
    %1524 = vmatpush.bf16.msra.mxu0 %v1099
    %1525 = vmatpush.bf16.msra.mxu0 %v1095
    %1526 = vmatmul.bf16.gmra.mxu0 %v1517
    %v1527 = vpop.f32.mrf.mxu0
    %v1528 = vadd.f32 %v512, %v1527
    %v1529 = vpop.f32.mrf.mxu0
    %1530 = vdwg.mxu0
    %1531 = vmatpush.bf16.msra.mxu0 %v1155
    %1532 = vmatpush.bf16.msra.mxu0 %v1151
    %1533 = vmatpush.bf16.msra.mxu0 %v1147
    %1534 = vmatpush.bf16.msra.mxu0 %v1143
    %1535 = vmatpush.bf16.msra.mxu0 %v1139
    %1536 = vmatpush.bf16.msra.mxu0 %v1135
    %1537 = vmatpush.bf16.msra.mxu0 %v1131
    %1538 = vmatpush.bf16.msra.mxu0 %v1127
    %1539 = vmatmul.bf16.gmra.mxu0 %v1390
    %v1540 = vpop.f32.mrf.mxu0
    %v1541 = vadd.f32 %v1528, %v1540
    %v1542 = vpop.f32.mrf.mxu0
    %1543 = vdwg.mxu0
    %1544 = vmatpush.bf16.msra.mxu0 %v1124
    %1545 = vmatpush.bf16.msra.mxu0 %v1120
    %1546 = vmatpush.bf16.msra.mxu0 %v1116
    %1547 = vmatpush.bf16.msra.mxu0 %v1112
    %1548 = vmatpush.bf16.msra.mxu0 %v1108
    %1549 = vmatpush.bf16.msra.mxu0 %v1104
    %1550 = vmatpush.bf16.msra.mxu0 %v1100
    %1551 = vmatpush.bf16.msra.mxu0 %v1096
    %1552 = vmatmul.bf16.gmra.mxu0 %v1517
    %v1553 = vpop.f32.mrf.mxu0
    %v1554 = vadd.f32 %v513, %v1553
    %v1555 = vpop.f32.mrf.mxu0
    %1556 = vdwg.mxu0
    %1557 = vmatpush.bf16.msra.mxu0 %v1156
    %1558 = vmatpush.bf16.msra.mxu0 %v1152
    %1559 = vmatpush.bf16.msra.mxu0 %v1148
    %1560 = vmatpush.bf16.msra.mxu0 %v1144
    %1561 = vmatpush.bf16.msra.mxu0 %v1140
    %1562 = vmatpush.bf16.msra.mxu0 %v1136
    %1563 = vmatpush.bf16.msra.mxu0 %v1132
    %1564 = vmatpush.bf16.msra.mxu0 %v1128
    %1565 = vmatmul.bf16.gmra.mxu0 %v1390
    %v1566 = vpop.f32.mrf.mxu0
    %v1567 = vadd.f32 %v1554, %v1566
    %v1568 = vpop.f32.mrf.mxu0
    %1569 = vdwg.mxu0
    %1570 = vmatpush.bf16.msra.mxu0 %v1125
    %1571 = vmatpush.bf16.msra.mxu0 %v1121
    %1572 = vmatpush.bf16.msra.mxu0 %v1117
    %1573 = vmatpush.bf16.msra.mxu0 %v1113
    %1574 = vmatpush.bf16.msra.mxu0 %v1109
    %1575 = vmatpush.bf16.msra.mxu0 %v1105
    %1576 = vmatpush.bf16.msra.mxu0 %v1101
    %1577 = vmatpush.bf16.msra.mxu0 %v1097
    %1578 = vmatmul.bf16.gmra.mxu0 %v1517
    %v1579 = vpop.f32.mrf.mxu0
    %v1580 = vadd.f32 %v514, %v1579
    %v1581 = vpop.f32.mrf.mxu0
    %1582 = vdwg.mxu0
    %1583 = vmatpush.bf16.msra.mxu0 %v1157
    %1584 = vmatpush.bf16.msra.mxu0 %v1153
    %1585 = vmatpush.bf16.msra.mxu0 %v1149
    %1586 = vmatpush.bf16.msra.mxu0 %v1145
    %1587 = vmatpush.bf16.msra.mxu0 %v1141
    %1588 = vmatpush.bf16.msra.mxu0 %v1137
    %1589 = vmatpush.bf16.msra.mxu0 %v1133
    %1590 = vmatpush.bf16.msra.mxu0 %v1129
    %1591 = vmatmul.bf16.gmra.mxu0 %v1390
    %v1592 = vpop.f32.mrf.mxu0
    %v1593 = vadd.f32 %v1580, %v1592
    %v1594 = vpop.f32.mrf.mxu0
    %1595 = vdwg.mxu0
    %1596 = vmatpush.bf16.msra.mxu0 %v1126
    %1597 = vmatpush.bf16.msra.mxu0 %v1122
    %1598 = vmatpush.bf16.msra.mxu0 %v1118
    %1599 = vmatpush.bf16.msra.mxu0 %v1114
    %1600 = vmatpush.bf16.msra.mxu0 %v1110
    %1601 = vmatpush.bf16.msra.mxu0 %v1106
    %1602 = vmatpush.bf16.msra.mxu0 %v1102
    %1603 = vmatpush.bf16.msra.mxu0 %v1098
    %1604 = vmatmul.bf16.gmra.mxu0 %v1517
    %v1605 = vpop.f32.mrf.mxu0
    %v1606 = vadd.f32 %v515, %v1605
    %v1607 = vpop.f32.mrf.mxu0
    %1608 = vdwg.mxu0
    %1609 = vmatpush.bf16.msra.mxu0 %v1158
    %1610 = vmatpush.bf16.msra.mxu0 %v1154
    %1611 = vmatpush.bf16.msra.mxu0 %v1150
    %1612 = vmatpush.bf16.msra.mxu0 %v1146
    %1613 = vmatpush.bf16.msra.mxu0 %v1142
    %1614 = vmatpush.bf16.msra.mxu0 %v1138
    %1615 = vmatpush.bf16.msra.mxu0 %v1134
    %1616 = vmatpush.bf16.msra.mxu0 %v1130
    %1617 = vmatmul.bf16.gmra.mxu0 %v1390
    %v1618 = vpop.f32.mrf.mxu0
    %v1619 = vadd.f32 %v1606, %v1618
    %v1620 = vpop.f32.mrf.mxu0
    %1621 = vdwg.mxu0
    %v1622 = vxor.u32 %v1541, 2147483648
    %v1623 = vxor.u32 %v1567, 2147483648
    %v1624 = vxor.u32 %v1593, 2147483648
    %v1625 = vmul.f32 %v1622, 1.442695
    %v1626 = vpow.pop %v1625
    %v1627 = vmul.f32 %v1623, 1.442695
    %v1628 = vpow.pop %v1627
    %v1629 = vmul.f32 %v1624, 1.442695
    %v1630 = vpow.pop %v1629
    %v1631 = vadd.f32 %v1626, 1.0
    %v1632 = vadd.f32 %v1628, 1.0
    %v1633 = vadd.f32 %v1630, 1.0
    %v1634 = vrcp.pop %v1631
    %v1635 = vmul.f32 %v1631, %v1634
    %v1636 = vsub.f32 1.0, %v1635
    %v1637 = vmul.f32 %v1634, %v1636
    %v1638 = vadd.f32 %v1634, %v1637
    %vm1639 = vweird.f32 %v1631
    %vm1640 = vweird.f32 %v1634
    %vm1641 = vmor %vm1639, %vm1640
    %v1642 = vsel %vm1641, %v1634, %v1638
    %v1643 = vand.u32 2147483647, %v1631
    %vm1644 = vcmp.eq.f32.partialorder %v1643, 8.507059e+37
    %v1645 = vand.u32 %v1631, 2147483648
    %v1646 = vor.u32 1.1754944e-38, %v1645
    %v1647 = vsel %vm1644, %v1646, %v1642
    %v1648 = vmul.f32 1.0, %v1647
    %v1649 = vrcp.pop %v1632
    %v1650 = vmul.f32 %v1632, %v1649
    %v1651 = vsub.f32 1.0, %v1650
    %v1652 = vmul.f32 %v1649, %v1651
    %v1653 = vadd.f32 %v1649, %v1652
    %vm1654 = vweird.f32 %v1632
    %vm1655 = vweird.f32 %v1649
    %vm1656 = vmor %vm1654, %vm1655
    %v1657 = vsel %vm1656, %v1649, %v1653
    %v1658 = vand.u32 2147483647, %v1632
    %vm1659 = vcmp.eq.f32.partialorder %v1658, 8.507059e+37
    %v1660 = vand.u32 %v1632, 2147483648
    %v1661 = vor.u32 1.1754944e-38, %v1660
    %v1662 = vsel %vm1659, %v1661, %v1657
    %v1663 = vmul.f32 1.0, %v1662
    %v1664 = vrcp.pop %v1633
    %v1665 = vmul.f32 %v1633, %v1664
    %v1666 = vsub.f32 1.0, %v1665
    %v1667 = vmul.f32 %v1664, %v1666
    %v1668 = vadd.f32 %v1664, %v1667
    %vm1669 = vweird.f32 %v1633
    %vm1670 = vweird.f32 %v1664
    %vm1671 = vmor %vm1669, %vm1670
    %v1672 = vsel %vm1671, %v1664, %v1668
    %v1673 = vand.u32 2147483647, %v1633
    %vm1674 = vcmp.eq.f32.partialorder %v1673, 8.507059e+37
    %v1675 = vand.u32 %v1633, 2147483648
    %v1676 = vor.u32 1.1754944e-38, %v1675
    %v1677 = vsel %vm1674, %v1676, %v1672
    %v1678 = vmul.f32 1.0, %v1677
    %v1679 = vtanh.pop %v1619
    %v1680 = vmul.f32 %v1663, %v1387
    %v1681 = vmul.f32 %v1648, %v1679
    %v1682 = vadd.f32 %v1680, %v1681
    %v1683 = vtanh.pop %v1682
    %v1684 = vmul.f32 %v1678, %v1683
    %v1685 = vpack.c.bf16 %v1684, %v1684
    %s1686 = smul.u32 2, 4
    %s1687 = smul.addr %s1686, 8
    %s1688 = scalar_lea.vmem [#allocation2], %s1687
    %v1689 = vld [vmem:[%s1688] sm:$0xff]
    %v1690 = vld [vmem:[%s1688 + $0x8] sm:$0xff]
    %v1691 = vld [vmem:[%s1688 + $0x10] sm:$0xff]
    %v1692 = vld [vmem:[%s1688 + $0x18] sm:$0xff]
    %1693 = vmatpush.bf16.msra.mxu0 %v683
    %1694 = vmatpush.bf16.msra.mxu0 %v679
    %1695 = vmatpush.bf16.msra.mxu0 %v675
    %1696 = vmatpush.bf16.msra.mxu0 %v671
    %1697 = vmatpush.bf16.msra.mxu0 %v667
    %1698 = vmatpush.bf16.msra.mxu0 %v663
    %1699 = vmatpush.bf16.msra.mxu0 %v659
    %1700 = vmatpush.bf16.msra.mxu0 %v655
    %1701 = vmatmul.bf16.gmra.mxu0 %v1517
    %v1702 = vpop.f32.mrf.mxu0
    %v1703 = vadd.f32 0.0, %v1702
    %v1704 = vpop.f32.mrf.mxu0
    %1705 = vdwg.mxu0
    %1706 = vmatpush.bf16.msra.mxu0 %v684
    %1707 = vmatpush.bf16.msra.mxu0 %v680
    %1708 = vmatpush.bf16.msra.mxu0 %v676
    %1709 = vmatpush.bf16.msra.mxu0 %v672
    %1710 = vmatpush.bf16.msra.mxu0 %v668
    %1711 = vmatpush.bf16.msra.mxu0 %v664
    %1712 = vmatpush.bf16.msra.mxu0 %v660
    %1713 = vmatpush.bf16.msra.mxu0 %v656
    %1714 = vmatmul.bf16.gmra.mxu0 %v1517
    %v1715 = vpop.f32.mrf.mxu0
    %v1716 = vadd.f32 0.0, %v1715
    %v1717 = vpop.f32.mrf.mxu0
    %1718 = vdwg.mxu0
    %1719 = vmatpush.bf16.msra.mxu0 %v685
    %1720 = vmatpush.bf16.msra.mxu0 %v681
    %1721 = vmatpush.bf16.msra.mxu0 %v677
    %1722 = vmatpush.bf16.msra.mxu0 %v673
    %1723 = vmatpush.bf16.msra.mxu0 %v669
    %1724 = vmatpush.bf16.msra.mxu0 %v665
    %1725 = vmatpush.bf16.msra.mxu0 %v661
    %1726 = vmatpush.bf16.msra.mxu0 %v657
    %1727 = vmatmul.bf16.gmra.mxu0 %v1517
    %v1728 = vpop.f32.mrf.mxu0
    %v1729 = vadd.f32 0.0, %v1728
    %v1730 = vpop.f32.mrf.mxu0
    %1731 = vdwg.mxu0
    %1732 = vmatpush.bf16.msra.mxu0 %v686
    %1733 = vmatpush.bf16.msra.mxu0 %v682
    %1734 = vmatpush.bf16.msra.mxu0 %v678
    %1735 = vmatpush.bf16.msra.mxu0 %v674
    %1736 = vmatpush.bf16.msra.mxu0 %v670
    %1737 = vmatpush.bf16.msra.mxu0 %v666
    %1738 = vmatpush.bf16.msra.mxu0 %v662
    %1739 = vmatpush.bf16.msra.mxu0 %v658
    %1740 = vmatmul.bf16.gmra.mxu0 %v1517
    %v1741 = vpop.f32.mrf.mxu0
    %v1742 = vadd.f32 0.0, %v1741
    %v1743 = vpop.f32.mrf.mxu0
    %1744 = vdwg.mxu0
    %v1745 = vadd.f32 %v1689, %v1703
    %v1746 = vadd.f32 %v1690, %v1716
    %v1747 = vadd.f32 %v1691, %v1729
    %v1748 = vadd.f32 %v1692, %v1742
    %v1749 = vxor.u32 %v1745, 2147483648
    %v1750 = vxor.u32 %v1746, 2147483648
    %v1751 = vxor.u32 %v1747, 2147483648
    %v1752 = vmul.f32 %v1749, 1.442695
    %v1753 = vpow.pop %v1752
    %v1754 = vmul.f32 %v1750, 1.442695
    %v1755 = vpow.pop %v1754
    %v1756 = vmul.f32 %v1751, 1.442695
    %v1757 = vpow.pop %v1756
    %v1758 = vadd.f32 %v1753, 1.0
    %v1759 = vadd.f32 %v1755, 1.0
    %v1760 = vadd.f32 %v1757, 1.0
    %v1761 = vrcp.pop %v1758
    %v1762 = vmul.f32 %v1758, %v1761
    %v1763 = vsub.f32 1.0, %v1762
    %v1764 = vmul.f32 %v1761, %v1763
    %v1765 = vadd.f32 %v1761, %v1764
    %vm1766 = vweird.f32 %v1758
    %vm1767 = vweird.f32 %v1761
    %vm1768 = vmor %vm1766, %vm1767
    %v1769 = vsel %vm1768, %v1761, %v1765
    %v1770 = vand.u32 2147483647, %v1758
    %vm1771 = vcmp.eq.f32.partialorder %v1770, 8.507059e+37
    %v1772 = vand.u32 %v1758, 2147483648
    %v1773 = vor.u32 1.1754944e-38, %v1772
    %v1774 = vsel %vm1771, %v1773, %v1769
    %v1775 = vmul.f32 1.0, %v1774
    %v1776 = vrcp.pop %v1759
    %v1777 = vmul.f32 %v1759, %v1776
    %v1778 = vsub.f32 1.0, %v1777
    %v1779 = vmul.f32 %v1776, %v1778
    %v1780 = vadd.f32 %v1776, %v1779
    %vm1781 = vweird.f32 %v1759
    %vm1782 = vweird.f32 %v1776
    %vm1783 = vmor %vm1781, %vm1782
    %v1784 = vsel %vm1783, %v1776, %v1780
    %v1785 = vand.u32 2147483647, %v1759
    %vm1786 = vcmp.eq.f32.partialorder %v1785, 8.507059e+37
    %v1787 = vand.u32 %v1759, 2147483648
    %v1788 = vor.u32 1.1754944e-38, %v1787
    %v1789 = vsel %vm1786, %v1788, %v1784
    %v1790 = vmul.f32 1.0, %v1789
    %v1791 = vrcp.pop %v1760
    %v1792 = vmul.f32 %v1760, %v1791
    %v1793 = vsub.f32 1.0, %v1792
    %v1794 = vmul.f32 %v1791, %v1793
    %v1795 = vadd.f32 %v1791, %v1794
    %vm1796 = vweird.f32 %v1760
    %vm1797 = vweird.f32 %v1791
    %vm1798 = vmor %vm1796, %vm1797
    %v1799 = vsel %vm1798, %v1791, %v1795
    %v1800 = vand.u32 2147483647, %v1760
    %vm1801 = vcmp.eq.f32.partialorder %v1800, 8.507059e+37
    %v1802 = vand.u32 %v1760, 2147483648
    %v1803 = vor.u32 1.1754944e-38, %v1802
    %v1804 = vsel %vm1801, %v1803, %v1799
    %v1805 = vmul.f32 1.0, %v1804
    %v1806 = vtanh.pop %v1748
    %v1807 = vmul.f32 %v1790, %v1514
    %v1808 = vmul.f32 %v1775, %v1806
    %v1809 = vadd.f32 %v1807, %v1808
    %v1810 = vtanh.pop %v1809
    %v1811 = vmul.f32 %v1805, %v1810
    %v1812 = vpack.c.bf16 %v1811, %v1811
    %1813 = vmatpush.bf16.msra.mxu0 %v1123
    %1814 = vmatpush.bf16.msra.mxu0 %v1119
    %1815 = vmatpush.bf16.msra.mxu0 %v1115
    %1816 = vmatpush.bf16.msra.mxu0 %v1111
    %1817 = vmatpush.bf16.msra.mxu0 %v1107
    %1818 = vmatpush.bf16.msra.mxu0 %v1103
    %1819 = vmatpush.bf16.msra.mxu0 %v1099
    %1820 = vmatpush.bf16.msra.mxu0 %v1095
    %1821 = vmatmul.bf16.gmra.mxu0 %v1812
    %v1822 = vpop.f32.mrf.mxu0
    %v1823 = vadd.f32 %v512, %v1822
    %v1824 = vpop.f32.mrf.mxu0
    %1825 = vdwg.mxu0
    %1826 = vmatpush.bf16.msra.mxu0 %v1155
    %1827 = vmatpush.bf16.msra.mxu0 %v1151
    %1828 = vmatpush.bf16.msra.mxu0 %v1147
    %1829 = vmatpush.bf16.msra.mxu0 %v1143
    %1830 = vmatpush.bf16.msra.mxu0 %v1139
    %1831 = vmatpush.bf16.msra.mxu0 %v1135
    %1832 = vmatpush.bf16.msra.mxu0 %v1131
    %1833 = vmatpush.bf16.msra.mxu0 %v1127
    %1834 = vmatmul.bf16.gmra.mxu0 %v1685
    %v1835 = vpop.f32.mrf.mxu0
    %v1836 = vadd.f32 %v1823, %v1835
    %v1837 = vpop.f32.mrf.mxu0
    %1838 = vdwg.mxu0
    %1839 = vmatpush.bf16.msra.mxu0 %v1124
    %1840 = vmatpush.bf16.msra.mxu0 %v1120
    %1841 = vmatpush.bf16.msra.mxu0 %v1116
    %1842 = vmatpush.bf16.msra.mxu0 %v1112
    %1843 = vmatpush.bf16.msra.mxu0 %v1108
    %1844 = vmatpush.bf16.msra.mxu0 %v1104
    %1845 = vmatpush.bf16.msra.mxu0 %v1100
    %1846 = vmatpush.bf16.msra.mxu0 %v1096
    %1847 = vmatmul.bf16.gmra.mxu0 %v1812
    %v1848 = vpop.f32.mrf.mxu0
    %v1849 = vadd.f32 %v513, %v1848
    %v1850 = vpop.f32.mrf.mxu0
    %1851 = vdwg.mxu0
    %1852 = vmatpush.bf16.msra.mxu0 %v1156
    %1853 = vmatpush.bf16.msra.mxu0 %v1152
    %1854 = vmatpush.bf16.msra.mxu0 %v1148
    %1855 = vmatpush.bf16.msra.mxu0 %v1144
    %1856 = vmatpush.bf16.msra.mxu0 %v1140
    %1857 = vmatpush.bf16.msra.mxu0 %v1136
    %1858 = vmatpush.bf16.msra.mxu0 %v1132
    %1859 = vmatpush.bf16.msra.mxu0 %v1128
    %1860 = vmatmul.bf16.gmra.mxu0 %v1685
    %v1861 = vpop.f32.mrf.mxu0
    %v1862 = vadd.f32 %v1849, %v1861
    %v1863 = vpop.f32.mrf.mxu0
    %1864 = vdwg.mxu0
    %1865 = vmatpush.bf16.msra.mxu0 %v1125
    %1866 = vmatpush.bf16.msra.mxu0 %v1121
    %1867 = vmatpush.bf16.msra.mxu0 %v1117
    %1868 = vmatpush.bf16.msra.mxu0 %v1113
    %1869 = vmatpush.bf16.msra.mxu0 %v1109
    %1870 = vmatpush.bf16.msra.mxu0 %v1105
    %1871 = vmatpush.bf16.msra.mxu0 %v1101
    %1872 = vmatpush.bf16.msra.mxu0 %v1097
    %1873 = vmatmul.bf16.gmra.mxu0 %v1812
    %v1874 = vpop.f32.mrf.mxu0
    %v1875 = vadd.f32 %v514, %v1874
    %v1876 = vpop.f32.mrf.mxu0
    %1877 = vdwg.mxu0
    %1878 = vmatpush.bf16.msra.mxu0 %v1157
    %1879 = vmatpush.bf16.msra.mxu0 %v1153
    %1880 = vmatpush.bf16.msra.mxu0 %v1149
    %1881 = vmatpush.bf16.msra.mxu0 %v1145
    %1882 = vmatpush.bf16.msra.mxu0 %v1141
    %1883 = vmatpush.bf16.msra.mxu0 %v1137
    %1884 = vmatpush.bf16.msra.mxu0 %v1133
    %1885 = vmatpush.bf16.msra.mxu0 %v1129
    %1886 = vmatmul.bf16.gmra.mxu0 %v1685
    %v1887 = vpop.f32.mrf.mxu0
    %v1888 = vadd.f32 %v1875, %v1887
    %v1889 = vpop.f32.mrf.mxu0
    %1890 = vdwg.mxu0
    %1891 = vmatpush.bf16.msra.mxu0 %v1126
    %1892 = vmatpush.bf16.msra.mxu0 %v1122
    %1893 = vmatpush.bf16.msra.mxu0 %v1118
    %1894 = vmatpush.bf16.msra.mxu0 %v1114
    %1895 = vmatpush.bf16.msra.mxu0 %v1110
    %1896 = vmatpush.bf16.msra.mxu0 %v1106
    %1897 = vmatpush.bf16.msra.mxu0 %v1102
    %1898 = vmatpush.bf16.msra.mxu0 %v1098
    %1899 = vmatmul.bf16.gmra.mxu0 %v1812
    %v1900 = vpop.f32.mrf.mxu0
    %v1901 = vadd.f32 %v515, %v1900
    %v1902 = vpop.f32.mrf.mxu0
    %1903 = vdwg.mxu0
    %1904 = vmatpush.bf16.msra.mxu0 %v1158
    %1905 = vmatpush.bf16.msra.mxu0 %v1154
    %1906 = vmatpush.bf16.msra.mxu0 %v1150
    %1907 = vmatpush.bf16.msra.mxu0 %v1146
    %1908 = vmatpush.bf16.msra.mxu0 %v1142
    %1909 = vmatpush.bf16.msra.mxu0 %v1138
    %1910 = vmatpush.bf16.msra.mxu0 %v1134
    %1911 = vmatpush.bf16.msra.mxu0 %v1130
    %1912 = vmatmul.bf16.gmra.mxu0 %v1685
    %v1913 = vpop.f32.mrf.mxu0
    %v1914 = vadd.f32 %v1901, %v1913
    %v1915 = vpop.f32.mrf.mxu0
    %1916 = vdwg.mxu0
    %v1917 = vxor.u32 %v1836, 2147483648
    %v1918 = vxor.u32 %v1862, 2147483648
    %v1919 = vxor.u32 %v1888, 2147483648
    %v1920 = vmul.f32 %v1917, 1.442695
    %v1921 = vpow.pop %v1920
    %v1922 = vmul.f32 %v1918, 1.442695
    %v1923 = vpow.pop %v1922
    %v1924 = vmul.f32 %v1919, 1.442695
    %v1925 = vpow.pop %v1924
    %v1926 = vadd.f32 %v1921, 1.0
    %v1927 = vadd.f32 %v1923, 1.0
    %v1928 = vadd.f32 %v1925, 1.0
    %v1929 = vrcp.pop %v1926
    %v1930 = vmul.f32 %v1926, %v1929
    %v1931 = vsub.f32 1.0, %v1930
    %v1932 = vmul.f32 %v1929, %v1931
    %v1933 = vadd.f32 %v1929, %v1932
    %vm1934 = vweird.f32 %v1926
    %vm1935 = vweird.f32 %v1929
    %vm1936 = vmor %vm1934, %vm1935
    %v1937 = vsel %vm1936, %v1929, %v1933
    %v1938 = vand.u32 2147483647, %v1926
    %vm1939 = vcmp.eq.f32.partialorder %v1938, 8.507059e+37
    %v1940 = vand.u32 %v1926, 2147483648
    %v1941 = vor.u32 1.1754944e-38, %v1940
    %v1942 = vsel %vm1939, %v1941, %v1937
    %v1943 = vmul.f32 1.0, %v1942
    %v1944 = vrcp.pop %v1927
    %v1945 = vmul.f32 %v1927, %v1944
    %v1946 = vsub.f32 1.0, %v1945
    %v1947 = vmul.f32 %v1944, %v1946
    %v1948 = vadd.f32 %v1944, %v1947
    %vm1949 = vweird.f32 %v1927
    %vm1950 = vweird.f32 %v1944
    %vm1951 = vmor %vm1949, %vm1950
    %v1952 = vsel %vm1951, %v1944, %v1948
    %v1953 = vand.u32 2147483647, %v1927
    %vm1954 = vcmp.eq.f32.partialorder %v1953, 8.507059e+37
    %v1955 = vand.u32 %v1927, 2147483648
    %v1956 = vor.u32 1.1754944e-38, %v1955
    %v1957 = vsel %vm1954, %v1956, %v1952
    %v1958 = vmul.f32 1.0, %v1957
    %v1959 = vrcp.pop %v1928
    %v1960 = vmul.f32 %v1928, %v1959
    %v1961 = vsub.f32 1.0, %v1960
    %v1962 = vmul.f32 %v1959, %v1961
    %v1963 = vadd.f32 %v1959, %v1962
    %vm1964 = vweird.f32 %v1928
    %vm1965 = vweird.f32 %v1959
    %vm1966 = vmor %vm1964, %vm1965
    %v1967 = vsel %vm1966, %v1959, %v1963
    %v1968 = vand.u32 2147483647, %v1928
    %vm1969 = vcmp.eq.f32.partialorder %v1968, 8.507059e+37
    %v1970 = vand.u32 %v1928, 2147483648
    %v1971 = vor.u32 1.1754944e-38, %v1970
    %v1972 = vsel %vm1969, %v1971, %v1967
    %v1973 = vmul.f32 1.0, %v1972
    %v1974 = vtanh.pop %v1914
    %v1975 = vmul.f32 %v1958, %v1682
    %v1976 = vmul.f32 %v1943, %v1974
    %v1977 = vadd.f32 %v1975, %v1976
    %v1978 = vtanh.pop %v1977
    %v1979 = vmul.f32 %v1973, %v1978
    %v1980 = vpack.c.bf16 %v1979, %v1979
    %s1981 = smul.u32 3, 4
    %s1982 = smul.addr %s1981, 8
    %s1983 = scalar_lea.vmem [#allocation2], %s1982
    %v1984 = vld [vmem:[%s1983] sm:$0xff]
    %v1985 = vld [vmem:[%s1983 + $0x8] sm:$0xff]
    %v1986 = vld [vmem:[%s1983 + $0x10] sm:$0xff]
    %v1987 = vld [vmem:[%s1983 + $0x18] sm:$0xff]
    %1988 = vmatpush.bf16.msra.mxu0 %v683
    %1989 = vmatpush.bf16.msra.mxu0 %v679
    %1990 = vmatpush.bf16.msra.mxu0 %v675
    %1991 = vmatpush.bf16.msra.mxu0 %v671
    %1992 = vmatpush.bf16.msra.mxu0 %v667
    %1993 = vmatpush.bf16.msra.mxu0 %v663
    %1994 = vmatpush.bf16.msra.mxu0 %v659
    %1995 = vmatpush.bf16.msra.mxu0 %v655
    %1996 = vmatmul.bf16.gmra.mxu0 %v1812
    %v1997 = vpop.f32.mrf.mxu0
    %v1998 = vadd.f32 0.0, %v1997
    %v1999 = vpop.f32.mrf.mxu0
    %2000 = vdwg.mxu0
    %2001 = vmatpush.bf16.msra.mxu0 %v684
    %2002 = vmatpush.bf16.msra.mxu0 %v680
    %2003 = vmatpush.bf16.msra.mxu0 %v676
    %2004 = vmatpush.bf16.msra.mxu0 %v672
    %2005 = vmatpush.bf16.msra.mxu0 %v668
    %2006 = vmatpush.bf16.msra.mxu0 %v664
    %2007 = vmatpush.bf16.msra.mxu0 %v660
    %2008 = vmatpush.bf16.msra.mxu0 %v656
    %2009 = vmatmul.bf16.gmra.mxu0 %v1812
    %v2010 = vpop.f32.mrf.mxu0
    %v2011 = vadd.f32 0.0, %v2010
    %v2012 = vpop.f32.mrf.mxu0
    %2013 = vdwg.mxu0
    %2014 = vmatpush.bf16.msra.mxu0 %v685
    %2015 = vmatpush.bf16.msra.mxu0 %v681
    %2016 = vmatpush.bf16.msra.mxu0 %v677
    %2017 = vmatpush.bf16.msra.mxu0 %v673
    %2018 = vmatpush.bf16.msra.mxu0 %v669
    %2019 = vmatpush.bf16.msra.mxu0 %v665
    %2020 = vmatpush.bf16.msra.mxu0 %v661
    %2021 = vmatpush.bf16.msra.mxu0 %v657
    %2022 = vmatmul.bf16.gmra.mxu0 %v1812
    %v2023 = vpop.f32.mrf.mxu0
    %v2024 = vadd.f32 0.0, %v2023
    %v2025 = vpop.f32.mrf.mxu0
    %2026 = vdwg.mxu0
    %2027 = vmatpush.bf16.msra.mxu0 %v686
    %2028 = vmatpush.bf16.msra.mxu0 %v682
    %2029 = vmatpush.bf16.msra.mxu0 %v678
    %2030 = vmatpush.bf16.msra.mxu0 %v674
    %2031 = vmatpush.bf16.msra.mxu0 %v670
    %2032 = vmatpush.bf16.msra.mxu0 %v666
    %2033 = vmatpush.bf16.msra.mxu0 %v662
    %2034 = vmatpush.bf16.msra.mxu0 %v658
    %2035 = vmatmul.bf16.gmra.mxu0 %v1812
    %v2036 = vpop.f32.mrf.mxu0
    %v2037 = vadd.f32 0.0, %v2036
    %v2038 = vpop.f32.mrf.mxu0
    %2039 = vdwg.mxu0
    %v2040 = vadd.f32 %v1984, %v1998
    %v2041 = vadd.f32 %v1985, %v2011
    %v2042 = vadd.f32 %v1986, %v2024
    %v2043 = vadd.f32 %v1987, %v2037
    %v2044 = vxor.u32 %v2040, 2147483648
    %v2045 = vxor.u32 %v2041, 2147483648
    %v2046 = vxor.u32 %v2042, 2147483648
    %v2047 = vmul.f32 %v2044, 1.442695
    %v2048 = vpow.pop %v2047
    %v2049 = vmul.f32 %v2045, 1.442695
    %v2050 = vpow.pop %v2049
    %v2051 = vmul.f32 %v2046, 1.442695
    %v2052 = vpow.pop %v2051
    %v2053 = vadd.f32 %v2048, 1.0
    %v2054 = vadd.f32 %v2050, 1.0
    %v2055 = vadd.f32 %v2052, 1.0
    %v2056 = vrcp.pop %v2053
    %v2057 = vmul.f32 %v2053, %v2056
    %v2058 = vsub.f32 1.0, %v2057
    %v2059 = vmul.f32 %v2056, %v2058
    %v2060 = vadd.f32 %v2056, %v2059
    %vm2061 = vweird.f32 %v2053
    %vm2062 = vweird.f32 %v2056
    %vm2063 = vmor %vm2061, %vm2062
    %v2064 = vsel %vm2063, %v2056, %v2060
    %v2065 = vand.u32 2147483647, %v2053
    %vm2066 = vcmp.eq.f32.partialorder %v2065, 8.507059e+37
    %v2067 = vand.u32 %v2053, 2147483648
    %v2068 = vor.u32 1.1754944e-38, %v2067
    %v2069 = vsel %vm2066, %v2068, %v2064
    %v2070 = vmul.f32 1.0, %v2069
    %v2071 = vrcp.pop %v2054
    %v2072 = vmul.f32 %v2054, %v2071
    %v2073 = vsub.f32 1.0, %v2072
    %v2074 = vmul.f32 %v2071, %v2073
    %v2075 = vadd.f32 %v2071, %v2074
    %vm2076 = vweird.f32 %v2054
    %vm2077 = vweird.f32 %v2071
    %vm2078 = vmor %vm2076, %vm2077
    %v2079 = vsel %vm2078, %v2071, %v2075
    %v2080 = vand.u32 2147483647, %v2054
    %vm2081 = vcmp.eq.f32.partialorder %v2080, 8.507059e+37
    %v2082 = vand.u32 %v2054, 2147483648
    %v2083 = vor.u32 1.1754944e-38, %v2082
    %v2084 = vsel %vm2081, %v2083, %v2079
    %v2085 = vmul.f32 1.0, %v2084
    %v2086 = vrcp.pop %v2055
    %v2087 = vmul.f32 %v2055, %v2086
    %v2088 = vsub.f32 1.0, %v2087
    %v2089 = vmul.f32 %v2086, %v2088
    %v2090 = vadd.f32 %v2086, %v2089
    %vm2091 = vweird.f32 %v2055
    %vm2092 = vweird.f32 %v2086
    %vm2093 = vmor %vm2091, %vm2092
    %v2094 = vsel %vm2093, %v2086, %v2090
    %v2095 = vand.u32 2147483647, %v2055
    %vm2096 = vcmp.eq.f32.partialorder %v2095, 8.507059e+37
    %v2097 = vand.u32 %v2055, 2147483648
    %v2098 = vor.u32 1.1754944e-38, %v2097
    %v2099 = vsel %vm2096, %v2098, %v2094
    %v2100 = vmul.f32 1.0, %v2099
    %v2101 = vtanh.pop %v2043
    %v2102 = vmul.f32 %v2085, %v1809
    %v2103 = vmul.f32 %v2070, %v2101
    %v2104 = vadd.f32 %v2102, %v2103
    %v2105 = vtanh.pop %v2104
    %v2106 = vmul.f32 %v2100, %v2105
    %v2107 = vpack.c.bf16 %v2106, %v2106
    %2108 = vmatpush.bf16.msra.mxu0 %v1123
    %2109 = vmatpush.bf16.msra.mxu0 %v1119
    %2110 = vmatpush.bf16.msra.mxu0 %v1115
    %2111 = vmatpush.bf16.msra.mxu0 %v1111
    %2112 = vmatpush.bf16.msra.mxu0 %v1107
    %2113 = vmatpush.bf16.msra.mxu0 %v1103
    %2114 = vmatpush.bf16.msra.mxu0 %v1099
    %2115 = vmatpush.bf16.msra.mxu0 %v1095
    %2116 = vmatmul.bf16.gmra.mxu0 %v2107
    %v2117 = vpop.f32.mrf.mxu0
    %v2118 = vadd.f32 %v512, %v2117
    %v2119 = vpop.f32.mrf.mxu0
    %2120 = vdwg.mxu0
    %2121 = vmatpush.bf16.msra.mxu0 %v1155
    %2122 = vmatpush.bf16.msra.mxu0 %v1151
    %2123 = vmatpush.bf16.msra.mxu0 %v1147
    %2124 = vmatpush.bf16.msra.mxu0 %v1143
    %2125 = vmatpush.bf16.msra.mxu0 %v1139
    %2126 = vmatpush.bf16.msra.mxu0 %v1135
    %2127 = vmatpush.bf16.msra.mxu0 %v1131
    %2128 = vmatpush.bf16.msra.mxu0 %v1127
    %2129 = vmatmul.bf16.gmra.mxu0 %v1980
    %v2130 = vpop.f32.mrf.mxu0
    %v2131 = vadd.f32 %v2118, %v2130
    %v2132 = vpop.f32.mrf.mxu0
    %2133 = vdwg.mxu0
    %2134 = vmatpush.bf16.msra.mxu0 %v1124
    %2135 = vmatpush.bf16.msra.mxu0 %v1120
    %2136 = vmatpush.bf16.msra.mxu0 %v1116
    %2137 = vmatpush.bf16.msra.mxu0 %v1112
    %2138 = vmatpush.bf16.msra.mxu0 %v1108
    %2139 = vmatpush.bf16.msra.mxu0 %v1104
    %2140 = vmatpush.bf16.msra.mxu0 %v1100
    %2141 = vmatpush.bf16.msra.mxu0 %v1096
    %2142 = vmatmul.bf16.gmra.mxu0 %v2107
    %v2143 = vpop.f32.mrf.mxu0
    %v2144 = vadd.f32 %v513, %v2143
    %v2145 = vpop.f32.mrf.mxu0
    %2146 = vdwg.mxu0
    %2147 = vmatpush.bf16.msra.mxu0 %v1156
    %2148 = vmatpush.bf16.msra.mxu0 %v1152
    %2149 = vmatpush.bf16.msra.mxu0 %v1148
    %2150 = vmatpush.bf16.msra.mxu0 %v1144
    %2151 = vmatpush.bf16.msra.mxu0 %v1140
    %2152 = vmatpush.bf16.msra.mxu0 %v1136
    %2153 = vmatpush.bf16.msra.mxu0 %v1132
    %2154 = vmatpush.bf16.msra.mxu0 %v1128
    %2155 = vmatmul.bf16.gmra.mxu0 %v1980
    %v2156 = vpop.f32.mrf.mxu0
    %v2157 = vadd.f32 %v2144, %v2156
    %v2158 = vpop.f32.mrf.mxu0
    %2159 = vdwg.mxu0
    %2160 = vmatpush.bf16.msra.mxu0 %v1125
    %2161 = vmatpush.bf16.msra.mxu0 %v1121
    %2162 = vmatpush.bf16.msra.mxu0 %v1117
    %2163 = vmatpush.bf16.msra.mxu0 %v1113
    %2164 = vmatpush.bf16.msra.mxu0 %v1109
    %2165 = vmatpush.bf16.msra.mxu0 %v1105
    %2166 = vmatpush.bf16.msra.mxu0 %v1101
    %2167 = vmatpush.bf16.msra.mxu0 %v1097
    %2168 = vmatmul.bf16.gmra.mxu0 %v2107
    %v2169 = vpop.f32.mrf.mxu0
    %v2170 = vadd.f32 %v514, %v2169
    %v2171 = vpop.f32.mrf.mxu0
    %2172 = vdwg.mxu0
    %2173 = vmatpush.bf16.msra.mxu0 %v1157
    %2174 = vmatpush.bf16.msra.mxu0 %v1153
    %2175 = vmatpush.bf16.msra.mxu0 %v1149
    %2176 = vmatpush.bf16.msra.mxu0 %v1145
    %2177 = vmatpush.bf16.msra.mxu0 %v1141
    %2178 = vmatpush.bf16.msra.mxu0 %v1137
    %2179 = vmatpush.bf16.msra.mxu0 %v1133
    %2180 = vmatpush.bf16.msra.mxu0 %v1129
    %2181 = vmatmul.bf16.gmra.mxu0 %v1980
    %v2182 = vpop.f32.mrf.mxu0
    %v2183 = vadd.f32 %v2170, %v2182
    %v2184 = vpop.f32.mrf.mxu0
    %2185 = vdwg.mxu0
    %2186 = vmatpush.bf16.msra.mxu0 %v1126
    %2187 = vmatpush.bf16.msra.mxu0 %v1122
    %2188 = vmatpush.bf16.msra.mxu0 %v1118
    %2189 = vmatpush.bf16.msra.mxu0 %v1114
    %2190 = vmatpush.bf16.msra.mxu0 %v1110
    %2191 = vmatpush.bf16.msra.mxu0 %v1106
    %2192 = vmatpush.bf16.msra.mxu0 %v1102
    %2193 = vmatpush.bf16.msra.mxu0 %v1098
    %2194 = vmatmul.bf16.gmra.mxu0 %v2107
    %v2195 = vpop.f32.mrf.mxu0
    %v2196 = vadd.f32 %v515, %v2195
    %v2197 = vpop.f32.mrf.mxu0
    %2198 = vdwg.mxu0
    %2199 = vmatpush.bf16.msra.mxu0 %v1158
    %2200 = vmatpush.bf16.msra.mxu0 %v1154
    %2201 = vmatpush.bf16.msra.mxu0 %v1150
    %2202 = vmatpush.bf16.msra.mxu0 %v1146
    %2203 = vmatpush.bf16.msra.mxu0 %v1142
    %2204 = vmatpush.bf16.msra.mxu0 %v1138
    %2205 = vmatpush.bf16.msra.mxu0 %v1134
    %2206 = vmatpush.bf16.msra.mxu0 %v1130
    %2207 = vmatmul.bf16.gmra.mxu0 %v1980
    %v2208 = vpop.f32.mrf.mxu0
    %v2209 = vadd.f32 %v2196, %v2208
    %v2210 = vpop.f32.mrf.mxu0
    %2211 = vdwg.mxu0
    %v2212 = vxor.u32 %v2131, 2147483648
    %v2213 = vxor.u32 %v2157, 2147483648
    %v2214 = vxor.u32 %v2183, 2147483648
    %v2215 = vmul.f32 %v2212, 1.442695
    %v2216 = vpow.pop %v2215
    %v2217 = vmul.f32 %v2213, 1.442695
    %v2218 = vpow.pop %v2217
    %v2219 = vmul.f32 %v2214, 1.442695
    %v2220 = vpow.pop %v2219
    %v2221 = vadd.f32 %v2216, 1.0
    %v2222 = vadd.f32 %v2218, 1.0
    %v2223 = vadd.f32 %v2220, 1.0
    %v2224 = vrcp.pop %v2221
    %v2225 = vmul.f32 %v2221, %v2224
    %v2226 = vsub.f32 1.0, %v2225
    %v2227 = vmul.f32 %v2224, %v2226
    %v2228 = vadd.f32 %v2224, %v2227
    %vm2229 = vweird.f32 %v2221
    %vm2230 = vweird.f32 %v2224
    %vm2231 = vmor %vm2229, %vm2230
    %v2232 = vsel %vm2231, %v2224, %v2228
    %v2233 = vand.u32 2147483647, %v2221
    %vm2234 = vcmp.eq.f32.partialorder %v2233, 8.507059e+37
    %v2235 = vand.u32 %v2221, 2147483648
    %v2236 = vor.u32 1.1754944e-38, %v2235
    %v2237 = vsel %vm2234, %v2236, %v2232
    %v2238 = vmul.f32 1.0, %v2237
    %v2239 = vrcp.pop %v2222
    %v2240 = vmul.f32 %v2222, %v2239
    %v2241 = vsub.f32 1.0, %v2240
    %v2242 = vmul.f32 %v2239, %v2241
    %v2243 = vadd.f32 %v2239, %v2242
    %vm2244 = vweird.f32 %v2222
    %vm2245 = vweird.f32 %v2239
    %vm2246 = vmor %vm2244, %vm2245
    %v2247 = vsel %vm2246, %v2239, %v2243
    %v2248 = vand.u32 2147483647, %v2222
    %vm2249 = vcmp.eq.f32.partialorder %v2248, 8.507059e+37
    %v2250 = vand.u32 %v2222, 2147483648
    %v2251 = vor.u32 1.1754944e-38, %v2250
    %v2252 = vsel %vm2249, %v2251, %v2247
    %v2253 = vmul.f32 1.0, %v2252
    %v2254 = vrcp.pop %v2223
    %v2255 = vmul.f32 %v2223, %v2254
    %v2256 = vsub.f32 1.0, %v2255
    %v2257 = vmul.f32 %v2254, %v2256
    %v2258 = vadd.f32 %v2254, %v2257
    %vm2259 = vweird.f32 %v2223
    %vm2260 = vweird.f32 %v2254
    %vm2261 = vmor %vm2259, %vm2260
    %v2262 = vsel %vm2261, %v2254, %v2258
    %v2263 = vand.u32 2147483647, %v2223
    %vm2264 = vcmp.eq.f32.partialorder %v2263, 8.507059e+37
    %v2265 = vand.u32 %v2223, 2147483648
    %v2266 = vor.u32 1.1754944e-38, %v2265
    %v2267 = vsel %vm2264, %v2266, %v2262
    %v2268 = vmul.f32 1.0, %v2267
    %v2269 = vtanh.pop %v2209
    %v2270 = vmul.f32 %v2253, %v1977
    %v2271 = vmul.f32 %v2238, %v2269
    %v2272 = vadd.f32 %v2270, %v2271
    %v2273 = vtanh.pop %v2272
    %v2274 = vmul.f32 %v2268, %v2273
    %v2275 = vpack.c.bf16 %v2274, %v2274
    %s2276 = smul.u32 4, 4
    %s2277 = smul.addr %s2276, 8
    %s2278 = scalar_lea.vmem [#allocation2], %s2277
    %v2279 = vld [vmem:[%s2278] sm:$0xff]
    %v2280 = vld [vmem:[%s2278 + $0x8] sm:$0xff]
    %v2281 = vld [vmem:[%s2278 + $0x10] sm:$0xff]
    %v2282 = vld [vmem:[%s2278 + $0x18] sm:$0xff]
    %2283 = vmatpush.bf16.msra.mxu0 %v683
    %2284 = vmatpush.bf16.msra.mxu0 %v679
    %2285 = vmatpush.bf16.msra.mxu0 %v675
    %2286 = vmatpush.bf16.msra.mxu0 %v671
    %2287 = vmatpush.bf16.msra.mxu0 %v667
    %2288 = vmatpush.bf16.msra.mxu0 %v663
    %2289 = vmatpush.bf16.msra.mxu0 %v659
    %2290 = vmatpush.bf16.msra.mxu0 %v655
    %2291 = vmatmul.bf16.gmra.mxu0 %v2107
    %v2292 = vpop.f32.mrf.mxu0
    %v2293 = vadd.f32 0.0, %v2292
    %v2294 = vpop.f32.mrf.mxu0
    %2295 = vdwg.mxu0
    %2296 = vmatpush.bf16.msra.mxu0 %v684
    %2297 = vmatpush.bf16.msra.mxu0 %v680
    %2298 = vmatpush.bf16.msra.mxu0 %v676
    %2299 = vmatpush.bf16.msra.mxu0 %v672
    %2300 = vmatpush.bf16.msra.mxu0 %v668
    %2301 = vmatpush.bf16.msra.mxu0 %v664
    %2302 = vmatpush.bf16.msra.mxu0 %v660
    %2303 = vmatpush.bf16.msra.mxu0 %v656
    %2304 = vmatmul.bf16.gmra.mxu0 %v2107
    %v2305 = vpop.f32.mrf.mxu0
    %v2306 = vadd.f32 0.0, %v2305
    %v2307 = vpop.f32.mrf.mxu0
    %2308 = vdwg.mxu0
    %2309 = vmatpush.bf16.msra.mxu0 %v685
    %2310 = vmatpush.bf16.msra.mxu0 %v681
    %2311 = vmatpush.bf16.msra.mxu0 %v677
    %2312 = vmatpush.bf16.msra.mxu0 %v673
    %2313 = vmatpush.bf16.msra.mxu0 %v669
    %2314 = vmatpush.bf16.msra.mxu0 %v665
    %2315 = vmatpush.bf16.msra.mxu0 %v661
    %2316 = vmatpush.bf16.msra.mxu0 %v657
    %2317 = vmatmul.bf16.gmra.mxu0 %v2107
    %v2318 = vpop.f32.mrf.mxu0
    %v2319 = vadd.f32 0.0, %v2318
    %v2320 = vpop.f32.mrf.mxu0
    %2321 = vdwg.mxu0
    %2322 = vmatpush.bf16.msra.mxu0 %v686
    %2323 = vmatpush.bf16.msra.mxu0 %v682
    %2324 = vmatpush.bf16.msra.mxu0 %v678
    %2325 = vmatpush.bf16.msra.mxu0 %v674
    %2326 = vmatpush.bf16.msra.mxu0 %v670
    %2327 = vmatpush.bf16.msra.mxu0 %v666
    %2328 = vmatpush.bf16.msra.mxu0 %v662
    %2329 = vmatpush.bf16.msra.mxu0 %v658
    %2330 = vmatmul.bf16.gmra.mxu0 %v2107
    %v2331 = vpop.f32.mrf.mxu0
    %v2332 = vadd.f32 0.0, %v2331
    %v2333 = vpop.f32.mrf.mxu0
    %2334 = vdwg.mxu0
    %v2335 = vadd.f32 %v2279, %v2293
    %v2336 = vadd.f32 %v2280, %v2306
    %v2337 = vadd.f32 %v2281, %v2319
    %v2338 = vadd.f32 %v2282, %v2332
    %v2339 = vxor.u32 %v2335, 2147483648
    %v2340 = vxor.u32 %v2336, 2147483648
    %v2341 = vxor.u32 %v2337, 2147483648
    %v2342 = vmul.f32 %v2339, 1.442695
    %v2343 = vpow.pop %v2342
    %v2344 = vmul.f32 %v2340, 1.442695
    %v2345 = vpow.pop %v2344
    %v2346 = vmul.f32 %v2341, 1.442695
    %v2347 = vpow.pop %v2346
    %v2348 = vadd.f32 %v2343, 1.0
    %v2349 = vadd.f32 %v2345, 1.0
    %v2350 = vadd.f32 %v2347, 1.0
    %v2351 = vrcp.pop %v2348
    %v2352 = vmul.f32 %v2348, %v2351
    %v2353 = vsub.f32 1.0, %v2352
    %v2354 = vmul.f32 %v2351, %v2353
    %v2355 = vadd.f32 %v2351, %v2354
    %vm2356 = vweird.f32 %v2348
    %vm2357 = vweird.f32 %v2351
    %vm2358 = vmor %vm2356, %vm2357
    %v2359 = vsel %vm2358, %v2351, %v2355
    %v2360 = vand.u32 2147483647, %v2348
    %vm2361 = vcmp.eq.f32.partialorder %v2360, 8.507059e+37
    %v2362 = vand.u32 %v2348, 2147483648
    %v2363 = vor.u32 1.1754944e-38, %v2362
    %v2364 = vsel %vm2361, %v2363, %v2359
    %v2365 = vmul.f32 1.0, %v2364
    %v2366 = vrcp.pop %v2349
    %v2367 = vmul.f32 %v2349, %v2366
    %v2368 = vsub.f32 1.0, %v2367
    %v2369 = vmul.f32 %v2366, %v2368
    %v2370 = vadd.f32 %v2366, %v2369
    %vm2371 = vweird.f32 %v2349
    %vm2372 = vweird.f32 %v2366
    %vm2373 = vmor %vm2371, %vm2372
    %v2374 = vsel %vm2373, %v2366, %v2370
    %v2375 = vand.u32 2147483647, %v2349
    %vm2376 = vcmp.eq.f32.partialorder %v2375, 8.507059e+37
    %v2377 = vand.u32 %v2349, 2147483648
    %v2378 = vor.u32 1.1754944e-38, %v2377
    %v2379 = vsel %vm2376, %v2378, %v2374
    %v2380 = vmul.f32 1.0, %v2379
    %v2381 = vrcp.pop %v2350
    %v2382 = vmul.f32 %v2350, %v2381
    %v2383 = vsub.f32 1.0, %v2382
    %v2384 = vmul.f32 %v2381, %v2383
    %v2385 = vadd.f32 %v2381, %v2384
    %vm2386 = vweird.f32 %v2350
    %vm2387 = vweird.f32 %v2381
    %vm2388 = vmor %vm2386, %vm2387
    %v2389 = vsel %vm2388, %v2381, %v2385
    %v2390 = vand.u32 2147483647, %v2350
    %vm2391 = vcmp.eq.f32.partialorder %v2390, 8.507059e+37
    %v2392 = vand.u32 %v2350, 2147483648
    %v2393 = vor.u32 1.1754944e-38, %v2392
    %v2394 = vsel %vm2391, %v2393, %v2389
    %v2395 = vmul.f32 1.0, %v2394
    %v2396 = vtanh.pop %v2338
    %v2397 = vmul.f32 %v2380, %v2104
    %v2398 = vmul.f32 %v2365, %v2396
    %v2399 = vadd.f32 %v2397, %v2398
    %v2400 = vtanh.pop %v2399
    %v2401 = vmul.f32 %v2395, %v2400
    %v2402 = vpack.c.bf16 %v2401, %v2401
    %2403 = vmatpush.bf16.msra.mxu0 %v1123
    %2404 = vmatpush.bf16.msra.mxu0 %v1119
    %2405 = vmatpush.bf16.msra.mxu0 %v1115
    %2406 = vmatpush.bf16.msra.mxu0 %v1111
    %2407 = vmatpush.bf16.msra.mxu0 %v1107
    %2408 = vmatpush.bf16.msra.mxu0 %v1103
    %2409 = vmatpush.bf16.msra.mxu0 %v1099
    %2410 = vmatpush.bf16.msra.mxu0 %v1095
    %2411 = vmatmul.bf16.gmra.mxu0 %v2402
    %v2412 = vpop.f32.mrf.mxu0
    %v2413 = vadd.f32 %v512, %v2412
    %v2414 = vpop.f32.mrf.mxu0
    %2415 = vdwg.mxu0
    %2416 = vmatpush.bf16.msra.mxu0 %v1155
    %2417 = vmatpush.bf16.msra.mxu0 %v1151
    %2418 = vmatpush.bf16.msra.mxu0 %v1147
    %2419 = vmatpush.bf16.msra.mxu0 %v1143
    %2420 = vmatpush.bf16.msra.mxu0 %v1139
    %2421 = vmatpush.bf16.msra.mxu0 %v1135
    %2422 = vmatpush.bf16.msra.mxu0 %v1131
    %2423 = vmatpush.bf16.msra.mxu0 %v1127
    %2424 = vmatmul.bf16.gmra.mxu0 %v2275
    %v2425 = vpop.f32.mrf.mxu0
    %v2426 = vadd.f32 %v2413, %v2425
    %v2427 = vpop.f32.mrf.mxu0
    %2428 = vdwg.mxu0
    %2429 = vmatpush.bf16.msra.mxu0 %v1124
    %2430 = vmatpush.bf16.msra.mxu0 %v1120
    %2431 = vmatpush.bf16.msra.mxu0 %v1116
    %2432 = vmatpush.bf16.msra.mxu0 %v1112
    %2433 = vmatpush.bf16.msra.mxu0 %v1108
    %2434 = vmatpush.bf16.msra.mxu0 %v1104
    %2435 = vmatpush.bf16.msra.mxu0 %v1100
    %2436 = vmatpush.bf16.msra.mxu0 %v1096
    %2437 = vmatmul.bf16.gmra.mxu0 %v2402
    %v2438 = vpop.f32.mrf.mxu0
    %v2439 = vadd.f32 %v513, %v2438
    %v2440 = vpop.f32.mrf.mxu0
    %2441 = vdwg.mxu0
    %2442 = vmatpush.bf16.msra.mxu0 %v1156
    %2443 = vmatpush.bf16.msra.mxu0 %v1152
    %2444 = vmatpush.bf16.msra.mxu0 %v1148
    %2445 = vmatpush.bf16.msra.mxu0 %v1144
    %2446 = vmatpush.bf16.msra.mxu0 %v1140
    %2447 = vmatpush.bf16.msra.mxu0 %v1136
    %2448 = vmatpush.bf16.msra.mxu0 %v1132
    %2449 = vmatpush.bf16.msra.mxu0 %v1128
    %2450 = vmatmul.bf16.gmra.mxu0 %v2275
    %v2451 = vpop.f32.mrf.mxu0
    %v2452 = vadd.f32 %v2439, %v2451
    %v2453 = vpop.f32.mrf.mxu0
    %2454 = vdwg.mxu0
    %2455 = vmatpush.bf16.msra.mxu0 %v1125
    %2456 = vmatpush.bf16.msra.mxu0 %v1121
    %2457 = vmatpush.bf16.msra.mxu0 %v1117
    %2458 = vmatpush.bf16.msra.mxu0 %v1113
    %2459 = vmatpush.bf16.msra.mxu0 %v1109
    %2460 = vmatpush.bf16.msra.mxu0 %v1105
    %2461 = vmatpush.bf16.msra.mxu0 %v1101
    %2462 = vmatpush.bf16.msra.mxu0 %v1097
    %2463 = vmatmul.bf16.gmra.mxu0 %v2402
    %v2464 = vpop.f32.mrf.mxu0
    %v2465 = vadd.f32 %v514, %v2464
    %v2466 = vpop.f32.mrf.mxu0
    %2467 = vdwg.mxu0
    %2468 = vmatpush.bf16.msra.mxu0 %v1157
    %2469 = vmatpush.bf16.msra.mxu0 %v1153
    %2470 = vmatpush.bf16.msra.mxu0 %v1149
    %2471 = vmatpush.bf16.msra.mxu0 %v1145
    %2472 = vmatpush.bf16.msra.mxu0 %v1141
    %2473 = vmatpush.bf16.msra.mxu0 %v1137
    %2474 = vmatpush.bf16.msra.mxu0 %v1133
    %2475 = vmatpush.bf16.msra.mxu0 %v1129
    %2476 = vmatmul.bf16.gmra.mxu0 %v2275
    %v2477 = vpop.f32.mrf.mxu0
    %v2478 = vadd.f32 %v2465, %v2477
    %v2479 = vpop.f32.mrf.mxu0
    %2480 = vdwg.mxu0
    %2481 = vmatpush.bf16.msra.mxu0 %v1126
    %2482 = vmatpush.bf16.msra.mxu0 %v1122
    %2483 = vmatpush.bf16.msra.mxu0 %v1118
    %2484 = vmatpush.bf16.msra.mxu0 %v1114
    %2485 = vmatpush.bf16.msra.mxu0 %v1110
    %2486 = vmatpush.bf16.msra.mxu0 %v1106
    %2487 = vmatpush.bf16.msra.mxu0 %v1102
    %2488 = vmatpush.bf16.msra.mxu0 %v1098
    %2489 = vmatmul.bf16.gmra.mxu0 %v2402
    %v2490 = vpop.f32.mrf.mxu0
    %v2491 = vadd.f32 %v515, %v2490
    %v2492 = vpop.f32.mrf.mxu0
    %2493 = vdwg.mxu0
    %2494 = vmatpush.bf16.msra.mxu0 %v1158
    %2495 = vmatpush.bf16.msra.mxu0 %v1154
    %2496 = vmatpush.bf16.msra.mxu0 %v1150
    %2497 = vmatpush.bf16.msra.mxu0 %v1146
    %2498 = vmatpush.bf16.msra.mxu0 %v1142
    %2499 = vmatpush.bf16.msra.mxu0 %v1138
    %2500 = vmatpush.bf16.msra.mxu0 %v1134
    %2501 = vmatpush.bf16.msra.mxu0 %v1130
    %2502 = vmatmul.bf16.gmra.mxu0 %v2275
    %v2503 = vpop.f32.mrf.mxu0
    %v2504 = vadd.f32 %v2491, %v2503
    %v2505 = vpop.f32.mrf.mxu0
    %2506 = vdwg.mxu0
    %v2507 = vxor.u32 %v2426, 2147483648
    %v2508 = vxor.u32 %v2452, 2147483648
    %v2509 = vxor.u32 %v2478, 2147483648
    %v2510 = vmul.f32 %v2507, 1.442695
    %v2511 = vpow.pop %v2510
    %v2512 = vmul.f32 %v2508, 1.442695
    %v2513 = vpow.pop %v2512
    %v2514 = vmul.f32 %v2509, 1.442695
    %v2515 = vpow.pop %v2514
    %v2516 = vadd.f32 %v2511, 1.0
    %v2517 = vadd.f32 %v2513, 1.0
    %v2518 = vadd.f32 %v2515, 1.0
    %v2519 = vrcp.pop %v2516
    %v2520 = vmul.f32 %v2516, %v2519
    %v2521 = vsub.f32 1.0, %v2520
    %v2522 = vmul.f32 %v2519, %v2521
    %v2523 = vadd.f32 %v2519, %v2522
    %vm2524 = vweird.f32 %v2516
    %vm2525 = vweird.f32 %v2519
    %vm2526 = vmor %vm2524, %vm2525
    %v2527 = vsel %vm2526, %v2519, %v2523
    %v2528 = vand.u32 2147483647, %v2516
    %vm2529 = vcmp.eq.f32.partialorder %v2528, 8.507059e+37
    %v2530 = vand.u32 %v2516, 2147483648
    %v2531 = vor.u32 1.1754944e-38, %v2530
    %v2532 = vsel %vm2529, %v2531, %v2527
    %v2533 = vmul.f32 1.0, %v2532
    %v2534 = vrcp.pop %v2517
    %v2535 = vmul.f32 %v2517, %v2534
    %v2536 = vsub.f32 1.0, %v2535
    %v2537 = vmul.f32 %v2534, %v2536
    %v2538 = vadd.f32 %v2534, %v2537
    %vm2539 = vweird.f32 %v2517
    %vm2540 = vweird.f32 %v2534
    %vm2541 = vmor %vm2539, %vm2540
    %v2542 = vsel %vm2541, %v2534, %v2538
    %v2543 = vand.u32 2147483647, %v2517
    %vm2544 = vcmp.eq.f32.partialorder %v2543, 8.507059e+37
    %v2545 = vand.u32 %v2517, 2147483648
    %v2546 = vor.u32 1.1754944e-38, %v2545
    %v2547 = vsel %vm2544, %v2546, %v2542
    %v2548 = vmul.f32 1.0, %v2547
    %v2549 = vrcp.pop %v2518
    %v2550 = vmul.f32 %v2518, %v2549
    %v2551 = vsub.f32 1.0, %v2550
    %v2552 = vmul.f32 %v2549, %v2551
    %v2553 = vadd.f32 %v2549, %v2552
    %vm2554 = vweird.f32 %v2518
    %vm2555 = vweird.f32 %v2549
    %vm2556 = vmor %vm2554, %vm2555
    %v2557 = vsel %vm2556, %v2549, %v2553
    %v2558 = vand.u32 2147483647, %v2518
    %vm2559 = vcmp.eq.f32.partialorder %v2558, 8.507059e+37
    %v2560 = vand.u32 %v2518, 2147483648
    %v2561 = vor.u32 1.1754944e-38, %v2560
    %v2562 = vsel %vm2559, %v2561, %v2557
    %v2563 = vmul.f32 1.0, %v2562
    %v2564 = vtanh.pop %v2504
    %v2565 = vmul.f32 %v2548, %v2272
    %v2566 = vmul.f32 %v2533, %v2564
    %v2567 = vadd.f32 %v2565, %v2566
    %v2568 = vtanh.pop %v2567
    %v2569 = vmul.f32 %v2563, %v2568
    %v2570 = vpack.c.bf16 %v2569, %v2569
    %s2571 = smul.u32 5, 4
    %s2572 = smul.addr %s2571, 8
    %s2573 = scalar_lea.vmem [#allocation2], %s2572
    %v2574 = vld [vmem:[%s2573] sm:$0xff]
    %v2575 = vld [vmem:[%s2573 + $0x8] sm:$0xff]
    %v2576 = vld [vmem:[%s2573 + $0x10] sm:$0xff]
    %v2577 = vld [vmem:[%s2573 + $0x18] sm:$0xff]
    %2578 = vmatpush.bf16.msra.mxu0 %v683
    %2579 = vmatpush.bf16.msra.mxu0 %v679
    %2580 = vmatpush.bf16.msra.mxu0 %v675
    %2581 = vmatpush.bf16.msra.mxu0 %v671
    %2582 = vmatpush.bf16.msra.mxu0 %v667
    %2583 = vmatpush.bf16.msra.mxu0 %v663
    %2584 = vmatpush.bf16.msra.mxu0 %v659
    %2585 = vmatpush.bf16.msra.mxu0 %v655
    %2586 = vmatmul.bf16.gmra.mxu0 %v2402
    %v2587 = vpop.f32.mrf.mxu0
    %v2588 = vadd.f32 0.0, %v2587
    %v2589 = vpop.f32.mrf.mxu0
    %2590 = vdwg.mxu0
    %2591 = vmatpush.bf16.msra.mxu0 %v684
    %2592 = vmatpush.bf16.msra.mxu0 %v680
    %2593 = vmatpush.bf16.msra.mxu0 %v676
    %2594 = vmatpush.bf16.msra.mxu0 %v672
    %2595 = vmatpush.bf16.msra.mxu0 %v668
    %2596 = vmatpush.bf16.msra.mxu0 %v664
    %2597 = vmatpush.bf16.msra.mxu0 %v660
    %2598 = vmatpush.bf16.msra.mxu0 %v656
    %2599 = vmatmul.bf16.gmra.mxu0 %v2402
    %v2600 = vpop.f32.mrf.mxu0
    %v2601 = vadd.f32 0.0, %v2600
    %v2602 = vpop.f32.mrf.mxu0
    %2603 = vdwg.mxu0
    %2604 = vmatpush.bf16.msra.mxu0 %v685
    %2605 = vmatpush.bf16.msra.mxu0 %v681
    %2606 = vmatpush.bf16.msra.mxu0 %v677
    %2607 = vmatpush.bf16.msra.mxu0 %v673
    %2608 = vmatpush.bf16.msra.mxu0 %v669
    %2609 = vmatpush.bf16.msra.mxu0 %v665
    %2610 = vmatpush.bf16.msra.mxu0 %v661
    %2611 = vmatpush.bf16.msra.mxu0 %v657
    %2612 = vmatmul.bf16.gmra.mxu0 %v2402
    %v2613 = vpop.f32.mrf.mxu0
    %v2614 = vadd.f32 0.0, %v2613
    %v2615 = vpop.f32.mrf.mxu0
    %2616 = vdwg.mxu0
    %2617 = vmatpush.bf16.msra.mxu0 %v686
    %2618 = vmatpush.bf16.msra.mxu0 %v682
    %2619 = vmatpush.bf16.msra.mxu0 %v678
    %2620 = vmatpush.bf16.msra.mxu0 %v674
    %2621 = vmatpush.bf16.msra.mxu0 %v670
    %2622 = vmatpush.bf16.msra.mxu0 %v666
    %2623 = vmatpush.bf16.msra.mxu0 %v662
    %2624 = vmatpush.bf16.msra.mxu0 %v658
    %2625 = vmatmul.bf16.gmra.mxu0 %v2402
    %v2626 = vpop.f32.mrf.mxu0
    %v2627 = vadd.f32 0.0, %v2626
    %v2628 = vpop.f32.mrf.mxu0
    %2629 = vdwg.mxu0
    %v2630 = vadd.f32 %v2574, %v2588
    %v2631 = vadd.f32 %v2575, %v2601
    %v2632 = vadd.f32 %v2576, %v2614
    %v2633 = vadd.f32 %v2577, %v2627
    %v2634 = vxor.u32 %v2630, 2147483648
    %v2635 = vxor.u32 %v2631, 2147483648
    %v2636 = vxor.u32 %v2632, 2147483648
    %v2637 = vmul.f32 %v2634, 1.442695
    %v2638 = vpow.pop %v2637
    %v2639 = vmul.f32 %v2635, 1.442695
    %v2640 = vpow.pop %v2639
    %v2641 = vmul.f32 %v2636, 1.442695
    %v2642 = vpow.pop %v2641
    %v2643 = vadd.f32 %v2638, 1.0
    %v2644 = vadd.f32 %v2640, 1.0
    %v2645 = vadd.f32 %v2642, 1.0
    %v2646 = vrcp.pop %v2643
    %v2647 = vmul.f32 %v2643, %v2646
    %v2648 = vsub.f32 1.0, %v2647
    %v2649 = vmul.f32 %v2646, %v2648
    %v2650 = vadd.f32 %v2646, %v2649
    %vm2651 = vweird.f32 %v2643
    %vm2652 = vweird.f32 %v2646
    %vm2653 = vmor %vm2651, %vm2652
    %v2654 = vsel %vm2653, %v2646, %v2650
    %v2655 = vand.u32 2147483647, %v2643
    %vm2656 = vcmp.eq.f32.partialorder %v2655, 8.507059e+37
    %v2657 = vand.u32 %v2643, 2147483648
    %v2658 = vor.u32 1.1754944e-38, %v2657
    %v2659 = vsel %vm2656, %v2658, %v2654
    %v2660 = vmul.f32 1.0, %v2659
    %v2661 = vrcp.pop %v2644
    %v2662 = vmul.f32 %v2644, %v2661
    %v2663 = vsub.f32 1.0, %v2662
    %v2664 = vmul.f32 %v2661, %v2663
    %v2665 = vadd.f32 %v2661, %v2664
    %vm2666 = vweird.f32 %v2644
    %vm2667 = vweird.f32 %v2661
    %vm2668 = vmor %vm2666, %vm2667
    %v2669 = vsel %vm2668, %v2661, %v2665
    %v2670 = vand.u32 2147483647, %v2644
    %vm2671 = vcmp.eq.f32.partialorder %v2670, 8.507059e+37
    %v2672 = vand.u32 %v2644, 2147483648
    %v2673 = vor.u32 1.1754944e-38, %v2672
    %v2674 = vsel %vm2671, %v2673, %v2669
    %v2675 = vmul.f32 1.0, %v2674
    %v2676 = vrcp.pop %v2645
    %v2677 = vmul.f32 %v2645, %v2676
    %v2678 = vsub.f32 1.0, %v2677
    %v2679 = vmul.f32 %v2676, %v2678
    %v2680 = vadd.f32 %v2676, %v2679
    %vm2681 = vweird.f32 %v2645
    %vm2682 = vweird.f32 %v2676
    %vm2683 = vmor %vm2681, %vm2682
    %v2684 = vsel %vm2683, %v2676, %v2680
    %v2685 = vand.u32 2147483647, %v2645
    %vm2686 = vcmp.eq.f32.partialorder %v2685, 8.507059e+37
    %v2687 = vand.u32 %v2645, 2147483648
    %v2688 = vor.u32 1.1754944e-38, %v2687
    %v2689 = vsel %vm2686, %v2688, %v2684
    %v2690 = vmul.f32 1.0, %v2689
    %v2691 = vtanh.pop %v2633
    %v2692 = vmul.f32 %v2675, %v2399
    %v2693 = vmul.f32 %v2660, %v2691
    %v2694 = vadd.f32 %v2692, %v2693
    %v2695 = vtanh.pop %v2694
    %v2696 = vmul.f32 %v2690, %v2695
    %v2697 = vpack.c.bf16 %v2696, %v2696
    %2698 = vmatpush.bf16.msra.mxu0 %v1123
    %2699 = vmatpush.bf16.msra.mxu0 %v1119
    %2700 = vmatpush.bf16.msra.mxu0 %v1115
    %2701 = vmatpush.bf16.msra.mxu0 %v1111
    %2702 = vmatpush.bf16.msra.mxu0 %v1107
    %2703 = vmatpush.bf16.msra.mxu0 %v1103
    %2704 = vmatpush.bf16.msra.mxu0 %v1099
    %2705 = vmatpush.bf16.msra.mxu0 %v1095
    %2706 = vmatmul.bf16.gmra.mxu0 %v2697
    %v2707 = vpop.f32.mrf.mxu0
    %v2708 = vadd.f32 %v512, %v2707
    %v2709 = vpop.f32.mrf.mxu0
    %2710 = vdwg.mxu0
    %2711 = vmatpush.bf16.msra.mxu0 %v1155
    %2712 = vmatpush.bf16.msra.mxu0 %v1151
    %2713 = vmatpush.bf16.msra.mxu0 %v1147
    %2714 = vmatpush.bf16.msra.mxu0 %v1143
    %2715 = vmatpush.bf16.msra.mxu0 %v1139
    %2716 = vmatpush.bf16.msra.mxu0 %v1135
    %2717 = vmatpush.bf16.msra.mxu0 %v1131
    %2718 = vmatpush.bf16.msra.mxu0 %v1127
    %2719 = vmatmul.bf16.gmra.mxu0 %v2570
    %v2720 = vpop.f32.mrf.mxu0
    %v2721 = vadd.f32 %v2708, %v2720
    %v2722 = vpop.f32.mrf.mxu0
    %2723 = vdwg.mxu0
    %2724 = vmatpush.bf16.msra.mxu0 %v1124
    %2725 = vmatpush.bf16.msra.mxu0 %v1120
    %2726 = vmatpush.bf16.msra.mxu0 %v1116
    %2727 = vmatpush.bf16.msra.mxu0 %v1112
    %2728 = vmatpush.bf16.msra.mxu0 %v1108
    %2729 = vmatpush.bf16.msra.mxu0 %v1104
    %2730 = vmatpush.bf16.msra.mxu0 %v1100
    %2731 = vmatpush.bf16.msra.mxu0 %v1096
    %2732 = vmatmul.bf16.gmra.mxu0 %v2697
    %v2733 = vpop.f32.mrf.mxu0
    %v2734 = vadd.f32 %v513, %v2733
    %v2735 = vpop.f32.mrf.mxu0
    %2736 = vdwg.mxu0
    %2737 = vmatpush.bf16.msra.mxu0 %v1156
    %2738 = vmatpush.bf16.msra.mxu0 %v1152
    %2739 = vmatpush.bf16.msra.mxu0 %v1148
    %2740 = vmatpush.bf16.msra.mxu0 %v1144
    %2741 = vmatpush.bf16.msra.mxu0 %v1140
    %2742 = vmatpush.bf16.msra.mxu0 %v1136
    %2743 = vmatpush.bf16.msra.mxu0 %v1132
    %2744 = vmatpush.bf16.msra.mxu0 %v1128
    %2745 = vmatmul.bf16.gmra.mxu0 %v2570
    %v2746 = vpop.f32.mrf.mxu0
    %v2747 = vadd.f32 %v2734, %v2746
    %v2748 = vpop.f32.mrf.mxu0
    %2749 = vdwg.mxu0
    %2750 = vmatpush.bf16.msra.mxu0 %v1125
    %2751 = vmatpush.bf16.msra.mxu0 %v1121
    %2752 = vmatpush.bf16.msra.mxu0 %v1117
    %2753 = vmatpush.bf16.msra.mxu0 %v1113
    %2754 = vmatpush.bf16.msra.mxu0 %v1109
    %2755 = vmatpush.bf16.msra.mxu0 %v1105
    %2756 = vmatpush.bf16.msra.mxu0 %v1101
    %2757 = vmatpush.bf16.msra.mxu0 %v1097
    %2758 = vmatmul.bf16.gmra.mxu0 %v2697
    %v2759 = vpop.f32.mrf.mxu0
    %v2760 = vadd.f32 %v514, %v2759
    %v2761 = vpop.f32.mrf.mxu0
    %2762 = vdwg.mxu0
    %2763 = vmatpush.bf16.msra.mxu0 %v1157
    %2764 = vmatpush.bf16.msra.mxu0 %v1153
    %2765 = vmatpush.bf16.msra.mxu0 %v1149
    %2766 = vmatpush.bf16.msra.mxu0 %v1145
    %2767 = vmatpush.bf16.msra.mxu0 %v1141
    %2768 = vmatpush.bf16.msra.mxu0 %v1137
    %2769 = vmatpush.bf16.msra.mxu0 %v1133
    %2770 = vmatpush.bf16.msra.mxu0 %v1129
    %2771 = vmatmul.bf16.gmra.mxu0 %v2570
    %v2772 = vpop.f32.mrf.mxu0
    %v2773 = vadd.f32 %v2760, %v2772
    %v2774 = vpop.f32.mrf.mxu0
    %2775 = vdwg.mxu0
    %2776 = vmatpush.bf16.msra.mxu0 %v1126
    %2777 = vmatpush.bf16.msra.mxu0 %v1122
    %2778 = vmatpush.bf16.msra.mxu0 %v1118
    %2779 = vmatpush.bf16.msra.mxu0 %v1114
    %2780 = vmatpush.bf16.msra.mxu0 %v1110
    %2781 = vmatpush.bf16.msra.mxu0 %v1106
    %2782 = vmatpush.bf16.msra.mxu0 %v1102
    %2783 = vmatpush.bf16.msra.mxu0 %v1098
    %2784 = vmatmul.bf16.gmra.mxu0 %v2697
    %v2785 = vpop.f32.mrf.mxu0
    %v2786 = vadd.f32 %v515, %v2785
    %v2787 = vpop.f32.mrf.mxu0
    %2788 = vdwg.mxu0
    %2789 = vmatpush.bf16.msra.mxu0 %v1158
    %2790 = vmatpush.bf16.msra.mxu0 %v1154
    %2791 = vmatpush.bf16.msra.mxu0 %v1150
    %2792 = vmatpush.bf16.msra.mxu0 %v1146
    %2793 = vmatpush.bf16.msra.mxu0 %v1142
    %2794 = vmatpush.bf16.msra.mxu0 %v1138
    %2795 = vmatpush.bf16.msra.mxu0 %v1134
    %2796 = vmatpush.bf16.msra.mxu0 %v1130
    %2797 = vmatmul.bf16.gmra.mxu0 %v2570
    %v2798 = vpop.f32.mrf.mxu0
    %v2799 = vadd.f32 %v2786, %v2798
    %v2800 = vpop.f32.mrf.mxu0
    %2801 = vdwg.mxu0
    %v2802 = vxor.u32 %v2721, 2147483648
    %v2803 = vxor.u32 %v2747, 2147483648
    %v2804 = vxor.u32 %v2773, 2147483648
    %v2805 = vmul.f32 %v2802, 1.442695
    %v2806 = vpow.pop %v2805
    %v2807 = vmul.f32 %v2803, 1.442695
    %v2808 = vpow.pop %v2807
    %v2809 = vmul.f32 %v2804, 1.442695
    %v2810 = vpow.pop %v2809
    %v2811 = vadd.f32 %v2806, 1.0
    %v2812 = vadd.f32 %v2808, 1.0
    %v2813 = vadd.f32 %v2810, 1.0
    %v2814 = vrcp.pop %v2811
    %v2815 = vmul.f32 %v2811, %v2814
    %v2816 = vsub.f32 1.0, %v2815
    %v2817 = vmul.f32 %v2814, %v2816
    %v2818 = vadd.f32 %v2814, %v2817
    %vm2819 = vweird.f32 %v2811
    %vm2820 = vweird.f32 %v2814
    %vm2821 = vmor %vm2819, %vm2820
    %v2822 = vsel %vm2821, %v2814, %v2818
    %v2823 = vand.u32 2147483647, %v2811
    %vm2824 = vcmp.eq.f32.partialorder %v2823, 8.507059e+37
    %v2825 = vand.u32 %v2811, 2147483648
    %v2826 = vor.u32 1.1754944e-38, %v2825
    %v2827 = vsel %vm2824, %v2826, %v2822
    %v2828 = vmul.f32 1.0, %v2827
    %v2829 = vrcp.pop %v2812
    %v2830 = vmul.f32 %v2812, %v2829
    %v2831 = vsub.f32 1.0, %v2830
    %v2832 = vmul.f32 %v2829, %v2831
    %v2833 = vadd.f32 %v2829, %v2832
    %vm2834 = vweird.f32 %v2812
    %vm2835 = vweird.f32 %v2829
    %vm2836 = vmor %vm2834, %vm2835
    %v2837 = vsel %vm2836, %v2829, %v2833
    %v2838 = vand.u32 2147483647, %v2812
    %vm2839 = vcmp.eq.f32.partialorder %v2838, 8.507059e+37
    %v2840 = vand.u32 %v2812, 2147483648
    %v2841 = vor.u32 1.1754944e-38, %v2840
    %v2842 = vsel %vm2839, %v2841, %v2837
    %v2843 = vmul.f32 1.0, %v2842
    %v2844 = vrcp.pop %v2813
    %v2845 = vmul.f32 %v2813, %v2844
    %v2846 = vsub.f32 1.0, %v2845
    %v2847 = vmul.f32 %v2844, %v2846
    %v2848 = vadd.f32 %v2844, %v2847
    %vm2849 = vweird.f32 %v2813
    %vm2850 = vweird.f32 %v2844
    %vm2851 = vmor %vm2849, %vm2850
    %v2852 = vsel %vm2851, %v2844, %v2848
    %v2853 = vand.u32 2147483647, %v2813
    %vm2854 = vcmp.eq.f32.partialorder %v2853, 8.507059e+37
    %v2855 = vand.u32 %v2813, 2147483648
    %v2856 = vor.u32 1.1754944e-38, %v2855
    %v2857 = vsel %vm2854, %v2856, %v2852
    %v2858 = vmul.f32 1.0, %v2857
    %v2859 = vtanh.pop %v2799
    %v2860 = vmul.f32 %v2843, %v2567
    %v2861 = vmul.f32 %v2828, %v2859
    %v2862 = vadd.f32 %v2860, %v2861
    %v2863 = vtanh.pop %v2862
    %v2864 = vmul.f32 %v2858, %v2863
    %v2865 = vpack.c.bf16 %v2864, %v2864
    %s2866 = smul.u32 6, 4
    %s2867 = smul.addr %s2866, 8
    %s2868 = scalar_lea.vmem [#allocation2], %s2867
    %v2869 = vld [vmem:[%s2868] sm:$0xff]
    %v2870 = vld [vmem:[%s2868 + $0x8] sm:$0xff]
    %v2871 = vld [vmem:[%s2868 + $0x10] sm:$0xff]
    %v2872 = vld [vmem:[%s2868 + $0x18] sm:$0xff]
    %2873 = vmatpush.bf16.msra.mxu0 %v683
    %2874 = vmatpush.bf16.msra.mxu0 %v679
    %2875 = vmatpush.bf16.msra.mxu0 %v675
    %2876 = vmatpush.bf16.msra.mxu0 %v671
    %2877 = vmatpush.bf16.msra.mxu0 %v667
    %2878 = vmatpush.bf16.msra.mxu0 %v663
    %2879 = vmatpush.bf16.msra.mxu0 %v659
    %2880 = vmatpush.bf16.msra.mxu0 %v655
    %2881 = vmatmul.bf16.gmra.mxu0 %v2697
    %v2882 = vpop.f32.mrf.mxu0
    %v2883 = vadd.f32 0.0, %v2882
    %v2884 = vpop.f32.mrf.mxu0
    %2885 = vdwg.mxu0
    %2886 = vmatpush.bf16.msra.mxu0 %v684
    %2887 = vmatpush.bf16.msra.mxu0 %v680
    %2888 = vmatpush.bf16.msra.mxu0 %v676
    %2889 = vmatpush.bf16.msra.mxu0 %v672
    %2890 = vmatpush.bf16.msra.mxu0 %v668
    %2891 = vmatpush.bf16.msra.mxu0 %v664
    %2892 = vmatpush.bf16.msra.mxu0 %v660
    %2893 = vmatpush.bf16.msra.mxu0 %v656
    %2894 = vmatmul.bf16.gmra.mxu0 %v2697
    %v2895 = vpop.f32.mrf.mxu0
    %v2896 = vadd.f32 0.0, %v2895
    %v2897 = vpop.f32.mrf.mxu0
    %2898 = vdwg.mxu0
    %2899 = vmatpush.bf16.msra.mxu0 %v685
    %2900 = vmatpush.bf16.msra.mxu0 %v681
    %2901 = vmatpush.bf16.msra.mxu0 %v677
    %2902 = vmatpush.bf16.msra.mxu0 %v673
    %2903 = vmatpush.bf16.msra.mxu0 %v669
    %2904 = vmatpush.bf16.msra.mxu0 %v665
    %2905 = vmatpush.bf16.msra.mxu0 %v661
    %2906 = vmatpush.bf16.msra.mxu0 %v657
    %2907 = vmatmul.bf16.gmra.mxu0 %v2697
    %v2908 = vpop.f32.mrf.mxu0
    %v2909 = vadd.f32 0.0, %v2908
    %v2910 = vpop.f32.mrf.mxu0
    %2911 = vdwg.mxu0
    %2912 = vmatpush.bf16.msra.mxu0 %v686
    %2913 = vmatpush.bf16.msra.mxu0 %v682
    %2914 = vmatpush.bf16.msra.mxu0 %v678
    %2915 = vmatpush.bf16.msra.mxu0 %v674
    %2916 = vmatpush.bf16.msra.mxu0 %v670
    %2917 = vmatpush.bf16.msra.mxu0 %v666
    %2918 = vmatpush.bf16.msra.mxu0 %v662
    %2919 = vmatpush.bf16.msra.mxu0 %v658
    %2920 = vmatmul.bf16.gmra.mxu0 %v2697
    %v2921 = vpop.f32.mrf.mxu0
    %v2922 = vadd.f32 0.0, %v2921
    %v2923 = vpop.f32.mrf.mxu0
    %2924 = vdwg.mxu0
    %v2925 = vadd.f32 %v2869, %v2883
    %v2926 = vadd.f32 %v2870, %v2896
    %v2927 = vadd.f32 %v2871, %v2909
    %v2928 = vadd.f32 %v2872, %v2922
    %v2929 = vxor.u32 %v2925, 2147483648
    %v2930 = vxor.u32 %v2926, 2147483648
    %v2931 = vxor.u32 %v2927, 2147483648
    %v2932 = vmul.f32 %v2929, 1.442695
    %v2933 = vpow.pop %v2932
    %v2934 = vmul.f32 %v2930, 1.442695
    %v2935 = vpow.pop %v2934
    %v2936 = vmul.f32 %v2931, 1.442695
    %v2937 = vpow.pop %v2936
    %v2938 = vadd.f32 %v2933, 1.0
    %v2939 = vadd.f32 %v2935, 1.0
    %v2940 = vadd.f32 %v2937, 1.0
    %v2941 = vrcp.pop %v2938
    %v2942 = vmul.f32 %v2938, %v2941
    %v2943 = vsub.f32 1.0, %v2942
    %v2944 = vmul.f32 %v2941, %v2943
    %v2945 = vadd.f32 %v2941, %v2944
    %vm2946 = vweird.f32 %v2938
    %vm2947 = vweird.f32 %v2941
    %vm2948 = vmor %vm2946, %vm2947
    %v2949 = vsel %vm2948, %v2941, %v2945
    %v2950 = vand.u32 2147483647, %v2938
    %vm2951 = vcmp.eq.f32.partialorder %v2950, 8.507059e+37
    %v2952 = vand.u32 %v2938, 2147483648
    %v2953 = vor.u32 1.1754944e-38, %v2952
    %v2954 = vsel %vm2951, %v2953, %v2949
    %v2955 = vmul.f32 1.0, %v2954
    %v2956 = vrcp.pop %v2939
    %v2957 = vmul.f32 %v2939, %v2956
    %v2958 = vsub.f32 1.0, %v2957
    %v2959 = vmul.f32 %v2956, %v2958
    %v2960 = vadd.f32 %v2956, %v2959
    %vm2961 = vweird.f32 %v2939
    %vm2962 = vweird.f32 %v2956
    %vm2963 = vmor %vm2961, %vm2962
    %v2964 = vsel %vm2963, %v2956, %v2960
    %v2965 = vand.u32 2147483647, %v2939
    %vm2966 = vcmp.eq.f32.partialorder %v2965, 8.507059e+37
    %v2967 = vand.u32 %v2939, 2147483648
    %v2968 = vor.u32 1.1754944e-38, %v2967
    %v2969 = vsel %vm2966, %v2968, %v2964
    %v2970 = vmul.f32 1.0, %v2969
    %v2971 = vrcp.pop %v2940
    %v2972 = vmul.f32 %v2940, %v2971
    %v2973 = vsub.f32 1.0, %v2972
    %v2974 = vmul.f32 %v2971, %v2973
    %v2975 = vadd.f32 %v2971, %v2974
    %vm2976 = vweird.f32 %v2940
    %vm2977 = vweird.f32 %v2971
    %vm2978 = vmor %vm2976, %vm2977
    %v2979 = vsel %vm2978, %v2971, %v2975
    %v2980 = vand.u32 2147483647, %v2940
    %vm2981 = vcmp.eq.f32.partialorder %v2980, 8.507059e+37
    %v2982 = vand.u32 %v2940, 2147483648
    %v2983 = vor.u32 1.1754944e-38, %v2982
    %v2984 = vsel %vm2981, %v2983, %v2979
    %v2985 = vmul.f32 1.0, %v2984
    %v2986 = vtanh.pop %v2928
    %v2987 = vmul.f32 %v2970, %v2694
    %v2988 = vmul.f32 %v2955, %v2986
    %v2989 = vadd.f32 %v2987, %v2988
    %v2990 = vtanh.pop %v2989
    %v2991 = vmul.f32 %v2985, %v2990
    %v2992 = vpack.c.bf16 %v2991, %v2991
    %2993 = vmatpush.bf16.msra.mxu0 %v1123
    %2994 = vmatpush.bf16.msra.mxu0 %v1119
    %2995 = vmatpush.bf16.msra.mxu0 %v1115
    %2996 = vmatpush.bf16.msra.mxu0 %v1111
    %2997 = vmatpush.bf16.msra.mxu0 %v1107
    %2998 = vmatpush.bf16.msra.mxu0 %v1103
    %2999 = vmatpush.bf16.msra.mxu0 %v1099
    %3000 = vmatpush.bf16.msra.mxu0 %v1095
    %3001 = vmatmul.bf16.gmra.mxu0 %v2992
    %v3002 = vpop.f32.mrf.mxu0
    %v3003 = vadd.f32 %v512, %v3002
    %v3004 = vpop.f32.mrf.mxu0
    %3005 = vdwg.mxu0
    %3006 = vmatpush.bf16.msra.mxu0 %v1155
    %3007 = vmatpush.bf16.msra.mxu0 %v1151
    %3008 = vmatpush.bf16.msra.mxu0 %v1147
    %3009 = vmatpush.bf16.msra.mxu0 %v1143
    %3010 = vmatpush.bf16.msra.mxu0 %v1139
    %3011 = vmatpush.bf16.msra.mxu0 %v1135
    %3012 = vmatpush.bf16.msra.mxu0 %v1131
    %3013 = vmatpush.bf16.msra.mxu0 %v1127
    %3014 = vmatmul.bf16.gmra.mxu0 %v2865
    %v3015 = vpop.f32.mrf.mxu0
    %v3016 = vadd.f32 %v3003, %v3015
    %v3017 = vpop.f32.mrf.mxu0
    %3018 = vdwg.mxu0
    %3019 = vmatpush.bf16.msra.mxu0 %v1124
    %3020 = vmatpush.bf16.msra.mxu0 %v1120
    %3021 = vmatpush.bf16.msra.mxu0 %v1116
    %3022 = vmatpush.bf16.msra.mxu0 %v1112
    %3023 = vmatpush.bf16.msra.mxu0 %v1108
    %3024 = vmatpush.bf16.msra.mxu0 %v1104
    %3025 = vmatpush.bf16.msra.mxu0 %v1100
    %3026 = vmatpush.bf16.msra.mxu0 %v1096
    %3027 = vmatmul.bf16.gmra.mxu0 %v2992
    %v3028 = vpop.f32.mrf.mxu0
    %v3029 = vadd.f32 %v513, %v3028
    %v3030 = vpop.f32.mrf.mxu0
    %3031 = vdwg.mxu0
    %3032 = vmatpush.bf16.msra.mxu0 %v1156
    %3033 = vmatpush.bf16.msra.mxu0 %v1152
    %3034 = vmatpush.bf16.msra.mxu0 %v1148
    %3035 = vmatpush.bf16.msra.mxu0 %v1144
    %3036 = vmatpush.bf16.msra.mxu0 %v1140
    %3037 = vmatpush.bf16.msra.mxu0 %v1136
    %3038 = vmatpush.bf16.msra.mxu0 %v1132
    %3039 = vmatpush.bf16.msra.mxu0 %v1128
    %3040 = vmatmul.bf16.gmra.mxu0 %v2865
    %v3041 = vpop.f32.mrf.mxu0
    %v3042 = vadd.f32 %v3029, %v3041
    %v3043 = vpop.f32.mrf.mxu0
    %3044 = vdwg.mxu0
    %3045 = vmatpush.bf16.msra.mxu0 %v1125
    %3046 = vmatpush.bf16.msra.mxu0 %v1121
    %3047 = vmatpush.bf16.msra.mxu0 %v1117
    %3048 = vmatpush.bf16.msra.mxu0 %v1113
    %3049 = vmatpush.bf16.msra.mxu0 %v1109
    %3050 = vmatpush.bf16.msra.mxu0 %v1105
    %3051 = vmatpush.bf16.msra.mxu0 %v1101
    %3052 = vmatpush.bf16.msra.mxu0 %v1097
    %3053 = vmatmul.bf16.gmra.mxu0 %v2992
    %v3054 = vpop.f32.mrf.mxu0
    %v3055 = vadd.f32 %v514, %v3054
    %v3056 = vpop.f32.mrf.mxu0
    %3057 = vdwg.mxu0
    %3058 = vmatpush.bf16.msra.mxu0 %v1157
    %3059 = vmatpush.bf16.msra.mxu0 %v1153
    %3060 = vmatpush.bf16.msra.mxu0 %v1149
    %3061 = vmatpush.bf16.msra.mxu0 %v1145
    %3062 = vmatpush.bf16.msra.mxu0 %v1141
    %3063 = vmatpush.bf16.msra.mxu0 %v1137
    %3064 = vmatpush.bf16.msra.mxu0 %v1133
    %3065 = vmatpush.bf16.msra.mxu0 %v1129
    %3066 = vmatmul.bf16.gmra.mxu0 %v2865
    %v3067 = vpop.f32.mrf.mxu0
    %v3068 = vadd.f32 %v3055, %v3067
    %v3069 = vpop.f32.mrf.mxu0
    %3070 = vdwg.mxu0
    %3071 = vmatpush.bf16.msra.mxu0 %v1126
    %3072 = vmatpush.bf16.msra.mxu0 %v1122
    %3073 = vmatpush.bf16.msra.mxu0 %v1118
    %3074 = vmatpush.bf16.msra.mxu0 %v1114
    %3075 = vmatpush.bf16.msra.mxu0 %v1110
    %3076 = vmatpush.bf16.msra.mxu0 %v1106
    %3077 = vmatpush.bf16.msra.mxu0 %v1102
    %3078 = vmatpush.bf16.msra.mxu0 %v1098
    %3079 = vmatmul.bf16.gmra.mxu0 %v2992
    %v3080 = vpop.f32.mrf.mxu0
    %v3081 = vadd.f32 %v515, %v3080
    %v3082 = vpop.f32.mrf.mxu0
    %3083 = vdwg.mxu0
    %3084 = vmatpush.bf16.msra.mxu0 %v1158
    %3085 = vmatpush.bf16.msra.mxu0 %v1154
    %3086 = vmatpush.bf16.msra.mxu0 %v1150
    %3087 = vmatpush.bf16.msra.mxu0 %v1146
    %3088 = vmatpush.bf16.msra.mxu0 %v1142
    %3089 = vmatpush.bf16.msra.mxu0 %v1138
    %3090 = vmatpush.bf16.msra.mxu0 %v1134
    %3091 = vmatpush.bf16.msra.mxu0 %v1130
    %3092 = vmatmul.bf16.gmra.mxu0 %v2865
    %v3093 = vpop.f32.mrf.mxu0
    %v3094 = vadd.f32 %v3081, %v3093
    %v3095 = vpop.f32.mrf.mxu0
    %3096 = vdwg.mxu0
    %v3097 = vxor.u32 %v3016, 2147483648
    %v3098 = vxor.u32 %v3042, 2147483648
    %v3099 = vxor.u32 %v3068, 2147483648
    %v3100 = vmul.f32 %v3097, 1.442695
    %v3101 = vpow.pop %v3100
    %v3102 = vmul.f32 %v3098, 1.442695
    %v3103 = vpow.pop %v3102
    %v3104 = vmul.f32 %v3099, 1.442695
    %v3105 = vpow.pop %v3104
    %v3106 = vadd.f32 %v3101, 1.0
    %v3107 = vadd.f32 %v3103, 1.0
    %v3108 = vadd.f32 %v3105, 1.0
    %v3109 = vrcp.pop %v3106
    %v3110 = vmul.f32 %v3106, %v3109
    %v3111 = vsub.f32 1.0, %v3110
    %v3112 = vmul.f32 %v3109, %v3111
    %v3113 = vadd.f32 %v3109, %v3112
    %vm3114 = vweird.f32 %v3106
    %vm3115 = vweird.f32 %v3109
    %vm3116 = vmor %vm3114, %vm3115
    %v3117 = vsel %vm3116, %v3109, %v3113
    %v3118 = vand.u32 2147483647, %v3106
    %vm3119 = vcmp.eq.f32.partialorder %v3118, 8.507059e+37
    %v3120 = vand.u32 %v3106, 2147483648
    %v3121 = vor.u32 1.1754944e-38, %v3120
    %v3122 = vsel %vm3119, %v3121, %v3117
    %v3123 = vmul.f32 1.0, %v3122
    %v3124 = vrcp.pop %v3107
    %v3125 = vmul.f32 %v3107, %v3124
    %v3126 = vsub.f32 1.0, %v3125
    %v3127 = vmul.f32 %v3124, %v3126
    %v3128 = vadd.f32 %v3124, %v3127
    %vm3129 = vweird.f32 %v3107
    %vm3130 = vweird.f32 %v3124
    %vm3131 = vmor %vm3129, %vm3130
    %v3132 = vsel %vm3131, %v3124, %v3128
    %v3133 = vand.u32 2147483647, %v3107
    %vm3134 = vcmp.eq.f32.partialorder %v3133, 8.507059e+37
    %v3135 = vand.u32 %v3107, 2147483648
    %v3136 = vor.u32 1.1754944e-38, %v3135
    %v3137 = vsel %vm3134, %v3136, %v3132
    %v3138 = vmul.f32 1.0, %v3137
    %v3139 = vrcp.pop %v3108
    %v3140 = vmul.f32 %v3108, %v3139
    %v3141 = vsub.f32 1.0, %v3140
    %v3142 = vmul.f32 %v3139, %v3141
    %v3143 = vadd.f32 %v3139, %v3142
    %vm3144 = vweird.f32 %v3108
    %vm3145 = vweird.f32 %v3139
    %vm3146 = vmor %vm3144, %vm3145
    %v3147 = vsel %vm3146, %v3139, %v3143
    %v3148 = vand.u32 2147483647, %v3108
    %vm3149 = vcmp.eq.f32.partialorder %v3148, 8.507059e+37
    %v3150 = vand.u32 %v3108, 2147483648
    %v3151 = vor.u32 1.1754944e-38, %v3150
    %v3152 = vsel %vm3149, %v3151, %v3147
    %v3153 = vmul.f32 1.0, %v3152
    %v3154 = vtanh.pop %v3094
    %v3155 = vmul.f32 %v3138, %v2862
    %v3156 = vmul.f32 %v3123, %v3154
    %v3157 = vadd.f32 %v3155, %v3156
    %v3158 = vtanh.pop %v3157
    %v3159 = vmul.f32 %v3153, %v3158
    %v3160 = vpack.c.bf16 %v3159, %v3159
    %s3161 = smul.u32 7, 4
    %s3162 = smul.addr %s3161, 8
    %s3163 = scalar_lea.vmem [#allocation2], %s3162
    %v3164 = vld [vmem:[%s3163] sm:$0xff]
    %v3165 = vld [vmem:[%s3163 + $0x8] sm:$0xff]
    %v3166 = vld [vmem:[%s3163 + $0x10] sm:$0xff]
    %v3167 = vld [vmem:[%s3163 + $0x18] sm:$0xff]
    %3168 = vmatpush.bf16.msra.mxu0 %v683
    %3169 = vmatpush.bf16.msra.mxu0 %v679
    %3170 = vmatpush.bf16.msra.mxu0 %v675
    %3171 = vmatpush.bf16.msra.mxu0 %v671
    %3172 = vmatpush.bf16.msra.mxu0 %v667
    %3173 = vmatpush.bf16.msra.mxu0 %v663
    %3174 = vmatpush.bf16.msra.mxu0 %v659
    %3175 = vmatpush.bf16.msra.mxu0 %v655
    %3176 = vmatmul.bf16.gmra.mxu0 %v2992
    %v3177 = vpop.f32.mrf.mxu0
    %v3178 = vadd.f32 0.0, %v3177
    %v3179 = vpop.f32.mrf.mxu0
    %3180 = vdwg.mxu0
    %3181 = vmatpush.bf16.msra.mxu0 %v684
    %3182 = vmatpush.bf16.msra.mxu0 %v680
    %3183 = vmatpush.bf16.msra.mxu0 %v676
    %3184 = vmatpush.bf16.msra.mxu0 %v672
    %3185 = vmatpush.bf16.msra.mxu0 %v668
    %3186 = vmatpush.bf16.msra.mxu0 %v664
    %3187 = vmatpush.bf16.msra.mxu0 %v660
    %3188 = vmatpush.bf16.msra.mxu0 %v656
    %3189 = vmatmul.bf16.gmra.mxu0 %v2992
    %v3190 = vpop.f32.mrf.mxu0
    %v3191 = vadd.f32 0.0, %v3190
    %v3192 = vpop.f32.mrf.mxu0
    %3193 = vdwg.mxu0
    %3194 = vmatpush.bf16.msra.mxu0 %v685
    %3195 = vmatpush.bf16.msra.mxu0 %v681
    %3196 = vmatpush.bf16.msra.mxu0 %v677
    %3197 = vmatpush.bf16.msra.mxu0 %v673
    %3198 = vmatpush.bf16.msra.mxu0 %v669
    %3199 = vmatpush.bf16.msra.mxu0 %v665
    %3200 = vmatpush.bf16.msra.mxu0 %v661
    %3201 = vmatpush.bf16.msra.mxu0 %v657
    %3202 = vmatmul.bf16.gmra.mxu0 %v2992
    %v3203 = vpop.f32.mrf.mxu0
    %v3204 = vadd.f32 0.0, %v3203
    %v3205 = vpop.f32.mrf.mxu0
    %3206 = vdwg.mxu0
    %3207 = vmatpush.bf16.msra.mxu0 %v686
    %3208 = vmatpush.bf16.msra.mxu0 %v682
    %3209 = vmatpush.bf16.msra.mxu0 %v678
    %3210 = vmatpush.bf16.msra.mxu0 %v674
    %3211 = vmatpush.bf16.msra.mxu0 %v670
    %3212 = vmatpush.bf16.msra.mxu0 %v666
    %3213 = vmatpush.bf16.msra.mxu0 %v662
    %3214 = vmatpush.bf16.msra.mxu0 %v658
    %3215 = vmatmul.bf16.gmra.mxu0 %v2992
    %v3216 = vpop.f32.mrf.mxu0
    %v3217 = vadd.f32 0.0, %v3216
    %v3218 = vpop.f32.mrf.mxu0
    %3219 = vdwg.mxu0
    %v3220 = vadd.f32 %v3164, %v3178
    %v3221 = vadd.f32 %v3165, %v3191
    %v3222 = vadd.f32 %v3166, %v3204
    %v3223 = vadd.f32 %v3167, %v3217
    %v3224 = vxor.u32 %v3220, 2147483648
    %v3225 = vxor.u32 %v3221, 2147483648
    %v3226 = vxor.u32 %v3222, 2147483648
    %v3227 = vmul.f32 %v3224, 1.442695
    %v3228 = vpow.pop %v3227
    %v3229 = vmul.f32 %v3225, 1.442695
    %v3230 = vpow.pop %v3229
    %v3231 = vmul.f32 %v3226, 1.442695
    %v3232 = vpow.pop %v3231
    %v3233 = vadd.f32 %v3228, 1.0
    %v3234 = vadd.f32 %v3230, 1.0
    %v3235 = vadd.f32 %v3232, 1.0
    %v3236 = vrcp.pop %v3233
    %v3237 = vmul.f32 %v3233, %v3236
    %v3238 = vsub.f32 1.0, %v3237
    %v3239 = vmul.f32 %v3236, %v3238
    %v3240 = vadd.f32 %v3236, %v3239
    %vm3241 = vweird.f32 %v3233
    %vm3242 = vweird.f32 %v3236
    %vm3243 = vmor %vm3241, %vm3242
    %v3244 = vsel %vm3243, %v3236, %v3240
    %v3245 = vand.u32 2147483647, %v3233
    %vm3246 = vcmp.eq.f32.partialorder %v3245, 8.507059e+37
    %v3247 = vand.u32 %v3233, 2147483648
    %v3248 = vor.u32 1.1754944e-38, %v3247
    %v3249 = vsel %vm3246, %v3248, %v3244
    %v3250 = vmul.f32 1.0, %v3249
    %v3251 = vrcp.pop %v3234
    %v3252 = vmul.f32 %v3234, %v3251
    %v3253 = vsub.f32 1.0, %v3252
    %v3254 = vmul.f32 %v3251, %v3253
    %v3255 = vadd.f32 %v3251, %v3254
    %vm3256 = vweird.f32 %v3234
    %vm3257 = vweird.f32 %v3251
    %vm3258 = vmor %vm3256, %vm3257
    %v3259 = vsel %vm3258, %v3251, %v3255
    %v3260 = vand.u32 2147483647, %v3234
    %vm3261 = vcmp.eq.f32.partialorder %v3260, 8.507059e+37
    %v3262 = vand.u32 %v3234, 2147483648
    %v3263 = vor.u32 1.1754944e-38, %v3262
    %v3264 = vsel %vm3261, %v3263, %v3259
    %v3265 = vmul.f32 1.0, %v3264
    %v3266 = vrcp.pop %v3235
    %v3267 = vmul.f32 %v3235, %v3266
    %v3268 = vsub.f32 1.0, %v3267
    %v3269 = vmul.f32 %v3266, %v3268
    %v3270 = vadd.f32 %v3266, %v3269
    %vm3271 = vweird.f32 %v3235
    %vm3272 = vweird.f32 %v3266
    %vm3273 = vmor %vm3271, %vm3272
    %v3274 = vsel %vm3273, %v3266, %v3270
    %v3275 = vand.u32 2147483647, %v3235
    %vm3276 = vcmp.eq.f32.partialorder %v3275, 8.507059e+37
    %v3277 = vand.u32 %v3235, 2147483648
    %v3278 = vor.u32 1.1754944e-38, %v3277
    %v3279 = vsel %vm3276, %v3278, %v3274
    %v3280 = vmul.f32 1.0, %v3279
    %v3281 = vtanh.pop %v3223
    %v3282 = vmul.f32 %v3265, %v2989
    %v3283 = vmul.f32 %v3250, %v3281
    %v3284 = vadd.f32 %v3282, %v3283
    %v3285 = vtanh.pop %v3284
    %v3286 = vmul.f32 %v3280, %v3285
    %v3287 = vpack.c.bf16 %v3286, %v3286
    %3288 = vmatpush.bf16.msra.mxu0 %v1123
    %3289 = vmatpush.bf16.msra.mxu0 %v1119
    %3290 = vmatpush.bf16.msra.mxu0 %v1115
    %3291 = vmatpush.bf16.msra.mxu0 %v1111
    %3292 = vmatpush.bf16.msra.mxu0 %v1107
    %3293 = vmatpush.bf16.msra.mxu0 %v1103
    %3294 = vmatpush.bf16.msra.mxu0 %v1099
    %3295 = vmatpush.bf16.msra.mxu0 %v1095
    %3296 = vmatmul.bf16.gmra.mxu0 %v3287
    %v3297 = vpop.f32.mrf.mxu0
    %v3298 = vadd.f32 %v512, %v3297
    %v3299 = vpop.f32.mrf.mxu0
    %3300 = vdwg.mxu0
    %3301 = vmatpush.bf16.msra.mxu0 %v1155
    %3302 = vmatpush.bf16.msra.mxu0 %v1151
    %3303 = vmatpush.bf16.msra.mxu0 %v1147
    %3304 = vmatpush.bf16.msra.mxu0 %v1143
    %3305 = vmatpush.bf16.msra.mxu0 %v1139
    %3306 = vmatpush.bf16.msra.mxu0 %v1135
    %3307 = vmatpush.bf16.msra.mxu0 %v1131
    %3308 = vmatpush.bf16.msra.mxu0 %v1127
    %3309 = vmatmul.bf16.gmra.mxu0 %v3160
    %v3310 = vpop.f32.mrf.mxu0
    %v3311 = vadd.f32 %v3298, %v3310
    %v3312 = vpop.f32.mrf.mxu0
    %3313 = vdwg.mxu0
    %3314 = vmatpush.bf16.msra.mxu0 %v1124
    %3315 = vmatpush.bf16.msra.mxu0 %v1120
    %3316 = vmatpush.bf16.msra.mxu0 %v1116
    %3317 = vmatpush.bf16.msra.mxu0 %v1112
    %3318 = vmatpush.bf16.msra.mxu0 %v1108
    %3319 = vmatpush.bf16.msra.mxu0 %v1104
    %3320 = vmatpush.bf16.msra.mxu0 %v1100
    %3321 = vmatpush.bf16.msra.mxu0 %v1096
    %3322 = vmatmul.bf16.gmra.mxu0 %v3287
    %v3323 = vpop.f32.mrf.mxu0
    %v3324 = vadd.f32 %v513, %v3323
    %v3325 = vpop.f32.mrf.mxu0
    %3326 = vdwg.mxu0
    %3327 = vmatpush.bf16.msra.mxu0 %v1156
    %3328 = vmatpush.bf16.msra.mxu0 %v1152
    %3329 = vmatpush.bf16.msra.mxu0 %v1148
    %3330 = vmatpush.bf16.msra.mxu0 %v1144
    %3331 = vmatpush.bf16.msra.mxu0 %v1140
    %3332 = vmatpush.bf16.msra.mxu0 %v1136
    %3333 = vmatpush.bf16.msra.mxu0 %v1132
    %3334 = vmatpush.bf16.msra.mxu0 %v1128
    %3335 = vmatmul.bf16.gmra.mxu0 %v3160
    %v3336 = vpop.f32.mrf.mxu0
    %v3337 = vadd.f32 %v3324, %v3336
    %v3338 = vpop.f32.mrf.mxu0
    %3339 = vdwg.mxu0
    %3340 = vmatpush.bf16.msra.mxu0 %v1125
    %3341 = vmatpush.bf16.msra.mxu0 %v1121
    %3342 = vmatpush.bf16.msra.mxu0 %v1117
    %3343 = vmatpush.bf16.msra.mxu0 %v1113
    %3344 = vmatpush.bf16.msra.mxu0 %v1109
    %3345 = vmatpush.bf16.msra.mxu0 %v1105
    %3346 = vmatpush.bf16.msra.mxu0 %v1101
    %3347 = vmatpush.bf16.msra.mxu0 %v1097
    %3348 = vmatmul.bf16.gmra.mxu0 %v3287
    %v3349 = vpop.f32.mrf.mxu0
    %v3350 = vadd.f32 %v514, %v3349
    %v3351 = vpop.f32.mrf.mxu0
    %3352 = vdwg.mxu0
    %3353 = vmatpush.bf16.msra.mxu0 %v1157
    %3354 = vmatpush.bf16.msra.mxu0 %v1153
    %3355 = vmatpush.bf16.msra.mxu0 %v1149
    %3356 = vmatpush.bf16.msra.mxu0 %v1145
    %3357 = vmatpush.bf16.msra.mxu0 %v1141
    %3358 = vmatpush.bf16.msra.mxu0 %v1137
    %3359 = vmatpush.bf16.msra.mxu0 %v1133
    %3360 = vmatpush.bf16.msra.mxu0 %v1129
    %3361 = vmatmul.bf16.gmra.mxu0 %v3160
    %v3362 = vpop.f32.mrf.mxu0
    %v3363 = vadd.f32 %v3350, %v3362
    %v3364 = vpop.f32.mrf.mxu0
    %3365 = vdwg.mxu0
    %3366 = vmatpush.bf16.msra.mxu0 %v1126
    %3367 = vmatpush.bf16.msra.mxu0 %v1122
    %3368 = vmatpush.bf16.msra.mxu0 %v1118
    %3369 = vmatpush.bf16.msra.mxu0 %v1114
    %3370 = vmatpush.bf16.msra.mxu0 %v1110
    %3371 = vmatpush.bf16.msra.mxu0 %v1106
    %3372 = vmatpush.bf16.msra.mxu0 %v1102
    %3373 = vmatpush.bf16.msra.mxu0 %v1098
    %3374 = vmatmul.bf16.gmra.mxu0 %v3287
    %v3375 = vpop.f32.mrf.mxu0
    %v3376 = vadd.f32 %v515, %v3375
    %v3377 = vpop.f32.mrf.mxu0
    %3378 = vdwg.mxu0
    %3379 = vmatpush.bf16.msra.mxu0 %v1158
    %3380 = vmatpush.bf16.msra.mxu0 %v1154
    %3381 = vmatpush.bf16.msra.mxu0 %v1150
    %3382 = vmatpush.bf16.msra.mxu0 %v1146
    %3383 = vmatpush.bf16.msra.mxu0 %v1142
    %3384 = vmatpush.bf16.msra.mxu0 %v1138
    %3385 = vmatpush.bf16.msra.mxu0 %v1134
    %3386 = vmatpush.bf16.msra.mxu0 %v1130
    %3387 = vmatmul.bf16.gmra.mxu0 %v3160
    %v3388 = vpop.f32.mrf.mxu0
    %v3389 = vadd.f32 %v3376, %v3388
    %v3390 = vpop.f32.mrf.mxu0
    %3391 = vdwg.mxu0
    %v3392 = vxor.u32 %v3311, 2147483648
    %v3393 = vxor.u32 %v3337, 2147483648
    %v3394 = vxor.u32 %v3363, 2147483648
    %v3395 = vmul.f32 %v3392, 1.442695
    %v3396 = vpow.pop %v3395
    %v3397 = vmul.f32 %v3393, 1.442695
    %v3398 = vpow.pop %v3397
    %v3399 = vmul.f32 %v3394, 1.442695
    %v3400 = vpow.pop %v3399
    %v3401 = vadd.f32 %v3396, 1.0
    %v3402 = vadd.f32 %v3398, 1.0
    %v3403 = vadd.f32 %v3400, 1.0
    %v3404 = vrcp.pop %v3401
    %v3405 = vmul.f32 %v3401, %v3404
    %v3406 = vsub.f32 1.0, %v3405
    %v3407 = vmul.f32 %v3404, %v3406
    %v3408 = vadd.f32 %v3404, %v3407
    %vm3409 = vweird.f32 %v3401
    %vm3410 = vweird.f32 %v3404
    %vm3411 = vmor %vm3409, %vm3410
    %v3412 = vsel %vm3411, %v3404, %v3408
    %v3413 = vand.u32 2147483647, %v3401
    %vm3414 = vcmp.eq.f32.partialorder %v3413, 8.507059e+37
    %v3415 = vand.u32 %v3401, 2147483648
    %v3416 = vor.u32 1.1754944e-38, %v3415
    %v3417 = vsel %vm3414, %v3416, %v3412
    %v3418 = vmul.f32 1.0, %v3417
    %v3419 = vrcp.pop %v3402
    %v3420 = vmul.f32 %v3402, %v3419
    %v3421 = vsub.f32 1.0, %v3420
    %v3422 = vmul.f32 %v3419, %v3421
    %v3423 = vadd.f32 %v3419, %v3422
    %vm3424 = vweird.f32 %v3402
    %vm3425 = vweird.f32 %v3419
    %vm3426 = vmor %vm3424, %vm3425
    %v3427 = vsel %vm3426, %v3419, %v3423
    %v3428 = vand.u32 2147483647, %v3402
    %vm3429 = vcmp.eq.f32.partialorder %v3428, 8.507059e+37
    %v3430 = vand.u32 %v3402, 2147483648
    %v3431 = vor.u32 1.1754944e-38, %v3430
    %v3432 = vsel %vm3429, %v3431, %v3427
    %v3433 = vmul.f32 1.0, %v3432
    %v3434 = vrcp.pop %v3403
    %v3435 = vmul.f32 %v3403, %v3434
    %v3436 = vsub.f32 1.0, %v3435
    %v3437 = vmul.f32 %v3434, %v3436
    %v3438 = vadd.f32 %v3434, %v3437
    %vm3439 = vweird.f32 %v3403
    %vm3440 = vweird.f32 %v3434
    %vm3441 = vmor %vm3439, %vm3440
    %v3442 = vsel %vm3441, %v3434, %v3438
    %v3443 = vand.u32 2147483647, %v3403
    %vm3444 = vcmp.eq.f32.partialorder %v3443, 8.507059e+37
    %v3445 = vand.u32 %v3403, 2147483648
    %v3446 = vor.u32 1.1754944e-38, %v3445
    %v3447 = vsel %vm3444, %v3446, %v3442
    %v3448 = vmul.f32 1.0, %v3447
    %v3449 = vtanh.pop %v3389
    %v3450 = vmul.f32 %v3433, %v3157
    %v3451 = vmul.f32 %v3418, %v3449
    %v3452 = vadd.f32 %v3450, %v3451
    %v3453 = vtanh.pop %v3452
    %v3454 = vmul.f32 %v3448, %v3453
    %v3455 = vpack.c.bf16 %v3454, %v3454
    %v3456 = vld [vmem:[%s10] sm:$0xf]
    %v3458 = vperm.slane %v3456, 0
    %v3459 = vperm.slane %v3456, 1
    %v3460 = vperm.slane %v3456, 2
    %v3461 = vperm.slane %v3456, 3
    %v3466 = vld [vmem:[%s12] sm:$0xf]
    %v3468 = vperm.slane %v3466, 0
    %v3469 = vperm.slane %v3466, 1
    %v3470 = vperm.slane %v3466, 2
    %v3471 = vperm.slane %v3466, 3
    %v3476 = vld [vmem:[%s14] sm:$0x1]
    %v3478 = vperm.slane %v3476, 0
    %v3480 = vlaneseq
    %v3481 = vand.u32 %v3480, 127
    %v3482 = vcvt.s32.f32 %v3481
    %3483 = vst [vmem:[#allocation13] sm:$0xff] 0.0
    %v3484 = vld [vmem:[%s1] sm:$0xff]
    %3485 = vset.pattern.permute.xlu0 0
    %3486 = vperm.xlu0 %3485, %v3484
    %v3487 = vpop.permute.xlu0 %3486
    %vm3488 = vcmp.eq.s32.totalorder %v3481, %v3487
    %v3489 = vsel %vm3488, 1, 0
    %v3490 = vcvt.s32.f32 %v3489
    %v3491 = vpack.c.bf16 %v3490, %v3490
    %v3492 = vld [vmem:[%s8] sm:$0xf]
    %v3493 = vld [vmem:[%s8 + $0x4] sm:$0xf]
    %v3494 = vld [vmem:[%s8 + $0x8] sm:$0xf]
    %v3495 = vld [vmem:[%s8 + $0xc] sm:$0xf]
    %v3496 = vld [vmem:[%s8 + $0x10] sm:$0xf]
    %v3497 = vld [vmem:[%s8 + $0x14] sm:$0xf]
    %v3498 = vld [vmem:[%s8 + $0x18] sm:$0xf]
    %v3499 = vld [vmem:[%s8 + $0x1c] sm:$0xf]
    %v3500 = vld [vmem:[%s8 + $0x20] sm:$0xf]
    %v3501 = vld [vmem:[%s8 + $0x24] sm:$0xf]
    %v3502 = vld [vmem:[%s8 + $0x28] sm:$0xf]
    %v3503 = vld [vmem:[%s8 + $0x2c] sm:$0xf]
    %v3504 = vld [vmem:[%s8 + $0x30] sm:$0xf]
    %v3505 = vld [vmem:[%s8 + $0x34] sm:$0xf]
    %v3506 = vld [vmem:[%s8 + $0x38] sm:$0xf]
    %v3507 = vld [vmem:[%s8 + $0x3c] sm:$0xf]
    %v3524 = vunpack.c.l.b16 %v3492
    %v3525 = vunpack.c.l.b16 %v3493
    %v3526 = vunpack.c.l.b16 %v3494
    %v3527 = vunpack.c.l.b16 %v3495
    %v3528 = vunpack.c.l.b16 %v3496
    %v3529 = vunpack.c.l.b16 %v3497
    %v3530 = vunpack.c.l.b16 %v3498
    %v3531 = vunpack.c.l.b16 %v3499
    %v3532 = vunpack.c.l.b16 %v3500
    %v3533 = vunpack.c.l.b16 %v3501
    %v3534 = vunpack.c.l.b16 %v3502
    %v3535 = vunpack.c.l.b16 %v3503
    %v3536 = vunpack.c.l.b16 %v3504
    %v3537 = vunpack.c.l.b16 %v3505
    %v3538 = vunpack.c.l.b16 %v3506
    %v3539 = vunpack.c.l.b16 %v3507
    %v3540 = vpack.c.b16 %v3525, %v3524
    %v3541 = vpack.c.b16 %v3527, %v3526
    %v3542 = vpack.c.b16 %v3529, %v3528
    %v3543 = vpack.c.b16 %v3531, %v3530
    %v3544 = vpack.c.b16 %v3533, %v3532
    %v3545 = vpack.c.b16 %v3535, %v3534
    %v3546 = vpack.c.b16 %v3537, %v3536
    %v3547 = vpack.c.b16 %v3539, %v3538
    %3556 = vmatpush.bf16.msra.mxu0 %v3547
    %3557 = vmatpush.bf16.msra.mxu0 %v3546
    %3558 = vmatpush.bf16.msra.mxu0 %v3545
    %3559 = vmatpush.bf16.msra.mxu0 %v3544
    %3560 = vmatpush.bf16.msra.mxu0 %v3543
    %3561 = vmatpush.bf16.msra.mxu0 %v3542
    %3562 = vmatpush.bf16.msra.mxu0 %v3541
    %3563 = vmatpush.bf16.msra.mxu0 %v3540
    %3564 = vmatmul.bf16.gmra.mxu0 %v3491
    %v3565 = vpop.f32.mrf.mxu0
    %v3566 = vadd.f32 0.0, %v3565
    %v3567 = vpop.f32.mrf.mxu0
    %3568 = vdwg.mxu0
    %v3569 = vpack.c.bf16 %v3566, %v3566
    %v3570 = vld [vmem:[#allocation10] sm:$0xff]
    %v3571 = vld [vmem:[#allocation10 + $0x8] sm:$0xff]
    %v3572 = vld [vmem:[#allocation10 + $0x10] sm:$0xff]
    %v3573 = vld [vmem:[#allocation10 + $0x18] sm:$0xff]
    %v3574 = vld [vmem:[#allocation10 + $0x20] sm:$0xff]
    %v3575 = vld [vmem:[#allocation10 + $0x28] sm:$0xff]
    %v3576 = vld [vmem:[#allocation10 + $0x30] sm:$0xff]
    %v3577 = vld [vmem:[#allocation10 + $0x38] sm:$0xff]
    %v3578 = vld [vmem:[#allocation10 + $0x40] sm:$0xff]
    %v3579 = vld [vmem:[#allocation10 + $0x48] sm:$0xff]
    %v3580 = vld [vmem:[#allocation10 + $0x50] sm:$0xff]
    %v3581 = vld [vmem:[#allocation10 + $0x58] sm:$0xff]
    %v3582 = vld [vmem:[#allocation10 + $0x60] sm:$0xff]
    %v3583 = vld [vmem:[#allocation10 + $0x68] sm:$0xff]
    %v3584 = vld [vmem:[#allocation10 + $0x70] sm:$0xff]
    %v3585 = vld [vmem:[#allocation10 + $0x78] sm:$0xff]
    %v3586 = vld [vmem:[#allocation10 + $0x80] sm:$0xff]
    %v3587 = vld [vmem:[#allocation10 + $0x88] sm:$0xff]
    %v3588 = vld [vmem:[#allocation10 + $0x90] sm:$0xff]
    %v3589 = vld [vmem:[#allocation10 + $0x98] sm:$0xff]
    %v3590 = vld [vmem:[#allocation10 + $0xa0] sm:$0xff]
    %v3591 = vld [vmem:[#allocation10 + $0xa8] sm:$0xff]
    %v3592 = vld [vmem:[#allocation10 + $0xb0] sm:$0xff]
    %v3593 = vld [vmem:[#allocation10 + $0xb8] sm:$0xff]
    %v3594 = vld [vmem:[#allocation10 + $0xc0] sm:$0xff]
    %v3595 = vld [vmem:[#allocation10 + $0xc8] sm:$0xff]
    %v3596 = vld [vmem:[#allocation10 + $0xd0] sm:$0xff]
    %v3597 = vld [vmem:[#allocation10 + $0xd8] sm:$0xff]
    %v3598 = vld [vmem:[#allocation10 + $0xe0] sm:$0xff]
    %v3599 = vld [vmem:[#allocation10 + $0xe8] sm:$0xff]
    %v3600 = vld [vmem:[#allocation10 + $0xf0] sm:$0xff]
    %v3601 = vld [vmem:[#allocation10 + $0xf8] sm:$0xff]
    %v3602 = vld [vmem:[#allocation10 + $0x100] sm:$0xff]
    %v3603 = vld [vmem:[#allocation10 + $0x108] sm:$0xff]
    %v3604 = vld [vmem:[#allocation10 + $0x110] sm:$0xff]
    %v3605 = vld [vmem:[#allocation10 + $0x118] sm:$0xff]
    %v3606 = vld [vmem:[#allocation10 + $0x120] sm:$0xff]
    %v3607 = vld [vmem:[#allocation10 + $0x128] sm:$0xff]
    %v3608 = vld [vmem:[#allocation10 + $0x130] sm:$0xff]
    %v3609 = vld [vmem:[#allocation10 + $0x138] sm:$0xff]
    %v3610 = vld [vmem:[#allocation10 + $0x140] sm:$0xff]
    %v3611 = vld [vmem:[#allocation10 + $0x148] sm:$0xff]
    %v3612 = vld [vmem:[#allocation10 + $0x150] sm:$0xff]
    %v3613 = vld [vmem:[#allocation10 + $0x158] sm:$0xff]
    %v3614 = vld [vmem:[#allocation10 + $0x160] sm:$0xff]
    %v3615 = vld [vmem:[#allocation10 + $0x168] sm:$0xff]
    %v3616 = vld [vmem:[#allocation10 + $0x170] sm:$0xff]
    %v3617 = vld [vmem:[#allocation10 + $0x178] sm:$0xff]
    %v3618 = vld [vmem:[#allocation10 + $0x180] sm:$0xff]
    %v3619 = vld [vmem:[#allocation10 + $0x188] sm:$0xff]
    %v3620 = vld [vmem:[#allocation10 + $0x190] sm:$0xff]
    %v3621 = vld [vmem:[#allocation10 + $0x198] sm:$0xff]
    %v3622 = vld [vmem:[#allocation10 + $0x1a0] sm:$0xff]
    %v3623 = vld [vmem:[#allocation10 + $0x1a8] sm:$0xff]
    %v3624 = vld [vmem:[#allocation10 + $0x1b0] sm:$0xff]
    %v3625 = vld [vmem:[#allocation10 + $0x1b8] sm:$0xff]
    %v3626 = vld [vmem:[#allocation10 + $0x1c0] sm:$0xff]
    %v3627 = vld [vmem:[#allocation10 + $0x1c8] sm:$0xff]
    %v3628 = vld [vmem:[#allocation10 + $0x1d0] sm:$0xff]
    %v3629 = vld [vmem:[#allocation10 + $0x1d8] sm:$0xff]
    %v3630 = vld [vmem:[#allocation10 + $0x1e0] sm:$0xff]
    %v3631 = vld [vmem:[#allocation10 + $0x1e8] sm:$0xff]
    %v3632 = vld [vmem:[#allocation10 + $0x1f0] sm:$0xff]
    %v3633 = vld [vmem:[#allocation10 + $0x1f8] sm:$0xff]
    %v3698 = vunpack.c.l.b16 %v3570
    %v3699 = vunpack.c.h.b16 %v3570
    %v3700 = vunpack.c.l.b16 %v3571
    %v3701 = vunpack.c.h.b16 %v3571
    %v3702 = vunpack.c.l.b16 %v3572
    %v3703 = vunpack.c.h.b16 %v3572
    %v3704 = vunpack.c.l.b16 %v3573
    %v3705 = vunpack.c.h.b16 %v3573
    %v3706 = vunpack.c.l.b16 %v3574
    %v3707 = vunpack.c.h.b16 %v3574
    %v3708 = vunpack.c.l.b16 %v3575
    %v3709 = vunpack.c.h.b16 %v3575
    %v3710 = vunpack.c.l.b16 %v3576
    %v3711 = vunpack.c.h.b16 %v3576
    %v3712 = vunpack.c.l.b16 %v3577
    %v3713 = vunpack.c.h.b16 %v3577
    %v3714 = vunpack.c.l.b16 %v3578
    %v3715 = vunpack.c.h.b16 %v3578
    %v3716 = vunpack.c.l.b16 %v3579
    %v3717 = vunpack.c.h.b16 %v3579
    %v3718 = vunpack.c.l.b16 %v3580
    %v3719 = vunpack.c.h.b16 %v3580
    %v3720 = vunpack.c.l.b16 %v3581
    %v3721 = vunpack.c.h.b16 %v3581
    %v3722 = vunpack.c.l.b16 %v3582
    %v3723 = vunpack.c.h.b16 %v3582
    %v3724 = vunpack.c.l.b16 %v3583
    %v3725 = vunpack.c.h.b16 %v3583
    %v3726 = vunpack.c.l.b16 %v3584
    %v3727 = vunpack.c.h.b16 %v3584
    %v3728 = vunpack.c.l.b16 %v3585
    %v3729 = vunpack.c.h.b16 %v3585
    %v3730 = vunpack.c.l.b16 %v3586
    %v3731 = vunpack.c.h.b16 %v3586
    %v3732 = vunpack.c.l.b16 %v3587
    %v3733 = vunpack.c.h.b16 %v3587
    %v3734 = vunpack.c.l.b16 %v3588
    %v3735 = vunpack.c.h.b16 %v3588
    %v3736 = vunpack.c.l.b16 %v3589
    %v3737 = vunpack.c.h.b16 %v3589
    %v3738 = vunpack.c.l.b16 %v3590
    %v3739 = vunpack.c.h.b16 %v3590
    %v3740 = vunpack.c.l.b16 %v3591
    %v3741 = vunpack.c.h.b16 %v3591
    %v3742 = vunpack.c.l.b16 %v3592
    %v3743 = vunpack.c.h.b16 %v3592
    %v3744 = vunpack.c.l.b16 %v3593
    %v3745 = vunpack.c.h.b16 %v3593
    %v3746 = vunpack.c.l.b16 %v3594
    %v3747 = vunpack.c.h.b16 %v3594
    %v3748 = vunpack.c.l.b16 %v3595
    %v3749 = vunpack.c.h.b16 %v3595
    %v3750 = vunpack.c.l.b16 %v3596
    %v3751 = vunpack.c.h.b16 %v3596
    %v3752 = vunpack.c.l.b16 %v3597
    %v3753 = vunpack.c.h.b16 %v3597
    %v3754 = vunpack.c.l.b16 %v3598
    %v3755 = vunpack.c.h.b16 %v3598
    %v3756 = vunpack.c.l.b16 %v3599
    %v3757 = vunpack.c.h.b16 %v3599
    %v3758 = vunpack.c.l.b16 %v3600
    %v3759 = vunpack.c.h.b16 %v3600
    %v3760 = vunpack.c.l.b16 %v3601
    %v3761 = vunpack.c.h.b16 %v3601
    %v3762 = vunpack.c.l.b16 %v3602
    %v3763 = vunpack.c.h.b16 %v3602
    %v3764 = vunpack.c.l.b16 %v3603
    %v3765 = vunpack.c.h.b16 %v3603
    %v3766 = vunpack.c.l.b16 %v3604
    %v3767 = vunpack.c.h.b16 %v3604
    %v3768 = vunpack.c.l.b16 %v3605
    %v3769 = vunpack.c.h.b16 %v3605
    %v3770 = vunpack.c.l.b16 %v3606
    %v3771 = vunpack.c.h.b16 %v3606
    %v3772 = vunpack.c.l.b16 %v3607
    %v3773 = vunpack.c.h.b16 %v3607
    %v3774 = vunpack.c.l.b16 %v3608
    %v3775 = vunpack.c.h.b16 %v3608
    %v3776 = vunpack.c.l.b16 %v3609
    %v3777 = vunpack.c.h.b16 %v3609
    %v3778 = vunpack.c.l.b16 %v3610
    %v3779 = vunpack.c.h.b16 %v3610
    %v3780 = vunpack.c.l.b16 %v3611
    %v3781 = vunpack.c.h.b16 %v3611
    %v3782 = vunpack.c.l.b16 %v3612
    %v3783 = vunpack.c.h.b16 %v3612
    %v3784 = vunpack.c.l.b16 %v3613
    %v3785 = vunpack.c.h.b16 %v3613
    %v3786 = vunpack.c.l.b16 %v3614
    %v3787 = vunpack.c.h.b16 %v3614
    %v3788 = vunpack.c.l.b16 %v3615
    %v3789 = vunpack.c.h.b16 %v3615
    %v3790 = vunpack.c.l.b16 %v3616
    %v3791 = vunpack.c.h.b16 %v3616
    %v3792 = vunpack.c.l.b16 %v3617
    %v3793 = vunpack.c.h.b16 %v3617
    %v3794 = vunpack.c.l.b16 %v3618
    %v3795 = vunpack.c.h.b16 %v3618
    %v3796 = vunpack.c.l.b16 %v3619
    %v3797 = vunpack.c.h.b16 %v3619
    %v3798 = vunpack.c.l.b16 %v3620
    %v3799 = vunpack.c.h.b16 %v3620
    %v3800 = vunpack.c.l.b16 %v3621
    %v3801 = vunpack.c.h.b16 %v3621
    %v3802 = vunpack.c.l.b16 %v3622
    %v3803 = vunpack.c.h.b16 %v3622
    %v3804 = vunpack.c.l.b16 %v3623
    %v3805 = vunpack.c.h.b16 %v3623
    %v3806 = vunpack.c.l.b16 %v3624
    %v3807 = vunpack.c.h.b16 %v3624
    %v3808 = vunpack.c.l.b16 %v3625
    %v3809 = vunpack.c.h.b16 %v3625
    %v3810 = vunpack.c.l.b16 %v3626
    %v3811 = vunpack.c.h.b16 %v3626
    %v3812 = vunpack.c.l.b16 %v3627
    %v3813 = vunpack.c.h.b16 %v3627
    %v3814 = vunpack.c.l.b16 %v3628
    %v3815 = vunpack.c.h.b16 %v3628
    %v3816 = vunpack.c.l.b16 %v3629
    %v3817 = vunpack.c.h.b16 %v3629
    %v3818 = vunpack.c.l.b16 %v3630
    %v3819 = vunpack.c.h.b16 %v3630
    %v3820 = vunpack.c.l.b16 %v3631
    %v3821 = vunpack.c.h.b16 %v3631
    %v3822 = vunpack.c.l.b16 %v3632
    %v3823 = vunpack.c.h.b16 %v3632
    %v3824 = vunpack.c.l.b16 %v3633
    %v3825 = vunpack.c.h.b16 %v3633
    %v3826 = vpack.c.b16 %v3702, %v3698
    %v3827 = vpack.c.b16 %v3703, %v3699
    %v3828 = vpack.c.b16 %v3704, %v3700
    %v3829 = vpack.c.b16 %v3705, %v3701
    %v3830 = vpack.c.b16 %v3710, %v3706
    %v3831 = vpack.c.b16 %v3711, %v3707
    %v3832 = vpack.c.b16 %v3712, %v3708
    %v3833 = vpack.c.b16 %v3713, %v3709
    %v3834 = vpack.c.b16 %v3718, %v3714
    %v3835 = vpack.c.b16 %v3719, %v3715
    %v3836 = vpack.c.b16 %v3720, %v3716
    %v3837 = vpack.c.b16 %v3721, %v3717
    %v3838 = vpack.c.b16 %v3726, %v3722
    %v3839 = vpack.c.b16 %v3727, %v3723
    %v3840 = vpack.c.b16 %v3728, %v3724
    %v3841 = vpack.c.b16 %v3729, %v3725
    %v3842 = vpack.c.b16 %v3734, %v3730
    %v3843 = vpack.c.b16 %v3735, %v3731
    %v3844 = vpack.c.b16 %v3736, %v3732
    %v3845 = vpack.c.b16 %v3737, %v3733
    %v3846 = vpack.c.b16 %v3742, %v3738
    %v3847 = vpack.c.b16 %v3743, %v3739
    %v3848 = vpack.c.b16 %v3744, %v3740
    %v3849 = vpack.c.b16 %v3745, %v3741
    %v3850 = vpack.c.b16 %v3750, %v3746
    %v3851 = vpack.c.b16 %v3751, %v3747
    %v3852 = vpack.c.b16 %v3752, %v3748
    %v3853 = vpack.c.b16 %v3753, %v3749
    %v3854 = vpack.c.b16 %v3758, %v3754
    %v3855 = vpack.c.b16 %v3759, %v3755
    %v3856 = vpack.c.b16 %v3760, %v3756
    %v3857 = vpack.c.b16 %v3761, %v3757
    %v3858 = vpack.c.b16 %v3766, %v3762
    %v3859 = vpack.c.b16 %v3767, %v3763
    %v3860 = vpack.c.b16 %v3768, %v3764
    %v3861 = vpack.c.b16 %v3769, %v3765
    %v3862 = vpack.c.b16 %v3774, %v3770
    %v3863 = vpack.c.b16 %v3775, %v3771
    %v3864 = vpack.c.b16 %v3776, %v3772
    %v3865 = vpack.c.b16 %v3777, %v3773
    %v3866 = vpack.c.b16 %v3782, %v3778
    %v3867 = vpack.c.b16 %v3783, %v3779
    %v3868 = vpack.c.b16 %v3784, %v3780
    %v3869 = vpack.c.b16 %v3785, %v3781
    %v3870 = vpack.c.b16 %v3790, %v3786
    %v3871 = vpack.c.b16 %v3791, %v3787
    %v3872 = vpack.c.b16 %v3792, %v3788
    %v3873 = vpack.c.b16 %v3793, %v3789
    %v3874 = vpack.c.b16 %v3798, %v3794
    %v3875 = vpack.c.b16 %v3799, %v3795
    %v3876 = vpack.c.b16 %v3800, %v3796
    %v3877 = vpack.c.b16 %v3801, %v3797
    %v3878 = vpack.c.b16 %v3806, %v3802
    %v3879 = vpack.c.b16 %v3807, %v3803
    %v3880 = vpack.c.b16 %v3808, %v3804
    %v3881 = vpack.c.b16 %v3809, %v3805
    %v3882 = vpack.c.b16 %v3814, %v3810
    %v3883 = vpack.c.b16 %v3815, %v3811
    %v3884 = vpack.c.b16 %v3816, %v3812
    %v3885 = vpack.c.b16 %v3817, %v3813
    %v3886 = vpack.c.b16 %v3822, %v3818
    %v3887 = vpack.c.b16 %v3823, %v3819
    %v3888 = vpack.c.b16 %v3824, %v3820
    %v3889 = vpack.c.b16 %v3825, %v3821
    %3954 = vmatpush.bf16.msra.mxu0 %v3854
    %3955 = vmatpush.bf16.msra.mxu0 %v3850
    %3956 = vmatpush.bf16.msra.mxu0 %v3846
    %3957 = vmatpush.bf16.msra.mxu0 %v3842
    %3958 = vmatpush.bf16.msra.mxu0 %v3838
    %3959 = vmatpush.bf16.msra.mxu0 %v3834
    %3960 = vmatpush.bf16.msra.mxu0 %v3830
    %3961 = vmatpush.bf16.msra.mxu0 %v3826
    %3962 = vmatmul.bf16.gmra.mxu0 %v3569
    %v3963 = vpop.f32.mrf.mxu0
    %v3964 = vadd.f32 %v3458, %v3963
    %v3965 = vpop.f32.mrf.mxu0
    %3966 = vdwg.mxu0
    %3967 = vmatpush.bf16.msra.mxu0 %v3886
    %3968 = vmatpush.bf16.msra.mxu0 %v3882
    %3969 = vmatpush.bf16.msra.mxu0 %v3878
    %3970 = vmatpush.bf16.msra.mxu0 %v3874
    %3971 = vmatpush.bf16.msra.mxu0 %v3870
    %3972 = vmatpush.bf16.msra.mxu0 %v3866
    %3973 = vmatpush.bf16.msra.mxu0 %v3862
    %3974 = vmatpush.bf16.msra.mxu0 %v3858
    %3975 = vmatmul.bf16.gmra.mxu0 %v3287
    %v3976 = vpop.f32.mrf.mxu0
    %v3977 = vadd.f32 %v3964, %v3976
    %v3978 = vpop.f32.mrf.mxu0
    %3979 = vdwg.mxu0
    %3980 = vmatpush.bf16.msra.mxu0 %v3855
    %3981 = vmatpush.bf16.msra.mxu0 %v3851
    %3982 = vmatpush.bf16.msra.mxu0 %v3847
    %3983 = vmatpush.bf16.msra.mxu0 %v3843
    %3984 = vmatpush.bf16.msra.mxu0 %v3839
    %3985 = vmatpush.bf16.msra.mxu0 %v3835
    %3986 = vmatpush.bf16.msra.mxu0 %v3831
    %3987 = vmatpush.bf16.msra.mxu0 %v3827
    %3988 = vmatmul.bf16.gmra.mxu0 %v3569
    %v3989 = vpop.f32.mrf.mxu0
    %v3990 = vadd.f32 %v3459, %v3989
    %v3991 = vpop.f32.mrf.mxu0
    %3992 = vdwg.mxu0
    %3993 = vmatpush.bf16.msra.mxu0 %v3887
    %3994 = vmatpush.bf16.msra.mxu0 %v3883
    %3995 = vmatpush.bf16.msra.mxu0 %v3879
    %3996 = vmatpush.bf16.msra.mxu0 %v3875
    %3997 = vmatpush.bf16.msra.mxu0 %v3871
    %3998 = vmatpush.bf16.msra.mxu0 %v3867
    %3999 = vmatpush.bf16.msra.mxu0 %v3863
    %4000 = vmatpush.bf16.msra.mxu0 %v3859
    %4001 = vmatmul.bf16.gmra.mxu0 %v3287
    %v4002 = vpop.f32.mrf.mxu0
    %v4003 = vadd.f32 %v3990, %v4002
    %v4004 = vpop.f32.mrf.mxu0
    %4005 = vdwg.mxu0
    %4006 = vmatpush.bf16.msra.mxu0 %v3856
    %4007 = vmatpush.bf16.msra.mxu0 %v3852
    %4008 = vmatpush.bf16.msra.mxu0 %v3848
    %4009 = vmatpush.bf16.msra.mxu0 %v3844
    %4010 = vmatpush.bf16.msra.mxu0 %v3840
    %4011 = vmatpush.bf16.msra.mxu0 %v3836
    %4012 = vmatpush.bf16.msra.mxu0 %v3832
    %4013 = vmatpush.bf16.msra.mxu0 %v3828
    %4014 = vmatmul.bf16.gmra.mxu0 %v3569
    %v4015 = vpop.f32.mrf.mxu0
    %v4016 = vadd.f32 %v3460, %v4015
    %v4017 = vpop.f32.mrf.mxu0
    %4018 = vdwg.mxu0
    %4019 = vmatpush.bf16.msra.mxu0 %v3888
    %4020 = vmatpush.bf16.msra.mxu0 %v3884
    %4021 = vmatpush.bf16.msra.mxu0 %v3880
    %4022 = vmatpush.bf16.msra.mxu0 %v3876
    %4023 = vmatpush.bf16.msra.mxu0 %v3872
    %4024 = vmatpush.bf16.msra.mxu0 %v3868
    %4025 = vmatpush.bf16.msra.mxu0 %v3864
    %4026 = vmatpush.bf16.msra.mxu0 %v3860
    %4027 = vmatmul.bf16.gmra.mxu0 %v3287
    %v4028 = vpop.f32.mrf.mxu0
    %v4029 = vadd.f32 %v4016, %v4028
    %v4030 = vpop.f32.mrf.mxu0
    %4031 = vdwg.mxu0
    %4032 = vmatpush.bf16.msra.mxu0 %v3857
    %4033 = vmatpush.bf16.msra.mxu0 %v3853
    %4034 = vmatpush.bf16.msra.mxu0 %v3849
    %4035 = vmatpush.bf16.msra.mxu0 %v3845
    %4036 = vmatpush.bf16.msra.mxu0 %v3841
    %4037 = vmatpush.bf16.msra.mxu0 %v3837
    %4038 = vmatpush.bf16.msra.mxu0 %v3833
    %4039 = vmatpush.bf16.msra.mxu0 %v3829
    %4040 = vmatmul.bf16.gmra.mxu0 %v3569
    %v4041 = vpop.f32.mrf.mxu0
    %v4042 = vadd.f32 %v3461, %v4041
    %v4043 = vpop.f32.mrf.mxu0
    %4044 = vdwg.mxu0
    %4045 = vmatpush.bf16.msra.mxu0 %v3889
    %4046 = vmatpush.bf16.msra.mxu0 %v3885
    %4047 = vmatpush.bf16.msra.mxu0 %v3881
    %4048 = vmatpush.bf16.msra.mxu0 %v3877
    %4049 = vmatpush.bf16.msra.mxu0 %v3873
    %4050 = vmatpush.bf16.msra.mxu0 %v3869
    %4051 = vmatpush.bf16.msra.mxu0 %v3865
    %4052 = vmatpush.bf16.msra.mxu0 %v3861
    %4053 = vmatmul.bf16.gmra.mxu0 %v3287
    %v4054 = vpop.f32.mrf.mxu0
    %v4055 = vadd.f32 %v4042, %v4054
    %v4056 = vpop.f32.mrf.mxu0
    %4057 = vdwg.mxu0
    %v4058 = vxor.u32 %v3977, 2147483648
    %v4059 = vxor.u32 %v4003, 2147483648
    %v4060 = vxor.u32 %v4029, 2147483648
    %v4061 = vmul.f32 %v4058, 1.442695
    %v4062 = vpow.pop %v4061
    %v4063 = vmul.f32 %v4059, 1.442695
    %v4064 = vpow.pop %v4063
    %v4065 = vmul.f32 %v4060, 1.442695
    %v4066 = vpow.pop %v4065
    %v4067 = vadd.f32 %v4062, 1.0
    %v4068 = vadd.f32 %v4064, 1.0
    %v4069 = vadd.f32 %v4066, 1.0
    %v4070 = vrcp.pop %v4067
    %v4071 = vmul.f32 %v4067, %v4070
    %v4072 = vsub.f32 1.0, %v4071
    %v4073 = vmul.f32 %v4070, %v4072
    %v4074 = vadd.f32 %v4070, %v4073
    %vm4075 = vweird.f32 %v4067
    %vm4076 = vweird.f32 %v4070
    %vm4077 = vmor %vm4075, %vm4076
    %v4078 = vsel %vm4077, %v4070, %v4074
    %v4079 = vand.u32 2147483647, %v4067
    %vm4080 = vcmp.eq.f32.partialorder %v4079, 8.507059e+37
    %v4081 = vand.u32 %v4067, 2147483648
    %v4082 = vor.u32 1.1754944e-38, %v4081
    %v4083 = vsel %vm4080, %v4082, %v4078
    %v4084 = vmul.f32 1.0, %v4083
    %v4085 = vrcp.pop %v4068
    %v4086 = vmul.f32 %v4068, %v4085
    %v4087 = vsub.f32 1.0, %v4086
    %v4088 = vmul.f32 %v4085, %v4087
    %v4089 = vadd.f32 %v4085, %v4088
    %vm4090 = vweird.f32 %v4068
    %vm4091 = vweird.f32 %v4085
    %vm4092 = vmor %vm4090, %vm4091
    %v4093 = vsel %vm4092, %v4085, %v4089
    %v4094 = vand.u32 2147483647, %v4068
    %vm4095 = vcmp.eq.f32.partialorder %v4094, 8.507059e+37
    %v4096 = vand.u32 %v4068, 2147483648
    %v4097 = vor.u32 1.1754944e-38, %v4096
    %v4098 = vsel %vm4095, %v4097, %v4093
    %v4099 = vmul.f32 1.0, %v4098
    %v4100 = vrcp.pop %v4069
    %v4101 = vmul.f32 %v4069, %v4100
    %v4102 = vsub.f32 1.0, %v4101
    %v4103 = vmul.f32 %v4100, %v4102
    %v4104 = vadd.f32 %v4100, %v4103
    %vm4105 = vweird.f32 %v4069
    %vm4106 = vweird.f32 %v4100
    %vm4107 = vmor %vm4105, %vm4106
    %v4108 = vsel %vm4107, %v4100, %v4104
    %v4109 = vand.u32 2147483647, %v4069
    %vm4110 = vcmp.eq.f32.partialorder %v4109, 8.507059e+37
    %v4111 = vand.u32 %v4069, 2147483648
    %v4112 = vor.u32 1.1754944e-38, %v4111
    %v4113 = vsel %vm4110, %v4112, %v4108
    %v4114 = vmul.f32 1.0, %v4113
    %v4115 = vtanh.pop %v4055
    %v4116 = vmul.f32 %v4099, %v3284
    %v4117 = vmul.f32 %v4084, %v4115
    %v4118 = vadd.f32 %v4116, %v4117
    %v4119 = vtanh.pop %v4118
    %v4120 = vmul.f32 %v4114, %v4119
    %v4121 = vpack.c.bf16 %v4120, %v4120
    %v4122 = vld [vmem:[#allocation11] sm:$0xff]
    %v4123 = vld [vmem:[#allocation11 + $0x8] sm:$0xff]
    %v4124 = vld [vmem:[#allocation11 + $0x10] sm:$0xff]
    %v4125 = vld [vmem:[#allocation11 + $0x18] sm:$0xff]
    %v4126 = vld [vmem:[#allocation11 + $0x20] sm:$0xff]
    %v4127 = vld [vmem:[#allocation11 + $0x28] sm:$0xff]
    %v4128 = vld [vmem:[#allocation11 + $0x30] sm:$0xff]
    %v4129 = vld [vmem:[#allocation11 + $0x38] sm:$0xff]
    %v4130 = vld [vmem:[#allocation11 + $0x40] sm:$0xff]
    %v4131 = vld [vmem:[#allocation11 + $0x48] sm:$0xff]
    %v4132 = vld [vmem:[#allocation11 + $0x50] sm:$0xff]
    %v4133 = vld [vmem:[#allocation11 + $0x58] sm:$0xff]
    %v4134 = vld [vmem:[#allocation11 + $0x60] sm:$0xff]
    %v4135 = vld [vmem:[#allocation11 + $0x68] sm:$0xff]
    %v4136 = vld [vmem:[#allocation11 + $0x70] sm:$0xff]
    %v4137 = vld [vmem:[#allocation11 + $0x78] sm:$0xff]
    %v4138 = vld [vmem:[#allocation11 + $0x80] sm:$0xff]
    %v4139 = vld [vmem:[#allocation11 + $0x88] sm:$0xff]
    %v4140 = vld [vmem:[#allocation11 + $0x90] sm:$0xff]
    %v4141 = vld [vmem:[#allocation11 + $0x98] sm:$0xff]
    %v4142 = vld [vmem:[#allocation11 + $0xa0] sm:$0xff]
    %v4143 = vld [vmem:[#allocation11 + $0xa8] sm:$0xff]
    %v4144 = vld [vmem:[#allocation11 + $0xb0] sm:$0xff]
    %v4145 = vld [vmem:[#allocation11 + $0xb8] sm:$0xff]
    %v4146 = vld [vmem:[#allocation11 + $0xc0] sm:$0xff]
    %v4147 = vld [vmem:[#allocation11 + $0xc8] sm:$0xff]
    %v4148 = vld [vmem:[#allocation11 + $0xd0] sm:$0xff]
    %v4149 = vld [vmem:[#allocation11 + $0xd8] sm:$0xff]
    %v4150 = vld [vmem:[#allocation11 + $0xe0] sm:$0xff]
    %v4151 = vld [vmem:[#allocation11 + $0xe8] sm:$0xff]
    %v4152 = vld [vmem:[#allocation11 + $0xf0] sm:$0xff]
    %v4153 = vld [vmem:[#allocation11 + $0xf8] sm:$0xff]
    %v4154 = vld [vmem:[#allocation11 + $0x100] sm:$0xff]
    %v4155 = vld [vmem:[#allocation11 + $0x108] sm:$0xff]
    %v4156 = vld [vmem:[#allocation11 + $0x110] sm:$0xff]
    %v4157 = vld [vmem:[#allocation11 + $0x118] sm:$0xff]
    %v4158 = vld [vmem:[#allocation11 + $0x120] sm:$0xff]
    %v4159 = vld [vmem:[#allocation11 + $0x128] sm:$0xff]
    %v4160 = vld [vmem:[#allocation11 + $0x130] sm:$0xff]
    %v4161 = vld [vmem:[#allocation11 + $0x138] sm:$0xff]
    %v4162 = vld [vmem:[#allocation11 + $0x140] sm:$0xff]
    %v4163 = vld [vmem:[#allocation11 + $0x148] sm:$0xff]
    %v4164 = vld [vmem:[#allocation11 + $0x150] sm:$0xff]
    %v4165 = vld [vmem:[#allocation11 + $0x158] sm:$0xff]
    %v4166 = vld [vmem:[#allocation11 + $0x160] sm:$0xff]
    %v4167 = vld [vmem:[#allocation11 + $0x168] sm:$0xff]
    %v4168 = vld [vmem:[#allocation11 + $0x170] sm:$0xff]
    %v4169 = vld [vmem:[#allocation11 + $0x178] sm:$0xff]
    %v4170 = vld [vmem:[#allocation11 + $0x180] sm:$0xff]
    %v4171 = vld [vmem:[#allocation11 + $0x188] sm:$0xff]
    %v4172 = vld [vmem:[#allocation11 + $0x190] sm:$0xff]
    %v4173 = vld [vmem:[#allocation11 + $0x198] sm:$0xff]
    %v4174 = vld [vmem:[#allocation11 + $0x1a0] sm:$0xff]
    %v4175 = vld [vmem:[#allocation11 + $0x1a8] sm:$0xff]
    %v4176 = vld [vmem:[#allocation11 + $0x1b0] sm:$0xff]
    %v4177 = vld [vmem:[#allocation11 + $0x1b8] sm:$0xff]
    %v4178 = vld [vmem:[#allocation11 + $0x1c0] sm:$0xff]
    %v4179 = vld [vmem:[#allocation11 + $0x1c8] sm:$0xff]
    %v4180 = vld [vmem:[#allocation11 + $0x1d0] sm:$0xff]
    %v4181 = vld [vmem:[#allocation11 + $0x1d8] sm:$0xff]
    %v4182 = vld [vmem:[#allocation11 + $0x1e0] sm:$0xff]
    %v4183 = vld [vmem:[#allocation11 + $0x1e8] sm:$0xff]
    %v4184 = vld [vmem:[#allocation11 + $0x1f0] sm:$0xff]
    %v4185 = vld [vmem:[#allocation11 + $0x1f8] sm:$0xff]
    %v4250 = vunpack.c.l.b16 %v4122
    %v4251 = vunpack.c.h.b16 %v4122
    %v4252 = vunpack.c.l.b16 %v4123
    %v4253 = vunpack.c.h.b16 %v4123
    %v4254 = vunpack.c.l.b16 %v4124
    %v4255 = vunpack.c.h.b16 %v4124
    %v4256 = vunpack.c.l.b16 %v4125
    %v4257 = vunpack.c.h.b16 %v4125
    %v4258 = vunpack.c.l.b16 %v4126
    %v4259 = vunpack.c.h.b16 %v4126
    %v4260 = vunpack.c.l.b16 %v4127
    %v4261 = vunpack.c.h.b16 %v4127
    %v4262 = vunpack.c.l.b16 %v4128
    %v4263 = vunpack.c.h.b16 %v4128
    %v4264 = vunpack.c.l.b16 %v4129
    %v4265 = vunpack.c.h.b16 %v4129
    %v4266 = vunpack.c.l.b16 %v4130
    %v4267 = vunpack.c.h.b16 %v4130
    %v4268 = vunpack.c.l.b16 %v4131
    %v4269 = vunpack.c.h.b16 %v4131
    %v4270 = vunpack.c.l.b16 %v4132
    %v4271 = vunpack.c.h.b16 %v4132
    %v4272 = vunpack.c.l.b16 %v4133
    %v4273 = vunpack.c.h.b16 %v4133
    %v4274 = vunpack.c.l.b16 %v4134
    %v4275 = vunpack.c.h.b16 %v4134
    %v4276 = vunpack.c.l.b16 %v4135
    %v4277 = vunpack.c.h.b16 %v4135
    %v4278 = vunpack.c.l.b16 %v4136
    %v4279 = vunpack.c.h.b16 %v4136
    %v4280 = vunpack.c.l.b16 %v4137
    %v4281 = vunpack.c.h.b16 %v4137
    %v4282 = vunpack.c.l.b16 %v4138
    %v4283 = vunpack.c.h.b16 %v4138
    %v4284 = vunpack.c.l.b16 %v4139
    %v4285 = vunpack.c.h.b16 %v4139
    %v4286 = vunpack.c.l.b16 %v4140
    %v4287 = vunpack.c.h.b16 %v4140
    %v4288 = vunpack.c.l.b16 %v4141
    %v4289 = vunpack.c.h.b16 %v4141
    %v4290 = vunpack.c.l.b16 %v4142
    %v4291 = vunpack.c.h.b16 %v4142
    %v4292 = vunpack.c.l.b16 %v4143
    %v4293 = vunpack.c.h.b16 %v4143
    %v4294 = vunpack.c.l.b16 %v4144
    %v4295 = vunpack.c.h.b16 %v4144
    %v4296 = vunpack.c.l.b16 %v4145
    %v4297 = vunpack.c.h.b16 %v4145
    %v4298 = vunpack.c.l.b16 %v4146
    %v4299 = vunpack.c.h.b16 %v4146
    %v4300 = vunpack.c.l.b16 %v4147
    %v4301 = vunpack.c.h.b16 %v4147
    %v4302 = vunpack.c.l.b16 %v4148
    %v4303 = vunpack.c.h.b16 %v4148
    %v4304 = vunpack.c.l.b16 %v4149
    %v4305 = vunpack.c.h.b16 %v4149
    %v4306 = vunpack.c.l.b16 %v4150
    %v4307 = vunpack.c.h.b16 %v4150
    %v4308 = vunpack.c.l.b16 %v4151
    %v4309 = vunpack.c.h.b16 %v4151
    %v4310 = vunpack.c.l.b16 %v4152
    %v4311 = vunpack.c.h.b16 %v4152
    %v4312 = vunpack.c.l.b16 %v4153
    %v4313 = vunpack.c.h.b16 %v4153
    %v4314 = vunpack.c.l.b16 %v4154
    %v4315 = vunpack.c.h.b16 %v4154
    %v4316 = vunpack.c.l.b16 %v4155
    %v4317 = vunpack.c.h.b16 %v4155
    %v4318 = vunpack.c.l.b16 %v4156
    %v4319 = vunpack.c.h.b16 %v4156
    %v4320 = vunpack.c.l.b16 %v4157
    %v4321 = vunpack.c.h.b16 %v4157
    %v4322 = vunpack.c.l.b16 %v4158
    %v4323 = vunpack.c.h.b16 %v4158
    %v4324 = vunpack.c.l.b16 %v4159
    %v4325 = vunpack.c.h.b16 %v4159
    %v4326 = vunpack.c.l.b16 %v4160
    %v4327 = vunpack.c.h.b16 %v4160
    %v4328 = vunpack.c.l.b16 %v4161
    %v4329 = vunpack.c.h.b16 %v4161
    %v4330 = vunpack.c.l.b16 %v4162
    %v4331 = vunpack.c.h.b16 %v4162
    %v4332 = vunpack.c.l.b16 %v4163
    %v4333 = vunpack.c.h.b16 %v4163
    %v4334 = vunpack.c.l.b16 %v4164
    %v4335 = vunpack.c.h.b16 %v4164
    %v4336 = vunpack.c.l.b16 %v4165
    %v4337 = vunpack.c.h.b16 %v4165
    %v4338 = vunpack.c.l.b16 %v4166
    %v4339 = vunpack.c.h.b16 %v4166
    %v4340 = vunpack.c.l.b16 %v4167
    %v4341 = vunpack.c.h.b16 %v4167
    %v4342 = vunpack.c.l.b16 %v4168
    %v4343 = vunpack.c.h.b16 %v4168
    %v4344 = vunpack.c.l.b16 %v4169
    %v4345 = vunpack.c.h.b16 %v4169
    %v4346 = vunpack.c.l.b16 %v4170
    %v4347 = vunpack.c.h.b16 %v4170
    %v4348 = vunpack.c.l.b16 %v4171
    %v4349 = vunpack.c.h.b16 %v4171
    %v4350 = vunpack.c.l.b16 %v4172
    %v4351 = vunpack.c.h.b16 %v4172
    %v4352 = vunpack.c.l.b16 %v4173
    %v4353 = vunpack.c.h.b16 %v4173
    %v4354 = vunpack.c.l.b16 %v4174
    %v4355 = vunpack.c.h.b16 %v4174
    %v4356 = vunpack.c.l.b16 %v4175
    %v4357 = vunpack.c.h.b16 %v4175
    %v4358 = vunpack.c.l.b16 %v4176
    %v4359 = vunpack.c.h.b16 %v4176
    %v4360 = vunpack.c.l.b16 %v4177
    %v4361 = vunpack.c.h.b16 %v4177
    %v4362 = vunpack.c.l.b16 %v4178
    %v4363 = vunpack.c.h.b16 %v4178
    %v4364 = vunpack.c.l.b16 %v4179
    %v4365 = vunpack.c.h.b16 %v4179
    %v4366 = vunpack.c.l.b16 %v4180
    %v4367 = vunpack.c.h.b16 %v4180
    %v4368 = vunpack.c.l.b16 %v4181
    %v4369 = vunpack.c.h.b16 %v4181
    %v4370 = vunpack.c.l.b16 %v4182
    %v4371 = vunpack.c.h.b16 %v4182
    %v4372 = vunpack.c.l.b16 %v4183
    %v4373 = vunpack.c.h.b16 %v4183
    %v4374 = vunpack.c.l.b16 %v4184
    %v4375 = vunpack.c.h.b16 %v4184
    %v4376 = vunpack.c.l.b16 %v4185
    %v4377 = vunpack.c.h.b16 %v4185
    %v4378 = vpack.c.b16 %v4254, %v4250
    %v4379 = vpack.c.b16 %v4255, %v4251
    %v4380 = vpack.c.b16 %v4256, %v4252
    %v4381 = vpack.c.b16 %v4257, %v4253
    %v4382 = vpack.c.b16 %v4262, %v4258
    %v4383 = vpack.c.b16 %v4263, %v4259
    %v4384 = vpack.c.b16 %v4264, %v4260
    %v4385 = vpack.c.b16 %v4265, %v4261
    %v4386 = vpack.c.b16 %v4270, %v4266
    %v4387 = vpack.c.b16 %v4271, %v4267
    %v4388 = vpack.c.b16 %v4272, %v4268
    %v4389 = vpack.c.b16 %v4273, %v4269
    %v4390 = vpack.c.b16 %v4278, %v4274
    %v4391 = vpack.c.b16 %v4279, %v4275
    %v4392 = vpack.c.b16 %v4280, %v4276
    %v4393 = vpack.c.b16 %v4281, %v4277
    %v4394 = vpack.c.b16 %v4286, %v4282
    %v4395 = vpack.c.b16 %v4287, %v4283
    %v4396 = vpack.c.b16 %v4288, %v4284
    %v4397 = vpack.c.b16 %v4289, %v4285
    %v4398 = vpack.c.b16 %v4294, %v4290
    %v4399 = vpack.c.b16 %v4295, %v4291
    %v4400 = vpack.c.b16 %v4296, %v4292
    %v4401 = vpack.c.b16 %v4297, %v4293
    %v4402 = vpack.c.b16 %v4302, %v4298
    %v4403 = vpack.c.b16 %v4303, %v4299
    %v4404 = vpack.c.b16 %v4304, %v4300
    %v4405 = vpack.c.b16 %v4305, %v4301
    %v4406 = vpack.c.b16 %v4310, %v4306
    %v4407 = vpack.c.b16 %v4311, %v4307
    %v4408 = vpack.c.b16 %v4312, %v4308
    %v4409 = vpack.c.b16 %v4313, %v4309
    %v4410 = vpack.c.b16 %v4318, %v4314
    %v4411 = vpack.c.b16 %v4319, %v4315
    %v4412 = vpack.c.b16 %v4320, %v4316
    %v4413 = vpack.c.b16 %v4321, %v4317
    %v4414 = vpack.c.b16 %v4326, %v4322
    %v4415 = vpack.c.b16 %v4327, %v4323
    %v4416 = vpack.c.b16 %v4328, %v4324
    %v4417 = vpack.c.b16 %v4329, %v4325
    %v4418 = vpack.c.b16 %v4334, %v4330
    %v4419 = vpack.c.b16 %v4335, %v4331
    %v4420 = vpack.c.b16 %v4336, %v4332
    %v4421 = vpack.c.b16 %v4337, %v4333
    %v4422 = vpack.c.b16 %v4342, %v4338
    %v4423 = vpack.c.b16 %v4343, %v4339
    %v4424 = vpack.c.b16 %v4344, %v4340
    %v4425 = vpack.c.b16 %v4345, %v4341
    %v4426 = vpack.c.b16 %v4350, %v4346
    %v4427 = vpack.c.b16 %v4351, %v4347
    %v4428 = vpack.c.b16 %v4352, %v4348
    %v4429 = vpack.c.b16 %v4353, %v4349
    %v4430 = vpack.c.b16 %v4358, %v4354
    %v4431 = vpack.c.b16 %v4359, %v4355
    %v4432 = vpack.c.b16 %v4360, %v4356
    %v4433 = vpack.c.b16 %v4361, %v4357
    %v4434 = vpack.c.b16 %v4366, %v4362
    %v4435 = vpack.c.b16 %v4367, %v4363
    %v4436 = vpack.c.b16 %v4368, %v4364
    %v4437 = vpack.c.b16 %v4369, %v4365
    %v4438 = vpack.c.b16 %v4374, %v4370
    %v4439 = vpack.c.b16 %v4375, %v4371
    %v4440 = vpack.c.b16 %v4376, %v4372
    %v4441 = vpack.c.b16 %v4377, %v4373
    %4506 = vmatpush.bf16.msra.mxu0 %v4406
    %4507 = vmatpush.bf16.msra.mxu0 %v4402
    %4508 = vmatpush.bf16.msra.mxu0 %v4398
    %4509 = vmatpush.bf16.msra.mxu0 %v4394
    %4510 = vmatpush.bf16.msra.mxu0 %v4390
    %4511 = vmatpush.bf16.msra.mxu0 %v4386
    %4512 = vmatpush.bf16.msra.mxu0 %v4382
    %4513 = vmatpush.bf16.msra.mxu0 %v4378
    %4514 = vmatmul.bf16.gmra.mxu0 %v4121
    %v4515 = vpop.f32.mrf.mxu0
    %v4516 = vadd.f32 %v3468, %v4515
    %v4517 = vpop.f32.mrf.mxu0
    %4518 = vdwg.mxu0
    %4519 = vmatpush.bf16.msra.mxu0 %v4438
    %4520 = vmatpush.bf16.msra.mxu0 %v4434
    %4521 = vmatpush.bf16.msra.mxu0 %v4430
    %4522 = vmatpush.bf16.msra.mxu0 %v4426
    %4523 = vmatpush.bf16.msra.mxu0 %v4422
    %4524 = vmatpush.bf16.msra.mxu0 %v4418
    %4525 = vmatpush.bf16.msra.mxu0 %v4414
    %4526 = vmatpush.bf16.msra.mxu0 %v4410
    %4527 = vmatmul.bf16.gmra.mxu0 %v3455
    %v4528 = vpop.f32.mrf.mxu0
    %v4529 = vadd.f32 %v4516, %v4528
    %v4530 = vpop.f32.mrf.mxu0
    %4531 = vdwg.mxu0
    %4532 = vmatpush.bf16.msra.mxu0 %v4407
    %4533 = vmatpush.bf16.msra.mxu0 %v4403
    %4534 = vmatpush.bf16.msra.mxu0 %v4399
    %4535 = vmatpush.bf16.msra.mxu0 %v4395
    %4536 = vmatpush.bf16.msra.mxu0 %v4391
    %4537 = vmatpush.bf16.msra.mxu0 %v4387
    %4538 = vmatpush.bf16.msra.mxu0 %v4383
    %4539 = vmatpush.bf16.msra.mxu0 %v4379
    %4540 = vmatmul.bf16.gmra.mxu0 %v4121
    %v4541 = vpop.f32.mrf.mxu0
    %v4542 = vadd.f32 %v3469, %v4541
    %v4543 = vpop.f32.mrf.mxu0
    %4544 = vdwg.mxu0
    %4545 = vmatpush.bf16.msra.mxu0 %v4439
    %4546 = vmatpush.bf16.msra.mxu0 %v4435
    %4547 = vmatpush.bf16.msra.mxu0 %v4431
    %4548 = vmatpush.bf16.msra.mxu0 %v4427
    %4549 = vmatpush.bf16.msra.mxu0 %v4423
    %4550 = vmatpush.bf16.msra.mxu0 %v4419
    %4551 = vmatpush.bf16.msra.mxu0 %v4415
    %4552 = vmatpush.bf16.msra.mxu0 %v4411
    %4553 = vmatmul.bf16.gmra.mxu0 %v3455
    %v4554 = vpop.f32.mrf.mxu0
    %v4555 = vadd.f32 %v4542, %v4554
    %v4556 = vpop.f32.mrf.mxu0
    %4557 = vdwg.mxu0
    %4558 = vmatpush.bf16.msra.mxu0 %v4408
    %4559 = vmatpush.bf16.msra.mxu0 %v4404
    %4560 = vmatpush.bf16.msra.mxu0 %v4400
    %4561 = vmatpush.bf16.msra.mxu0 %v4396
    %4562 = vmatpush.bf16.msra.mxu0 %v4392
    %4563 = vmatpush.bf16.msra.mxu0 %v4388
    %4564 = vmatpush.bf16.msra.mxu0 %v4384
    %4565 = vmatpush.bf16.msra.mxu0 %v4380
    %4566 = vmatmul.bf16.gmra.mxu0 %v4121
    %v4567 = vpop.f32.mrf.mxu0
    %v4568 = vadd.f32 %v3470, %v4567
    %v4569 = vpop.f32.mrf.mxu0
    %4570 = vdwg.mxu0
    %4571 = vmatpush.bf16.msra.mxu0 %v4440
    %4572 = vmatpush.bf16.msra.mxu0 %v4436
    %4573 = vmatpush.bf16.msra.mxu0 %v4432
    %4574 = vmatpush.bf16.msra.mxu0 %v4428
    %4575 = vmatpush.bf16.msra.mxu0 %v4424
    %4576 = vmatpush.bf16.msra.mxu0 %v4420
    %4577 = vmatpush.bf16.msra.mxu0 %v4416
    %4578 = vmatpush.bf16.msra.mxu0 %v4412
    %4579 = vmatmul.bf16.gmra.mxu0 %v3455
    %v4580 = vpop.f32.mrf.mxu0
    %v4581 = vadd.f32 %v4568, %v4580
    %v4582 = vpop.f32.mrf.mxu0
    %4583 = vdwg.mxu0
    %4584 = vmatpush.bf16.msra.mxu0 %v4409
    %4585 = vmatpush.bf16.msra.mxu0 %v4405
    %4586 = vmatpush.bf16.msra.mxu0 %v4401
    %4587 = vmatpush.bf16.msra.mxu0 %v4397
    %4588 = vmatpush.bf16.msra.mxu0 %v4393
    %4589 = vmatpush.bf16.msra.mxu0 %v4389
    %4590 = vmatpush.bf16.msra.mxu0 %v4385
    %4591 = vmatpush.bf16.msra.mxu0 %v4381
    %4592 = vmatmul.bf16.gmra.mxu0 %v4121
    %v4593 = vpop.f32.mrf.mxu0
    %v4594 = vadd.f32 %v3471, %v4593
    %v4595 = vpop.f32.mrf.mxu0
    %4596 = vdwg.mxu0
    %4597 = vmatpush.bf16.msra.mxu0 %v4441
    %4598 = vmatpush.bf16.msra.mxu0 %v4437
    %4599 = vmatpush.bf16.msra.mxu0 %v4433
    %4600 = vmatpush.bf16.msra.mxu0 %v4429
    %4601 = vmatpush.bf16.msra.mxu0 %v4425
    %4602 = vmatpush.bf16.msra.mxu0 %v4421
    %4603 = vmatpush.bf16.msra.mxu0 %v4417
    %4604 = vmatpush.bf16.msra.mxu0 %v4413
    %4605 = vmatmul.bf16.gmra.mxu0 %v3455
    %v4606 = vpop.f32.mrf.mxu0
    %v4607 = vadd.f32 %v4594, %v4606
    %v4608 = vpop.f32.mrf.mxu0
    %4609 = vdwg.mxu0
    %v4610 = vxor.u32 %v4529, 2147483648
    %v4611 = vxor.u32 %v4555, 2147483648
    %v4612 = vxor.u32 %v4581, 2147483648
    %v4613 = vmul.f32 %v4610, 1.442695
    %v4614 = vpow.pop %v4613
    %v4615 = vmul.f32 %v4611, 1.442695
    %v4616 = vpow.pop %v4615
    %v4617 = vmul.f32 %v4612, 1.442695
    %v4618 = vpow.pop %v4617
    %v4619 = vadd.f32 %v4614, 1.0
    %v4620 = vadd.f32 %v4616, 1.0
    %v4621 = vadd.f32 %v4618, 1.0
    %v4622 = vrcp.pop %v4619
    %v4623 = vmul.f32 %v4619, %v4622
    %v4624 = vsub.f32 1.0, %v4623
    %v4625 = vmul.f32 %v4622, %v4624
    %v4626 = vadd.f32 %v4622, %v4625
    %vm4627 = vweird.f32 %v4619
    %vm4628 = vweird.f32 %v4622
    %vm4629 = vmor %vm4627, %vm4628
    %v4630 = vsel %vm4629, %v4622, %v4626
    %v4631 = vand.u32 2147483647, %v4619
    %vm4632 = vcmp.eq.f32.partialorder %v4631, 8.507059e+37
    %v4633 = vand.u32 %v4619, 2147483648
    %v4634 = vor.u32 1.1754944e-38, %v4633
    %v4635 = vsel %vm4632, %v4634, %v4630
    %v4636 = vmul.f32 1.0, %v4635
    %v4637 = vrcp.pop %v4620
    %v4638 = vmul.f32 %v4620, %v4637
    %v4639 = vsub.f32 1.0, %v4638
    %v4640 = vmul.f32 %v4637, %v4639
    %v4641 = vadd.f32 %v4637, %v4640
    %vm4642 = vweird.f32 %v4620
    %vm4643 = vweird.f32 %v4637
    %vm4644 = vmor %vm4642, %vm4643
    %v4645 = vsel %vm4644, %v4637, %v4641
    %v4646 = vand.u32 2147483647, %v4620
    %vm4647 = vcmp.eq.f32.partialorder %v4646, 8.507059e+37
    %v4648 = vand.u32 %v4620, 2147483648
    %v4649 = vor.u32 1.1754944e-38, %v4648
    %v4650 = vsel %vm4647, %v4649, %v4645
    %v4651 = vmul.f32 1.0, %v4650
    %v4652 = vrcp.pop %v4621
    %v4653 = vmul.f32 %v4621, %v4652
    %v4654 = vsub.f32 1.0, %v4653
    %v4655 = vmul.f32 %v4652, %v4654
    %v4656 = vadd.f32 %v4652, %v4655
    %vm4657 = vweird.f32 %v4621
    %vm4658 = vweird.f32 %v4652
    %vm4659 = vmor %vm4657, %vm4658
    %v4660 = vsel %vm4659, %v4652, %v4656
    %v4661 = vand.u32 2147483647, %v4621
    %vm4662 = vcmp.eq.f32.partialorder %v4661, 8.507059e+37
    %v4663 = vand.u32 %v4621, 2147483648
    %v4664 = vor.u32 1.1754944e-38, %v4663
    %v4665 = vsel %vm4662, %v4664, %v4660
    %v4666 = vmul.f32 1.0, %v4665
    %v4667 = vtanh.pop %v4607
    %v4668 = vmul.f32 %v4651, %v3452
    %v4669 = vmul.f32 %v4636, %v4667
    %v4670 = vadd.f32 %v4668, %v4669
    %v4671 = vtanh.pop %v4670
    %v4672 = vmul.f32 %v4666, %v4671
    %v4673 = vpack.c.bf16 %v4672, %v4672
    %v4674 = vld [vmem:[%s13] sm:$0xf]
    %v4675 = vld [vmem:[%s13 + $0x4] sm:$0xf]
    %v4676 = vld [vmem:[%s13 + $0x8] sm:$0xf]
    %v4677 = vld [vmem:[%s13 + $0xc] sm:$0xf]
    %v4678 = vld [vmem:[%s13 + $0x10] sm:$0xf]
    %v4679 = vld [vmem:[%s13 + $0x14] sm:$0xf]
    %v4680 = vld [vmem:[%s13 + $0x18] sm:$0xf]
    %v4681 = vld [vmem:[%s13 + $0x1c] sm:$0xf]
    %v4682 = vld [vmem:[%s13 + $0x20] sm:$0xf]
    %v4683 = vld [vmem:[%s13 + $0x24] sm:$0xf]
    %v4684 = vld [vmem:[%s13 + $0x28] sm:$0xf]
    %v4685 = vld [vmem:[%s13 + $0x2c] sm:$0xf]
    %v4686 = vld [vmem:[%s13 + $0x30] sm:$0xf]
    %v4687 = vld [vmem:[%s13 + $0x34] sm:$0xf]
    %v4688 = vld [vmem:[%s13 + $0x38] sm:$0xf]
    %v4689 = vld [vmem:[%s13 + $0x3c] sm:$0xf]
    %v4706 = vunpack.c.l.b16 %v4674
    %v4707 = vunpack.c.l.b16 %v4675
    %v4708 = vunpack.c.l.b16 %v4676
    %v4709 = vunpack.c.l.b16 %v4677
    %v4710 = vunpack.c.l.b16 %v4678
    %v4711 = vunpack.c.l.b16 %v4679
    %v4712 = vunpack.c.l.b16 %v4680
    %v4713 = vunpack.c.l.b16 %v4681
    %v4714 = vunpack.c.l.b16 %v4682
    %v4715 = vunpack.c.l.b16 %v4683
    %v4716 = vunpack.c.l.b16 %v4684
    %v4717 = vunpack.c.l.b16 %v4685
    %v4718 = vunpack.c.l.b16 %v4686
    %v4719 = vunpack.c.l.b16 %v4687
    %v4720 = vunpack.c.l.b16 %v4688
    %v4721 = vunpack.c.l.b16 %v4689
    %v4722 = vpack.c.b16 %v4707, %v4706
    %v4723 = vpack.c.b16 %v4709, %v4708
    %v4724 = vpack.c.b16 %v4711, %v4710
    %v4725 = vpack.c.b16 %v4713, %v4712
    %v4726 = vpack.c.b16 %v4715, %v4714
    %v4727 = vpack.c.b16 %v4717, %v4716
    %v4728 = vpack.c.b16 %v4719, %v4718
    %v4729 = vpack.c.b16 %v4721, %v4720
    %4738 = vmatpush.bf16.msra.mxu0 %v4729
    %4739 = vmatpush.bf16.msra.mxu0 %v4728
    %4740 = vmatpush.bf16.msra.mxu0 %v4727
    %4741 = vmatpush.bf16.msra.mxu0 %v4726
    %4742 = vmatpush.bf16.msra.mxu0 %v4725
    %4743 = vmatpush.bf16.msra.mxu0 %v4724
    %4744 = vmatpush.bf16.msra.mxu0 %v4723
    %4745 = vmatpush.bf16.msra.mxu0 %v4722
    %4746 = vmatmul.bf16.gmra.mxu0 %v4673
    %v4747 = vpop.f32.mrf.mxu0
    %v4748 = vadd.f32 %v3478, %v4747
    %v4749 = vpop.f32.mrf.mxu0
    %4750 = vdwg.mxu0
    %s4751 = scalar_lea.vmem [#allocation13], 8
    %4752 = vst [vmem:[%s4751] sm:$0xff] %v4748
    %s4753 = scalar_lea.vmem %s1, 8
    %v4754 = vld [vmem:[%s4753] sm:$0xff]
    %4755 = vset.pattern.permute.xlu0 0
    %4756 = vperm.xlu0 %4755, %v4754
    %v4757 = vpop.permute.xlu0 %4756
    %vm4758 = vcmp.eq.s32.totalorder %v3481, %v4757
    %v4759 = vsel %vm4758, 1, 0
    %v4760 = vcvt.s32.f32 %v4759
    %v4761 = vpack.c.bf16 %v4760, %v4760
    %s4762 = sld [smem:[#allocation3 + $0x1]]
    %p4763 = scmp.gt.s32.totalorder %s4762, 0
    // Predicated region
    $region82: #{seq2seq_forward.1} parent=1 // pred_check
      %p4764 = pneg %p4763
    $region83: #{seq2seq_forward.1} parent=1 // pred_check_branch
      %4766 = sbr.rel (%p4764) target = $region85
    $region84: #{seq2seq_forward.1} parent=1 // pred_region
      _
    $region85: #{seq2seq_forward.1} parent=1 // pred_fallthru
      _
    %p4767 = pneg %p4763
    // Predicated region
    $region86: #{seq2seq_forward.1} parent=1 // pred_check
      _
    $region87: #{seq2seq_forward.1} parent=1 // pred_check_branch
      %4769 = sbr.rel (%p4763) target = $region89
    $region88: #{seq2seq_forward.1} parent=1 // pred_region
      %4770 = vmax.xlane.f32.xlu0 %v4748
      %v4771 = vpop.xlane.xlu0 %4770
      %vm4772 = vcmp.eq.f32.partialorder %v4748, %v4771
      %v4773 = vsel %vm4772, %v3482, 128.0
      %4774 = vmin.xlane.f32.xlu0 %v4773
      %v4775 = vpop.xlane.xlu0 %4774
      %vm4776 = vcmp.eq.f32.partialorder %v3482, %v4775
      %v4777 = vsel %vm4776, 1, 0
      %v4778 = vcvt.s32.f32 %v4777
      %v4779 = vpack.c.bf16 %v4778, %v4778
    $region89: #{seq2seq_forward.1} parent=1 // pred_fallthru
      %v4780 = vphi %v4761, %v4779
    %v4781 = vld [vmem:[%s8] sm:$0xf]
    %v4782 = vld [vmem:[%s8 + $0x4] sm:$0xf]
    %v4783 = vld [vmem:[%s8 + $0x8] sm:$0xf]
    %v4784 = vld [vmem:[%s8 + $0xc] sm:$0xf]
    %v4785 = vld [vmem:[%s8 + $0x10] sm:$0xf]
    %v4786 = vld [vmem:[%s8 + $0x14] sm:$0xf]
    %v4787 = vld [vmem:[%s8 + $0x18] sm:$0xf]
    %v4788 = vld [vmem:[%s8 + $0x1c] sm:$0xf]
    %v4789 = vld [vmem:[%s8 + $0x20] sm:$0xf]
    %v4790 = vld [vmem:[%s8 + $0x24] sm:$0xf]
    %v4791 = vld [vmem:[%s8 + $0x28] sm:$0xf]
    %v4792 = vld [vmem:[%s8 + $0x2c] sm:$0xf]
    %v4793 = vld [vmem:[%s8 + $0x30] sm:$0xf]
    %v4794 = vld [vmem:[%s8 + $0x34] sm:$0xf]
    %v4795 = vld [vmem:[%s8 + $0x38] sm:$0xf]
    %v4796 = vld [vmem:[%s8 + $0x3c] sm:$0xf]
    %v4813 = vunpack.c.l.b16 %v4781
    %v4814 = vunpack.c.l.b16 %v4782
    %v4815 = vunpack.c.l.b16 %v4783
    %v4816 = vunpack.c.l.b16 %v4784
    %v4817 = vunpack.c.l.b16 %v4785
    %v4818 = vunpack.c.l.b16 %v4786
    %v4819 = vunpack.c.l.b16 %v4787
    %v4820 = vunpack.c.l.b16 %v4788
    %v4821 = vunpack.c.l.b16 %v4789
    %v4822 = vunpack.c.l.b16 %v4790
    %v4823 = vunpack.c.l.b16 %v4791
    %v4824 = vunpack.c.l.b16 %v4792
    %v4825 = vunpack.c.l.b16 %v4793
    %v4826 = vunpack.c.l.b16 %v4794
    %v4827 = vunpack.c.l.b16 %v4795
    %v4828 = vunpack.c.l.b16 %v4796
    %v4829 = vpack.c.b16 %v4814, %v4813
    %v4830 = vpack.c.b16 %v4816, %v4815
    %v4831 = vpack.c.b16 %v4818, %v4817
    %v4832 = vpack.c.b16 %v4820, %v4819
    %v4833 = vpack.c.b16 %v4822, %v4821
    %v4834 = vpack.c.b16 %v4824, %v4823
    %v4835 = vpack.c.b16 %v4826, %v4825
    %v4836 = vpack.c.b16 %v4828, %v4827
    %4845 = vmatpush.bf16.msra.mxu0 %v4836
    %4846 = vmatpush.bf16.msra.mxu0 %v4835
    %4847 = vmatpush.bf16.msra.mxu0 %v4834
    %4848 = vmatpush.bf16.msra.mxu0 %v4833
    %4849 = vmatpush.bf16.msra.mxu0 %v4832
    %4850 = vmatpush.bf16.msra.mxu0 %v4831
    %4851 = vmatpush.bf16.msra.mxu0 %v4830
    %4852 = vmatpush.bf16.msra.mxu0 %v4829
    %4853 = vmatmul.bf16.gmra.mxu0 %v4780
    %v4854 = vpop.f32.mrf.mxu0
    %v4855 = vadd.f32 0.0, %v4854
    %v4856 = vpop.f32.mrf.mxu0
    %4857 = vdwg.mxu0
    %v4858 = vpack.c.bf16 %v4855, %v4855
    %v4859 = vld [vmem:[#allocation10] sm:$0xff]
    %v4860 = vld [vmem:[#allocation10 + $0x8] sm:$0xff]
    %v4861 = vld [vmem:[#allocation10 + $0x10] sm:$0xff]
    %v4862 = vld [vmem:[#allocation10 + $0x18] sm:$0xff]
    %v4863 = vld [vmem:[#allocation10 + $0x20] sm:$0xff]
    %v4864 = vld [vmem:[#allocation10 + $0x28] sm:$0xff]
    %v4865 = vld [vmem:[#allocation10 + $0x30] sm:$0xff]
    %v4866 = vld [vmem:[#allocation10 + $0x38] sm:$0xff]
    %v4867 = vld [vmem:[#allocation10 + $0x40] sm:$0xff]
    %v4868 = vld [vmem:[#allocation10 + $0x48] sm:$0xff]
    %v4869 = vld [vmem:[#allocation10 + $0x50] sm:$0xff]
    %v4870 = vld [vmem:[#allocation10 + $0x58] sm:$0xff]
    %v4871 = vld [vmem:[#allocation10 + $0x60] sm:$0xff]
    %v4872 = vld [vmem:[#allocation10 + $0x68] sm:$0xff]
    %v4873 = vld [vmem:[#allocation10 + $0x70] sm:$0xff]
    %v4874 = vld [vmem:[#allocation10 + $0x78] sm:$0xff]
    %v4875 = vld [vmem:[#allocation10 + $0x80] sm:$0xff]
    %v4876 = vld [vmem:[#allocation10 + $0x88] sm:$0xff]
    %v4877 = vld [vmem:[#allocation10 + $0x90] sm:$0xff]
    %v4878 = vld [vmem:[#allocation10 + $0x98] sm:$0xff]
    %v4879 = vld [vmem:[#allocation10 + $0xa0] sm:$0xff]
    %v4880 = vld [vmem:[#allocation10 + $0xa8] sm:$0xff]
    %v4881 = vld [vmem:[#allocation10 + $0xb0] sm:$0xff]
    %v4882 = vld [vmem:[#allocation10 + $0xb8] sm:$0xff]
    %v4883 = vld [vmem:[#allocation10 + $0xc0] sm:$0xff]
    %v4884 = vld [vmem:[#allocation10 + $0xc8] sm:$0xff]
    %v4885 = vld [vmem:[#allocation10 + $0xd0] sm:$0xff]
    %v4886 = vld [vmem:[#allocation10 + $0xd8] sm:$0xff]
    %v4887 = vld [vmem:[#allocation10 + $0xe0] sm:$0xff]
    %v4888 = vld [vmem:[#allocation10 + $0xe8] sm:$0xff]
    %v4889 = vld [vmem:[#allocation10 + $0xf0] sm:$0xff]
    %v4890 = vld [vmem:[#allocation10 + $0xf8] sm:$0xff]
    %v4891 = vld [vmem:[#allocation10 + $0x100] sm:$0xff]
    %v4892 = vld [vmem:[#allocation10 + $0x108] sm:$0xff]
    %v4893 = vld [vmem:[#allocation10 + $0x110] sm:$0xff]
    %v4894 = vld [vmem:[#allocation10 + $0x118] sm:$0xff]
    %v4895 = vld [vmem:[#allocation10 + $0x120] sm:$0xff]
    %v4896 = vld [vmem:[#allocation10 + $0x128] sm:$0xff]
    %v4897 = vld [vmem:[#allocation10 + $0x130] sm:$0xff]
    %v4898 = vld [vmem:[#allocation10 + $0x138] sm:$0xff]
    %v4899 = vld [vmem:[#allocation10 + $0x140] sm:$0xff]
    %v4900 = vld [vmem:[#allocation10 + $0x148] sm:$0xff]
    %v4901 = vld [vmem:[#allocation10 + $0x150] sm:$0xff]
    %v4902 = vld [vmem:[#allocation10 + $0x158] sm:$0xff]
    %v4903 = vld [vmem:[#allocation10 + $0x160] sm:$0xff]
    %v4904 = vld [vmem:[#allocation10 + $0x168] sm:$0xff]
    %v4905 = vld [vmem:[#allocation10 + $0x170] sm:$0xff]
    %v4906 = vld [vmem:[#allocation10 + $0x178] sm:$0xff]
    %v4907 = vld [vmem:[#allocation10 + $0x180] sm:$0xff]
    %v4908 = vld [vmem:[#allocation10 + $0x188] sm:$0xff]
    %v4909 = vld [vmem:[#allocation10 + $0x190] sm:$0xff]
    %v4910 = vld [vmem:[#allocation10 + $0x198] sm:$0xff]
    %v4911 = vld [vmem:[#allocation10 + $0x1a0] sm:$0xff]
    %v4912 = vld [vmem:[#allocation10 + $0x1a8] sm:$0xff]
    %v4913 = vld [vmem:[#allocation10 + $0x1b0] sm:$0xff]
    %v4914 = vld [vmem:[#allocation10 + $0x1b8] sm:$0xff]
    %v4915 = vld [vmem:[#allocation10 + $0x1c0] sm:$0xff]
    %v4916 = vld [vmem:[#allocation10 + $0x1c8] sm:$0xff]
    %v4917 = vld [vmem:[#allocation10 + $0x1d0] sm:$0xff]
    %v4918 = vld [vmem:[#allocation10 + $0x1d8] sm:$0xff]
    %v4919 = vld [vmem:[#allocation10 + $0x1e0] sm:$0xff]
    %v4920 = vld [vmem:[#allocation10 + $0x1e8] sm:$0xff]
    %v4921 = vld [vmem:[#allocation10 + $0x1f0] sm:$0xff]
    %v4922 = vld [vmem:[#allocation10 + $0x1f8] sm:$0xff]
    %v4987 = vunpack.c.l.b16 %v4859
    %v4988 = vunpack.c.h.b16 %v4859
    %v4989 = vunpack.c.l.b16 %v4860
    %v4990 = vunpack.c.h.b16 %v4860
    %v4991 = vunpack.c.l.b16 %v4861
    %v4992 = vunpack.c.h.b16 %v4861
    %v4993 = vunpack.c.l.b16 %v4862
    %v4994 = vunpack.c.h.b16 %v4862
    %v4995 = vunpack.c.l.b16 %v4863
    %v4996 = vunpack.c.h.b16 %v4863
    %v4997 = vunpack.c.l.b16 %v4864
    %v4998 = vunpack.c.h.b16 %v4864
    %v4999 = vunpack.c.l.b16 %v4865
    %v5000 = vunpack.c.h.b16 %v4865
    %v5001 = vunpack.c.l.b16 %v4866
    %v5002 = vunpack.c.h.b16 %v4866
    %v5003 = vunpack.c.l.b16 %v4867
    %v5004 = vunpack.c.h.b16 %v4867
    %v5005 = vunpack.c.l.b16 %v4868
    %v5006 = vunpack.c.h.b16 %v4868
    %v5007 = vunpack.c.l.b16 %v4869
    %v5008 = vunpack.c.h.b16 %v4869
    %v5009 = vunpack.c.l.b16 %v4870
    %v5010 = vunpack.c.h.b16 %v4870
    %v5011 = vunpack.c.l.b16 %v4871
    %v5012 = vunpack.c.h.b16 %v4871
    %v5013 = vunpack.c.l.b16 %v4872
    %v5014 = vunpack.c.h.b16 %v4872
    %v5015 = vunpack.c.l.b16 %v4873
    %v5016 = vunpack.c.h.b16 %v4873
    %v5017 = vunpack.c.l.b16 %v4874
    %v5018 = vunpack.c.h.b16 %v4874
    %v5019 = vunpack.c.l.b16 %v4875
    %v5020 = vunpack.c.h.b16 %v4875
    %v5021 = vunpack.c.l.b16 %v4876
    %v5022 = vunpack.c.h.b16 %v4876
    %v5023 = vunpack.c.l.b16 %v4877
    %v5024 = vunpack.c.h.b16 %v4877
    %v5025 = vunpack.c.l.b16 %v4878
    %v5026 = vunpack.c.h.b16 %v4878
    %v5027 = vunpack.c.l.b16 %v4879
    %v5028 = vunpack.c.h.b16 %v4879
    %v5029 = vunpack.c.l.b16 %v4880
    %v5030 = vunpack.c.h.b16 %v4880
    %v5031 = vunpack.c.l.b16 %v4881
    %v5032 = vunpack.c.h.b16 %v4881
    %v5033 = vunpack.c.l.b16 %v4882
    %v5034 = vunpack.c.h.b16 %v4882
    %v5035 = vunpack.c.l.b16 %v4883
    %v5036 = vunpack.c.h.b16 %v4883
    %v5037 = vunpack.c.l.b16 %v4884
    %v5038 = vunpack.c.h.b16 %v4884
    %v5039 = vunpack.c.l.b16 %v4885
    %v5040 = vunpack.c.h.b16 %v4885
    %v5041 = vunpack.c.l.b16 %v4886
    %v5042 = vunpack.c.h.b16 %v4886
    %v5043 = vunpack.c.l.b16 %v4887
    %v5044 = vunpack.c.h.b16 %v4887
    %v5045 = vunpack.c.l.b16 %v4888
    %v5046 = vunpack.c.h.b16 %v4888
    %v5047 = vunpack.c.l.b16 %v4889
    %v5048 = vunpack.c.h.b16 %v4889
    %v5049 = vunpack.c.l.b16 %v4890
    %v5050 = vunpack.c.h.b16 %v4890
    %v5051 = vunpack.c.l.b16 %v4891
    %v5052 = vunpack.c.h.b16 %v4891
    %v5053 = vunpack.c.l.b16 %v4892
    %v5054 = vunpack.c.h.b16 %v4892
    %v5055 = vunpack.c.l.b16 %v4893
    %v5056 = vunpack.c.h.b16 %v4893
    %v5057 = vunpack.c.l.b16 %v4894
    %v5058 = vunpack.c.h.b16 %v4894
    %v5059 = vunpack.c.l.b16 %v4895
    %v5060 = vunpack.c.h.b16 %v4895
    %v5061 = vunpack.c.l.b16 %v4896
    %v5062 = vunpack.c.h.b16 %v4896
    %v5063 = vunpack.c.l.b16 %v4897
    %v5064 = vunpack.c.h.b16 %v4897
    %v5065 = vunpack.c.l.b16 %v4898
    %v5066 = vunpack.c.h.b16 %v4898
    %v5067 = vunpack.c.l.b16 %v4899
    %v5068 = vunpack.c.h.b16 %v4899
    %v5069 = vunpack.c.l.b16 %v4900
    %v5070 = vunpack.c.h.b16 %v4900
    %v5071 = vunpack.c.l.b16 %v4901
    %v5072 = vunpack.c.h.b16 %v4901
    %v5073 = vunpack.c.l.b16 %v4902
    %v5074 = vunpack.c.h.b16 %v4902
    %v5075 = vunpack.c.l.b16 %v4903
    %v5076 = vunpack.c.h.b16 %v4903
    %v5077 = vunpack.c.l.b16 %v4904
    %v5078 = vunpack.c.h.b16 %v4904
    %v5079 = vunpack.c.l.b16 %v4905
    %v5080 = vunpack.c.h.b16 %v4905
    %v5081 = vunpack.c.l.b16 %v4906
    %v5082 = vunpack.c.h.b16 %v4906
    %v5083 = vunpack.c.l.b16 %v4907
    %v5084 = vunpack.c.h.b16 %v4907
    %v5085 = vunpack.c.l.b16 %v4908
    %v5086 = vunpack.c.h.b16 %v4908
    %v5087 = vunpack.c.l.b16 %v4909
    %v5088 = vunpack.c.h.b16 %v4909
    %v5089 = vunpack.c.l.b16 %v4910
    %v5090 = vunpack.c.h.b16 %v4910
    %v5091 = vunpack.c.l.b16 %v4911
    %v5092 = vunpack.c.h.b16 %v4911
    %v5093 = vunpack.c.l.b16 %v4912
    %v5094 = vunpack.c.h.b16 %v4912
    %v5095 = vunpack.c.l.b16 %v4913
    %v5096 = vunpack.c.h.b16 %v4913
    %v5097 = vunpack.c.l.b16 %v4914
    %v5098 = vunpack.c.h.b16 %v4914
    %v5099 = vunpack.c.l.b16 %v4915
    %v5100 = vunpack.c.h.b16 %v4915
    %v5101 = vunpack.c.l.b16 %v4916
    %v5102 = vunpack.c.h.b16 %v4916
    %v5103 = vunpack.c.l.b16 %v4917
    %v5104 = vunpack.c.h.b16 %v4917
    %v5105 = vunpack.c.l.b16 %v4918
    %v5106 = vunpack.c.h.b16 %v4918
    %v5107 = vunpack.c.l.b16 %v4919
    %v5108 = vunpack.c.h.b16 %v4919
    %v5109 = vunpack.c.l.b16 %v4920
    %v5110 = vunpack.c.h.b16 %v4920
    %v5111 = vunpack.c.l.b16 %v4921
    %v5112 = vunpack.c.h.b16 %v4921
    %v5113 = vunpack.c.l.b16 %v4922
    %v5114 = vunpack.c.h.b16 %v4922
    %v5115 = vpack.c.b16 %v4991, %v4987
    %v5116 = vpack.c.b16 %v4992, %v4988
    %v5117 = vpack.c.b16 %v4993, %v4989
    %v5118 = vpack.c.b16 %v4994, %v4990
    %v5119 = vpack.c.b16 %v4999, %v4995
    %v5120 = vpack.c.b16 %v5000, %v4996
    %v5121 = vpack.c.b16 %v5001, %v4997
    %v5122 = vpack.c.b16 %v5002, %v4998
    %v5123 = vpack.c.b16 %v5007, %v5003
    %v5124 = vpack.c.b16 %v5008, %v5004
    %v5125 = vpack.c.b16 %v5009, %v5005
    %v5126 = vpack.c.b16 %v5010, %v5006
    %v5127 = vpack.c.b16 %v5015, %v5011
    %v5128 = vpack.c.b16 %v5016, %v5012
    %v5129 = vpack.c.b16 %v5017, %v5013
    %v5130 = vpack.c.b16 %v5018, %v5014
    %v5131 = vpack.c.b16 %v5023, %v5019
    %v5132 = vpack.c.b16 %v5024, %v5020
    %v5133 = vpack.c.b16 %v5025, %v5021
    %v5134 = vpack.c.b16 %v5026, %v5022
    %v5135 = vpack.c.b16 %v5031, %v5027
    %v5136 = vpack.c.b16 %v5032, %v5028
    %v5137 = vpack.c.b16 %v5033, %v5029
    %v5138 = vpack.c.b16 %v5034, %v5030
    %v5139 = vpack.c.b16 %v5039, %v5035
    %v5140 = vpack.c.b16 %v5040, %v5036
    %v5141 = vpack.c.b16 %v5041, %v5037
    %v5142 = vpack.c.b16 %v5042, %v5038
    %v5143 = vpack.c.b16 %v5047, %v5043
    %v5144 = vpack.c.b16 %v5048, %v5044
    %v5145 = vpack.c.b16 %v5049, %v5045
    %v5146 = vpack.c.b16 %v5050, %v5046
    %v5147 = vpack.c.b16 %v5055, %v5051
    %v5148 = vpack.c.b16 %v5056, %v5052
    %v5149 = vpack.c.b16 %v5057, %v5053
    %v5150 = vpack.c.b16 %v5058, %v5054
    %v5151 = vpack.c.b16 %v5063, %v5059
    %v5152 = vpack.c.b16 %v5064, %v5060
    %v5153 = vpack.c.b16 %v5065, %v5061
    %v5154 = vpack.c.b16 %v5066, %v5062
    %v5155 = vpack.c.b16 %v5071, %v5067
    %v5156 = vpack.c.b16 %v5072, %v5068
    %v5157 = vpack.c.b16 %v5073, %v5069
    %v5158 = vpack.c.b16 %v5074, %v5070
    %v5159 = vpack.c.b16 %v5079, %v5075
    %v5160 = vpack.c.b16 %v5080, %v5076
    %v5161 = vpack.c.b16 %v5081, %v5077
    %v5162 = vpack.c.b16 %v5082, %v5078
    %v5163 = vpack.c.b16 %v5087, %v5083
    %v5164 = vpack.c.b16 %v5088, %v5084
    %v5165 = vpack.c.b16 %v5089, %v5085
    %v5166 = vpack.c.b16 %v5090, %v5086
    %v5167 = vpack.c.b16 %v5095, %v5091
    %v5168 = vpack.c.b16 %v5096, %v5092
    %v5169 = vpack.c.b16 %v5097, %v5093
    %v5170 = vpack.c.b16 %v5098, %v5094
    %v5171 = vpack.c.b16 %v5103, %v5099
    %v5172 = vpack.c.b16 %v5104, %v5100
    %v5173 = vpack.c.b16 %v5105, %v5101
    %v5174 = vpack.c.b16 %v5106, %v5102
    %v5175 = vpack.c.b16 %v5111, %v5107
    %v5176 = vpack.c.b16 %v5112, %v5108
    %v5177 = vpack.c.b16 %v5113, %v5109
    %v5178 = vpack.c.b16 %v5114, %v5110
    %5243 = vmatpush.bf16.msra.mxu0 %v5143
    %5244 = vmatpush.bf16.msra.mxu0 %v5139
    %5245 = vmatpush.bf16.msra.mxu0 %v5135
    %5246 = vmatpush.bf16.msra.mxu0 %v5131
    %5247 = vmatpush.bf16.msra.mxu0 %v5127
    %5248 = vmatpush.bf16.msra.mxu0 %v5123
    %5249 = vmatpush.bf16.msra.mxu0 %v5119
    %5250 = vmatpush.bf16.msra.mxu0 %v5115
    %5251 = vmatmul.bf16.gmra.mxu0 %v4858
    %v5252 = vpop.f32.mrf.mxu0
    %v5253 = vadd.f32 %v3458, %v5252
    %v5254 = vpop.f32.mrf.mxu0
    %5255 = vdwg.mxu0
    %5256 = vmatpush.bf16.msra.mxu0 %v5175
    %5257 = vmatpush.bf16.msra.mxu0 %v5171
    %5258 = vmatpush.bf16.msra.mxu0 %v5167
    %5259 = vmatpush.bf16.msra.mxu0 %v5163
    %5260 = vmatpush.bf16.msra.mxu0 %v5159
    %5261 = vmatpush.bf16.msra.mxu0 %v5155
    %5262 = vmatpush.bf16.msra.mxu0 %v5151
    %5263 = vmatpush.bf16.msra.mxu0 %v5147
    %5264 = vmatmul.bf16.gmra.mxu0 %v4121
    %v5265 = vpop.f32.mrf.mxu0
    %v5266 = vadd.f32 %v5253, %v5265
    %v5267 = vpop.f32.mrf.mxu0
    %5268 = vdwg.mxu0
    %5269 = vmatpush.bf16.msra.mxu0 %v5144
    %5270 = vmatpush.bf16.msra.mxu0 %v5140
    %5271 = vmatpush.bf16.msra.mxu0 %v5136
    %5272 = vmatpush.bf16.msra.mxu0 %v5132
    %5273 = vmatpush.bf16.msra.mxu0 %v5128
    %5274 = vmatpush.bf16.msra.mxu0 %v5124
    %5275 = vmatpush.bf16.msra.mxu0 %v5120
    %5276 = vmatpush.bf16.msra.mxu0 %v5116
    %5277 = vmatmul.bf16.gmra.mxu0 %v4858
    %v5278 = vpop.f32.mrf.mxu0
    %v5279 = vadd.f32 %v3459, %v5278
    %v5280 = vpop.f32.mrf.mxu0
    %5281 = vdwg.mxu0
    %5282 = vmatpush.bf16.msra.mxu0 %v5176
    %5283 = vmatpush.bf16.msra.mxu0 %v5172
    %5284 = vmatpush.bf16.msra.mxu0 %v5168
    %5285 = vmatpush.bf16.msra.mxu0 %v5164
    %5286 = vmatpush.bf16.msra.mxu0 %v5160
    %5287 = vmatpush.bf16.msra.mxu0 %v5156
    %5288 = vmatpush.bf16.msra.mxu0 %v5152
    %5289 = vmatpush.bf16.msra.mxu0 %v5148
    %5290 = vmatmul.bf16.gmra.mxu0 %v4121
    %v5291 = vpop.f32.mrf.mxu0
    %v5292 = vadd.f32 %v5279, %v5291
    %v5293 = vpop.f32.mrf.mxu0
    %5294 = vdwg.mxu0
    %5295 = vmatpush.bf16.msra.mxu0 %v5145
    %5296 = vmatpush.bf16.msra.mxu0 %v5141
    %5297 = vmatpush.bf16.msra.mxu0 %v5137
    %5298 = vmatpush.bf16.msra.mxu0 %v5133
    %5299 = vmatpush.bf16.msra.mxu0 %v5129
    %5300 = vmatpush.bf16.msra.mxu0 %v5125
    %5301 = vmatpush.bf16.msra.mxu0 %v5121
    %5302 = vmatpush.bf16.msra.mxu0 %v5117
    %5303 = vmatmul.bf16.gmra.mxu0 %v4858
    %v5304 = vpop.f32.mrf.mxu0
    %v5305 = vadd.f32 %v3460, %v5304
    %v5306 = vpop.f32.mrf.mxu0
    %5307 = vdwg.mxu0
    %5308 = vmatpush.bf16.msra.mxu0 %v5177
    %5309 = vmatpush.bf16.msra.mxu0 %v5173
    %5310 = vmatpush.bf16.msra.mxu0 %v5169
    %5311 = vmatpush.bf16.msra.mxu0 %v5165
    %5312 = vmatpush.bf16.msra.mxu0 %v5161
    %5313 = vmatpush.bf16.msra.mxu0 %v5157
    %5314 = vmatpush.bf16.msra.mxu0 %v5153
    %5315 = vmatpush.bf16.msra.mxu0 %v5149
    %5316 = vmatmul.bf16.gmra.mxu0 %v4121
    %v5317 = vpop.f32.mrf.mxu0
    %v5318 = vadd.f32 %v5305, %v5317
    %v5319 = vpop.f32.mrf.mxu0
    %5320 = vdwg.mxu0
    %5321 = vmatpush.bf16.msra.mxu0 %v5146
    %5322 = vmatpush.bf16.msra.mxu0 %v5142
    %5323 = vmatpush.bf16.msra.mxu0 %v5138
    %5324 = vmatpush.bf16.msra.mxu0 %v5134
    %5325 = vmatpush.bf16.msra.mxu0 %v5130
    %5326 = vmatpush.bf16.msra.mxu0 %v5126
    %5327 = vmatpush.bf16.msra.mxu0 %v5122
    %5328 = vmatpush.bf16.msra.mxu0 %v5118
    %5329 = vmatmul.bf16.gmra.mxu0 %v4858
    %v5330 = vpop.f32.mrf.mxu0
    %v5331 = vadd.f32 %v3461, %v5330
    %v5332 = vpop.f32.mrf.mxu0
    %5333 = vdwg.mxu0
    %5334 = vmatpush.bf16.msra.mxu0 %v5178
    %5335 = vmatpush.bf16.msra.mxu0 %v5174
    %5336 = vmatpush.bf16.msra.mxu0 %v5170
    %5337 = vmatpush.bf16.msra.mxu0 %v5166
    %5338 = vmatpush.bf16.msra.mxu0 %v5162
    %5339 = vmatpush.bf16.msra.mxu0 %v5158
    %5340 = vmatpush.bf16.msra.mxu0 %v5154
    %5341 = vmatpush.bf16.msra.mxu0 %v5150
    %5342 = vmatmul.bf16.gmra.mxu0 %v4121
    %v5343 = vpop.f32.mrf.mxu0
    %v5344 = vadd.f32 %v5331, %v5343
    %v5345 = vpop.f32.mrf.mxu0
    %5346 = vdwg.mxu0
    %v5347 = vxor.u32 %v5266, 2147483648
    %v5348 = vxor.u32 %v5292, 2147483648
    %v5349 = vxor.u32 %v5318, 2147483648
    %v5350 = vmul.f32 %v5347, 1.442695
    %v5351 = vpow.pop %v5350
    %v5352 = vmul.f32 %v5348, 1.442695
    %v5353 = vpow.pop %v5352
    %v5354 = vmul.f32 %v5349, 1.442695
    %v5355 = vpow.pop %v5354
    %v5356 = vadd.f32 %v5351, 1.0
    %v5357 = vadd.f32 %v5353, 1.0
    %v5358 = vadd.f32 %v5355, 1.0
    %v5359 = vrcp.pop %v5356
    %v5360 = vmul.f32 %v5356, %v5359
    %v5361 = vsub.f32 1.0, %v5360
    %v5362 = vmul.f32 %v5359, %v5361
    %v5363 = vadd.f32 %v5359, %v5362
    %vm5364 = vweird.f32 %v5356
    %vm5365 = vweird.f32 %v5359
    %vm5366 = vmor %vm5364, %vm5365
    %v5367 = vsel %vm5366, %v5359, %v5363
    %v5368 = vand.u32 2147483647, %v5356
    %vm5369 = vcmp.eq.f32.partialorder %v5368, 8.507059e+37
    %v5370 = vand.u32 %v5356, 2147483648
    %v5371 = vor.u32 1.1754944e-38, %v5370
    %v5372 = vsel %vm5369, %v5371, %v5367
    %v5373 = vmul.f32 1.0, %v5372
    %v5374 = vrcp.pop %v5357
    %v5375 = vmul.f32 %v5357, %v5374
    %v5376 = vsub.f32 1.0, %v5375
    %v5377 = vmul.f32 %v5374, %v5376
    %v5378 = vadd.f32 %v5374, %v5377
    %vm5379 = vweird.f32 %v5357
    %vm5380 = vweird.f32 %v5374
    %vm5381 = vmor %vm5379, %vm5380
    %v5382 = vsel %vm5381, %v5374, %v5378
    %v5383 = vand.u32 2147483647, %v5357
    %vm5384 = vcmp.eq.f32.partialorder %v5383, 8.507059e+37
    %v5385 = vand.u32 %v5357, 2147483648
    %v5386 = vor.u32 1.1754944e-38, %v5385
    %v5387 = vsel %vm5384, %v5386, %v5382
    %v5388 = vmul.f32 1.0, %v5387
    %v5389 = vrcp.pop %v5358
    %v5390 = vmul.f32 %v5358, %v5389
    %v5391 = vsub.f32 1.0, %v5390
    %v5392 = vmul.f32 %v5389, %v5391
    %v5393 = vadd.f32 %v5389, %v5392
    %vm5394 = vweird.f32 %v5358
    %vm5395 = vweird.f32 %v5389
    %vm5396 = vmor %vm5394, %vm5395
    %v5397 = vsel %vm5396, %v5389, %v5393
    %v5398 = vand.u32 2147483647, %v5358
    %vm5399 = vcmp.eq.f32.partialorder %v5398, 8.507059e+37
    %v5400 = vand.u32 %v5358, 2147483648
    %v5401 = vor.u32 1.1754944e-38, %v5400
    %v5402 = vsel %vm5399, %v5401, %v5397
    %v5403 = vmul.f32 1.0, %v5402
    %v5404 = vtanh.pop %v5344
    %v5405 = vmul.f32 %v5388, %v4118
    %v5406 = vmul.f32 %v5373, %v5404
    %v5407 = vadd.f32 %v5405, %v5406
    %v5408 = vtanh.pop %v5407
    %v5409 = vmul.f32 %v5403, %v5408
    %v5410 = vpack.c.bf16 %v5409, %v5409
    %v5411 = vld [vmem:[#allocation11] sm:$0xff]
    %v5412 = vld [vmem:[#allocation11 + $0x8] sm:$0xff]
    %v5413 = vld [vmem:[#allocation11 + $0x10] sm:$0xff]
    %v5414 = vld [vmem:[#allocation11 + $0x18] sm:$0xff]
    %v5415 = vld [vmem:[#allocation11 + $0x20] sm:$0xff]
    %v5416 = vld [vmem:[#allocation11 + $0x28] sm:$0xff]
    %v5417 = vld [vmem:[#allocation11 + $0x30] sm:$0xff]
    %v5418 = vld [vmem:[#allocation11 + $0x38] sm:$0xff]
    %v5419 = vld [vmem:[#allocation11 + $0x40] sm:$0xff]
    %v5420 = vld [vmem:[#allocation11 + $0x48] sm:$0xff]
    %v5421 = vld [vmem:[#allocation11 + $0x50] sm:$0xff]
    %v5422 = vld [vmem:[#allocation11 + $0x58] sm:$0xff]
    %v5423 = vld [vmem:[#allocation11 + $0x60] sm:$0xff]
    %v5424 = vld [vmem:[#allocation11 + $0x68] sm:$0xff]
    %v5425 = vld [vmem:[#allocation11 + $0x70] sm:$0xff]
    %v5426 = vld [vmem:[#allocation11 + $0x78] sm:$0xff]
    %v5427 = vld [vmem:[#allocation11 + $0x80] sm:$0xff]
    %v5428 = vld [vmem:[#allocation11 + $0x88] sm:$0xff]
    %v5429 = vld [vmem:[#allocation11 + $0x90] sm:$0xff]
    %v5430 = vld [vmem:[#allocation11 + $0x98] sm:$0xff]
    %v5431 = vld [vmem:[#allocation11 + $0xa0] sm:$0xff]
    %v5432 = vld [vmem:[#allocation11 + $0xa8] sm:$0xff]
    %v5433 = vld [vmem:[#allocation11 + $0xb0] sm:$0xff]
    %v5434 = vld [vmem:[#allocation11 + $0xb8] sm:$0xff]
    %v5435 = vld [vmem:[#allocation11 + $0xc0] sm:$0xff]
    %v5436 = vld [vmem:[#allocation11 + $0xc8] sm:$0xff]
    %v5437 = vld [vmem:[#allocation11 + $0xd0] sm:$0xff]
    %v5438 = vld [vmem:[#allocation11 + $0xd8] sm:$0xff]
    %v5439 = vld [vmem:[#allocation11 + $0xe0] sm:$0xff]
    %v5440 = vld [vmem:[#allocation11 + $0xe8] sm:$0xff]
    %v5441 = vld [vmem:[#allocation11 + $0xf0] sm:$0xff]
    %v5442 = vld [vmem:[#allocation11 + $0xf8] sm:$0xff]
    %v5443 = vld [vmem:[#allocation11 + $0x100] sm:$0xff]
    %v5444 = vld [vmem:[#allocation11 + $0x108] sm:$0xff]
    %v5445 = vld [vmem:[#allocation11 + $0x110] sm:$0xff]
    %v5446 = vld [vmem:[#allocation11 + $0x118] sm:$0xff]
    %v5447 = vld [vmem:[#allocation11 + $0x120] sm:$0xff]
    %v5448 = vld [vmem:[#allocation11 + $0x128] sm:$0xff]
    %v5449 = vld [vmem:[#allocation11 + $0x130] sm:$0xff]
    %v5450 = vld [vmem:[#allocation11 + $0x138] sm:$0xff]
    %v5451 = vld [vmem:[#allocation11 + $0x140] sm:$0xff]
    %v5452 = vld [vmem:[#allocation11 + $0x148] sm:$0xff]
    %v5453 = vld [vmem:[#allocation11 + $0x150] sm:$0xff]
    %v5454 = vld [vmem:[#allocation11 + $0x158] sm:$0xff]
    %v5455 = vld [vmem:[#allocation11 + $0x160] sm:$0xff]
    %v5456 = vld [vmem:[#allocation11 + $0x168] sm:$0xff]
    %v5457 = vld [vmem:[#allocation11 + $0x170] sm:$0xff]
    %v5458 = vld [vmem:[#allocation11 + $0x178] sm:$0xff]
    %v5459 = vld [vmem:[#allocation11 + $0x180] sm:$0xff]
    %v5460 = vld [vmem:[#allocation11 + $0x188] sm:$0xff]
    %v5461 = vld [vmem:[#allocation11 + $0x190] sm:$0xff]
    %v5462 = vld [vmem:[#allocation11 + $0x198] sm:$0xff]
    %v5463 = vld [vmem:[#allocation11 + $0x1a0] sm:$0xff]
    %v5464 = vld [vmem:[#allocation11 + $0x1a8] sm:$0xff]
    %v5465 = vld [vmem:[#allocation11 + $0x1b0] sm:$0xff]
    %v5466 = vld [vmem:[#allocation11 + $0x1b8] sm:$0xff]
    %v5467 = vld [vmem:[#allocation11 + $0x1c0] sm:$0xff]
    %v5468 = vld [vmem:[#allocation11 + $0x1c8] sm:$0xff]
    %v5469 = vld [vmem:[#allocation11 + $0x1d0] sm:$0xff]
    %v5470 = vld [vmem:[#allocation11 + $0x1d8] sm:$0xff]
    %v5471 = vld [vmem:[#allocation11 + $0x1e0] sm:$0xff]
    %v5472 = vld [vmem:[#allocation11 + $0x1e8] sm:$0xff]
    %v5473 = vld [vmem:[#allocation11 + $0x1f0] sm:$0xff]
    %v5474 = vld [vmem:[#allocation11 + $0x1f8] sm:$0xff]
    %v5539 = vunpack.c.l.b16 %v5411
    %v5540 = vunpack.c.h.b16 %v5411
    %v5541 = vunpack.c.l.b16 %v5412
    %v5542 = vunpack.c.h.b16 %v5412
    %v5543 = vunpack.c.l.b16 %v5413
    %v5544 = vunpack.c.h.b16 %v5413
    %v5545 = vunpack.c.l.b16 %v5414
    %v5546 = vunpack.c.h.b16 %v5414
    %v5547 = vunpack.c.l.b16 %v5415
    %v5548 = vunpack.c.h.b16 %v5415
    %v5549 = vunpack.c.l.b16 %v5416
    %v5550 = vunpack.c.h.b16 %v5416
    %v5551 = vunpack.c.l.b16 %v5417
    %v5552 = vunpack.c.h.b16 %v5417
    %v5553 = vunpack.c.l.b16 %v5418
    %v5554 = vunpack.c.h.b16 %v5418
    %v5555 = vunpack.c.l.b16 %v5419
    %v5556 = vunpack.c.h.b16 %v5419
    %v5557 = vunpack.c.l.b16 %v5420
    %v5558 = vunpack.c.h.b16 %v5420
    %v5559 = vunpack.c.l.b16 %v5421
    %v5560 = vunpack.c.h.b16 %v5421
    %v5561 = vunpack.c.l.b16 %v5422
    %v5562 = vunpack.c.h.b16 %v5422
    %v5563 = vunpack.c.l.b16 %v5423
    %v5564 = vunpack.c.h.b16 %v5423
    %v5565 = vunpack.c.l.b16 %v5424
    %v5566 = vunpack.c.h.b16 %v5424
    %v5567 = vunpack.c.l.b16 %v5425
    %v5568 = vunpack.c.h.b16 %v5425
    %v5569 = vunpack.c.l.b16 %v5426
    %v5570 = vunpack.c.h.b16 %v5426
    %v5571 = vunpack.c.l.b16 %v5427
    %v5572 = vunpack.c.h.b16 %v5427
    %v5573 = vunpack.c.l.b16 %v5428
    %v5574 = vunpack.c.h.b16 %v5428
    %v5575 = vunpack.c.l.b16 %v5429
    %v5576 = vunpack.c.h.b16 %v5429
    %v5577 = vunpack.c.l.b16 %v5430
    %v5578 = vunpack.c.h.b16 %v5430
    %v5579 = vunpack.c.l.b16 %v5431
    %v5580 = vunpack.c.h.b16 %v5431
    %v5581 = vunpack.c.l.b16 %v5432
    %v5582 = vunpack.c.h.b16 %v5432
    %v5583 = vunpack.c.l.b16 %v5433
    %v5584 = vunpack.c.h.b16 %v5433
    %v5585 = vunpack.c.l.b16 %v5434
    %v5586 = vunpack.c.h.b16 %v5434
    %v5587 = vunpack.c.l.b16 %v5435
    %v5588 = vunpack.c.h.b16 %v5435
    %v5589 = vunpack.c.l.b16 %v5436
    %v5590 = vunpack.c.h.b16 %v5436
    %v5591 = vunpack.c.l.b16 %v5437
    %v5592 = vunpack.c.h.b16 %v5437
    %v5593 = vunpack.c.l.b16 %v5438
    %v5594 = vunpack.c.h.b16 %v5438
    %v5595 = vunpack.c.l.b16 %v5439
    %v5596 = vunpack.c.h.b16 %v5439
    %v5597 = vunpack.c.l.b16 %v5440
    %v5598 = vunpack.c.h.b16 %v5440
    %v5599 = vunpack.c.l.b16 %v5441
    %v5600 = vunpack.c.h.b16 %v5441
    %v5601 = vunpack.c.l.b16 %v5442
    %v5602 = vunpack.c.h.b16 %v5442
    %v5603 = vunpack.c.l.b16 %v5443
    %v5604 = vunpack.c.h.b16 %v5443
    %v5605 = vunpack.c.l.b16 %v5444
    %v5606 = vunpack.c.h.b16 %v5444
    %v5607 = vunpack.c.l.b16 %v5445
    %v5608 = vunpack.c.h.b16 %v5445
    %v5609 = vunpack.c.l.b16 %v5446
    %v5610 = vunpack.c.h.b16 %v5446
    %v5611 = vunpack.c.l.b16 %v5447
    %v5612 = vunpack.c.h.b16 %v5447
    %v5613 = vunpack.c.l.b16 %v5448
    %v5614 = vunpack.c.h.b16 %v5448
    %v5615 = vunpack.c.l.b16 %v5449
    %v5616 = vunpack.c.h.b16 %v5449
    %v5617 = vunpack.c.l.b16 %v5450
    %v5618 = vunpack.c.h.b16 %v5450
    %v5619 = vunpack.c.l.b16 %v5451
    %v5620 = vunpack.c.h.b16 %v5451
    %v5621 = vunpack.c.l.b16 %v5452
    %v5622 = vunpack.c.h.b16 %v5452
    %v5623 = vunpack.c.l.b16 %v5453
    %v5624 = vunpack.c.h.b16 %v5453
    %v5625 = vunpack.c.l.b16 %v5454
    %v5626 = vunpack.c.h.b16 %v5454
    %v5627 = vunpack.c.l.b16 %v5455
    %v5628 = vunpack.c.h.b16 %v5455
    %v5629 = vunpack.c.l.b16 %v5456
    %v5630 = vunpack.c.h.b16 %v5456
    %v5631 = vunpack.c.l.b16 %v5457
    %v5632 = vunpack.c.h.b16 %v5457
    %v5633 = vunpack.c.l.b16 %v5458
    %v5634 = vunpack.c.h.b16 %v5458
    %v5635 = vunpack.c.l.b16 %v5459
    %v5636 = vunpack.c.h.b16 %v5459
    %v5637 = vunpack.c.l.b16 %v5460
    %v5638 = vunpack.c.h.b16 %v5460
    %v5639 = vunpack.c.l.b16 %v5461
    %v5640 = vunpack.c.h.b16 %v5461
    %v5641 = vunpack.c.l.b16 %v5462
    %v5642 = vunpack.c.h.b16 %v5462
    %v5643 = vunpack.c.l.b16 %v5463
    %v5644 = vunpack.c.h.b16 %v5463
    %v5645 = vunpack.c.l.b16 %v5464
    %v5646 = vunpack.c.h.b16 %v5464
    %v5647 = vunpack.c.l.b16 %v5465
    %v5648 = vunpack.c.h.b16 %v5465
    %v5649 = vunpack.c.l.b16 %v5466
    %v5650 = vunpack.c.h.b16 %v5466
    %v5651 = vunpack.c.l.b16 %v5467
    %v5652 = vunpack.c.h.b16 %v5467
    %v5653 = vunpack.c.l.b16 %v5468
    %v5654 = vunpack.c.h.b16 %v5468
    %v5655 = vunpack.c.l.b16 %v5469
    %v5656 = vunpack.c.h.b16 %v5469
    %v5657 = vunpack.c.l.b16 %v5470
    %v5658 = vunpack.c.h.b16 %v5470
    %v5659 = vunpack.c.l.b16 %v5471
    %v5660 = vunpack.c.h.b16 %v5471
    %v5661 = vunpack.c.l.b16 %v5472
    %v5662 = vunpack.c.h.b16 %v5472
    %v5663 = vunpack.c.l.b16 %v5473
    %v5664 = vunpack.c.h.b16 %v5473
    %v5665 = vunpack.c.l.b16 %v5474
    %v5666 = vunpack.c.h.b16 %v5474
    %v5667 = vpack.c.b16 %v5543, %v5539
    %v5668 = vpack.c.b16 %v5544, %v5540
    %v5669 = vpack.c.b16 %v5545, %v5541
    %v5670 = vpack.c.b16 %v5546, %v5542
    %v5671 = vpack.c.b16 %v5551, %v5547
    %v5672 = vpack.c.b16 %v5552, %v5548
    %v5673 = vpack.c.b16 %v5553, %v5549
    %v5674 = vpack.c.b16 %v5554, %v5550
    %v5675 = vpack.c.b16 %v5559, %v5555
    %v5676 = vpack.c.b16 %v5560, %v5556
    %v5677 = vpack.c.b16 %v5561, %v5557
    %v5678 = vpack.c.b16 %v5562, %v5558
    %v5679 = vpack.c.b16 %v5567, %v5563
    %v5680 = vpack.c.b16 %v5568, %v5564
    %v5681 = vpack.c.b16 %v5569, %v5565
    %v5682 = vpack.c.b16 %v5570, %v5566
    %v5683 = vpack.c.b16 %v5575, %v5571
    %v5684 = vpack.c.b16 %v5576, %v5572
    %v5685 = vpack.c.b16 %v5577, %v5573
    %v5686 = vpack.c.b16 %v5578, %v5574
    %v5687 = vpack.c.b16 %v5583, %v5579
    %v5688 = vpack.c.b16 %v5584, %v5580
    %v5689 = vpack.c.b16 %v5585, %v5581
    %v5690 = vpack.c.b16 %v5586, %v5582
    %v5691 = vpack.c.b16 %v5591, %v5587
    %v5692 = vpack.c.b16 %v5592, %v5588
    %v5693 = vpack.c.b16 %v5593, %v5589
    %v5694 = vpack.c.b16 %v5594, %v5590
    %v5695 = vpack.c.b16 %v5599, %v5595
    %v5696 = vpack.c.b16 %v5600, %v5596
    %v5697 = vpack.c.b16 %v5601, %v5597
    %v5698 = vpack.c.b16 %v5602, %v5598
    %v5699 = vpack.c.b16 %v5607, %v5603
    %v5700 = vpack.c.b16 %v5608, %v5604
    %v5701 = vpack.c.b16 %v5609, %v5605
    %v5702 = vpack.c.b16 %v5610, %v5606
    %v5703 = vpack.c.b16 %v5615, %v5611
    %v5704 = vpack.c.b16 %v5616, %v5612
    %v5705 = vpack.c.b16 %v5617, %v5613
    %v5706 = vpack.c.b16 %v5618, %v5614
    %v5707 = vpack.c.b16 %v5623, %v5619
    %v5708 = vpack.c.b16 %v5624, %v5620
    %v5709 = vpack.c.b16 %v5625, %v5621
    %v5710 = vpack.c.b16 %v5626, %v5622
    %v5711 = vpack.c.b16 %v5631, %v5627
    %v5712 = vpack.c.b16 %v5632, %v5628
    %v5713 = vpack.c.b16 %v5633, %v5629
    %v5714 = vpack.c.b16 %v5634, %v5630
    %v5715 = vpack.c.b16 %v5639, %v5635
    %v5716 = vpack.c.b16 %v5640, %v5636
    %v5717 = vpack.c.b16 %v5641, %v5637
    %v5718 = vpack.c.b16 %v5642, %v5638
    %v5719 = vpack.c.b16 %v5647, %v5643
    %v5720 = vpack.c.b16 %v5648, %v5644
    %v5721 = vpack.c.b16 %v5649, %v5645
    %v5722 = vpack.c.b16 %v5650, %v5646
    %v5723 = vpack.c.b16 %v5655, %v5651
    %v5724 = vpack.c.b16 %v5656, %v5652
    %v5725 = vpack.c.b16 %v5657, %v5653
    %v5726 = vpack.c.b16 %v5658, %v5654
    %v5727 = vpack.c.b16 %v5663, %v5659
    %v5728 = vpack.c.b16 %v5664, %v5660
    %v5729 = vpack.c.b16 %v5665, %v5661
    %v5730 = vpack.c.b16 %v5666, %v5662
    %5795 = vmatpush.bf16.msra.mxu0 %v5695
    %5796 = vmatpush.bf16.msra.mxu0 %v5691
    %5797 = vmatpush.bf16.msra.mxu0 %v5687
    %5798 = vmatpush.bf16.msra.mxu0 %v5683
    %5799 = vmatpush.bf16.msra.mxu0 %v5679
    %5800 = vmatpush.bf16.msra.mxu0 %v5675
    %5801 = vmatpush.bf16.msra.mxu0 %v5671
    %5802 = vmatpush.bf16.msra.mxu0 %v5667
    %5803 = vmatmul.bf16.gmra.mxu0 %v5410
    %v5804 = vpop.f32.mrf.mxu0
    %v5805 = vadd.f32 %v3468, %v5804
    %v5806 = vpop.f32.mrf.mxu0
    %5807 = vdwg.mxu0
    %5808 = vmatpush.bf16.msra.mxu0 %v5727
    %5809 = vmatpush.bf16.msra.mxu0 %v5723
    %5810 = vmatpush.bf16.msra.mxu0 %v5719
    %5811 = vmatpush.bf16.msra.mxu0 %v5715
    %5812 = vmatpush.bf16.msra.mxu0 %v5711
    %5813 = vmatpush.bf16.msra.mxu0 %v5707
    %5814 = vmatpush.bf16.msra.mxu0 %v5703
    %5815 = vmatpush.bf16.msra.mxu0 %v5699
    %5816 = vmatmul.bf16.gmra.mxu0 %v4673
    %v5817 = vpop.f32.mrf.mxu0
    %v5818 = vadd.f32 %v5805, %v5817
    %v5819 = vpop.f32.mrf.mxu0
    %5820 = vdwg.mxu0
    %5821 = vmatpush.bf16.msra.mxu0 %v5696
    %5822 = vmatpush.bf16.msra.mxu0 %v5692
    %5823 = vmatpush.bf16.msra.mxu0 %v5688
    %5824 = vmatpush.bf16.msra.mxu0 %v5684
    %5825 = vmatpush.bf16.msra.mxu0 %v5680
    %5826 = vmatpush.bf16.msra.mxu0 %v5676
    %5827 = vmatpush.bf16.msra.mxu0 %v5672
    %5828 = vmatpush.bf16.msra.mxu0 %v5668
    %5829 = vmatmul.bf16.gmra.mxu0 %v5410
    %v5830 = vpop.f32.mrf.mxu0
    %v5831 = vadd.f32 %v3469, %v5830
    %v5832 = vpop.f32.mrf.mxu0
    %5833 = vdwg.mxu0
    %5834 = vmatpush.bf16.msra.mxu0 %v5728
    %5835 = vmatpush.bf16.msra.mxu0 %v5724
    %5836 = vmatpush.bf16.msra.mxu0 %v5720
    %5837 = vmatpush.bf16.msra.mxu0 %v5716
    %5838 = vmatpush.bf16.msra.mxu0 %v5712
    %5839 = vmatpush.bf16.msra.mxu0 %v5708
    %5840 = vmatpush.bf16.msra.mxu0 %v5704
    %5841 = vmatpush.bf16.msra.mxu0 %v5700
    %5842 = vmatmul.bf16.gmra.mxu0 %v4673
    %v5843 = vpop.f32.mrf.mxu0
    %v5844 = vadd.f32 %v5831, %v5843
    %v5845 = vpop.f32.mrf.mxu0
    %5846 = vdwg.mxu0
    %5847 = vmatpush.bf16.msra.mxu0 %v5697
    %5848 = vmatpush.bf16.msra.mxu0 %v5693
    %5849 = vmatpush.bf16.msra.mxu0 %v5689
    %5850 = vmatpush.bf16.msra.mxu0 %v5685
    %5851 = vmatpush.bf16.msra.mxu0 %v5681
    %5852 = vmatpush.bf16.msra.mxu0 %v5677
    %5853 = vmatpush.bf16.msra.mxu0 %v5673
    %5854 = vmatpush.bf16.msra.mxu0 %v5669
    %5855 = vmatmul.bf16.gmra.mxu0 %v5410
    %v5856 = vpop.f32.mrf.mxu0
    %v5857 = vadd.f32 %v3470, %v5856
    %v5858 = vpop.f32.mrf.mxu0
    %5859 = vdwg.mxu0
    %5860 = vmatpush.bf16.msra.mxu0 %v5729
    %5861 = vmatpush.bf16.msra.mxu0 %v5725
    %5862 = vmatpush.bf16.msra.mxu0 %v5721
    %5863 = vmatpush.bf16.msra.mxu0 %v5717
    %5864 = vmatpush.bf16.msra.mxu0 %v5713
    %5865 = vmatpush.bf16.msra.mxu0 %v5709
    %5866 = vmatpush.bf16.msra.mxu0 %v5705
    %5867 = vmatpush.bf16.msra.mxu0 %v5701
    %5868 = vmatmul.bf16.gmra.mxu0 %v4673
    %v5869 = vpop.f32.mrf.mxu0
    %v5870 = vadd.f32 %v5857, %v5869
    %v5871 = vpop.f32.mrf.mxu0
    %5872 = vdwg.mxu0
    %5873 = vmatpush.bf16.msra.mxu0 %v5698
    %5874 = vmatpush.bf16.msra.mxu0 %v5694
    %5875 = vmatpush.bf16.msra.mxu0 %v5690
    %5876 = vmatpush.bf16.msra.mxu0 %v5686
    %5877 = vmatpush.bf16.msra.mxu0 %v5682
    %5878 = vmatpush.bf16.msra.mxu0 %v5678
    %5879 = vmatpush.bf16.msra.mxu0 %v5674
    %5880 = vmatpush.bf16.msra.mxu0 %v5670
    %5881 = vmatmul.bf16.gmra.mxu0 %v5410
    %v5882 = vpop.f32.mrf.mxu0
    %v5883 = vadd.f32 %v3471, %v5882
    %v5884 = vpop.f32.mrf.mxu0
    %5885 = vdwg.mxu0
    %5886 = vmatpush.bf16.msra.mxu0 %v5730
    %5887 = vmatpush.bf16.msra.mxu0 %v5726
    %5888 = vmatpush.bf16.msra.mxu0 %v5722
    %5889 = vmatpush.bf16.msra.mxu0 %v5718
    %5890 = vmatpush.bf16.msra.mxu0 %v5714
    %5891 = vmatpush.bf16.msra.mxu0 %v5710
    %5892 = vmatpush.bf16.msra.mxu0 %v5706
    %5893 = vmatpush.bf16.msra.mxu0 %v5702
    %5894 = vmatmul.bf16.gmra.mxu0 %v4673
    %v5895 = vpop.f32.mrf.mxu0
    %v5896 = vadd.f32 %v5883, %v5895
    %v5897 = vpop.f32.mrf.mxu0
    %5898 = vdwg.mxu0
    %v5899 = vxor.u32 %v5818, 2147483648
    %v5900 = vxor.u32 %v5844, 2147483648
    %v5901 = vxor.u32 %v5870, 2147483648
    %v5902 = vmul.f32 %v5899, 1.442695
    %v5903 = vpow.pop %v5902
    %v5904 = vmul.f32 %v5900, 1.442695
    %v5905 = vpow.pop %v5904
    %v5906 = vmul.f32 %v5901, 1.442695
    %v5907 = vpow.pop %v5906
    %v5908 = vadd.f32 %v5903, 1.0
    %v5909 = vadd.f32 %v5905, 1.0
    %v5910 = vadd.f32 %v5907, 1.0
    %v5911 = vrcp.pop %v5908
    %v5912 = vmul.f32 %v5908, %v5911
    %v5913 = vsub.f32 1.0, %v5912
    %v5914 = vmul.f32 %v5911, %v5913
    %v5915 = vadd.f32 %v5911, %v5914
    %vm5916 = vweird.f32 %v5908
    %vm5917 = vweird.f32 %v5911
    %vm5918 = vmor %vm5916, %vm5917
    %v5919 = vsel %vm5918, %v5911, %v5915
    %v5920 = vand.u32 2147483647, %v5908
    %vm5921 = vcmp.eq.f32.partialorder %v5920, 8.507059e+37
    %v5922 = vand.u32 %v5908, 2147483648
    %v5923 = vor.u32 1.1754944e-38, %v5922
    %v5924 = vsel %vm5921, %v5923, %v5919
    %v5925 = vmul.f32 1.0, %v5924
    %v5926 = vrcp.pop %v5909
    %v5927 = vmul.f32 %v5909, %v5926
    %v5928 = vsub.f32 1.0, %v5927
    %v5929 = vmul.f32 %v5926, %v5928
    %v5930 = vadd.f32 %v5926, %v5929
    %vm5931 = vweird.f32 %v5909
    %vm5932 = vweird.f32 %v5926
    %vm5933 = vmor %vm5931, %vm5932
    %v5934 = vsel %vm5933, %v5926, %v5930
    %v5935 = vand.u32 2147483647, %v5909
    %vm5936 = vcmp.eq.f32.partialorder %v5935, 8.507059e+37
    %v5937 = vand.u32 %v5909, 2147483648
    %v5938 = vor.u32 1.1754944e-38, %v5937
    %v5939 = vsel %vm5936, %v5938, %v5934
    %v5940 = vmul.f32 1.0, %v5939
    %v5941 = vrcp.pop %v5910
    %v5942 = vmul.f32 %v5910, %v5941
    %v5943 = vsub.f32 1.0, %v5942
    %v5944 = vmul.f32 %v5941, %v5943
    %v5945 = vadd.f32 %v5941, %v5944
    %vm5946 = vweird.f32 %v5910
    %vm5947 = vweird.f32 %v5941
    %vm5948 = vmor %vm5946, %vm5947
    %v5949 = vsel %vm5948, %v5941, %v5945
    %v5950 = vand.u32 2147483647, %v5910
    %vm5951 = vcmp.eq.f32.partialorder %v5950, 8.507059e+37
    %v5952 = vand.u32 %v5910, 2147483648
    %v5953 = vor.u32 1.1754944e-38, %v5952
    %v5954 = vsel %vm5951, %v5953, %v5949
    %v5955 = vmul.f32 1.0, %v5954
    %v5956 = vtanh.pop %v5896
    %v5957 = vmul.f32 %v5940, %v4670
    %v5958 = vmul.f32 %v5925, %v5956
    %v5959 = vadd.f32 %v5957, %v5958
    %v5960 = vtanh.pop %v5959
    %v5961 = vmul.f32 %v5955, %v5960
    %v5962 = vpack.c.bf16 %v5961, %v5961
    %v5963 = vld [vmem:[%s13] sm:$0xf]
    %v5964 = vld [vmem:[%s13 + $0x4] sm:$0xf]
    %v5965 = vld [vmem:[%s13 + $0x8] sm:$0xf]
    %v5966 = vld [vmem:[%s13 + $0xc] sm:$0xf]
    %v5967 = vld [vmem:[%s13 + $0x10] sm:$0xf]
    %v5968 = vld [vmem:[%s13 + $0x14] sm:$0xf]
    %v5969 = vld [vmem:[%s13 + $0x18] sm:$0xf]
    %v5970 = vld [vmem:[%s13 + $0x1c] sm:$0xf]
    %v5971 = vld [vmem:[%s13 + $0x20] sm:$0xf]
    %v5972 = vld [vmem:[%s13 + $0x24] sm:$0xf]
    %v5973 = vld [vmem:[%s13 + $0x28] sm:$0xf]
    %v5974 = vld [vmem:[%s13 + $0x2c] sm:$0xf]
    %v5975 = vld [vmem:[%s13 + $0x30] sm:$0xf]
    %v5976 = vld [vmem:[%s13 + $0x34] sm:$0xf]
    %v5977 = vld [vmem:[%s13 + $0x38] sm:$0xf]
    %v5978 = vld [vmem:[%s13 + $0x3c] sm:$0xf]
    %v5995 = vunpack.c.l.b16 %v5963
    %v5996 = vunpack.c.l.b16 %v5964
    %v5997 = vunpack.c.l.b16 %v5965
    %v5998 = vunpack.c.l.b16 %v5966
    %v5999 = vunpack.c.l.b16 %v5967
    %v6000 = vunpack.c.l.b16 %v5968
    %v6001 = vunpack.c.l.b16 %v5969
    %v6002 = vunpack.c.l.b16 %v5970
    %v6003 = vunpack.c.l.b16 %v5971
    %v6004 = vunpack.c.l.b16 %v5972
    %v6005 = vunpack.c.l.b16 %v5973
    %v6006 = vunpack.c.l.b16 %v5974
    %v6007 = vunpack.c.l.b16 %v5975
    %v6008 = vunpack.c.l.b16 %v5976
    %v6009 = vunpack.c.l.b16 %v5977
    %v6010 = vunpack.c.l.b16 %v5978
    %v6011 = vpack.c.b16 %v5996, %v5995
    %v6012 = vpack.c.b16 %v5998, %v5997
    %v6013 = vpack.c.b16 %v6000, %v5999
    %v6014 = vpack.c.b16 %v6002, %v6001
    %v6015 = vpack.c.b16 %v6004, %v6003
    %v6016 = vpack.c.b16 %v6006, %v6005
    %v6017 = vpack.c.b16 %v6008, %v6007
    %v6018 = vpack.c.b16 %v6010, %v6009
    %6027 = vmatpush.bf16.msra.mxu0 %v6018
    %6028 = vmatpush.bf16.msra.mxu0 %v6017
    %6029 = vmatpush.bf16.msra.mxu0 %v6016
    %6030 = vmatpush.bf16.msra.mxu0 %v6015
    %6031 = vmatpush.bf16.msra.mxu0 %v6014
    %6032 = vmatpush.bf16.msra.mxu0 %v6013
    %6033 = vmatpush.bf16.msra.mxu0 %v6012
    %6034 = vmatpush.bf16.msra.mxu0 %v6011
    %6035 = vmatmul.bf16.gmra.mxu0 %v5962
    %v6036 = vpop.f32.mrf.mxu0
    %v6037 = vadd.f32 %v3478, %v6036
    %v6038 = vpop.f32.mrf.mxu0
    %6039 = vdwg.mxu0
    %s6040 = scalar_lea.vmem [#allocation13], 16
    %6041 = vst [vmem:[%s6040] sm:$0xff] %v6037
    %s6042 = scalar_lea.vmem %s1, 16
    %v6043 = vld [vmem:[%s6042] sm:$0xff]
    %6044 = vset.pattern.permute.xlu0 0
    %6045 = vperm.xlu0 %6044, %v6043
    %v6046 = vpop.permute.xlu0 %6045
    %vm6047 = vcmp.eq.s32.totalorder %v3481, %v6046
    %v6048 = vsel %vm6047, 1, 0
    %v6049 = vcvt.s32.f32 %v6048
    %v6050 = vpack.c.bf16 %v6049, %v6049
    %s6051 = sld [smem:[#allocation3 + $0x2]]
    %p6052 = scmp.gt.s32.totalorder %s6051, 0
    // Predicated region
    $region90: #{seq2seq_forward.1} parent=1 // pred_check
      %p6053 = pneg %p6052
    $region91: #{seq2seq_forward.1} parent=1 // pred_check_branch
      %6055 = sbr.rel (%p6053) target = $region93
    $region92: #{seq2seq_forward.1} parent=1 // pred_region
      _
    $region93: #{seq2seq_forward.1} parent=1 // pred_fallthru
      _
    %p6056 = pneg %p6052
    // Predicated region
    $region94: #{seq2seq_forward.1} parent=1 // pred_check
      _
    $region95: #{seq2seq_forward.1} parent=1 // pred_check_branch
      %6058 = sbr.rel (%p6052) target = $region97
    $region96: #{seq2seq_forward.1} parent=1 // pred_region
      %6059 = vmax.xlane.f32.xlu0 %v6037
      %v6060 = vpop.xlane.xlu0 %6059
      %vm6061 = vcmp.eq.f32.partialorder %v6037, %v6060
      %v6062 = vsel %vm6061, %v3482, 128.0
      %6063 = vmin.xlane.f32.xlu0 %v6062
      %v6064 = vpop.xlane.xlu0 %6063
      %vm6065 = vcmp.eq.f32.partialorder %v3482, %v6064
      %v6066 = vsel %vm6065, 1, 0
      %v6067 = vcvt.s32.f32 %v6066
      %v6068 = vpack.c.bf16 %v6067, %v6067
    $region97: #{seq2seq_forward.1} parent=1 // pred_fallthru
      %v6069 = vphi %v6050, %v6068
    %v6070 = vld [vmem:[%s8] sm:$0xf]
    %v6071 = vld [vmem:[%s8 + $0x4] sm:$0xf]
    %v6072 = vld [vmem:[%s8 + $0x8] sm:$0xf]
    %v6073 = vld [vmem:[%s8 + $0xc] sm:$0xf]
    %v6074 = vld [vmem:[%s8 + $0x10] sm:$0xf]
    %v6075 = vld [vmem:[%s8 + $0x14] sm:$0xf]
    %v6076 = vld [vmem:[%s8 + $0x18] sm:$0xf]
    %v6077 = vld [vmem:[%s8 + $0x1c] sm:$0xf]
    %v6078 = vld [vmem:[%s8 + $0x20] sm:$0xf]
    %v6079 = vld [vmem:[%s8 + $0x24] sm:$0xf]
    %v6080 = vld [vmem:[%s8 + $0x28] sm:$0xf]
    %v6081 = vld [vmem:[%s8 + $0x2c] sm:$0xf]
    %v6082 = vld [vmem:[%s8 + $0x30] sm:$0xf]
    %v6083 = vld [vmem:[%s8 + $0x34] sm:$0xf]
    %v6084 = vld [vmem:[%s8 + $0x38] sm:$0xf]
    %v6085 = vld [vmem:[%s8 + $0x3c] sm:$0xf]
    %v6102 = vunpack.c.l.b16 %v6070
    %v6103 = vunpack.c.l.b16 %v6071
    %v6104 = vunpack.c.l.b16 %v6072
    %v6105 = vunpack.c.l.b16 %v6073
    %v6106 = vunpack.c.l.b16 %v6074
    %v6107 = vunpack.c.l.b16 %v6075
    %v6108 = vunpack.c.l.b16 %v6076
    %v6109 = vunpack.c.l.b16 %v6077
    %v6110 = vunpack.c.l.b16 %v6078
    %v6111 = vunpack.c.l.b16 %v6079
    %v6112 = vunpack.c.l.b16 %v6080
    %v6113 = vunpack.c.l.b16 %v6081
    %v6114 = vunpack.c.l.b16 %v6082
    %v6115 = vunpack.c.l.b16 %v6083
    %v6116 = vunpack.c.l.b16 %v6084
    %v6117 = vunpack.c.l.b16 %v6085
    %v6118 = vpack.c.b16 %v6103, %v6102
    %v6119 = vpack.c.b16 %v6105, %v6104
    %v6120 = vpack.c.b16 %v6107, %v6106
    %v6121 = vpack.c.b16 %v6109, %v6108
    %v6122 = vpack.c.b16 %v6111, %v6110
    %v6123 = vpack.c.b16 %v6113, %v6112
    %v6124 = vpack.c.b16 %v6115, %v6114
    %v6125 = vpack.c.b16 %v6117, %v6116
    %6134 = vmatpush.bf16.msra.mxu0 %v6125
    %6135 = vmatpush.bf16.msra.mxu0 %v6124
    %6136 = vmatpush.bf16.msra.mxu0 %v6123
    %6137 = vmatpush.bf16.msra.mxu0 %v6122
    %6138 = vmatpush.bf16.msra.mxu0 %v6121
    %6139 = vmatpush.bf16.msra.mxu0 %v6120
    %6140 = vmatpush.bf16.msra.mxu0 %v6119
    %6141 = vmatpush.bf16.msra.mxu0 %v6118
    %6142 = vmatmul.bf16.gmra.mxu0 %v6069
    %v6143 = vpop.f32.mrf.mxu0
    %v6144 = vadd.f32 0.0, %v6143
    %v6145 = vpop.f32.mrf.mxu0
    %6146 = vdwg.mxu0
    %v6147 = vpack.c.bf16 %v6144, %v6144
    %v6148 = vld [vmem:[#allocation10] sm:$0xff]
    %v6149 = vld [vmem:[#allocation10 + $0x8] sm:$0xff]
    %v6150 = vld [vmem:[#allocation10 + $0x10] sm:$0xff]
    %v6151 = vld [vmem:[#allocation10 + $0x18] sm:$0xff]
    %v6152 = vld [vmem:[#allocation10 + $0x20] sm:$0xff]
    %v6153 = vld [vmem:[#allocation10 + $0x28] sm:$0xff]
    %v6154 = vld [vmem:[#allocation10 + $0x30] sm:$0xff]
    %v6155 = vld [vmem:[#allocation10 + $0x38] sm:$0xff]
    %v6156 = vld [vmem:[#allocation10 + $0x40] sm:$0xff]
    %v6157 = vld [vmem:[#allocation10 + $0x48] sm:$0xff]
    %v6158 = vld [vmem:[#allocation10 + $0x50] sm:$0xff]
    %v6159 = vld [vmem:[#allocation10 + $0x58] sm:$0xff]
    %v6160 = vld [vmem:[#allocation10 + $0x60] sm:$0xff]
    %v6161 = vld [vmem:[#allocation10 + $0x68] sm:$0xff]
    %v6162 = vld [vmem:[#allocation10 + $0x70] sm:$0xff]
    %v6163 = vld [vmem:[#allocation10 + $0x78] sm:$0xff]
    %v6164 = vld [vmem:[#allocation10 + $0x80] sm:$0xff]
    %v6165 = vld [vmem:[#allocation10 + $0x88] sm:$0xff]
    %v6166 = vld [vmem:[#allocation10 + $0x90] sm:$0xff]
    %v6167 = vld [vmem:[#allocation10 + $0x98] sm:$0xff]
    %v6168 = vld [vmem:[#allocation10 + $0xa0] sm:$0xff]
    %v6169 = vld [vmem:[#allocation10 + $0xa8] sm:$0xff]
    %v6170 = vld [vmem:[#allocation10 + $0xb0] sm:$0xff]
    %v6171 = vld [vmem:[#allocation10 + $0xb8] sm:$0xff]
    %v6172 = vld [vmem:[#allocation10 + $0xc0] sm:$0xff]
    %v6173 = vld [vmem:[#allocation10 + $0xc8] sm:$0xff]
    %v6174 = vld [vmem:[#allocation10 + $0xd0] sm:$0xff]
    %v6175 = vld [vmem:[#allocation10 + $0xd8] sm:$0xff]
    %v6176 = vld [vmem:[#allocation10 + $0xe0] sm:$0xff]
    %v6177 = vld [vmem:[#allocation10 + $0xe8] sm:$0xff]
    %v6178 = vld [vmem:[#allocation10 + $0xf0] sm:$0xff]
    %v6179 = vld [vmem:[#allocation10 + $0xf8] sm:$0xff]
    %v6180 = vld [vmem:[#allocation10 + $0x100] sm:$0xff]
    %v6181 = vld [vmem:[#allocation10 + $0x108] sm:$0xff]
    %v6182 = vld [vmem:[#allocation10 + $0x110] sm:$0xff]
    %v6183 = vld [vmem:[#allocation10 + $0x118] sm:$0xff]
    %v6184 = vld [vmem:[#allocation10 + $0x120] sm:$0xff]
    %v6185 = vld [vmem:[#allocation10 + $0x128] sm:$0xff]
    %v6186 = vld [vmem:[#allocation10 + $0x130] sm:$0xff]
    %v6187 = vld [vmem:[#allocation10 + $0x138] sm:$0xff]
    %v6188 = vld [vmem:[#allocation10 + $0x140] sm:$0xff]
    %v6189 = vld [vmem:[#allocation10 + $0x148] sm:$0xff]
    %v6190 = vld [vmem:[#allocation10 + $0x150] sm:$0xff]
    %v6191 = vld [vmem:[#allocation10 + $0x158] sm:$0xff]
    %v6192 = vld [vmem:[#allocation10 + $0x160] sm:$0xff]
    %v6193 = vld [vmem:[#allocation10 + $0x168] sm:$0xff]
    %v6194 = vld [vmem:[#allocation10 + $0x170] sm:$0xff]
    %v6195 = vld [vmem:[#allocation10 + $0x178] sm:$0xff]
    %v6196 = vld [vmem:[#allocation10 + $0x180] sm:$0xff]
    %v6197 = vld [vmem:[#allocation10 + $0x188] sm:$0xff]
    %v6198 = vld [vmem:[#allocation10 + $0x190] sm:$0xff]
    %v6199 = vld [vmem:[#allocation10 + $0x198] sm:$0xff]
    %v6200 = vld [vmem:[#allocation10 + $0x1a0] sm:$0xff]
    %v6201 = vld [vmem:[#allocation10 + $0x1a8] sm:$0xff]
    %v6202 = vld [vmem:[#allocation10 + $0x1b0] sm:$0xff]
    %v6203 = vld [vmem:[#allocation10 + $0x1b8] sm:$0xff]
    %v6204 = vld [vmem:[#allocation10 + $0x1c0] sm:$0xff]
    %v6205 = vld [vmem:[#allocation10 + $0x1c8] sm:$0xff]
    %v6206 = vld [vmem:[#allocation10 + $0x1d0] sm:$0xff]
    %v6207 = vld [vmem:[#allocation10 + $0x1d8] sm:$0xff]
    %v6208 = vld [vmem:[#allocation10 + $0x1e0] sm:$0xff]
    %v6209 = vld [vmem:[#allocation10 + $0x1e8] sm:$0xff]
    %v6210 = vld [vmem:[#allocation10 + $0x1f0] sm:$0xff]
    %v6211 = vld [vmem:[#allocation10 + $0x1f8] sm:$0xff]
    %v6276 = vunpack.c.l.b16 %v6148
    %v6277 = vunpack.c.h.b16 %v6148
    %v6278 = vunpack.c.l.b16 %v6149
    %v6279 = vunpack.c.h.b16 %v6149
    %v6280 = vunpack.c.l.b16 %v6150
    %v6281 = vunpack.c.h.b16 %v6150
    %v6282 = vunpack.c.l.b16 %v6151
    %v6283 = vunpack.c.h.b16 %v6151
    %v6284 = vunpack.c.l.b16 %v6152
    %v6285 = vunpack.c.h.b16 %v6152
    %v6286 = vunpack.c.l.b16 %v6153
    %v6287 = vunpack.c.h.b16 %v6153
    %v6288 = vunpack.c.l.b16 %v6154
    %v6289 = vunpack.c.h.b16 %v6154
    %v6290 = vunpack.c.l.b16 %v6155
    %v6291 = vunpack.c.h.b16 %v6155
    %v6292 = vunpack.c.l.b16 %v6156
    %v6293 = vunpack.c.h.b16 %v6156
    %v6294 = vunpack.c.l.b16 %v6157
    %v6295 = vunpack.c.h.b16 %v6157
    %v6296 = vunpack.c.l.b16 %v6158
    %v6297 = vunpack.c.h.b16 %v6158
    %v6298 = vunpack.c.l.b16 %v6159
    %v6299 = vunpack.c.h.b16 %v6159
    %v6300 = vunpack.c.l.b16 %v6160
    %v6301 = vunpack.c.h.b16 %v6160
    %v6302 = vunpack.c.l.b16 %v6161
    %v6303 = vunpack.c.h.b16 %v6161
    %v6304 = vunpack.c.l.b16 %v6162
    %v6305 = vunpack.c.h.b16 %v6162
    %v6306 = vunpack.c.l.b16 %v6163
    %v6307 = vunpack.c.h.b16 %v6163
    %v6308 = vunpack.c.l.b16 %v6164
    %v6309 = vunpack.c.h.b16 %v6164
    %v6310 = vunpack.c.l.b16 %v6165
    %v6311 = vunpack.c.h.b16 %v6165
    %v6312 = vunpack.c.l.b16 %v6166
    %v6313 = vunpack.c.h.b16 %v6166
    %v6314 = vunpack.c.l.b16 %v6167
    %v6315 = vunpack.c.h.b16 %v6167
    %v6316 = vunpack.c.l.b16 %v6168
    %v6317 = vunpack.c.h.b16 %v6168
    %v6318 = vunpack.c.l.b16 %v6169
    %v6319 = vunpack.c.h.b16 %v6169
    %v6320 = vunpack.c.l.b16 %v6170
    %v6321 = vunpack.c.h.b16 %v6170
    %v6322 = vunpack.c.l.b16 %v6171
    %v6323 = vunpack.c.h.b16 %v6171
    %v6324 = vunpack.c.l.b16 %v6172
    %v6325 = vunpack.c.h.b16 %v6172
    %v6326 = vunpack.c.l.b16 %v6173
    %v6327 = vunpack.c.h.b16 %v6173
    %v6328 = vunpack.c.l.b16 %v6174
    %v6329 = vunpack.c.h.b16 %v6174
    %v6330 = vunpack.c.l.b16 %v6175
    %v6331 = vunpack.c.h.b16 %v6175
    %v6332 = vunpack.c.l.b16 %v6176
    %v6333 = vunpack.c.h.b16 %v6176
    %v6334 = vunpack.c.l.b16 %v6177
    %v6335 = vunpack.c.h.b16 %v6177
    %v6336 = vunpack.c.l.b16 %v6178
    %v6337 = vunpack.c.h.b16 %v6178
    %v6338 = vunpack.c.l.b16 %v6179
    %v6339 = vunpack.c.h.b16 %v6179
    %v6340 = vunpack.c.l.b16 %v6180
    %v6341 = vunpack.c.h.b16 %v6180
    %v6342 = vunpack.c.l.b16 %v6181
    %v6343 = vunpack.c.h.b16 %v6181
    %v6344 = vunpack.c.l.b16 %v6182
    %v6345 = vunpack.c.h.b16 %v6182
    %v6346 = vunpack.c.l.b16 %v6183
    %v6347 = vunpack.c.h.b16 %v6183
    %v6348 = vunpack.c.l.b16 %v6184
    %v6349 = vunpack.c.h.b16 %v6184
    %v6350 = vunpack.c.l.b16 %v6185
    %v6351 = vunpack.c.h.b16 %v6185
    %v6352 = vunpack.c.l.b16 %v6186
    %v6353 = vunpack.c.h.b16 %v6186
    %v6354 = vunpack.c.l.b16 %v6187
    %v6355 = vunpack.c.h.b16 %v6187
    %v6356 = vunpack.c.l.b16 %v6188
    %v6357 = vunpack.c.h.b16 %v6188
    %v6358 = vunpack.c.l.b16 %v6189
    %v6359 = vunpack.c.h.b16 %v6189
    %v6360 = vunpack.c.l.b16 %v6190
    %v6361 = vunpack.c.h.b16 %v6190
    %v6362 = vunpack.c.l.b16 %v6191
    %v6363 = vunpack.c.h.b16 %v6191
    %v6364 = vunpack.c.l.b16 %v6192
    %v6365 = vunpack.c.h.b16 %v6192
    %v6366 = vunpack.c.l.b16 %v6193
    %v6367 = vunpack.c.h.b16 %v6193
    %v6368 = vunpack.c.l.b16 %v6194
    %v6369 = vunpack.c.h.b16 %v6194
    %v6370 = vunpack.c.l.b16 %v6195
    %v6371 = vunpack.c.h.b16 %v6195
    %v6372 = vunpack.c.l.b16 %v6196
    %v6373 = vunpack.c.h.b16 %v6196
    %v6374 = vunpack.c.l.b16 %v6197
    %v6375 = vunpack.c.h.b16 %v6197
    %v6376 = vunpack.c.l.b16 %v6198
    %v6377 = vunpack.c.h.b16 %v6198
    %v6378 = vunpack.c.l.b16 %v6199
    %v6379 = vunpack.c.h.b16 %v6199
    %v6380 = vunpack.c.l.b16 %v6200
    %v6381 = vunpack.c.h.b16 %v6200
    %v6382 = vunpack.c.l.b16 %v6201
    %v6383 = vunpack.c.h.b16 %v6201
    %v6384 = vunpack.c.l.b16 %v6202
    %v6385 = vunpack.c.h.b16 %v6202
    %v6386 = vunpack.c.l.b16 %v6203
    %v6387 = vunpack.c.h.b16 %v6203
    %v6388 = vunpack.c.l.b16 %v6204
    %v6389 = vunpack.c.h.b16 %v6204
    %v6390 = vunpack.c.l.b16 %v6205
    %v6391 = vunpack.c.h.b16 %v6205
    %v6392 = vunpack.c.l.b16 %v6206
    %v6393 = vunpack.c.h.b16 %v6206
    %v6394 = vunpack.c.l.b16 %v6207
    %v6395 = vunpack.c.h.b16 %v6207
    %v6396 = vunpack.c.l.b16 %v6208
    %v6397 = vunpack.c.h.b16 %v6208
    %v6398 = vunpack.c.l.b16 %v6209
    %v6399 = vunpack.c.h.b16 %v6209
    %v6400 = vunpack.c.l.b16 %v6210
    %v6401 = vunpack.c.h.b16 %v6210
    %v6402 = vunpack.c.l.b16 %v6211
    %v6403 = vunpack.c.h.b16 %v6211
    %v6404 = vpack.c.b16 %v6280, %v6276
    %v6405 = vpack.c.b16 %v6281, %v6277
    %v6406 = vpack.c.b16 %v6282, %v6278
    %v6407 = vpack.c.b16 %v6283, %v6279
    %v6408 = vpack.c.b16 %v6288, %v6284
    %v6409 = vpack.c.b16 %v6289, %v6285
    %v6410 = vpack.c.b16 %v6290, %v6286
    %v6411 = vpack.c.b16 %v6291, %v6287
    %v6412 = vpack.c.b16 %v6296, %v6292
    %v6413 = vpack.c.b16 %v6297, %v6293
    %v6414 = vpack.c.b16 %v6298, %v6294
    %v6415 = vpack.c.b16 %v6299, %v6295
    %v6416 = vpack.c.b16 %v6304, %v6300
    %v6417 = vpack.c.b16 %v6305, %v6301
    %v6418 = vpack.c.b16 %v6306, %v6302
    %v6419 = vpack.c.b16 %v6307, %v6303
    %v6420 = vpack.c.b16 %v6312, %v6308
    %v6421 = vpack.c.b16 %v6313, %v6309
    %v6422 = vpack.c.b16 %v6314, %v6310
    %v6423 = vpack.c.b16 %v6315, %v6311
    %v6424 = vpack.c.b16 %v6320, %v6316
    %v6425 = vpack.c.b16 %v6321, %v6317
    %v6426 = vpack.c.b16 %v6322, %v6318
    %v6427 = vpack.c.b16 %v6323, %v6319
    %v6428 = vpack.c.b16 %v6328, %v6324
    %v6429 = vpack.c.b16 %v6329, %v6325
    %v6430 = vpack.c.b16 %v6330, %v6326
    %v6431 = vpack.c.b16 %v6331, %v6327
    %v6432 = vpack.c.b16 %v6336, %v6332
    %v6433 = vpack.c.b16 %v6337, %v6333
    %v6434 = vpack.c.b16 %v6338, %v6334
    %v6435 = vpack.c.b16 %v6339, %v6335
    %v6436 = vpack.c.b16 %v6344, %v6340
    %v6437 = vpack.c.b16 %v6345, %v6341
    %v6438 = vpack.c.b16 %v6346, %v6342
    %v6439 = vpack.c.b16 %v6347, %v6343
    %v6440 = vpack.c.b16 %v6352, %v6348
    %v6441 = vpack.c.b16 %v6353, %v6349
    %v6442 = vpack.c.b16 %v6354, %v6350
    %v6443 = vpack.c.b16 %v6355, %v6351
    %v6444 = vpack.c.b16 %v6360, %v6356
    %v6445 = vpack.c.b16 %v6361, %v6357
    %v6446 = vpack.c.b16 %v6362, %v6358
    %v6447 = vpack.c.b16 %v6363, %v6359
    %v6448 = vpack.c.b16 %v6368, %v6364
    %v6449 = vpack.c.b16 %v6369, %v6365
    %v6450 = vpack.c.b16 %v6370, %v6366
    %v6451 = vpack.c.b16 %v6371, %v6367
    %v6452 = vpack.c.b16 %v6376, %v6372
    %v6453 = vpack.c.b16 %v6377, %v6373
    %v6454 = vpack.c.b16 %v6378, %v6374
    %v6455 = vpack.c.b16 %v6379, %v6375
    %v6456 = vpack.c.b16 %v6384, %v6380
    %v6457 = vpack.c.b16 %v6385, %v6381
    %v6458 = vpack.c.b16 %v6386, %v6382
    %v6459 = vpack.c.b16 %v6387, %v6383
    %v6460 = vpack.c.b16 %v6392, %v6388
    %v6461 = vpack.c.b16 %v6393, %v6389
    %v6462 = vpack.c.b16 %v6394, %v6390
    %v6463 = vpack.c.b16 %v6395, %v6391
    %v6464 = vpack.c.b16 %v6400, %v6396
    %v6465 = vpack.c.b16 %v6401, %v6397
    %v6466 = vpack.c.b16 %v6402, %v6398
    %v6467 = vpack.c.b16 %v6403, %v6399
    %6532 = vmatpush.bf16.msra.mxu0 %v6432
    %6533 = vmatpush.bf16.msra.mxu0 %v6428
    %6534 = vmatpush.bf16.msra.mxu0 %v6424
    %6535 = vmatpush.bf16.msra.mxu0 %v6420
    %6536 = vmatpush.bf16.msra.mxu0 %v6416
    %6537 = vmatpush.bf16.msra.mxu0 %v6412
    %6538 = vmatpush.bf16.msra.mxu0 %v6408
    %6539 = vmatpush.bf16.msra.mxu0 %v6404
    %6540 = vmatmul.bf16.gmra.mxu0 %v6147
    %v6541 = vpop.f32.mrf.mxu0
    %v6542 = vadd.f32 %v3458, %v6541
    %v6543 = vpop.f32.mrf.mxu0
    %6544 = vdwg.mxu0
    %6545 = vmatpush.bf16.msra.mxu0 %v6464
    %6546 = vmatpush.bf16.msra.mxu0 %v6460
    %6547 = vmatpush.bf16.msra.mxu0 %v6456
    %6548 = vmatpush.bf16.msra.mxu0 %v6452
    %6549 = vmatpush.bf16.msra.mxu0 %v6448
    %6550 = vmatpush.bf16.msra.mxu0 %v6444
    %6551 = vmatpush.bf16.msra.mxu0 %v6440
    %6552 = vmatpush.bf16.msra.mxu0 %v6436
    %6553 = vmatmul.bf16.gmra.mxu0 %v5410
    %v6554 = vpop.f32.mrf.mxu0
    %v6555 = vadd.f32 %v6542, %v6554
    %v6556 = vpop.f32.mrf.mxu0
    %6557 = vdwg.mxu0
    %6558 = vmatpush.bf16.msra.mxu0 %v6433
    %6559 = vmatpush.bf16.msra.mxu0 %v6429
    %6560 = vmatpush.bf16.msra.mxu0 %v6425
    %6561 = vmatpush.bf16.msra.mxu0 %v6421
    %6562 = vmatpush.bf16.msra.mxu0 %v6417
    %6563 = vmatpush.bf16.msra.mxu0 %v6413
    %6564 = vmatpush.bf16.msra.mxu0 %v6409
    %6565 = vmatpush.bf16.msra.mxu0 %v6405
    %6566 = vmatmul.bf16.gmra.mxu0 %v6147
    %v6567 = vpop.f32.mrf.mxu0
    %v6568 = vadd.f32 %v3459, %v6567
    %v6569 = vpop.f32.mrf.mxu0
    %6570 = vdwg.mxu0
    %6571 = vmatpush.bf16.msra.mxu0 %v6465
    %6572 = vmatpush.bf16.msra.mxu0 %v6461
    %6573 = vmatpush.bf16.msra.mxu0 %v6457
    %6574 = vmatpush.bf16.msra.mxu0 %v6453
    %6575 = vmatpush.bf16.msra.mxu0 %v6449
    %6576 = vmatpush.bf16.msra.mxu0 %v6445
    %6577 = vmatpush.bf16.msra.mxu0 %v6441
    %6578 = vmatpush.bf16.msra.mxu0 %v6437
    %6579 = vmatmul.bf16.gmra.mxu0 %v5410
    %v6580 = vpop.f32.mrf.mxu0
    %v6581 = vadd.f32 %v6568, %v6580
    %v6582 = vpop.f32.mrf.mxu0
    %6583 = vdwg.mxu0
    %6584 = vmatpush.bf16.msra.mxu0 %v6434
    %6585 = vmatpush.bf16.msra.mxu0 %v6430
    %6586 = vmatpush.bf16.msra.mxu0 %v6426
    %6587 = vmatpush.bf16.msra.mxu0 %v6422
    %6588 = vmatpush.bf16.msra.mxu0 %v6418
    %6589 = vmatpush.bf16.msra.mxu0 %v6414
    %6590 = vmatpush.bf16.msra.mxu0 %v6410
    %6591 = vmatpush.bf16.msra.mxu0 %v6406
    %6592 = vmatmul.bf16.gmra.mxu0 %v6147
    %v6593 = vpop.f32.mrf.mxu0
    %v6594 = vadd.f32 %v3460, %v6593
    %v6595 = vpop.f32.mrf.mxu0
    %6596 = vdwg.mxu0
    %6597 = vmatpush.bf16.msra.mxu0 %v6466
    %6598 = vmatpush.bf16.msra.mxu0 %v6462
    %6599 = vmatpush.bf16.msra.mxu0 %v6458
    %6600 = vmatpush.bf16.msra.mxu0 %v6454
    %6601 = vmatpush.bf16.msra.mxu0 %v6450
    %6602 = vmatpush.bf16.msra.mxu0 %v6446
    %6603 = vmatpush.bf16.msra.mxu0 %v6442
    %6604 = vmatpush.bf16.msra.mxu0 %v6438
    %6605 = vmatmul.bf16.gmra.mxu0 %v5410
    %v6606 = vpop.f32.mrf.mxu0
    %v6607 = vadd.f32 %v6594, %v6606
    %v6608 = vpop.f32.mrf.mxu0
    %6609 = vdwg.mxu0
    %6610 = vmatpush.bf16.msra.mxu0 %v6435
    %6611 = vmatpush.bf16.msra.mxu0 %v6431
    %6612 = vmatpush.bf16.msra.mxu0 %v6427
    %6613 = vmatpush.bf16.msra.mxu0 %v6423
    %6614 = vmatpush.bf16.msra.mxu0 %v6419
    %6615 = vmatpush.bf16.msra.mxu0 %v6415
    %6616 = vmatpush.bf16.msra.mxu0 %v6411
    %6617 = vmatpush.bf16.msra.mxu0 %v6407
    %6618 = vmatmul.bf16.gmra.mxu0 %v6147
    %v6619 = vpop.f32.mrf.mxu0
    %v6620 = vadd.f32 %v3461, %v6619
    %v6621 = vpop.f32.mrf.mxu0
    %6622 = vdwg.mxu0
    %6623 = vmatpush.bf16.msra.mxu0 %v6467
    %6624 = vmatpush.bf16.msra.mxu0 %v6463
    %6625 = vmatpush.bf16.msra.mxu0 %v6459
    %6626 = vmatpush.bf16.msra.mxu0 %v6455
    %6627 = vmatpush.bf16.msra.mxu0 %v6451
    %6628 = vmatpush.bf16.msra.mxu0 %v6447
    %6629 = vmatpush.bf16.msra.mxu0 %v6443
    %6630 = vmatpush.bf16.msra.mxu0 %v6439
    %6631 = vmatmul.bf16.gmra.mxu0 %v5410
    %v6632 = vpop.f32.mrf.mxu0
    %v6633 = vadd.f32 %v6620, %v6632
    %v6634 = vpop.f32.mrf.mxu0
    %6635 = vdwg.mxu0
    %v6636 = vxor.u32 %v6555, 2147483648
    %v6637 = vxor.u32 %v6581, 2147483648
    %v6638 = vxor.u32 %v6607, 2147483648
    %v6639 = vmul.f32 %v6636, 1.442695
    %v6640 = vpow.pop %v6639
    %v6641 = vmul.f32 %v6637, 1.442695
    %v6642 = vpow.pop %v6641
    %v6643 = vmul.f32 %v6638, 1.442695
    %v6644 = vpow.pop %v6643
    %v6645 = vadd.f32 %v6640, 1.0
    %v6646 = vadd.f32 %v6642, 1.0
    %v6647 = vadd.f32 %v6644, 1.0
    %v6648 = vrcp.pop %v6645
    %v6649 = vmul.f32 %v6645, %v6648
    %v6650 = vsub.f32 1.0, %v6649
    %v6651 = vmul.f32 %v6648, %v6650
    %v6652 = vadd.f32 %v6648, %v6651
    %vm6653 = vweird.f32 %v6645
    %vm6654 = vweird.f32 %v6648
    %vm6655 = vmor %vm6653, %vm6654
    %v6656 = vsel %vm6655, %v6648, %v6652
    %v6657 = vand.u32 2147483647, %v6645
    %vm6658 = vcmp.eq.f32.partialorder %v6657, 8.507059e+37
    %v6659 = vand.u32 %v6645, 2147483648
    %v6660 = vor.u32 1.1754944e-38, %v6659
    %v6661 = vsel %vm6658, %v6660, %v6656
    %v6662 = vmul.f32 1.0, %v6661
    %v6663 = vrcp.pop %v6646
    %v6664 = vmul.f32 %v6646, %v6663
    %v6665 = vsub.f32 1.0, %v6664
    %v6666 = vmul.f32 %v6663, %v6665
    %v6667 = vadd.f32 %v6663, %v6666
    %vm6668 = vweird.f32 %v6646
    %vm6669 = vweird.f32 %v6663
    %vm6670 = vmor %vm6668, %vm6669
    %v6671 = vsel %vm6670, %v6663, %v6667
    %v6672 = vand.u32 2147483647, %v6646
    %vm6673 = vcmp.eq.f32.partialorder %v6672, 8.507059e+37
    %v6674 = vand.u32 %v6646, 2147483648
    %v6675 = vor.u32 1.1754944e-38, %v6674
    %v6676 = vsel %vm6673, %v6675, %v6671
    %v6677 = vmul.f32 1.0, %v6676
    %v6678 = vrcp.pop %v6647
    %v6679 = vmul.f32 %v6647, %v6678
    %v6680 = vsub.f32 1.0, %v6679
    %v6681 = vmul.f32 %v6678, %v6680
    %v6682 = vadd.f32 %v6678, %v6681
    %vm6683 = vweird.f32 %v6647
    %vm6684 = vweird.f32 %v6678
    %vm6685 = vmor %vm6683, %vm6684
    %v6686 = vsel %vm6685, %v6678, %v6682
    %v6687 = vand.u32 2147483647, %v6647
    %vm6688 = vcmp.eq.f32.partialorder %v6687, 8.507059e+37
    %v6689 = vand.u32 %v6647, 2147483648
    %v6690 = vor.u32 1.1754944e-38, %v6689
    %v6691 = vsel %vm6688, %v6690, %v6686
    %v6692 = vmul.f32 1.0, %v6691
    %v6693 = vtanh.pop %v6633
    %v6694 = vmul.f32 %v6677, %v5407
    %v6695 = vmul.f32 %v6662, %v6693
    %v6696 = vadd.f32 %v6694, %v6695
    %v6697 = vtanh.pop %v6696
    %v6698 = vmul.f32 %v6692, %v6697
    %v6699 = vpack.c.bf16 %v6698, %v6698
    %v6700 = vld [vmem:[#allocation11] sm:$0xff]
    %v6701 = vld [vmem:[#allocation11 + $0x8] sm:$0xff]
    %v6702 = vld [vmem:[#allocation11 + $0x10] sm:$0xff]
    %v6703 = vld [vmem:[#allocation11 + $0x18] sm:$0xff]
    %v6704 = vld [vmem:[#allocation11 + $0x20] sm:$0xff]
    %v6705 = vld [vmem:[#allocation11 + $0x28] sm:$0xff]
    %v6706 = vld [vmem:[#allocation11 + $0x30] sm:$0xff]
    %v6707 = vld [vmem:[#allocation11 + $0x38] sm:$0xff]
    %v6708 = vld [vmem:[#allocation11 + $0x40] sm:$0xff]
    %v6709 = vld [vmem:[#allocation11 + $0x48] sm:$0xff]
    %v6710 = vld [vmem:[#allocation11 + $0x50] sm:$0xff]
    %v6711 = vld [vmem:[#allocation11 + $0x58] sm:$0xff]
    %v6712 = vld [vmem:[#allocation11 + $0x60] sm:$0xff]
    %v6713 = vld [vmem:[#allocation11 + $0x68] sm:$0xff]
    %v6714 = vld [vmem:[#allocation11 + $0x70] sm:$0xff]
    %v6715 = vld [vmem:[#allocation11 + $0x78] sm:$0xff]
    %v6716 = vld [vmem:[#allocation11 + $0x80] sm:$0xff]
    %v6717 = vld [vmem:[#allocation11 + $0x88] sm:$0xff]
    %v6718 = vld [vmem:[#allocation11 + $0x90] sm:$0xff]
    %v6719 = vld [vmem:[#allocation11 + $0x98] sm:$0xff]
    %v6720 = vld [vmem:[#allocation11 + $0xa0] sm:$0xff]
    %v6721 = vld [vmem:[#allocation11 + $0xa8] sm:$0xff]
    %v6722 = vld [vmem:[#allocation11 + $0xb0] sm:$0xff]
    %v6723 = vld [vmem:[#allocation11 + $0xb8] sm:$0xff]
    %v6724 = vld [vmem:[#allocation11 + $0xc0] sm:$0xff]
    %v6725 = vld [vmem:[#allocation11 + $0xc8] sm:$0xff]
    %v6726 = vld [vmem:[#allocation11 + $0xd0] sm:$0xff]
    %v6727 = vld [vmem:[#allocation11 + $0xd8] sm:$0xff]
    %v6728 = vld [vmem:[#allocation11 + $0xe0] sm:$0xff]
    %v6729 = vld [vmem:[#allocation11 + $0xe8] sm:$0xff]
    %v6730 = vld [vmem:[#allocation11 + $0xf0] sm:$0xff]
    %v6731 = vld [vmem:[#allocation11 + $0xf8] sm:$0xff]
    %v6732 = vld [vmem:[#allocation11 + $0x100] sm:$0xff]
    %v6733 = vld [vmem:[#allocation11 + $0x108] sm:$0xff]
    %v6734 = vld [vmem:[#allocation11 + $0x110] sm:$0xff]
    %v6735 = vld [vmem:[#allocation11 + $0x118] sm:$0xff]
    %v6736 = vld [vmem:[#allocation11 + $0x120] sm:$0xff]
    %v6737 = vld [vmem:[#allocation11 + $0x128] sm:$0xff]
    %v6738 = vld [vmem:[#allocation11 + $0x130] sm:$0xff]
    %v6739 = vld [vmem:[#allocation11 + $0x138] sm:$0xff]
    %v6740 = vld [vmem:[#allocation11 + $0x140] sm:$0xff]
    %v6741 = vld [vmem:[#allocation11 + $0x148] sm:$0xff]
    %v6742 = vld [vmem:[#allocation11 + $0x150] sm:$0xff]
    %v6743 = vld [vmem:[#allocation11 + $0x158] sm:$0xff]
    %v6744 = vld [vmem:[#allocation11 + $0x160] sm:$0xff]
    %v6745 = vld [vmem:[#allocation11 + $0x168] sm:$0xff]
    %v6746 = vld [vmem:[#allocation11 + $0x170] sm:$0xff]
    %v6747 = vld [vmem:[#allocation11 + $0x178] sm:$0xff]
    %v6748 = vld [vmem:[#allocation11 + $0x180] sm:$0xff]
    %v6749 = vld [vmem:[#allocation11 + $0x188] sm:$0xff]
    %v6750 = vld [vmem:[#allocation11 + $0x190] sm:$0xff]
    %v6751 = vld [vmem:[#allocation11 + $0x198] sm:$0xff]
    %v6752 = vld [vmem:[#allocation11 + $0x1a0] sm:$0xff]
    %v6753 = vld [vmem:[#allocation11 + $0x1a8] sm:$0xff]
    %v6754 = vld [vmem:[#allocation11 + $0x1b0] sm:$0xff]
    %v6755 = vld [vmem:[#allocation11 + $0x1b8] sm:$0xff]
    %v6756 = vld [vmem:[#allocation11 + $0x1c0] sm:$0xff]
    %v6757 = vld [vmem:[#allocation11 + $0x1c8] sm:$0xff]
    %v6758 = vld [vmem:[#allocation11 + $0x1d0] sm:$0xff]
    %v6759 = vld [vmem:[#allocation11 + $0x1d8] sm:$0xff]
    %v6760 = vld [vmem:[#allocation11 + $0x1e0] sm:$0xff]
    %v6761 = vld [vmem:[#allocation11 + $0x1e8] sm:$0xff]
    %v6762 = vld [vmem:[#allocation11 + $0x1f0] sm:$0xff]
    %v6763 = vld [vmem:[#allocation11 + $0x1f8] sm:$0xff]
    %v6828 = vunpack.c.l.b16 %v6700
    %v6829 = vunpack.c.h.b16 %v6700
    %v6830 = vunpack.c.l.b16 %v6701
    %v6831 = vunpack.c.h.b16 %v6701
    %v6832 = vunpack.c.l.b16 %v6702
    %v6833 = vunpack.c.h.b16 %v6702
    %v6834 = vunpack.c.l.b16 %v6703
    %v6835 = vunpack.c.h.b16 %v6703
    %v6836 = vunpack.c.l.b16 %v6704
    %v6837 = vunpack.c.h.b16 %v6704
    %v6838 = vunpack.c.l.b16 %v6705
    %v6839 = vunpack.c.h.b16 %v6705
    %v6840 = vunpack.c.l.b16 %v6706
    %v6841 = vunpack.c.h.b16 %v6706
    %v6842 = vunpack.c.l.b16 %v6707
    %v6843 = vunpack.c.h.b16 %v6707
    %v6844 = vunpack.c.l.b16 %v6708
    %v6845 = vunpack.c.h.b16 %v6708
    %v6846 = vunpack.c.l.b16 %v6709
    %v6847 = vunpack.c.h.b16 %v6709
    %v6848 = vunpack.c.l.b16 %v6710
    %v6849 = vunpack.c.h.b16 %v6710
    %v6850 = vunpack.c.l.b16 %v6711
    %v6851 = vunpack.c.h.b16 %v6711
    %v6852 = vunpack.c.l.b16 %v6712
    %v6853 = vunpack.c.h.b16 %v6712
    %v6854 = vunpack.c.l.b16 %v6713
    %v6855 = vunpack.c.h.b16 %v6713
    %v6856 = vunpack.c.l.b16 %v6714
    %v6857 = vunpack.c.h.b16 %v6714
    %v6858 = vunpack.c.l.b16 %v6715
    %v6859 = vunpack.c.h.b16 %v6715
    %v6860 = vunpack.c.l.b16 %v6716
    %v6861 = vunpack.c.h.b16 %v6716
    %v6862 = vunpack.c.l.b16 %v6717
    %v6863 = vunpack.c.h.b16 %v6717
    %v6864 = vunpack.c.l.b16 %v6718
    %v6865 = vunpack.c.h.b16 %v6718
    %v6866 = vunpack.c.l.b16 %v6719
    %v6867 = vunpack.c.h.b16 %v6719
    %v6868 = vunpack.c.l.b16 %v6720
    %v6869 = vunpack.c.h.b16 %v6720
    %v6870 = vunpack.c.l.b16 %v6721
    %v6871 = vunpack.c.h.b16 %v6721
    %v6872 = vunpack.c.l.b16 %v6722
    %v6873 = vunpack.c.h.b16 %v6722
    %v6874 = vunpack.c.l.b16 %v6723
    %v6875 = vunpack.c.h.b16 %v6723
    %v6876 = vunpack.c.l.b16 %v6724
    %v6877 = vunpack.c.h.b16 %v6724
    %v6878 = vunpack.c.l.b16 %v6725
    %v6879 = vunpack.c.h.b16 %v6725
    %v6880 = vunpack.c.l.b16 %v6726
    %v6881 = vunpack.c.h.b16 %v6726
    %v6882 = vunpack.c.l.b16 %v6727
    %v6883 = vunpack.c.h.b16 %v6727
    %v6884 = vunpack.c.l.b16 %v6728
    %v6885 = vunpack.c.h.b16 %v6728
    %v6886 = vunpack.c.l.b16 %v6729
    %v6887 = vunpack.c.h.b16 %v6729
    %v6888 = vunpack.c.l.b16 %v6730
    %v6889 = vunpack.c.h.b16 %v6730
    %v6890 = vunpack.c.l.b16 %v6731
    %v6891 = vunpack.c.h.b16 %v6731
    %v6892 = vunpack.c.l.b16 %v6732
    %v6893 = vunpack.c.h.b16 %v6732
    %v6894 = vunpack.c.l.b16 %v6733
    %v6895 = vunpack.c.h.b16 %v6733
    %v6896 = vunpack.c.l.b16 %v6734
    %v6897 = vunpack.c.h.b16 %v6734
    %v6898 = vunpack.c.l.b16 %v6735
    %v6899 = vunpack.c.h.b16 %v6735
    %v6900 = vunpack.c.l.b16 %v6736
    %v6901 = vunpack.c.h.b16 %v6736
    %v6902 = vunpack.c.l.b16 %v6737
    %v6903 = vunpack.c.h.b16 %v6737
    %v6904 = vunpack.c.l.b16 %v6738
    %v6905 = vunpack.c.h.b16 %v6738
    %v6906 = vunpack.c.l.b16 %v6739
    %v6907 = vunpack.c.h.b16 %v6739
    %v6908 = vunpack.c.l.b16 %v6740
    %v6909 = vunpack.c.h.b16 %v6740
    %v6910 = vunpack.c.l.b16 %v6741
    %v6911 = vunpack.c.h.b16 %v6741
    %v6912 = vunpack.c.l.b16 %v6742
    %v6913 = vunpack.c.h.b16 %v6742
    %v6914 = vunpack.c.l.b16 %v6743
    %v6915 = vunpack.c.h.b16 %v6743
    %v6916 = vunpack.c.l.b16 %v6744
    %v6917 = vunpack.c.h.b16 %v6744
    %v6918 = vunpack.c.l.b16 %v6745
    %v6919 = vunpack.c.h.b16 %v6745
    %v6920 = vunpack.c.l.b16 %v6746
    %v6921 = vunpack.c.h.b16 %v6746
    %v6922 = vunpack.c.l.b16 %v6747
    %v6923 = vunpack.c.h.b16 %v6747
    %v6924 = vunpack.c.l.b16 %v6748
    %v6925 = vunpack.c.h.b16 %v6748
    %v6926 = vunpack.c.l.b16 %v6749
    %v6927 = vunpack.c.h.b16 %v6749
    %v6928 = vunpack.c.l.b16 %v6750
    %v6929 = vunpack.c.h.b16 %v6750
    %v6930 = vunpack.c.l.b16 %v6751
    %v6931 = vunpack.c.h.b16 %v6751
    %v6932 = vunpack.c.l.b16 %v6752
    %v6933 = vunpack.c.h.b16 %v6752
    %v6934 = vunpack.c.l.b16 %v6753
    %v6935 = vunpack.c.h.b16 %v6753
    %v6936 = vunpack.c.l.b16 %v6754
    %v6937 = vunpack.c.h.b16 %v6754
    %v6938 = vunpack.c.l.b16 %v6755
    %v6939 = vunpack.c.h.b16 %v6755
    %v6940 = vunpack.c.l.b16 %v6756
    %v6941 = vunpack.c.h.b16 %v6756
    %v6942 = vunpack.c.l.b16 %v6757
    %v6943 = vunpack.c.h.b16 %v6757
    %v6944 = vunpack.c.l.b16 %v6758
    %v6945 = vunpack.c.h.b16 %v6758
    %v6946 = vunpack.c.l.b16 %v6759
    %v6947 = vunpack.c.h.b16 %v6759
    %v6948 = vunpack.c.l.b16 %v6760
    %v6949 = vunpack.c.h.b16 %v6760
    %v6950 = vunpack.c.l.b16 %v6761
    %v6951 = vunpack.c.h.b16 %v6761
    %v6952 = vunpack.c.l.b16 %v6762
    %v6953 = vunpack.c.h.b16 %v6762
    %v6954 = vunpack.c.l.b16 %v6763
    %v6955 = vunpack.c.h.b16 %v6763
    %v6956 = vpack.c.b16 %v6832, %v6828
    %v6957 = vpack.c.b16 %v6833, %v6829
    %v6958 = vpack.c.b16 %v6834, %v6830
    %v6959 = vpack.c.b16 %v6835, %v6831
    %v6960 = vpack.c.b16 %v6840, %v6836
    %v6961 = vpack.c.b16 %v6841, %v6837
    %v6962 = vpack.c.b16 %v6842, %v6838
    %v6963 = vpack.c.b16 %v6843, %v6839
    %v6964 = vpack.c.b16 %v6848, %v6844
    %v6965 = vpack.c.b16 %v6849, %v6845
    %v6966 = vpack.c.b16 %v6850, %v6846
    %v6967 = vpack.c.b16 %v6851, %v6847
    %v6968 = vpack.c.b16 %v6856, %v6852
    %v6969 = vpack.c.b16 %v6857, %v6853
    %v6970 = vpack.c.b16 %v6858, %v6854
    %v6971 = vpack.c.b16 %v6859, %v6855
    %v6972 = vpack.c.b16 %v6864, %v6860
    %v6973 = vpack.c.b16 %v6865, %v6861
    %v6974 = vpack.c.b16 %v6866, %v6862
    %v6975 = vpack.c.b16 %v6867, %v6863
    %v6976 = vpack.c.b16 %v6872, %v6868
    %v6977 = vpack.c.b16 %v6873, %v6869
    %v6978 = vpack.c.b16 %v6874, %v6870
    %v6979 = vpack.c.b16 %v6875, %v6871
    %v6980 = vpack.c.b16 %v6880, %v6876
    %v6981 = vpack.c.b16 %v6881, %v6877
    %v6982 = vpack.c.b16 %v6882, %v6878
    %v6983 = vpack.c.b16 %v6883, %v6879
    %v6984 = vpack.c.b16 %v6888, %v6884
    %v6985 = vpack.c.b16 %v6889, %v6885
    %v6986 = vpack.c.b16 %v6890, %v6886
    %v6987 = vpack.c.b16 %v6891, %v6887
    %v6988 = vpack.c.b16 %v6896, %v6892
    %v6989 = vpack.c.b16 %v6897, %v6893
    %v6990 = vpack.c.b16 %v6898, %v6894
    %v6991 = vpack.c.b16 %v6899, %v6895
    %v6992 = vpack.c.b16 %v6904, %v6900
    %v6993 = vpack.c.b16 %v6905, %v6901
    %v6994 = vpack.c.b16 %v6906, %v6902
    %v6995 = vpack.c.b16 %v6907, %v6903
    %v6996 = vpack.c.b16 %v6912, %v6908
    %v6997 = vpack.c.b16 %v6913, %v6909
    %v6998 = vpack.c.b16 %v6914, %v6910
    %v6999 = vpack.c.b16 %v6915, %v6911
    %v7000 = vpack.c.b16 %v6920, %v6916
    %v7001 = vpack.c.b16 %v6921, %v6917
    %v7002 = vpack.c.b16 %v6922, %v6918
    %v7003 = vpack.c.b16 %v6923, %v6919
    %v7004 = vpack.c.b16 %v6928, %v6924
    %v7005 = vpack.c.b16 %v6929, %v6925
    %v7006 = vpack.c.b16 %v6930, %v6926
    %v7007 = vpack.c.b16 %v6931, %v6927
    %v7008 = vpack.c.b16 %v6936, %v6932
    %v7009 = vpack.c.b16 %v6937, %v6933
    %v7010 = vpack.c.b16 %v6938, %v6934
    %v7011 = vpack.c.b16 %v6939, %v6935
    %v7012 = vpack.c.b16 %v6944, %v6940
    %v7013 = vpack.c.b16 %v6945, %v6941
    %v7014 = vpack.c.b16 %v6946, %v6942
    %v7015 = vpack.c.b16 %v6947, %v6943
    %v7016 = vpack.c.b16 %v6952, %v6948
    %v7017 = vpack.c.b16 %v6953, %v6949
    %v7018 = vpack.c.b16 %v6954, %v6950
    %v7019 = vpack.c.b16 %v6955, %v6951
    %7084 = vmatpush.bf16.msra.mxu0 %v6984
    %7085 = vmatpush.bf16.msra.mxu0 %v6980
    %7086 = vmatpush.bf16.msra.mxu0 %v6976
    %7087 = vmatpush.bf16.msra.mxu0 %v6972
    %7088 = vmatpush.bf16.msra.mxu0 %v6968
    %7089 = vmatpush.bf16.msra.mxu0 %v6964
    %7090 = vmatpush.bf16.msra.mxu0 %v6960
    %7091 = vmatpush.bf16.msra.mxu0 %v6956
    %7092 = vmatmul.bf16.gmra.mxu0 %v6699
    %v7093 = vpop.f32.mrf.mxu0
    %v7094 = vadd.f32 %v3468, %v7093
    %v7095 = vpop.f32.mrf.mxu0
    %7096 = vdwg.mxu0
    %7097 = vmatpush.bf16.msra.mxu0 %v7016
    %7098 = vmatpush.bf16.msra.mxu0 %v7012
    %7099 = vmatpush.bf16.msra.mxu0 %v7008
    %7100 = vmatpush.bf16.msra.mxu0 %v7004
    %7101 = vmatpush.bf16.msra.mxu0 %v7000
    %7102 = vmatpush.bf16.msra.mxu0 %v6996
    %7103 = vmatpush.bf16.msra.mxu0 %v6992
    %7104 = vmatpush.bf16.msra.mxu0 %v6988
    %7105 = vmatmul.bf16.gmra.mxu0 %v5962
    %v7106 = vpop.f32.mrf.mxu0
    %v7107 = vadd.f32 %v7094, %v7106
    %v7108 = vpop.f32.mrf.mxu0
    %7109 = vdwg.mxu0
    %7110 = vmatpush.bf16.msra.mxu0 %v6985
    %7111 = vmatpush.bf16.msra.mxu0 %v6981
    %7112 = vmatpush.bf16.msra.mxu0 %v6977
    %7113 = vmatpush.bf16.msra.mxu0 %v6973
    %7114 = vmatpush.bf16.msra.mxu0 %v6969
    %7115 = vmatpush.bf16.msra.mxu0 %v6965
    %7116 = vmatpush.bf16.msra.mxu0 %v6961
    %7117 = vmatpush.bf16.msra.mxu0 %v6957
    %7118 = vmatmul.bf16.gmra.mxu0 %v6699
    %v7119 = vpop.f32.mrf.mxu0
    %v7120 = vadd.f32 %v3469, %v7119
    %v7121 = vpop.f32.mrf.mxu0
    %7122 = vdwg.mxu0
    %7123 = vmatpush.bf16.msra.mxu0 %v7017
    %7124 = vmatpush.bf16.msra.mxu0 %v7013
    %7125 = vmatpush.bf16.msra.mxu0 %v7009
    %7126 = vmatpush.bf16.msra.mxu0 %v7005
    %7127 = vmatpush.bf16.msra.mxu0 %v7001
    %7128 = vmatpush.bf16.msra.mxu0 %v6997
    %7129 = vmatpush.bf16.msra.mxu0 %v6993
    %7130 = vmatpush.bf16.msra.mxu0 %v6989
    %7131 = vmatmul.bf16.gmra.mxu0 %v5962
    %v7132 = vpop.f32.mrf.mxu0
    %v7133 = vadd.f32 %v7120, %v7132
    %v7134 = vpop.f32.mrf.mxu0
    %7135 = vdwg.mxu0
    %7136 = vmatpush.bf16.msra.mxu0 %v6986
    %7137 = vmatpush.bf16.msra.mxu0 %v6982
    %7138 = vmatpush.bf16.msra.mxu0 %v6978
    %7139 = vmatpush.bf16.msra.mxu0 %v6974
    %7140 = vmatpush.bf16.msra.mxu0 %v6970
    %7141 = vmatpush.bf16.msra.mxu0 %v6966
    %7142 = vmatpush.bf16.msra.mxu0 %v6962
    %7143 = vmatpush.bf16.msra.mxu0 %v6958
    %7144 = vmatmul.bf16.gmra.mxu0 %v6699
    %v7145 = vpop.f32.mrf.mxu0
    %v7146 = vadd.f32 %v3470, %v7145
    %v7147 = vpop.f32.mrf.mxu0
    %7148 = vdwg.mxu0
    %7149 = vmatpush.bf16.msra.mxu0 %v7018
    %7150 = vmatpush.bf16.msra.mxu0 %v7014
    %7151 = vmatpush.bf16.msra.mxu0 %v7010
    %7152 = vmatpush.bf16.msra.mxu0 %v7006
    %7153 = vmatpush.bf16.msra.mxu0 %v7002
    %7154 = vmatpush.bf16.msra.mxu0 %v6998
    %7155 = vmatpush.bf16.msra.mxu0 %v6994
    %7156 = vmatpush.bf16.msra.mxu0 %v6990
    %7157 = vmatmul.bf16.gmra.mxu0 %v5962
    %v7158 = vpop.f32.mrf.mxu0
    %v7159 = vadd.f32 %v7146, %v7158
    %v7160 = vpop.f32.mrf.mxu0
    %7161 = vdwg.mxu0
    %7162 = vmatpush.bf16.msra.mxu0 %v6987
    %7163 = vmatpush.bf16.msra.mxu0 %v6983
    %7164 = vmatpush.bf16.msra.mxu0 %v6979
    %7165 = vmatpush.bf16.msra.mxu0 %v6975
    %7166 = vmatpush.bf16.msra.mxu0 %v6971
    %7167 = vmatpush.bf16.msra.mxu0 %v6967
    %7168 = vmatpush.bf16.msra.mxu0 %v6963
    %7169 = vmatpush.bf16.msra.mxu0 %v6959
    %7170 = vmatmul.bf16.gmra.mxu0 %v6699
    %v7171 = vpop.f32.mrf.mxu0
    %v7172 = vadd.f32 %v3471, %v7171
    %v7173 = vpop.f32.mrf.mxu0
    %7174 = vdwg.mxu0
    %7175 = vmatpush.bf16.msra.mxu0 %v7019
    %7176 = vmatpush.bf16.msra.mxu0 %v7015
    %7177 = vmatpush.bf16.msra.mxu0 %v7011
    %7178 = vmatpush.bf16.msra.mxu0 %v7007
    %7179 = vmatpush.bf16.msra.mxu0 %v7003
    %7180 = vmatpush.bf16.msra.mxu0 %v6999
    %7181 = vmatpush.bf16.msra.mxu0 %v6995
    %7182 = vmatpush.bf16.msra.mxu0 %v6991
    %7183 = vmatmul.bf16.gmra.mxu0 %v5962
    %v7184 = vpop.f32.mrf.mxu0
    %v7185 = vadd.f32 %v7172, %v7184
    %v7186 = vpop.f32.mrf.mxu0
    %7187 = vdwg.mxu0
    %v7188 = vxor.u32 %v7107, 2147483648
    %v7189 = vxor.u32 %v7133, 2147483648
    %v7190 = vxor.u32 %v7159, 2147483648
    %v7191 = vmul.f32 %v7188, 1.442695
    %v7192 = vpow.pop %v7191
    %v7193 = vmul.f32 %v7189, 1.442695
    %v7194 = vpow.pop %v7193
    %v7195 = vmul.f32 %v7190, 1.442695
    %v7196 = vpow.pop %v7195
    %v7197 = vadd.f32 %v7192, 1.0
    %v7198 = vadd.f32 %v7194, 1.0
    %v7199 = vadd.f32 %v7196, 1.0
    %v7200 = vrcp.pop %v7197
    %v7201 = vmul.f32 %v7197, %v7200
    %v7202 = vsub.f32 1.0, %v7201
    %v7203 = vmul.f32 %v7200, %v7202
    %v7204 = vadd.f32 %v7200, %v7203
    %vm7205 = vweird.f32 %v7197
    %vm7206 = vweird.f32 %v7200
    %vm7207 = vmor %vm7205, %vm7206
    %v7208 = vsel %vm7207, %v7200, %v7204
    %v7209 = vand.u32 2147483647, %v7197
    %vm7210 = vcmp.eq.f32.partialorder %v7209, 8.507059e+37
    %v7211 = vand.u32 %v7197, 2147483648
    %v7212 = vor.u32 1.1754944e-38, %v7211
    %v7213 = vsel %vm7210, %v7212, %v7208
    %v7214 = vmul.f32 1.0, %v7213
    %v7215 = vrcp.pop %v7198
    %v7216 = vmul.f32 %v7198, %v7215
    %v7217 = vsub.f32 1.0, %v7216
    %v7218 = vmul.f32 %v7215, %v7217
    %v7219 = vadd.f32 %v7215, %v7218
    %vm7220 = vweird.f32 %v7198
    %vm7221 = vweird.f32 %v7215
    %vm7222 = vmor %vm7220, %vm7221
    %v7223 = vsel %vm7222, %v7215, %v7219
    %v7224 = vand.u32 2147483647, %v7198
    %vm7225 = vcmp.eq.f32.partialorder %v7224, 8.507059e+37
    %v7226 = vand.u32 %v7198, 2147483648
    %v7227 = vor.u32 1.1754944e-38, %v7226
    %v7228 = vsel %vm7225, %v7227, %v7223
    %v7229 = vmul.f32 1.0, %v7228
    %v7230 = vrcp.pop %v7199
    %v7231 = vmul.f32 %v7199, %v7230
    %v7232 = vsub.f32 1.0, %v7231
    %v7233 = vmul.f32 %v7230, %v7232
    %v7234 = vadd.f32 %v7230, %v7233
    %vm7235 = vweird.f32 %v7199
    %vm7236 = vweird.f32 %v7230
    %vm7237 = vmor %vm7235, %vm7236
    %v7238 = vsel %vm7237, %v7230, %v7234
    %v7239 = vand.u32 2147483647, %v7199
    %vm7240 = vcmp.eq.f32.partialorder %v7239, 8.507059e+37
    %v7241 = vand.u32 %v7199, 2147483648
    %v7242 = vor.u32 1.1754944e-38, %v7241
    %v7243 = vsel %vm7240, %v7242, %v7238
    %v7244 = vmul.f32 1.0, %v7243
    %v7245 = vtanh.pop %v7185
    %v7246 = vmul.f32 %v7229, %v5959
    %v7247 = vmul.f32 %v7214, %v7245
    %v7248 = vadd.f32 %v7246, %v7247
    %v7249 = vtanh.pop %v7248
    %v7250 = vmul.f32 %v7244, %v7249
    %v7251 = vpack.c.bf16 %v7250, %v7250
    %v7252 = vld [vmem:[%s13] sm:$0xf]
    %v7253 = vld [vmem:[%s13 + $0x4] sm:$0xf]
    %v7254 = vld [vmem:[%s13 + $0x8] sm:$0xf]
    %v7255 = vld [vmem:[%s13 + $0xc] sm:$0xf]
    %v7256 = vld [vmem:[%s13 + $0x10] sm:$0xf]
    %v7257 = vld [vmem:[%s13 + $0x14] sm:$0xf]
    %v7258 = vld [vmem:[%s13 + $0x18] sm:$0xf]
    %v7259 = vld [vmem:[%s13 + $0x1c] sm:$0xf]
    %v7260 = vld [vmem:[%s13 + $0x20] sm:$0xf]
    %v7261 = vld [vmem:[%s13 + $0x24] sm:$0xf]
    %v7262 = vld [vmem:[%s13 + $0x28] sm:$0xf]
    %v7263 = vld [vmem:[%s13 + $0x2c] sm:$0xf]
    %v7264 = vld [vmem:[%s13 + $0x30] sm:$0xf]
    %v7265 = vld [vmem:[%s13 + $0x34] sm:$0xf]
    %v7266 = vld [vmem:[%s13 + $0x38] sm:$0xf]
    %v7267 = vld [vmem:[%s13 + $0x3c] sm:$0xf]
    %v7284 = vunpack.c.l.b16 %v7252
    %v7285 = vunpack.c.l.b16 %v7253
    %v7286 = vunpack.c.l.b16 %v7254
    %v7287 = vunpack.c.l.b16 %v7255
    %v7288 = vunpack.c.l.b16 %v7256
    %v7289 = vunpack.c.l.b16 %v7257
    %v7290 = vunpack.c.l.b16 %v7258
    %v7291 = vunpack.c.l.b16 %v7259
    %v7292 = vunpack.c.l.b16 %v7260
    %v7293 = vunpack.c.l.b16 %v7261
    %v7294 = vunpack.c.l.b16 %v7262
    %v7295 = vunpack.c.l.b16 %v7263
    %v7296 = vunpack.c.l.b16 %v7264
    %v7297 = vunpack.c.l.b16 %v7265
    %v7298 = vunpack.c.l.b16 %v7266
    %v7299 = vunpack.c.l.b16 %v7267
    %v7300 = vpack.c.b16 %v7285, %v7284
    %v7301 = vpack.c.b16 %v7287, %v7286
    %v7302 = vpack.c.b16 %v7289, %v7288
    %v7303 = vpack.c.b16 %v7291, %v7290
    %v7304 = vpack.c.b16 %v7293, %v7292
    %v7305 = vpack.c.b16 %v7295, %v7294
    %v7306 = vpack.c.b16 %v7297, %v7296
    %v7307 = vpack.c.b16 %v7299, %v7298
    %7316 = vmatpush.bf16.msra.mxu0 %v7307
    %7317 = vmatpush.bf16.msra.mxu0 %v7306
    %7318 = vmatpush.bf16.msra.mxu0 %v7305
    %7319 = vmatpush.bf16.msra.mxu0 %v7304
    %7320 = vmatpush.bf16.msra.mxu0 %v7303
    %7321 = vmatpush.bf16.msra.mxu0 %v7302
    %7322 = vmatpush.bf16.msra.mxu0 %v7301
    %7323 = vmatpush.bf16.msra.mxu0 %v7300
    %7324 = vmatmul.bf16.gmra.mxu0 %v7251
    %v7325 = vpop.f32.mrf.mxu0
    %v7326 = vadd.f32 %v3478, %v7325
    %v7327 = vpop.f32.mrf.mxu0
    %7328 = vdwg.mxu0
    %s7329 = scalar_lea.vmem [#allocation13], 24
    %7330 = vst [vmem:[%s7329] sm:$0xff] %v7326
    %s7331 = scalar_lea.vmem %s1, 24
    %v7332 = vld [vmem:[%s7331] sm:$0xff]
    %7333 = vset.pattern.permute.xlu0 0
    %7334 = vperm.xlu0 %7333, %v7332
    %v7335 = vpop.permute.xlu0 %7334
    %vm7336 = vcmp.eq.s32.totalorder %v3481, %v7335
    %v7337 = vsel %vm7336, 1, 0
    %v7338 = vcvt.s32.f32 %v7337
    %v7339 = vpack.c.bf16 %v7338, %v7338
    %s7340 = sld [smem:[#allocation3 + $0x3]]
    %p7341 = scmp.gt.s32.totalorder %s7340, 0
    // Predicated region
    $region98: #{seq2seq_forward.1} parent=1 // pred_check
      %p7342 = pneg %p7341
    $region99: #{seq2seq_forward.1} parent=1 // pred_check_branch
      %7344 = sbr.rel (%p7342) target = $region101
    $region100: #{seq2seq_forward.1} parent=1 // pred_region
      _
    $region101: #{seq2seq_forward.1} parent=1 // pred_fallthru
      _
    %p7345 = pneg %p7341
    // Predicated region
    $region102: #{seq2seq_forward.1} parent=1 // pred_check
      _
    $region103: #{seq2seq_forward.1} parent=1 // pred_check_branch
      %7347 = sbr.rel (%p7341) target = $region105
    $region104: #{seq2seq_forward.1} parent=1 // pred_region
      %7348 = vmax.xlane.f32.xlu0 %v7326
      %v7349 = vpop.xlane.xlu0 %7348
      %vm7350 = vcmp.eq.f32.partialorder %v7326, %v7349
      %v7351 = vsel %vm7350, %v3482, 128.0
      %7352 = vmin.xlane.f32.xlu0 %v7351
      %v7353 = vpop.xlane.xlu0 %7352
      %vm7354 = vcmp.eq.f32.partialorder %v3482, %v7353
      %v7355 = vsel %vm7354, 1, 0
      %v7356 = vcvt.s32.f32 %v7355
      %v7357 = vpack.c.bf16 %v7356, %v7356
    $region105: #{seq2seq_forward.1} parent=1 // pred_fallthru
      %v7358 = vphi %v7339, %v7357
    %v7359 = vld [vmem:[%s8] sm:$0xf]
    %v7360 = vld [vmem:[%s8 + $0x4] sm:$0xf]
    %v7361 = vld [vmem:[%s8 + $0x8] sm:$0xf]
    %v7362 = vld [vmem:[%s8 + $0xc] sm:$0xf]
    %v7363 = vld [vmem:[%s8 + $0x10] sm:$0xf]
    %v7364 = vld [vmem:[%s8 + $0x14] sm:$0xf]
    %v7365 = vld [vmem:[%s8 + $0x18] sm:$0xf]
    %v7366 = vld [vmem:[%s8 + $0x1c] sm:$0xf]
    %v7367 = vld [vmem:[%s8 + $0x20] sm:$0xf]
    %v7368 = vld [vmem:[%s8 + $0x24] sm:$0xf]
    %v7369 = vld [vmem:[%s8 + $0x28] sm:$0xf]
    %v7370 = vld [vmem:[%s8 + $0x2c] sm:$0xf]
    %v7371 = vld [vmem:[%s8 + $0x30] sm:$0xf]
    %v7372 = vld [vmem:[%s8 + $0x34] sm:$0xf]
    %v7373 = vld [vmem:[%s8 + $0x38] sm:$0xf]
    %v7374 = vld [vmem:[%s8 + $0x3c] sm:$0xf]
    %v7391 = vunpack.c.l.b16 %v7359
    %v7392 = vunpack.c.l.b16 %v7360
    %v7393 = vunpack.c.l.b16 %v7361
    %v7394 = vunpack.c.l.b16 %v7362
    %v7395 = vunpack.c.l.b16 %v7363
    %v7396 = vunpack.c.l.b16 %v7364
    %v7397 = vunpack.c.l.b16 %v7365
    %v7398 = vunpack.c.l.b16 %v7366
    %v7399 = vunpack.c.l.b16 %v7367
    %v7400 = vunpack.c.l.b16 %v7368
    %v7401 = vunpack.c.l.b16 %v7369
    %v7402 = vunpack.c.l.b16 %v7370
    %v7403 = vunpack.c.l.b16 %v7371
    %v7404 = vunpack.c.l.b16 %v7372
    %v7405 = vunpack.c.l.b16 %v7373
    %v7406 = vunpack.c.l.b16 %v7374
    %v7407 = vpack.c.b16 %v7392, %v7391
    %v7408 = vpack.c.b16 %v7394, %v7393
    %v7409 = vpack.c.b16 %v7396, %v7395
    %v7410 = vpack.c.b16 %v7398, %v7397
    %v7411 = vpack.c.b16 %v7400, %v7399
    %v7412 = vpack.c.b16 %v7402, %v7401
    %v7413 = vpack.c.b16 %v7404, %v7403
    %v7414 = vpack.c.b16 %v7406, %v7405
    %7423 = vmatpush.bf16.msra.mxu0 %v7414
    %7424 = vmatpush.bf16.msra.mxu0 %v7413
    %7425 = vmatpush.bf16.msra.mxu0 %v7412
    %7426 = vmatpush.bf16.msra.mxu0 %v7411
    %7427 = vmatpush.bf16.msra.mxu0 %v7410
    %7428 = vmatpush.bf16.msra.mxu0 %v7409
    %7429 = vmatpush.bf16.msra.mxu0 %v7408
    %7430 = vmatpush.bf16.msra.mxu0 %v7407
    %7431 = vmatmul.bf16.gmra.mxu0 %v7358
    %v7432 = vpop.f32.mrf.mxu0
    %v7433 = vadd.f32 0.0, %v7432
    %v7434 = vpop.f32.mrf.mxu0
    %7435 = vdwg.mxu0
    %v7436 = vpack.c.bf16 %v7433, %v7433
    %v7437 = vld [vmem:[#allocation10] sm:$0xff]
    %v7438 = vld [vmem:[#allocation10 + $0x8] sm:$0xff]
    %v7439 = vld [vmem:[#allocation10 + $0x10] sm:$0xff]
    %v7440 = vld [vmem:[#allocation10 + $0x18] sm:$0xff]
    %v7441 = vld [vmem:[#allocation10 + $0x20] sm:$0xff]
    %v7442 = vld [vmem:[#allocation10 + $0x28] sm:$0xff]
    %v7443 = vld [vmem:[#allocation10 + $0x30] sm:$0xff]
    %v7444 = vld [vmem:[#allocation10 + $0x38] sm:$0xff]
    %v7445 = vld [vmem:[#allocation10 + $0x40] sm:$0xff]
    %v7446 = vld [vmem:[#allocation10 + $0x48] sm:$0xff]
    %v7447 = vld [vmem:[#allocation10 + $0x50] sm:$0xff]
    %v7448 = vld [vmem:[#allocation10 + $0x58] sm:$0xff]
    %v7449 = vld [vmem:[#allocation10 + $0x60] sm:$0xff]
    %v7450 = vld [vmem:[#allocation10 + $0x68] sm:$0xff]
    %v7451 = vld [vmem:[#allocation10 + $0x70] sm:$0xff]
    %v7452 = vld [vmem:[#allocation10 + $0x78] sm:$0xff]
    %v7453 = vld [vmem:[#allocation10 + $0x80] sm:$0xff]
    %v7454 = vld [vmem:[#allocation10 + $0x88] sm:$0xff]
    %v7455 = vld [vmem:[#allocation10 + $0x90] sm:$0xff]
    %v7456 = vld [vmem:[#allocation10 + $0x98] sm:$0xff]
    %v7457 = vld [vmem:[#allocation10 + $0xa0] sm:$0xff]
    %v7458 = vld [vmem:[#allocation10 + $0xa8] sm:$0xff]
    %v7459 = vld [vmem:[#allocation10 + $0xb0] sm:$0xff]
    %v7460 = vld [vmem:[#allocation10 + $0xb8] sm:$0xff]
    %v7461 = vld [vmem:[#allocation10 + $0xc0] sm:$0xff]
    %v7462 = vld [vmem:[#allocation10 + $0xc8] sm:$0xff]
    %v7463 = vld [vmem:[#allocation10 + $0xd0] sm:$0xff]
    %v7464 = vld [vmem:[#allocation10 + $0xd8] sm:$0xff]
    %v7465 = vld [vmem:[#allocation10 + $0xe0] sm:$0xff]
    %v7466 = vld [vmem:[#allocation10 + $0xe8] sm:$0xff]
    %v7467 = vld [vmem:[#allocation10 + $0xf0] sm:$0xff]
    %v7468 = vld [vmem:[#allocation10 + $0xf8] sm:$0xff]
    %v7469 = vld [vmem:[#allocation10 + $0x100] sm:$0xff]
    %v7470 = vld [vmem:[#allocation10 + $0x108] sm:$0xff]
    %v7471 = vld [vmem:[#allocation10 + $0x110] sm:$0xff]
    %v7472 = vld [vmem:[#allocation10 + $0x118] sm:$0xff]
    %v7473 = vld [vmem:[#allocation10 + $0x120] sm:$0xff]
    %v7474 = vld [vmem:[#allocation10 + $0x128] sm:$0xff]
    %v7475 = vld [vmem:[#allocation10 + $0x130] sm:$0xff]
    %v7476 = vld [vmem:[#allocation10 + $0x138] sm:$0xff]
    %v7477 = vld [vmem:[#allocation10 + $0x140] sm:$0xff]
    %v7478 = vld [vmem:[#allocation10 + $0x148] sm:$0xff]
    %v7479 = vld [vmem:[#allocation10 + $0x150] sm:$0xff]
    %v7480 = vld [vmem:[#allocation10 + $0x158] sm:$0xff]
    %v7481 = vld [vmem:[#allocation10 + $0x160] sm:$0xff]
    %v7482 = vld [vmem:[#allocation10 + $0x168] sm:$0xff]
    %v7483 = vld [vmem:[#allocation10 + $0x170] sm:$0xff]
    %v7484 = vld [vmem:[#allocation10 + $0x178] sm:$0xff]
    %v7485 = vld [vmem:[#allocation10 + $0x180] sm:$0xff]
    %v7486 = vld [vmem:[#allocation10 + $0x188] sm:$0xff]
    %v7487 = vld [vmem:[#allocation10 + $0x190] sm:$0xff]
    %v7488 = vld [vmem:[#allocation10 + $0x198] sm:$0xff]
    %v7489 = vld [vmem:[#allocation10 + $0x1a0] sm:$0xff]
    %v7490 = vld [vmem:[#allocation10 + $0x1a8] sm:$0xff]
    %v7491 = vld [vmem:[#allocation10 + $0x1b0] sm:$0xff]
    %v7492 = vld [vmem:[#allocation10 + $0x1b8] sm:$0xff]
    %v7493 = vld [vmem:[#allocation10 + $0x1c0] sm:$0xff]
    %v7494 = vld [vmem:[#allocation10 + $0x1c8] sm:$0xff]
    %v7495 = vld [vmem:[#allocation10 + $0x1d0] sm:$0xff]
    %v7496 = vld [vmem:[#allocation10 + $0x1d8] sm:$0xff]
    %v7497 = vld [vmem:[#allocation10 + $0x1e0] sm:$0xff]
    %v7498 = vld [vmem:[#allocation10 + $0x1e8] sm:$0xff]
    %v7499 = vld [vmem:[#allocation10 + $0x1f0] sm:$0xff]
    %v7500 = vld [vmem:[#allocation10 + $0x1f8] sm:$0xff]
    %v7565 = vunpack.c.l.b16 %v7437
    %v7566 = vunpack.c.h.b16 %v7437
    %v7567 = vunpack.c.l.b16 %v7438
    %v7568 = vunpack.c.h.b16 %v7438
    %v7569 = vunpack.c.l.b16 %v7439
    %v7570 = vunpack.c.h.b16 %v7439
    %v7571 = vunpack.c.l.b16 %v7440
    %v7572 = vunpack.c.h.b16 %v7440
    %v7573 = vunpack.c.l.b16 %v7441
    %v7574 = vunpack.c.h.b16 %v7441
    %v7575 = vunpack.c.l.b16 %v7442
    %v7576 = vunpack.c.h.b16 %v7442
    %v7577 = vunpack.c.l.b16 %v7443
    %v7578 = vunpack.c.h.b16 %v7443
    %v7579 = vunpack.c.l.b16 %v7444
    %v7580 = vunpack.c.h.b16 %v7444
    %v7581 = vunpack.c.l.b16 %v7445
    %v7582 = vunpack.c.h.b16 %v7445
    %v7583 = vunpack.c.l.b16 %v7446
    %v7584 = vunpack.c.h.b16 %v7446
    %v7585 = vunpack.c.l.b16 %v7447
    %v7586 = vunpack.c.h.b16 %v7447
    %v7587 = vunpack.c.l.b16 %v7448
    %v7588 = vunpack.c.h.b16 %v7448
    %v7589 = vunpack.c.l.b16 %v7449
    %v7590 = vunpack.c.h.b16 %v7449
    %v7591 = vunpack.c.l.b16 %v7450
    %v7592 = vunpack.c.h.b16 %v7450
    %v7593 = vunpack.c.l.b16 %v7451
    %v7594 = vunpack.c.h.b16 %v7451
    %v7595 = vunpack.c.l.b16 %v7452
    %v7596 = vunpack.c.h.b16 %v7452
    %v7597 = vunpack.c.l.b16 %v7453
    %v7598 = vunpack.c.h.b16 %v7453
    %v7599 = vunpack.c.l.b16 %v7454
    %v7600 = vunpack.c.h.b16 %v7454
    %v7601 = vunpack.c.l.b16 %v7455
    %v7602 = vunpack.c.h.b16 %v7455
    %v7603 = vunpack.c.l.b16 %v7456
    %v7604 = vunpack.c.h.b16 %v7456
    %v7605 = vunpack.c.l.b16 %v7457
    %v7606 = vunpack.c.h.b16 %v7457
    %v7607 = vunpack.c.l.b16 %v7458
    %v7608 = vunpack.c.h.b16 %v7458
    %v7609 = vunpack.c.l.b16 %v7459
    %v7610 = vunpack.c.h.b16 %v7459
    %v7611 = vunpack.c.l.b16 %v7460
    %v7612 = vunpack.c.h.b16 %v7460
    %v7613 = vunpack.c.l.b16 %v7461
    %v7614 = vunpack.c.h.b16 %v7461
    %v7615 = vunpack.c.l.b16 %v7462
    %v7616 = vunpack.c.h.b16 %v7462
    %v7617 = vunpack.c.l.b16 %v7463
    %v7618 = vunpack.c.h.b16 %v7463
    %v7619 = vunpack.c.l.b16 %v7464
    %v7620 = vunpack.c.h.b16 %v7464
    %v7621 = vunpack.c.l.b16 %v7465
    %v7622 = vunpack.c.h.b16 %v7465
    %v7623 = vunpack.c.l.b16 %v7466
    %v7624 = vunpack.c.h.b16 %v7466
    %v7625 = vunpack.c.l.b16 %v7467
    %v7626 = vunpack.c.h.b16 %v7467
    %v7627 = vunpack.c.l.b16 %v7468
    %v7628 = vunpack.c.h.b16 %v7468
    %v7629 = vunpack.c.l.b16 %v7469
    %v7630 = vunpack.c.h.b16 %v7469
    %v7631 = vunpack.c.l.b16 %v7470
    %v7632 = vunpack.c.h.b16 %v7470
    %v7633 = vunpack.c.l.b16 %v7471
    %v7634 = vunpack.c.h.b16 %v7471
    %v7635 = vunpack.c.l.b16 %v7472
    %v7636 = vunpack.c.h.b16 %v7472
    %v7637 = vunpack.c.l.b16 %v7473
    %v7638 = vunpack.c.h.b16 %v7473
    %v7639 = vunpack.c.l.b16 %v7474
    %v7640 = vunpack.c.h.b16 %v7474
    %v7641 = vunpack.c.l.b16 %v7475
    %v7642 = vunpack.c.h.b16 %v7475
    %v7643 = vunpack.c.l.b16 %v7476
    %v7644 = vunpack.c.h.b16 %v7476
    %v7645 = vunpack.c.l.b16 %v7477
    %v7646 = vunpack.c.h.b16 %v7477
    %v7647 = vunpack.c.l.b16 %v7478
    %v7648 = vunpack.c.h.b16 %v7478
    %v7649 = vunpack.c.l.b16 %v7479
    %v7650 = vunpack.c.h.b16 %v7479
    %v7651 = vunpack.c.l.b16 %v7480
    %v7652 = vunpack.c.h.b16 %v7480
    %v7653 = vunpack.c.l.b16 %v7481
    %v7654 = vunpack.c.h.b16 %v7481
    %v7655 = vunpack.c.l.b16 %v7482
    %v7656 = vunpack.c.h.b16 %v7482
    %v7657 = vunpack.c.l.b16 %v7483
    %v7658 = vunpack.c.h.b16 %v7483
    %v7659 = vunpack.c.l.b16 %v7484
    %v7660 = vunpack.c.h.b16 %v7484
    %v7661 = vunpack.c.l.b16 %v7485
    %v7662 = vunpack.c.h.b16 %v7485
    %v7663 = vunpack.c.l.b16 %v7486
    %v7664 = vunpack.c.h.b16 %v7486
    %v7665 = vunpack.c.l.b16 %v7487
    %v7666 = vunpack.c.h.b16 %v7487
    %v7667 = vunpack.c.l.b16 %v7488
    %v7668 = vunpack.c.h.b16 %v7488
    %v7669 = vunpack.c.l.b16 %v7489
    %v7670 = vunpack.c.h.b16 %v7489
    %v7671 = vunpack.c.l.b16 %v7490
    %v7672 = vunpack.c.h.b16 %v7490
    %v7673 = vunpack.c.l.b16 %v7491
    %v7674 = vunpack.c.h.b16 %v7491
    %v7675 = vunpack.c.l.b16 %v7492
    %v7676 = vunpack.c.h.b16 %v7492
    %v7677 = vunpack.c.l.b16 %v7493
    %v7678 = vunpack.c.h.b16 %v7493
    %v7679 = vunpack.c.l.b16 %v7494
    %v7680 = vunpack.c.h.b16 %v7494
    %v7681 = vunpack.c.l.b16 %v7495
    %v7682 = vunpack.c.h.b16 %v7495
    %v7683 = vunpack.c.l.b16 %v7496
    %v7684 = vunpack.c.h.b16 %v7496
    %v7685 = vunpack.c.l.b16 %v7497
    %v7686 = vunpack.c.h.b16 %v7497
    %v7687 = vunpack.c.l.b16 %v7498
    %v7688 = vunpack.c.h.b16 %v7498
    %v7689 = vunpack.c.l.b16 %v7499
    %v7690 = vunpack.c.h.b16 %v7499
    %v7691 = vunpack.c.l.b16 %v7500
    %v7692 = vunpack.c.h.b16 %v7500
    %v7693 = vpack.c.b16 %v7569, %v7565
    %v7694 = vpack.c.b16 %v7570, %v7566
    %v7695 = vpack.c.b16 %v7571, %v7567
    %v7696 = vpack.c.b16 %v7572, %v7568
    %v7697 = vpack.c.b16 %v7577, %v7573
    %v7698 = vpack.c.b16 %v7578, %v7574
    %v7699 = vpack.c.b16 %v7579, %v7575
    %v7700 = vpack.c.b16 %v7580, %v7576
    %v7701 = vpack.c.b16 %v7585, %v7581
    %v7702 = vpack.c.b16 %v7586, %v7582
    %v7703 = vpack.c.b16 %v7587, %v7583
    %v7704 = vpack.c.b16 %v7588, %v7584
    %v7705 = vpack.c.b16 %v7593, %v7589
    %v7706 = vpack.c.b16 %v7594, %v7590
    %v7707 = vpack.c.b16 %v7595, %v7591
    %v7708 = vpack.c.b16 %v7596, %v7592
    %v7709 = vpack.c.b16 %v7601, %v7597
    %v7710 = vpack.c.b16 %v7602, %v7598
    %v7711 = vpack.c.b16 %v7603, %v7599
    %v7712 = vpack.c.b16 %v7604, %v7600
    %v7713 = vpack.c.b16 %v7609, %v7605
    %v7714 = vpack.c.b16 %v7610, %v7606
    %v7715 = vpack.c.b16 %v7611, %v7607
    %v7716 = vpack.c.b16 %v7612, %v7608
    %v7717 = vpack.c.b16 %v7617, %v7613
    %v7718 = vpack.c.b16 %v7618, %v7614
    %v7719 = vpack.c.b16 %v7619, %v7615
    %v7720 = vpack.c.b16 %v7620, %v7616
    %v7721 = vpack.c.b16 %v7625, %v7621
    %v7722 = vpack.c.b16 %v7626, %v7622
    %v7723 = vpack.c.b16 %v7627, %v7623
    %v7724 = vpack.c.b16 %v7628, %v7624
    %v7725 = vpack.c.b16 %v7633, %v7629
    %v7726 = vpack.c.b16 %v7634, %v7630
    %v7727 = vpack.c.b16 %v7635, %v7631
    %v7728 = vpack.c.b16 %v7636, %v7632
    %v7729 = vpack.c.b16 %v7641, %v7637
    %v7730 = vpack.c.b16 %v7642, %v7638
    %v7731 = vpack.c.b16 %v7643, %v7639
    %v7732 = vpack.c.b16 %v7644, %v7640
    %v7733 = vpack.c.b16 %v7649, %v7645
    %v7734 = vpack.c.b16 %v7650, %v7646
    %v7735 = vpack.c.b16 %v7651, %v7647
    %v7736 = vpack.c.b16 %v7652, %v7648
    %v7737 = vpack.c.b16 %v7657, %v7653
    %v7738 = vpack.c.b16 %v7658, %v7654
    %v7739 = vpack.c.b16 %v7659, %v7655
    %v7740 = vpack.c.b16 %v7660, %v7656
    %v7741 = vpack.c.b16 %v7665, %v7661
    %v7742 = vpack.c.b16 %v7666, %v7662
    %v7743 = vpack.c.b16 %v7667, %v7663
    %v7744 = vpack.c.b16 %v7668, %v7664
    %v7745 = vpack.c.b16 %v7673, %v7669
    %v7746 = vpack.c.b16 %v7674, %v7670
    %v7747 = vpack.c.b16 %v7675, %v7671
    %v7748 = vpack.c.b16 %v7676, %v7672
    %v7749 = vpack.c.b16 %v7681, %v7677
    %v7750 = vpack.c.b16 %v7682, %v7678
    %v7751 = vpack.c.b16 %v7683, %v7679
    %v7752 = vpack.c.b16 %v7684, %v7680
    %v7753 = vpack.c.b16 %v7689, %v7685
    %v7754 = vpack.c.b16 %v7690, %v7686
    %v7755 = vpack.c.b16 %v7691, %v7687
    %v7756 = vpack.c.b16 %v7692, %v7688
    %7821 = vmatpush.bf16.msra.mxu0 %v7721
    %7822 = vmatpush.bf16.msra.mxu0 %v7717
    %7823 = vmatpush.bf16.msra.mxu0 %v7713
    %7824 = vmatpush.bf16.msra.mxu0 %v7709
    %7825 = vmatpush.bf16.msra.mxu0 %v7705
    %7826 = vmatpush.bf16.msra.mxu0 %v7701
    %7827 = vmatpush.bf16.msra.mxu0 %v7697
    %7828 = vmatpush.bf16.msra.mxu0 %v7693
    %7829 = vmatmul.bf16.gmra.mxu0 %v7436
    %v7830 = vpop.f32.mrf.mxu0
    %v7831 = vadd.f32 %v3458, %v7830
    %v7832 = vpop.f32.mrf.mxu0
    %7833 = vdwg.mxu0
    %7834 = vmatpush.bf16.msra.mxu0 %v7753
    %7835 = vmatpush.bf16.msra.mxu0 %v7749
    %7836 = vmatpush.bf16.msra.mxu0 %v7745
    %7837 = vmatpush.bf16.msra.mxu0 %v7741
    %7838 = vmatpush.bf16.msra.mxu0 %v7737
    %7839 = vmatpush.bf16.msra.mxu0 %v7733
    %7840 = vmatpush.bf16.msra.mxu0 %v7729
    %7841 = vmatpush.bf16.msra.mxu0 %v7725
    %7842 = vmatmul.bf16.gmra.mxu0 %v6699
    %v7843 = vpop.f32.mrf.mxu0
    %v7844 = vadd.f32 %v7831, %v7843
    %v7845 = vpop.f32.mrf.mxu0
    %7846 = vdwg.mxu0
    %7847 = vmatpush.bf16.msra.mxu0 %v7722
    %7848 = vmatpush.bf16.msra.mxu0 %v7718
    %7849 = vmatpush.bf16.msra.mxu0 %v7714
    %7850 = vmatpush.bf16.msra.mxu0 %v7710
    %7851 = vmatpush.bf16.msra.mxu0 %v7706
    %7852 = vmatpush.bf16.msra.mxu0 %v7702
    %7853 = vmatpush.bf16.msra.mxu0 %v7698
    %7854 = vmatpush.bf16.msra.mxu0 %v7694
    %7855 = vmatmul.bf16.gmra.mxu0 %v7436
    %v7856 = vpop.f32.mrf.mxu0
    %v7857 = vadd.f32 %v3459, %v7856
    %v7858 = vpop.f32.mrf.mxu0
    %7859 = vdwg.mxu0
    %7860 = vmatpush.bf16.msra.mxu0 %v7754
    %7861 = vmatpush.bf16.msra.mxu0 %v7750
    %7862 = vmatpush.bf16.msra.mxu0 %v7746
    %7863 = vmatpush.bf16.msra.mxu0 %v7742
    %7864 = vmatpush.bf16.msra.mxu0 %v7738
    %7865 = vmatpush.bf16.msra.mxu0 %v7734
    %7866 = vmatpush.bf16.msra.mxu0 %v7730
    %7867 = vmatpush.bf16.msra.mxu0 %v7726
    %7868 = vmatmul.bf16.gmra.mxu0 %v6699
    %v7869 = vpop.f32.mrf.mxu0
    %v7870 = vadd.f32 %v7857, %v7869
    %v7871 = vpop.f32.mrf.mxu0
    %7872 = vdwg.mxu0
    %7873 = vmatpush.bf16.msra.mxu0 %v7723
    %7874 = vmatpush.bf16.msra.mxu0 %v7719
    %7875 = vmatpush.bf16.msra.mxu0 %v7715
    %7876 = vmatpush.bf16.msra.mxu0 %v7711
    %7877 = vmatpush.bf16.msra.mxu0 %v7707
    %7878 = vmatpush.bf16.msra.mxu0 %v7703
    %7879 = vmatpush.bf16.msra.mxu0 %v7699
    %7880 = vmatpush.bf16.msra.mxu0 %v7695
    %7881 = vmatmul.bf16.gmra.mxu0 %v7436
    %v7882 = vpop.f32.mrf.mxu0
    %v7883 = vadd.f32 %v3460, %v7882
    %v7884 = vpop.f32.mrf.mxu0
    %7885 = vdwg.mxu0
    %7886 = vmatpush.bf16.msra.mxu0 %v7755
    %7887 = vmatpush.bf16.msra.mxu0 %v7751
    %7888 = vmatpush.bf16.msra.mxu0 %v7747
    %7889 = vmatpush.bf16.msra.mxu0 %v7743
    %7890 = vmatpush.bf16.msra.mxu0 %v7739
    %7891 = vmatpush.bf16.msra.mxu0 %v7735
    %7892 = vmatpush.bf16.msra.mxu0 %v7731
    %7893 = vmatpush.bf16.msra.mxu0 %v7727
    %7894 = vmatmul.bf16.gmra.mxu0 %v6699
    %v7895 = vpop.f32.mrf.mxu0
    %v7896 = vadd.f32 %v7883, %v7895
    %v7897 = vpop.f32.mrf.mxu0
    %7898 = vdwg.mxu0
    %7899 = vmatpush.bf16.msra.mxu0 %v7724
    %7900 = vmatpush.bf16.msra.mxu0 %v7720
    %7901 = vmatpush.bf16.msra.mxu0 %v7716
    %7902 = vmatpush.bf16.msra.mxu0 %v7712
    %7903 = vmatpush.bf16.msra.mxu0 %v7708
    %7904 = vmatpush.bf16.msra.mxu0 %v7704
    %7905 = vmatpush.bf16.msra.mxu0 %v7700
    %7906 = vmatpush.bf16.msra.mxu0 %v7696
    %7907 = vmatmul.bf16.gmra.mxu0 %v7436
    %v7908 = vpop.f32.mrf.mxu0
    %v7909 = vadd.f32 %v3461, %v7908
    %v7910 = vpop.f32.mrf.mxu0
    %7911 = vdwg.mxu0
    %7912 = vmatpush.bf16.msra.mxu0 %v7756
    %7913 = vmatpush.bf16.msra.mxu0 %v7752
    %7914 = vmatpush.bf16.msra.mxu0 %v7748
    %7915 = vmatpush.bf16.msra.mxu0 %v7744
    %7916 = vmatpush.bf16.msra.mxu0 %v7740
    %7917 = vmatpush.bf16.msra.mxu0 %v7736
    %7918 = vmatpush.bf16.msra.mxu0 %v7732
    %7919 = vmatpush.bf16.msra.mxu0 %v7728
    %7920 = vmatmul.bf16.gmra.mxu0 %v6699
    %v7921 = vpop.f32.mrf.mxu0
    %v7922 = vadd.f32 %v7909, %v7921
    %v7923 = vpop.f32.mrf.mxu0
    %7924 = vdwg.mxu0
    %v7925 = vxor.u32 %v7844, 2147483648
    %v7926 = vxor.u32 %v7870, 2147483648
    %v7927 = vxor.u32 %v7896, 2147483648
    %v7928 = vmul.f32 %v7925, 1.442695
    %v7929 = vpow.pop %v7928
    %v7930 = vmul.f32 %v7926, 1.442695
    %v7931 = vpow.pop %v7930
    %v7932 = vmul.f32 %v7927, 1.442695
    %v7933 = vpow.pop %v7932
    %v7934 = vadd.f32 %v7929, 1.0
    %v7935 = vadd.f32 %v7931, 1.0
    %v7936 = vadd.f32 %v7933, 1.0
    %v7937 = vrcp.pop %v7934
    %v7938 = vmul.f32 %v7934, %v7937
    %v7939 = vsub.f32 1.0, %v7938
    %v7940 = vmul.f32 %v7937, %v7939
    %v7941 = vadd.f32 %v7937, %v7940
    %vm7942 = vweird.f32 %v7934
    %vm7943 = vweird.f32 %v7937
    %vm7944 = vmor %vm7942, %vm7943
    %v7945 = vsel %vm7944, %v7937, %v7941
    %v7946 = vand.u32 2147483647, %v7934
    %vm7947 = vcmp.eq.f32.partialorder %v7946, 8.507059e+37
    %v7948 = vand.u32 %v7934, 2147483648
    %v7949 = vor.u32 1.1754944e-38, %v7948
    %v7950 = vsel %vm7947, %v7949, %v7945
    %v7951 = vmul.f32 1.0, %v7950
    %v7952 = vrcp.pop %v7935
    %v7953 = vmul.f32 %v7935, %v7952
    %v7954 = vsub.f32 1.0, %v7953
    %v7955 = vmul.f32 %v7952, %v7954
    %v7956 = vadd.f32 %v7952, %v7955
    %vm7957 = vweird.f32 %v7935
    %vm7958 = vweird.f32 %v7952
    %vm7959 = vmor %vm7957, %vm7958
    %v7960 = vsel %vm7959, %v7952, %v7956
    %v7961 = vand.u32 2147483647, %v7935
    %vm7962 = vcmp.eq.f32.partialorder %v7961, 8.507059e+37
    %v7963 = vand.u32 %v7935, 2147483648
    %v7964 = vor.u32 1.1754944e-38, %v7963
    %v7965 = vsel %vm7962, %v7964, %v7960
    %v7966 = vmul.f32 1.0, %v7965
    %v7967 = vrcp.pop %v7936
    %v7968 = vmul.f32 %v7936, %v7967
    %v7969 = vsub.f32 1.0, %v7968
    %v7970 = vmul.f32 %v7967, %v7969
    %v7971 = vadd.f32 %v7967, %v7970
    %vm7972 = vweird.f32 %v7936
    %vm7973 = vweird.f32 %v7967
    %vm7974 = vmor %vm7972, %vm7973
    %v7975 = vsel %vm7974, %v7967, %v7971
    %v7976 = vand.u32 2147483647, %v7936
    %vm7977 = vcmp.eq.f32.partialorder %v7976, 8.507059e+37
    %v7978 = vand.u32 %v7936, 2147483648
    %v7979 = vor.u32 1.1754944e-38, %v7978
    %v7980 = vsel %vm7977, %v7979, %v7975
    %v7981 = vmul.f32 1.0, %v7980
    %v7982 = vtanh.pop %v7922
    %v7983 = vmul.f32 %v7966, %v6696
    %v7984 = vmul.f32 %v7951, %v7982
    %v7985 = vadd.f32 %v7983, %v7984
    %v7986 = vtanh.pop %v7985
    %v7987 = vmul.f32 %v7981, %v7986
    %v7988 = vpack.c.bf16 %v7987, %v7987
    %v7989 = vld [vmem:[#allocation11] sm:$0xff]
    %v7990 = vld [vmem:[#allocation11 + $0x8] sm:$0xff]
    %v7991 = vld [vmem:[#allocation11 + $0x10] sm:$0xff]
    %v7992 = vld [vmem:[#allocation11 + $0x18] sm:$0xff]
    %v7993 = vld [vmem:[#allocation11 + $0x20] sm:$0xff]
    %v7994 = vld [vmem:[#allocation11 + $0x28] sm:$0xff]
    %v7995 = vld [vmem:[#allocation11 + $0x30] sm:$0xff]
    %v7996 = vld [vmem:[#allocation11 + $0x38] sm:$0xff]
    %v7997 = vld [vmem:[#allocation11 + $0x40] sm:$0xff]
    %v7998 = vld [vmem:[#allocation11 + $0x48] sm:$0xff]
    %v7999 = vld [vmem:[#allocation11 + $0x50] sm:$0xff]
    %v8000 = vld [vmem:[#allocation11 + $0x58] sm:$0xff]
    %v8001 = vld [vmem:[#allocation11 + $0x60] sm:$0xff]
    %v8002 = vld [vmem:[#allocation11 + $0x68] sm:$0xff]
    %v8003 = vld [vmem:[#allocation11 + $0x70] sm:$0xff]
    %v8004 = vld [vmem:[#allocation11 + $0x78] sm:$0xff]
    %v8005 = vld [vmem:[#allocation11 + $0x80] sm:$0xff]
    %v8006 = vld [vmem:[#allocation11 + $0x88] sm:$0xff]
    %v8007 = vld [vmem:[#allocation11 + $0x90] sm:$0xff]
    %v8008 = vld [vmem:[#allocation11 + $0x98] sm:$0xff]
    %v8009 = vld [vmem:[#allocation11 + $0xa0] sm:$0xff]
    %v8010 = vld [vmem:[#allocation11 + $0xa8] sm:$0xff]
    %v8011 = vld [vmem:[#allocation11 + $0xb0] sm:$0xff]
    %v8012 = vld [vmem:[#allocation11 + $0xb8] sm:$0xff]
    %v8013 = vld [vmem:[#allocation11 + $0xc0] sm:$0xff]
    %v8014 = vld [vmem:[#allocation11 + $0xc8] sm:$0xff]
    %v8015 = vld [vmem:[#allocation11 + $0xd0] sm:$0xff]
    %v8016 = vld [vmem:[#allocation11 + $0xd8] sm:$0xff]
    %v8017 = vld [vmem:[#allocation11 + $0xe0] sm:$0xff]
    %v8018 = vld [vmem:[#allocation11 + $0xe8] sm:$0xff]
    %v8019 = vld [vmem:[#allocation11 + $0xf0] sm:$0xff]
    %v8020 = vld [vmem:[#allocation11 + $0xf8] sm:$0xff]
    %v8021 = vld [vmem:[#allocation11 + $0x100] sm:$0xff]
    %v8022 = vld [vmem:[#allocation11 + $0x108] sm:$0xff]
    %v8023 = vld [vmem:[#allocation11 + $0x110] sm:$0xff]
    %v8024 = vld [vmem:[#allocation11 + $0x118] sm:$0xff]
    %v8025 = vld [vmem:[#allocation11 + $0x120] sm:$0xff]
    %v8026 = vld [vmem:[#allocation11 + $0x128] sm:$0xff]
    %v8027 = vld [vmem:[#allocation11 + $0x130] sm:$0xff]
    %v8028 = vld [vmem:[#allocation11 + $0x138] sm:$0xff]
    %v8029 = vld [vmem:[#allocation11 + $0x140] sm:$0xff]
    %v8030 = vld [vmem:[#allocation11 + $0x148] sm:$0xff]
    %v8031 = vld [vmem:[#allocation11 + $0x150] sm:$0xff]
    %v8032 = vld [vmem:[#allocation11 + $0x158] sm:$0xff]
    %v8033 = vld [vmem:[#allocation11 + $0x160] sm:$0xff]
    %v8034 = vld [vmem:[#allocation11 + $0x168] sm:$0xff]
    %v8035 = vld [vmem:[#allocation11 + $0x170] sm:$0xff]
    %v8036 = vld [vmem:[#allocation11 + $0x178] sm:$0xff]
    %v8037 = vld [vmem:[#allocation11 + $0x180] sm:$0xff]
    %v8038 = vld [vmem:[#allocation11 + $0x188] sm:$0xff]
    %v8039 = vld [vmem:[#allocation11 + $0x190] sm:$0xff]
    %v8040 = vld [vmem:[#allocation11 + $0x198] sm:$0xff]
    %v8041 = vld [vmem:[#allocation11 + $0x1a0] sm:$0xff]
    %v8042 = vld [vmem:[#allocation11 + $0x1a8] sm:$0xff]
    %v8043 = vld [vmem:[#allocation11 + $0x1b0] sm:$0xff]
    %v8044 = vld [vmem:[#allocation11 + $0x1b8] sm:$0xff]
    %v8045 = vld [vmem:[#allocation11 + $0x1c0] sm:$0xff]
    %v8046 = vld [vmem:[#allocation11 + $0x1c8] sm:$0xff]
    %v8047 = vld [vmem:[#allocation11 + $0x1d0] sm:$0xff]
    %v8048 = vld [vmem:[#allocation11 + $0x1d8] sm:$0xff]
    %v8049 = vld [vmem:[#allocation11 + $0x1e0] sm:$0xff]
    %v8050 = vld [vmem:[#allocation11 + $0x1e8] sm:$0xff]
    %v8051 = vld [vmem:[#allocation11 + $0x1f0] sm:$0xff]
    %v8052 = vld [vmem:[#allocation11 + $0x1f8] sm:$0xff]
    %v8117 = vunpack.c.l.b16 %v7989
    %v8118 = vunpack.c.h.b16 %v7989
    %v8119 = vunpack.c.l.b16 %v7990
    %v8120 = vunpack.c.h.b16 %v7990
    %v8121 = vunpack.c.l.b16 %v7991
    %v8122 = vunpack.c.h.b16 %v7991
    %v8123 = vunpack.c.l.b16 %v7992
    %v8124 = vunpack.c.h.b16 %v7992
    %v8125 = vunpack.c.l.b16 %v7993
    %v8126 = vunpack.c.h.b16 %v7993
    %v8127 = vunpack.c.l.b16 %v7994
    %v8128 = vunpack.c.h.b16 %v7994
    %v8129 = vunpack.c.l.b16 %v7995
    %v8130 = vunpack.c.h.b16 %v7995
    %v8131 = vunpack.c.l.b16 %v7996
    %v8132 = vunpack.c.h.b16 %v7996
    %v8133 = vunpack.c.l.b16 %v7997
    %v8134 = vunpack.c.h.b16 %v7997
    %v8135 = vunpack.c.l.b16 %v7998
    %v8136 = vunpack.c.h.b16 %v7998
    %v8137 = vunpack.c.l.b16 %v7999
    %v8138 = vunpack.c.h.b16 %v7999
    %v8139 = vunpack.c.l.b16 %v8000
    %v8140 = vunpack.c.h.b16 %v8000
    %v8141 = vunpack.c.l.b16 %v8001
    %v8142 = vunpack.c.h.b16 %v8001
    %v8143 = vunpack.c.l.b16 %v8002
    %v8144 = vunpack.c.h.b16 %v8002
    %v8145 = vunpack.c.l.b16 %v8003
    %v8146 = vunpack.c.h.b16 %v8003
    %v8147 = vunpack.c.l.b16 %v8004
    %v8148 = vunpack.c.h.b16 %v8004
    %v8149 = vunpack.c.l.b16 %v8005
    %v8150 = vunpack.c.h.b16 %v8005
    %v8151 = vunpack.c.l.b16 %v8006
    %v8152 = vunpack.c.h.b16 %v8006
    %v8153 = vunpack.c.l.b16 %v8007
    %v8154 = vunpack.c.h.b16 %v8007
    %v8155 = vunpack.c.l.b16 %v8008
    %v8156 = vunpack.c.h.b16 %v8008
    %v8157 = vunpack.c.l.b16 %v8009
    %v8158 = vunpack.c.h.b16 %v8009
    %v8159 = vunpack.c.l.b16 %v8010
    %v8160 = vunpack.c.h.b16 %v8010
    %v8161 = vunpack.c.l.b16 %v8011
    %v8162 = vunpack.c.h.b16 %v8011
    %v8163 = vunpack.c.l.b16 %v8012
    %v8164 = vunpack.c.h.b16 %v8012
    %v8165 = vunpack.c.l.b16 %v8013
    %v8166 = vunpack.c.h.b16 %v8013
    %v8167 = vunpack.c.l.b16 %v8014
    %v8168 = vunpack.c.h.b16 %v8014
    %v8169 = vunpack.c.l.b16 %v8015
    %v8170 = vunpack.c.h.b16 %v8015
    %v8171 = vunpack.c.l.b16 %v8016
    %v8172 = vunpack.c.h.b16 %v8016
    %v8173 = vunpack.c.l.b16 %v8017
    %v8174 = vunpack.c.h.b16 %v8017
    %v8175 = vunpack.c.l.b16 %v8018
    %v8176 = vunpack.c.h.b16 %v8018
    %v8177 = vunpack.c.l.b16 %v8019
    %v8178 = vunpack.c.h.b16 %v8019
    %v8179 = vunpack.c.l.b16 %v8020
    %v8180 = vunpack.c.h.b16 %v8020
    %v8181 = vunpack.c.l.b16 %v8021
    %v8182 = vunpack.c.h.b16 %v8021
    %v8183 = vunpack.c.l.b16 %v8022
    %v8184 = vunpack.c.h.b16 %v8022
    %v8185 = vunpack.c.l.b16 %v8023
    %v8186 = vunpack.c.h.b16 %v8023
    %v8187 = vunpack.c.l.b16 %v8024
    %v8188 = vunpack.c.h.b16 %v8024
    %v8189 = vunpack.c.l.b16 %v8025
    %v8190 = vunpack.c.h.b16 %v8025
    %v8191 = vunpack.c.l.b16 %v8026
    %v8192 = vunpack.c.h.b16 %v8026
    %v8193 = vunpack.c.l.b16 %v8027
    %v8194 = vunpack.c.h.b16 %v8027
    %v8195 = vunpack.c.l.b16 %v8028
    %v8196 = vunpack.c.h.b16 %v8028
    %v8197 = vunpack.c.l.b16 %v8029
    %v8198 = vunpack.c.h.b16 %v8029
    %v8199 = vunpack.c.l.b16 %v8030
    %v8200 = vunpack.c.h.b16 %v8030
    %v8201 = vunpack.c.l.b16 %v8031
    %v8202 = vunpack.c.h.b16 %v8031
    %v8203 = vunpack.c.l.b16 %v8032
    %v8204 = vunpack.c.h.b16 %v8032
    %v8205 = vunpack.c.l.b16 %v8033
    %v8206 = vunpack.c.h.b16 %v8033
    %v8207 = vunpack.c.l.b16 %v8034
    %v8208 = vunpack.c.h.b16 %v8034
    %v8209 = vunpack.c.l.b16 %v8035
    %v8210 = vunpack.c.h.b16 %v8035
    %v8211 = vunpack.c.l.b16 %v8036
    %v8212 = vunpack.c.h.b16 %v8036
    %v8213 = vunpack.c.l.b16 %v8037
    %v8214 = vunpack.c.h.b16 %v8037
    %v8215 = vunpack.c.l.b16 %v8038
    %v8216 = vunpack.c.h.b16 %v8038
    %v8217 = vunpack.c.l.b16 %v8039
    %v8218 = vunpack.c.h.b16 %v8039
    %v8219 = vunpack.c.l.b16 %v8040
    %v8220 = vunpack.c.h.b16 %v8040
    %v8221 = vunpack.c.l.b16 %v8041
    %v8222 = vunpack.c.h.b16 %v8041
    %v8223 = vunpack.c.l.b16 %v8042
    %v8224 = vunpack.c.h.b16 %v8042
    %v8225 = vunpack.c.l.b16 %v8043
    %v8226 = vunpack.c.h.b16 %v8043
    %v8227 = vunpack.c.l.b16 %v8044
    %v8228 = vunpack.c.h.b16 %v8044
    %v8229 = vunpack.c.l.b16 %v8045
    %v8230 = vunpack.c.h.b16 %v8045
    %v8231 = vunpack.c.l.b16 %v8046
    %v8232 = vunpack.c.h.b16 %v8046
    %v8233 = vunpack.c.l.b16 %v8047
    %v8234 = vunpack.c.h.b16 %v8047
    %v8235 = vunpack.c.l.b16 %v8048
    %v8236 = vunpack.c.h.b16 %v8048
    %v8237 = vunpack.c.l.b16 %v8049
    %v8238 = vunpack.c.h.b16 %v8049
    %v8239 = vunpack.c.l.b16 %v8050
    %v8240 = vunpack.c.h.b16 %v8050
    %v8241 = vunpack.c.l.b16 %v8051
    %v8242 = vunpack.c.h.b16 %v8051
    %v8243 = vunpack.c.l.b16 %v8052
    %v8244 = vunpack.c.h.b16 %v8052
    %v8245 = vpack.c.b16 %v8121, %v8117
    %v8246 = vpack.c.b16 %v8122, %v8118
    %v8247 = vpack.c.b16 %v8123, %v8119
    %v8248 = vpack.c.b16 %v8124, %v8120
    %v8249 = vpack.c.b16 %v8129, %v8125
    %v8250 = vpack.c.b16 %v8130, %v8126
    %v8251 = vpack.c.b16 %v8131, %v8127
    %v8252 = vpack.c.b16 %v8132, %v8128
    %v8253 = vpack.c.b16 %v8137, %v8133
    %v8254 = vpack.c.b16 %v8138, %v8134
    %v8255 = vpack.c.b16 %v8139, %v8135
    %v8256 = vpack.c.b16 %v8140, %v8136
    %v8257 = vpack.c.b16 %v8145, %v8141
    %v8258 = vpack.c.b16 %v8146, %v8142
    %v8259 = vpack.c.b16 %v8147, %v8143
    %v8260 = vpack.c.b16 %v8148, %v8144
    %v8261 = vpack.c.b16 %v8153, %v8149
    %v8262 = vpack.c.b16 %v8154, %v8150
    %v8263 = vpack.c.b16 %v8155, %v8151
    %v8264 = vpack.c.b16 %v8156, %v8152
    %v8265 = vpack.c.b16 %v8161, %v8157
    %v8266 = vpack.c.b16 %v8162, %v8158
    %v8267 = vpack.c.b16 %v8163, %v8159
    %v8268 = vpack.c.b16 %v8164, %v8160
    %v8269 = vpack.c.b16 %v8169, %v8165
    %v8270 = vpack.c.b16 %v8170, %v8166
    %v8271 = vpack.c.b16 %v8171, %v8167
    %v8272 = vpack.c.b16 %v8172, %v8168
    %v8273 = vpack.c.b16 %v8177, %v8173
    %v8274 = vpack.c.b16 %v8178, %v8174
    %v8275 = vpack.c.b16 %v8179, %v8175
    %v8276 = vpack.c.b16 %v8180, %v8176
    %v8277 = vpack.c.b16 %v8185, %v8181
    %v8278 = vpack.c.b16 %v8186, %v8182
    %v8279 = vpack.c.b16 %v8187, %v8183
    %v8280 = vpack.c.b16 %v8188, %v8184
    %v8281 = vpack.c.b16 %v8193, %v8189
    %v8282 = vpack.c.b16 %v8194, %v8190
    %v8283 = vpack.c.b16 %v8195, %v8191
    %v8284 = vpack.c.b16 %v8196, %v8192
    %v8285 = vpack.c.b16 %v8201, %v8197
    %v8286 = vpack.c.b16 %v8202, %v8198
    %v8287 = vpack.c.b16 %v8203, %v8199
    %v8288 = vpack.c.b16 %v8204, %v8200
    %v8289 = vpack.c.b16 %v8209, %v8205
    %v8290 = vpack.c.b16 %v8210, %v8206
    %v8291 = vpack.c.b16 %v8211, %v8207
    %v8292 = vpack.c.b16 %v8212, %v8208
    %v8293 = vpack.c.b16 %v8217, %v8213
    %v8294 = vpack.c.b16 %v8218, %v8214
    %v8295 = vpack.c.b16 %v8219, %v8215
    %v8296 = vpack.c.b16 %v8220, %v8216
    %v8297 = vpack.c.b16 %v8225, %v8221
    %v8298 = vpack.c.b16 %v8226, %v8222
    %v8299 = vpack.c.b16 %v8227, %v8223
    %v8300 = vpack.c.b16 %v8228, %v8224
    %v8301 = vpack.c.b16 %v8233, %v8229
    %v8302 = vpack.c.b16 %v8234, %v8230
    %v8303 = vpack.c.b16 %v8235, %v8231
    %v8304 = vpack.c.b16 %v8236, %v8232
    %v8305 = vpack.c.b16 %v8241, %v8237
    %v8306 = vpack.c.b16 %v8242, %v8238
    %v8307 = vpack.c.b16 %v8243, %v8239
    %v8308 = vpack.c.b16 %v8244, %v8240
    %8373 = vmatpush.bf16.msra.mxu0 %v8273
    %8374 = vmatpush.bf16.msra.mxu0 %v8269
    %8375 = vmatpush.bf16.msra.mxu0 %v8265
    %8376 = vmatpush.bf16.msra.mxu0 %v8261
    %8377 = vmatpush.bf16.msra.mxu0 %v8257
    %8378 = vmatpush.bf16.msra.mxu0 %v8253
    %8379 = vmatpush.bf16.msra.mxu0 %v8249
    %8380 = vmatpush.bf16.msra.mxu0 %v8245
    %8381 = vmatmul.bf16.gmra.mxu0 %v7988
    %v8382 = vpop.f32.mrf.mxu0
    %v8383 = vadd.f32 %v3468, %v8382
    %v8384 = vpop.f32.mrf.mxu0
    %8385 = vdwg.mxu0
    %8386 = vmatpush.bf16.msra.mxu0 %v8305
    %8387 = vmatpush.bf16.msra.mxu0 %v8301
    %8388 = vmatpush.bf16.msra.mxu0 %v8297
    %8389 = vmatpush.bf16.msra.mxu0 %v8293
    %8390 = vmatpush.bf16.msra.mxu0 %v8289
    %8391 = vmatpush.bf16.msra.mxu0 %v8285
    %8392 = vmatpush.bf16.msra.mxu0 %v8281
    %8393 = vmatpush.bf16.msra.mxu0 %v8277
    %8394 = vmatmul.bf16.gmra.mxu0 %v7251
    %v8395 = vpop.f32.mrf.mxu0
    %v8396 = vadd.f32 %v8383, %v8395
    %v8397 = vpop.f32.mrf.mxu0
    %8398 = vdwg.mxu0
    %8399 = vmatpush.bf16.msra.mxu0 %v8274
    %8400 = vmatpush.bf16.msra.mxu0 %v8270
    %8401 = vmatpush.bf16.msra.mxu0 %v8266
    %8402 = vmatpush.bf16.msra.mxu0 %v8262
    %8403 = vmatpush.bf16.msra.mxu0 %v8258
    %8404 = vmatpush.bf16.msra.mxu0 %v8254
    %8405 = vmatpush.bf16.msra.mxu0 %v8250
    %8406 = vmatpush.bf16.msra.mxu0 %v8246
    %8407 = vmatmul.bf16.gmra.mxu0 %v7988
    %v8408 = vpop.f32.mrf.mxu0
    %v8409 = vadd.f32 %v3469, %v8408
    %v8410 = vpop.f32.mrf.mxu0
    %8411 = vdwg.mxu0
    %8412 = vmatpush.bf16.msra.mxu0 %v8306
    %8413 = vmatpush.bf16.msra.mxu0 %v8302
    %8414 = vmatpush.bf16.msra.mxu0 %v8298
    %8415 = vmatpush.bf16.msra.mxu0 %v8294
    %8416 = vmatpush.bf16.msra.mxu0 %v8290
    %8417 = vmatpush.bf16.msra.mxu0 %v8286
    %8418 = vmatpush.bf16.msra.mxu0 %v8282
    %8419 = vmatpush.bf16.msra.mxu0 %v8278
    %8420 = vmatmul.bf16.gmra.mxu0 %v7251
    %v8421 = vpop.f32.mrf.mxu0
    %v8422 = vadd.f32 %v8409, %v8421
    %v8423 = vpop.f32.mrf.mxu0
    %8424 = vdwg.mxu0
    %8425 = vmatpush.bf16.msra.mxu0 %v8275
    %8426 = vmatpush.bf16.msra.mxu0 %v8271
    %8427 = vmatpush.bf16.msra.mxu0 %v8267
    %8428 = vmatpush.bf16.msra.mxu0 %v8263
    %8429 = vmatpush.bf16.msra.mxu0 %v8259
    %8430 = vmatpush.bf16.msra.mxu0 %v8255
    %8431 = vmatpush.bf16.msra.mxu0 %v8251
    %8432 = vmatpush.bf16.msra.mxu0 %v8247
    %8433 = vmatmul.bf16.gmra.mxu0 %v7988
    %v8434 = vpop.f32.mrf.mxu0
    %v8435 = vadd.f32 %v3470, %v8434
    %v8436 = vpop.f32.mrf.mxu0
    %8437 = vdwg.mxu0
    %8438 = vmatpush.bf16.msra.mxu0 %v8307
    %8439 = vmatpush.bf16.msra.mxu0 %v8303
    %8440 = vmatpush.bf16.msra.mxu0 %v8299
    %8441 = vmatpush.bf16.msra.mxu0 %v8295
    %8442 = vmatpush.bf16.msra.mxu0 %v8291
    %8443 = vmatpush.bf16.msra.mxu0 %v8287
    %8444 = vmatpush.bf16.msra.mxu0 %v8283
    %8445 = vmatpush.bf16.msra.mxu0 %v8279
    %8446 = vmatmul.bf16.gmra.mxu0 %v7251
    %v8447 = vpop.f32.mrf.mxu0
    %v8448 = vadd.f32 %v8435, %v8447
    %v8449 = vpop.f32.mrf.mxu0
    %8450 = vdwg.mxu0
    %8451 = vmatpush.bf16.msra.mxu0 %v8276
    %8452 = vmatpush.bf16.msra.mxu0 %v8272
    %8453 = vmatpush.bf16.msra.mxu0 %v8268
    %8454 = vmatpush.bf16.msra.mxu0 %v8264
    %8455 = vmatpush.bf16.msra.mxu0 %v8260
    %8456 = vmatpush.bf16.msra.mxu0 %v8256
    %8457 = vmatpush.bf16.msra.mxu0 %v8252
    %8458 = vmatpush.bf16.msra.mxu0 %v8248
    %8459 = vmatmul.bf16.gmra.mxu0 %v7988
    %v8460 = vpop.f32.mrf.mxu0
    %v8461 = vadd.f32 %v3471, %v8460
    %v8462 = vpop.f32.mrf.mxu0
    %8463 = vdwg.mxu0
    %8464 = vmatpush.bf16.msra.mxu0 %v8308
    %8465 = vmatpush.bf16.msra.mxu0 %v8304
    %8466 = vmatpush.bf16.msra.mxu0 %v8300
    %8467 = vmatpush.bf16.msra.mxu0 %v8296
    %8468 = vmatpush.bf16.msra.mxu0 %v8292
    %8469 = vmatpush.bf16.msra.mxu0 %v8288
    %8470 = vmatpush.bf16.msra.mxu0 %v8284
    %8471 = vmatpush.bf16.msra.mxu0 %v8280
    %8472 = vmatmul.bf16.gmra.mxu0 %v7251
    %v8473 = vpop.f32.mrf.mxu0
    %v8474 = vadd.f32 %v8461, %v8473
    %v8475 = vpop.f32.mrf.mxu0
    %8476 = vdwg.mxu0
    %v8477 = vxor.u32 %v8396, 2147483648
    %v8478 = vxor.u32 %v8422, 2147483648
    %v8479 = vxor.u32 %v8448, 2147483648
    %v8480 = vmul.f32 %v8477, 1.442695
    %v8481 = vpow.pop %v8480
    %v8482 = vmul.f32 %v8478, 1.442695
    %v8483 = vpow.pop %v8482
    %v8484 = vmul.f32 %v8479, 1.442695
    %v8485 = vpow.pop %v8484
    %v8486 = vadd.f32 %v8481, 1.0
    %v8487 = vadd.f32 %v8483, 1.0
    %v8488 = vadd.f32 %v8485, 1.0
    %v8489 = vrcp.pop %v8486
    %v8490 = vmul.f32 %v8486, %v8489
    %v8491 = vsub.f32 1.0, %v8490
    %v8492 = vmul.f32 %v8489, %v8491
    %v8493 = vadd.f32 %v8489, %v8492
    %vm8494 = vweird.f32 %v8486
    %vm8495 = vweird.f32 %v8489
    %vm8496 = vmor %vm8494, %vm8495
    %v8497 = vsel %vm8496, %v8489, %v8493
    %v8498 = vand.u32 2147483647, %v8486
    %vm8499 = vcmp.eq.f32.partialorder %v8498, 8.507059e+37
    %v8500 = vand.u32 %v8486, 2147483648
    %v8501 = vor.u32 1.1754944e-38, %v8500
    %v8502 = vsel %vm8499, %v8501, %v8497
    %v8503 = vmul.f32 1.0, %v8502
    %v8504 = vrcp.pop %v8487
    %v8505 = vmul.f32 %v8487, %v8504
    %v8506 = vsub.f32 1.0, %v8505
    %v8507 = vmul.f32 %v8504, %v8506
    %v8508 = vadd.f32 %v8504, %v8507
    %vm8509 = vweird.f32 %v8487
    %vm8510 = vweird.f32 %v8504
    %vm8511 = vmor %vm8509, %vm8510
    %v8512 = vsel %vm8511, %v8504, %v8508
    %v8513 = vand.u32 2147483647, %v8487
    %vm8514 = vcmp.eq.f32.partialorder %v8513, 8.507059e+37
    %v8515 = vand.u32 %v8487, 2147483648
    %v8516 = vor.u32 1.1754944e-38, %v8515
    %v8517 = vsel %vm8514, %v8516, %v8512
    %v8518 = vmul.f32 1.0, %v8517
    %v8519 = vrcp.pop %v8488
    %v8520 = vmul.f32 %v8488, %v8519
    %v8521 = vsub.f32 1.0, %v8520
    %v8522 = vmul.f32 %v8519, %v8521
    %v8523 = vadd.f32 %v8519, %v8522
    %vm8524 = vweird.f32 %v8488
    %vm8525 = vweird.f32 %v8519
    %vm8526 = vmor %vm8524, %vm8525
    %v8527 = vsel %vm8526, %v8519, %v8523
    %v8528 = vand.u32 2147483647, %v8488
    %vm8529 = vcmp.eq.f32.partialorder %v8528, 8.507059e+37
    %v8530 = vand.u32 %v8488, 2147483648
    %v8531 = vor.u32 1.1754944e-38, %v8530
    %v8532 = vsel %vm8529, %v8531, %v8527
    %v8533 = vmul.f32 1.0, %v8532
    %v8534 = vtanh.pop %v8474
    %v8535 = vmul.f32 %v8518, %v7248
    %v8536 = vmul.f32 %v8503, %v8534
    %v8537 = vadd.f32 %v8535, %v8536
    %v8538 = vtanh.pop %v8537
    %v8539 = vmul.f32 %v8533, %v8538
    %v8540 = vpack.c.bf16 %v8539, %v8539
    %v8541 = vld [vmem:[%s13] sm:$0xf]
    %v8542 = vld [vmem:[%s13 + $0x4] sm:$0xf]
    %v8543 = vld [vmem:[%s13 + $0x8] sm:$0xf]
    %v8544 = vld [vmem:[%s13 + $0xc] sm:$0xf]
    %v8545 = vld [vmem:[%s13 + $0x10] sm:$0xf]
    %v8546 = vld [vmem:[%s13 + $0x14] sm:$0xf]
    %v8547 = vld [vmem:[%s13 + $0x18] sm:$0xf]
    %v8548 = vld [vmem:[%s13 + $0x1c] sm:$0xf]
    %v8549 = vld [vmem:[%s13 + $0x20] sm:$0xf]
    %v8550 = vld [vmem:[%s13 + $0x24] sm:$0xf]
    %v8551 = vld [vmem:[%s13 + $0x28] sm:$0xf]
    %v8552 = vld [vmem:[%s13 + $0x2c] sm:$0xf]
    %v8553 = vld [vmem:[%s13 + $0x30] sm:$0xf]
    %v8554 = vld [vmem:[%s13 + $0x34] sm:$0xf]
    %v8555 = vld [vmem:[%s13 + $0x38] sm:$0xf]
    %v8556 = vld [vmem:[%s13 + $0x3c] sm:$0xf]
    %v8573 = vunpack.c.l.b16 %v8541
    %v8574 = vunpack.c.l.b16 %v8542
    %v8575 = vunpack.c.l.b16 %v8543
    %v8576 = vunpack.c.l.b16 %v8544
    %v8577 = vunpack.c.l.b16 %v8545
    %v8578 = vunpack.c.l.b16 %v8546
    %v8579 = vunpack.c.l.b16 %v8547
    %v8580 = vunpack.c.l.b16 %v8548
    %v8581 = vunpack.c.l.b16 %v8549
    %v8582 = vunpack.c.l.b16 %v8550
    %v8583 = vunpack.c.l.b16 %v8551
    %v8584 = vunpack.c.l.b16 %v8552
    %v8585 = vunpack.c.l.b16 %v8553
    %v8586 = vunpack.c.l.b16 %v8554
    %v8587 = vunpack.c.l.b16 %v8555
    %v8588 = vunpack.c.l.b16 %v8556
    %v8589 = vpack.c.b16 %v8574, %v8573
    %v8590 = vpack.c.b16 %v8576, %v8575
    %v8591 = vpack.c.b16 %v8578, %v8577
    %v8592 = vpack.c.b16 %v8580, %v8579
    %v8593 = vpack.c.b16 %v8582, %v8581
    %v8594 = vpack.c.b16 %v8584, %v8583
    %v8595 = vpack.c.b16 %v8586, %v8585
    %v8596 = vpack.c.b16 %v8588, %v8587
    %8605 = vmatpush.bf16.msra.mxu0 %v8596
    %8606 = vmatpush.bf16.msra.mxu0 %v8595
    %8607 = vmatpush.bf16.msra.mxu0 %v8594
    %8608 = vmatpush.bf16.msra.mxu0 %v8593
    %8609 = vmatpush.bf16.msra.mxu0 %v8592
    %8610 = vmatpush.bf16.msra.mxu0 %v8591
    %8611 = vmatpush.bf16.msra.mxu0 %v8590
    %8612 = vmatpush.bf16.msra.mxu0 %v8589
    %8613 = vmatmul.bf16.gmra.mxu0 %v8540
    %v8614 = vpop.f32.mrf.mxu0
    %v8615 = vadd.f32 %v3478, %v8614
    %v8616 = vpop.f32.mrf.mxu0
    %8617 = vdwg.mxu0
    %s8618 = scalar_lea.vmem [#allocation13], 32
    %8619 = vst [vmem:[%s8618] sm:$0xff] %v8615
    %s8620 = scalar_lea.vmem %s1, 32
    %v8621 = vld [vmem:[%s8620] sm:$0xff]
    %8622 = vset.pattern.permute.xlu0 0
    %8623 = vperm.xlu0 %8622, %v8621
    %v8624 = vpop.permute.xlu0 %8623
    %vm8625 = vcmp.eq.s32.totalorder %v3481, %v8624
    %v8626 = vsel %vm8625, 1, 0
    %v8627 = vcvt.s32.f32 %v8626
    %v8628 = vpack.c.bf16 %v8627, %v8627
    %s8629 = sld [smem:[#allocation3 + $0x4]]
    %p8630 = scmp.gt.s32.totalorder %s8629, 0
    // Predicated region
    $region106: #{seq2seq_forward.1} parent=1 // pred_check
      %p8631 = pneg %p8630
    $region107: #{seq2seq_forward.1} parent=1 // pred_check_branch
      %8633 = sbr.rel (%p8631) target = $region109
    $region108: #{seq2seq_forward.1} parent=1 // pred_region
      _
    $region109: #{seq2seq_forward.1} parent=1 // pred_fallthru
      _
    %p8634 = pneg %p8630
    // Predicated region
    $region110: #{seq2seq_forward.1} parent=1 // pred_check
      _
    $region111: #{seq2seq_forward.1} parent=1 // pred_check_branch
      %8636 = sbr.rel (%p8630) target = $region113
    $region112: #{seq2seq_forward.1} parent=1 // pred_region
      %8637 = vmax.xlane.f32.xlu0 %v8615
      %v8638 = vpop.xlane.xlu0 %8637
      %vm8639 = vcmp.eq.f32.partialorder %v8615, %v8638
      %v8640 = vsel %vm8639, %v3482, 128.0
      %8641 = vmin.xlane.f32.xlu0 %v8640
      %v8642 = vpop.xlane.xlu0 %8641
      %vm8643 = vcmp.eq.f32.partialorder %v3482, %v8642
      %v8644 = vsel %vm8643, 1, 0
      %v8645 = vcvt.s32.f32 %v8644
      %v8646 = vpack.c.bf16 %v8645, %v8645
    $region113: #{seq2seq_forward.1} parent=1 // pred_fallthru
      %v8647 = vphi %v8628, %v8646
    %v8648 = vld [vmem:[%s8] sm:$0xf]
    %v8649 = vld [vmem:[%s8 + $0x4] sm:$0xf]
    %v8650 = vld [vmem:[%s8 + $0x8] sm:$0xf]
    %v8651 = vld [vmem:[%s8 + $0xc] sm:$0xf]
    %v8652 = vld [vmem:[%s8 + $0x10] sm:$0xf]
    %v8653 = vld [vmem:[%s8 + $0x14] sm:$0xf]
    %v8654 = vld [vmem:[%s8 + $0x18] sm:$0xf]
    %v8655 = vld [vmem:[%s8 + $0x1c] sm:$0xf]
    %v8656 = vld [vmem:[%s8 + $0x20] sm:$0xf]
    %v8657 = vld [vmem:[%s8 + $0x24] sm:$0xf]
    %v8658 = vld [vmem:[%s8 + $0x28] sm:$0xf]
    %v8659 = vld [vmem:[%s8 + $0x2c] sm:$0xf]
    %v8660 = vld [vmem:[%s8 + $0x30] sm:$0xf]
    %v8661 = vld [vmem:[%s8 + $0x34] sm:$0xf]
    %v8662 = vld [vmem:[%s8 + $0x38] sm:$0xf]
    %v8663 = vld [vmem:[%s8 + $0x3c] sm:$0xf]
    %v8680 = vunpack.c.l.b16 %v8648
    %v8681 = vunpack.c.l.b16 %v8649
    %v8682 = vunpack.c.l.b16 %v8650
    %v8683 = vunpack.c.l.b16 %v8651
    %v8684 = vunpack.c.l.b16 %v8652
    %v8685 = vunpack.c.l.b16 %v8653
    %v8686 = vunpack.c.l.b16 %v8654
    %v8687 = vunpack.c.l.b16 %v8655
    %v8688 = vunpack.c.l.b16 %v8656
    %v8689 = vunpack.c.l.b16 %v8657
    %v8690 = vunpack.c.l.b16 %v8658
    %v8691 = vunpack.c.l.b16 %v8659
    %v8692 = vunpack.c.l.b16 %v8660
    %v8693 = vunpack.c.l.b16 %v8661
    %v8694 = vunpack.c.l.b16 %v8662
    %v8695 = vunpack.c.l.b16 %v8663
    %v8696 = vpack.c.b16 %v8681, %v8680
    %v8697 = vpack.c.b16 %v8683, %v8682
    %v8698 = vpack.c.b16 %v8685, %v8684
    %v8699 = vpack.c.b16 %v8687, %v8686
    %v8700 = vpack.c.b16 %v8689, %v8688
    %v8701 = vpack.c.b16 %v8691, %v8690
    %v8702 = vpack.c.b16 %v8693, %v8692
    %v8703 = vpack.c.b16 %v8695, %v8694
    %8712 = vmatpush.bf16.msra.mxu0 %v8703
    %8713 = vmatpush.bf16.msra.mxu0 %v8702
    %8714 = vmatpush.bf16.msra.mxu0 %v8701
    %8715 = vmatpush.bf16.msra.mxu0 %v8700
    %8716 = vmatpush.bf16.msra.mxu0 %v8699
    %8717 = vmatpush.bf16.msra.mxu0 %v8698
    %8718 = vmatpush.bf16.msra.mxu0 %v8697
    %8719 = vmatpush.bf16.msra.mxu0 %v8696
    %8720 = vmatmul.bf16.gmra.mxu0 %v8647
    %v8721 = vpop.f32.mrf.mxu0
    %v8722 = vadd.f32 0.0, %v8721
    %v8723 = vpop.f32.mrf.mxu0
    %8724 = vdwg.mxu0
    %v8725 = vpack.c.bf16 %v8722, %v8722
    %v8726 = vld [vmem:[#allocation10] sm:$0xff]
    %v8727 = vld [vmem:[#allocation10 + $0x8] sm:$0xff]
    %v8728 = vld [vmem:[#allocation10 + $0x10] sm:$0xff]
    %v8729 = vld [vmem:[#allocation10 + $0x18] sm:$0xff]
    %v8730 = vld [vmem:[#allocation10 + $0x20] sm:$0xff]
    %v8731 = vld [vmem:[#allocation10 + $0x28] sm:$0xff]
    %v8732 = vld [vmem:[#allocation10 + $0x30] sm:$0xff]
    %v8733 = vld [vmem:[#allocation10 + $0x38] sm:$0xff]
    %v8734 = vld [vmem:[#allocation10 + $0x40] sm:$0xff]
    %v8735 = vld [vmem:[#allocation10 + $0x48] sm:$0xff]
    %v8736 = vld [vmem:[#allocation10 + $0x50] sm:$0xff]
    %v8737 = vld [vmem:[#allocation10 + $0x58] sm:$0xff]
    %v8738 = vld [vmem:[#allocation10 + $0x60] sm:$0xff]
    %v8739 = vld [vmem:[#allocation10 + $0x68] sm:$0xff]
    %v8740 = vld [vmem:[#allocation10 + $0x70] sm:$0xff]
    %v8741 = vld [vmem:[#allocation10 + $0x78] sm:$0xff]
    %v8742 = vld [vmem:[#allocation10 + $0x80] sm:$0xff]
    %v8743 = vld [vmem:[#allocation10 + $0x88] sm:$0xff]
    %v8744 = vld [vmem:[#allocation10 + $0x90] sm:$0xff]
    %v8745 = vld [vmem:[#allocation10 + $0x98] sm:$0xff]
    %v8746 = vld [vmem:[#allocation10 + $0xa0] sm:$0xff]
    %v8747 = vld [vmem:[#allocation10 + $0xa8] sm:$0xff]
    %v8748 = vld [vmem:[#allocation10 + $0xb0] sm:$0xff]
    %v8749 = vld [vmem:[#allocation10 + $0xb8] sm:$0xff]
    %v8750 = vld [vmem:[#allocation10 + $0xc0] sm:$0xff]
    %v8751 = vld [vmem:[#allocation10 + $0xc8] sm:$0xff]
    %v8752 = vld [vmem:[#allocation10 + $0xd0] sm:$0xff]
    %v8753 = vld [vmem:[#allocation10 + $0xd8] sm:$0xff]
    %v8754 = vld [vmem:[#allocation10 + $0xe0] sm:$0xff]
    %v8755 = vld [vmem:[#allocation10 + $0xe8] sm:$0xff]
    %v8756 = vld [vmem:[#allocation10 + $0xf0] sm:$0xff]
    %v8757 = vld [vmem:[#allocation10 + $0xf8] sm:$0xff]
    %v8758 = vld [vmem:[#allocation10 + $0x100] sm:$0xff]
    %v8759 = vld [vmem:[#allocation10 + $0x108] sm:$0xff]
    %v8760 = vld [vmem:[#allocation10 + $0x110] sm:$0xff]
    %v8761 = vld [vmem:[#allocation10 + $0x118] sm:$0xff]
    %v8762 = vld [vmem:[#allocation10 + $0x120] sm:$0xff]
    %v8763 = vld [vmem:[#allocation10 + $0x128] sm:$0xff]
    %v8764 = vld [vmem:[#allocation10 + $0x130] sm:$0xff]
    %v8765 = vld [vmem:[#allocation10 + $0x138] sm:$0xff]
    %v8766 = vld [vmem:[#allocation10 + $0x140] sm:$0xff]
    %v8767 = vld [vmem:[#allocation10 + $0x148] sm:$0xff]
    %v8768 = vld [vmem:[#allocation10 + $0x150] sm:$0xff]
    %v8769 = vld [vmem:[#allocation10 + $0x158] sm:$0xff]
    %v8770 = vld [vmem:[#allocation10 + $0x160] sm:$0xff]
    %v8771 = vld [vmem:[#allocation10 + $0x168] sm:$0xff]
    %v8772 = vld [vmem:[#allocation10 + $0x170] sm:$0xff]
    %v8773 = vld [vmem:[#allocation10 + $0x178] sm:$0xff]
    %v8774 = vld [vmem:[#allocation10 + $0x180] sm:$0xff]
    %v8775 = vld [vmem:[#allocation10 + $0x188] sm:$0xff]
    %v8776 = vld [vmem:[#allocation10 + $0x190] sm:$0xff]
    %v8777 = vld [vmem:[#allocation10 + $0x198] sm:$0xff]
    %v8778 = vld [vmem:[#allocation10 + $0x1a0] sm:$0xff]
    %v8779 = vld [vmem:[#allocation10 + $0x1a8] sm:$0xff]
    %v8780 = vld [vmem:[#allocation10 + $0x1b0] sm:$0xff]
    %v8781 = vld [vmem:[#allocation10 + $0x1b8] sm:$0xff]
    %v8782 = vld [vmem:[#allocation10 + $0x1c0] sm:$0xff]
    %v8783 = vld [vmem:[#allocation10 + $0x1c8] sm:$0xff]
    %v8784 = vld [vmem:[#allocation10 + $0x1d0] sm:$0xff]
    %v8785 = vld [vmem:[#allocation10 + $0x1d8] sm:$0xff]
    %v8786 = vld [vmem:[#allocation10 + $0x1e0] sm:$0xff]
    %v8787 = vld [vmem:[#allocation10 + $0x1e8] sm:$0xff]
    %v8788 = vld [vmem:[#allocation10 + $0x1f0] sm:$0xff]
    %v8789 = vld [vmem:[#allocation10 + $0x1f8] sm:$0xff]
    %v8854 = vunpack.c.l.b16 %v8726
    %v8855 = vunpack.c.h.b16 %v8726
    %v8856 = vunpack.c.l.b16 %v8727
    %v8857 = vunpack.c.h.b16 %v8727
    %v8858 = vunpack.c.l.b16 %v8728
    %v8859 = vunpack.c.h.b16 %v8728
    %v8860 = vunpack.c.l.b16 %v8729
    %v8861 = vunpack.c.h.b16 %v8729
    %v8862 = vunpack.c.l.b16 %v8730
    %v8863 = vunpack.c.h.b16 %v8730
    %v8864 = vunpack.c.l.b16 %v8731
    %v8865 = vunpack.c.h.b16 %v8731
    %v8866 = vunpack.c.l.b16 %v8732
    %v8867 = vunpack.c.h.b16 %v8732
    %v8868 = vunpack.c.l.b16 %v8733
    %v8869 = vunpack.c.h.b16 %v8733
    %v8870 = vunpack.c.l.b16 %v8734
    %v8871 = vunpack.c.h.b16 %v8734
    %v8872 = vunpack.c.l.b16 %v8735
    %v8873 = vunpack.c.h.b16 %v8735
    %v8874 = vunpack.c.l.b16 %v8736
    %v8875 = vunpack.c.h.b16 %v8736
    %v8876 = vunpack.c.l.b16 %v8737
    %v8877 = vunpack.c.h.b16 %v8737
    %v8878 = vunpack.c.l.b16 %v8738
    %v8879 = vunpack.c.h.b16 %v8738
    %v8880 = vunpack.c.l.b16 %v8739
    %v8881 = vunpack.c.h.b16 %v8739
    %v8882 = vunpack.c.l.b16 %v8740
    %v8883 = vunpack.c.h.b16 %v8740
    %v8884 = vunpack.c.l.b16 %v8741
    %v8885 = vunpack.c.h.b16 %v8741
    %v8886 = vunpack.c.l.b16 %v8742
    %v8887 = vunpack.c.h.b16 %v8742
    %v8888 = vunpack.c.l.b16 %v8743
    %v8889 = vunpack.c.h.b16 %v8743
    %v8890 = vunpack.c.l.b16 %v8744
    %v8891 = vunpack.c.h.b16 %v8744
    %v8892 = vunpack.c.l.b16 %v8745
    %v8893 = vunpack.c.h.b16 %v8745
    %v8894 = vunpack.c.l.b16 %v8746
    %v8895 = vunpack.c.h.b16 %v8746
    %v8896 = vunpack.c.l.b16 %v8747
    %v8897 = vunpack.c.h.b16 %v8747
    %v8898 = vunpack.c.l.b16 %v8748
    %v8899 = vunpack.c.h.b16 %v8748
    %v8900 = vunpack.c.l.b16 %v8749
    %v8901 = vunpack.c.h.b16 %v8749
    %v8902 = vunpack.c.l.b16 %v8750
    %v8903 = vunpack.c.h.b16 %v8750
    %v8904 = vunpack.c.l.b16 %v8751
    %v8905 = vunpack.c.h.b16 %v8751
    %v8906 = vunpack.c.l.b16 %v8752
    %v8907 = vunpack.c.h.b16 %v8752
    %v8908 = vunpack.c.l.b16 %v8753
    %v8909 = vunpack.c.h.b16 %v8753
    %v8910 = vunpack.c.l.b16 %v8754
    %v8911 = vunpack.c.h.b16 %v8754
    %v8912 = vunpack.c.l.b16 %v8755
    %v8913 = vunpack.c.h.b16 %v8755
    %v8914 = vunpack.c.l.b16 %v8756
    %v8915 = vunpack.c.h.b16 %v8756
    %v8916 = vunpack.c.l.b16 %v8757
    %v8917 = vunpack.c.h.b16 %v8757
    %v8918 = vunpack.c.l.b16 %v8758
    %v8919 = vunpack.c.h.b16 %v8758
    %v8920 = vunpack.c.l.b16 %v8759
    %v8921 = vunpack.c.h.b16 %v8759
    %v8922 = vunpack.c.l.b16 %v8760
    %v8923 = vunpack.c.h.b16 %v8760
    %v8924 = vunpack.c.l.b16 %v8761
    %v8925 = vunpack.c.h.b16 %v8761
    %v8926 = vunpack.c.l.b16 %v8762
    %v8927 = vunpack.c.h.b16 %v8762
    %v8928 = vunpack.c.l.b16 %v8763
    %v8929 = vunpack.c.h.b16 %v8763
    %v8930 = vunpack.c.l.b16 %v8764
    %v8931 = vunpack.c.h.b16 %v8764
    %v8932 = vunpack.c.l.b16 %v8765
    %v8933 = vunpack.c.h.b16 %v8765
    %v8934 = vunpack.c.l.b16 %v8766
    %v8935 = vunpack.c.h.b16 %v8766
    %v8936 = vunpack.c.l.b16 %v8767
    %v8937 = vunpack.c.h.b16 %v8767
    %v8938 = vunpack.c.l.b16 %v8768
    %v8939 = vunpack.c.h.b16 %v8768
    %v8940 = vunpack.c.l.b16 %v8769
    %v8941 = vunpack.c.h.b16 %v8769
    %v8942 = vunpack.c.l.b16 %v8770
    %v8943 = vunpack.c.h.b16 %v8770
    %v8944 = vunpack.c.l.b16 %v8771
    %v8945 = vunpack.c.h.b16 %v8771
    %v8946 = vunpack.c.l.b16 %v8772
    %v8947 = vunpack.c.h.b16 %v8772
    %v8948 = vunpack.c.l.b16 %v8773
    %v8949 = vunpack.c.h.b16 %v8773
    %v8950 = vunpack.c.l.b16 %v8774
    %v8951 = vunpack.c.h.b16 %v8774
    %v8952 = vunpack.c.l.b16 %v8775
    %v8953 = vunpack.c.h.b16 %v8775
    %v8954 = vunpack.c.l.b16 %v8776
    %v8955 = vunpack.c.h.b16 %v8776
    %v8956 = vunpack.c.l.b16 %v8777
    %v8957 = vunpack.c.h.b16 %v8777
    %v8958 = vunpack.c.l.b16 %v8778
    %v8959 = vunpack.c.h.b16 %v8778
    %v8960 = vunpack.c.l.b16 %v8779
    %v8961 = vunpack.c.h.b16 %v8779
    %v8962 = vunpack.c.l.b16 %v8780
    %v8963 = vunpack.c.h.b16 %v8780
    %v8964 = vunpack.c.l.b16 %v8781
    %v8965 = vunpack.c.h.b16 %v8781
    %v8966 = vunpack.c.l.b16 %v8782
    %v8967 = vunpack.c.h.b16 %v8782
    %v8968 = vunpack.c.l.b16 %v8783
    %v8969 = vunpack.c.h.b16 %v8783
    %v8970 = vunpack.c.l.b16 %v8784
    %v8971 = vunpack.c.h.b16 %v8784
    %v8972 = vunpack.c.l.b16 %v8785
    %v8973 = vunpack.c.h.b16 %v8785
    %v8974 = vunpack.c.l.b16 %v8786
    %v8975 = vunpack.c.h.b16 %v8786
    %v8976 = vunpack.c.l.b16 %v8787
    %v8977 = vunpack.c.h.b16 %v8787
    %v8978 = vunpack.c.l.b16 %v8788
    %v8979 = vunpack.c.h.b16 %v8788
    %v8980 = vunpack.c.l.b16 %v8789
    %v8981 = vunpack.c.h.b16 %v8789
    %v8982 = vpack.c.b16 %v8858, %v8854
    %v8983 = vpack.c.b16 %v8859, %v8855
    %v8984 = vpack.c.b16 %v8860, %v8856
    %v8985 = vpack.c.b16 %v8861, %v8857
    %v8986 = vpack.c.b16 %v8866, %v8862
    %v8987 = vpack.c.b16 %v8867, %v8863
    %v8988 = vpack.c.b16 %v8868, %v8864
    %v8989 = vpack.c.b16 %v8869, %v8865
    %v8990 = vpack.c.b16 %v8874, %v8870
    %v8991 = vpack.c.b16 %v8875, %v8871
    %v8992 = vpack.c.b16 %v8876, %v8872
    %v8993 = vpack.c.b16 %v8877, %v8873
    %v8994 = vpack.c.b16 %v8882, %v8878
    %v8995 = vpack.c.b16 %v8883, %v8879
    %v8996 = vpack.c.b16 %v8884, %v8880
    %v8997 = vpack.c.b16 %v8885, %v8881
    %v8998 = vpack.c.b16 %v8890, %v8886
    %v8999 = vpack.c.b16 %v8891, %v8887
    %v9000 = vpack.c.b16 %v8892, %v8888
    %v9001 = vpack.c.b16 %v8893, %v8889
    %v9002 = vpack.c.b16 %v8898, %v8894
    %v9003 = vpack.c.b16 %v8899, %v8895
    %v9004 = vpack.c.b16 %v8900, %v8896
    %v9005 = vpack.c.b16 %v8901, %v8897
    %v9006 = vpack.c.b16 %v8906, %v8902
    %v9007 = vpack.c.b16 %v8907, %v8903
    %v9008 = vpack.c.b16 %v8908, %v8904
    %v9009 = vpack.c.b16 %v8909, %v8905
    %v9010 = vpack.c.b16 %v8914, %v8910
    %v9011 = vpack.c.b16 %v8915, %v8911
    %v9012 = vpack.c.b16 %v8916, %v8912
    %v9013 = vpack.c.b16 %v8917, %v8913
    %v9014 = vpack.c.b16 %v8922, %v8918
    %v9015 = vpack.c.b16 %v8923, %v8919
    %v9016 = vpack.c.b16 %v8924, %v8920
    %v9017 = vpack.c.b16 %v8925, %v8921
    %v9018 = vpack.c.b16 %v8930, %v8926
    %v9019 = vpack.c.b16 %v8931, %v8927
    %v9020 = vpack.c.b16 %v8932, %v8928
    %v9021 = vpack.c.b16 %v8933, %v8929
    %v9022 = vpack.c.b16 %v8938, %v8934
    %v9023 = vpack.c.b16 %v8939, %v8935
    %v9024 = vpack.c.b16 %v8940, %v8936
    %v9025 = vpack.c.b16 %v8941, %v8937
    %v9026 = vpack.c.b16 %v8946, %v8942
    %v9027 = vpack.c.b16 %v8947, %v8943
    %v9028 = vpack.c.b16 %v8948, %v8944
    %v9029 = vpack.c.b16 %v8949, %v8945
    %v9030 = vpack.c.b16 %v8954, %v8950
    %v9031 = vpack.c.b16 %v8955, %v8951
    %v9032 = vpack.c.b16 %v8956, %v8952
    %v9033 = vpack.c.b16 %v8957, %v8953
    %v9034 = vpack.c.b16 %v8962, %v8958
    %v9035 = vpack.c.b16 %v8963, %v8959
    %v9036 = vpack.c.b16 %v8964, %v8960
    %v9037 = vpack.c.b16 %v8965, %v8961
    %v9038 = vpack.c.b16 %v8970, %v8966
    %v9039 = vpack.c.b16 %v8971, %v8967
    %v9040 = vpack.c.b16 %v8972, %v8968
    %v9041 = vpack.c.b16 %v8973, %v8969
    %v9042 = vpack.c.b16 %v8978, %v8974
    %v9043 = vpack.c.b16 %v8979, %v8975
    %v9044 = vpack.c.b16 %v8980, %v8976
    %v9045 = vpack.c.b16 %v8981, %v8977
    %9110 = vmatpush.bf16.msra.mxu0 %v9010
    %9111 = vmatpush.bf16.msra.mxu0 %v9006
    %9112 = vmatpush.bf16.msra.mxu0 %v9002
    %9113 = vmatpush.bf16.msra.mxu0 %v8998
    %9114 = vmatpush.bf16.msra.mxu0 %v8994
    %9115 = vmatpush.bf16.msra.mxu0 %v8990
    %9116 = vmatpush.bf16.msra.mxu0 %v8986
    %9117 = vmatpush.bf16.msra.mxu0 %v8982
    %9118 = vmatmul.bf16.gmra.mxu0 %v8725
    %v9119 = vpop.f32.mrf.mxu0
    %v9120 = vadd.f32 %v3458, %v9119
    %v9121 = vpop.f32.mrf.mxu0
    %9122 = vdwg.mxu0
    %9123 = vmatpush.bf16.msra.mxu0 %v9042
    %9124 = vmatpush.bf16.msra.mxu0 %v9038
    %9125 = vmatpush.bf16.msra.mxu0 %v9034
    %9126 = vmatpush.bf16.msra.mxu0 %v9030
    %9127 = vmatpush.bf16.msra.mxu0 %v9026
    %9128 = vmatpush.bf16.msra.mxu0 %v9022
    %9129 = vmatpush.bf16.msra.mxu0 %v9018
    %9130 = vmatpush.bf16.msra.mxu0 %v9014
    %9131 = vmatmul.bf16.gmra.mxu0 %v7988
    %v9132 = vpop.f32.mrf.mxu0
    %v9133 = vadd.f32 %v9120, %v9132
    %v9134 = vpop.f32.mrf.mxu0
    %9135 = vdwg.mxu0
    %9136 = vmatpush.bf16.msra.mxu0 %v9011
    %9137 = vmatpush.bf16.msra.mxu0 %v9007
    %9138 = vmatpush.bf16.msra.mxu0 %v9003
    %9139 = vmatpush.bf16.msra.mxu0 %v8999
    %9140 = vmatpush.bf16.msra.mxu0 %v8995
    %9141 = vmatpush.bf16.msra.mxu0 %v8991
    %9142 = vmatpush.bf16.msra.mxu0 %v8987
    %9143 = vmatpush.bf16.msra.mxu0 %v8983
    %9144 = vmatmul.bf16.gmra.mxu0 %v8725
    %v9145 = vpop.f32.mrf.mxu0
    %v9146 = vadd.f32 %v3459, %v9145
    %v9147 = vpop.f32.mrf.mxu0
    %9148 = vdwg.mxu0
    %9149 = vmatpush.bf16.msra.mxu0 %v9043
    %9150 = vmatpush.bf16.msra.mxu0 %v9039
    %9151 = vmatpush.bf16.msra.mxu0 %v9035
    %9152 = vmatpush.bf16.msra.mxu0 %v9031
    %9153 = vmatpush.bf16.msra.mxu0 %v9027
    %9154 = vmatpush.bf16.msra.mxu0 %v9023
    %9155 = vmatpush.bf16.msra.mxu0 %v9019
    %9156 = vmatpush.bf16.msra.mxu0 %v9015
    %9157 = vmatmul.bf16.gmra.mxu0 %v7988
    %v9158 = vpop.f32.mrf.mxu0
    %v9159 = vadd.f32 %v9146, %v9158
    %v9160 = vpop.f32.mrf.mxu0
    %9161 = vdwg.mxu0
    %9162 = vmatpush.bf16.msra.mxu0 %v9012
    %9163 = vmatpush.bf16.msra.mxu0 %v9008
    %9164 = vmatpush.bf16.msra.mxu0 %v9004
    %9165 = vmatpush.bf16.msra.mxu0 %v9000
    %9166 = vmatpush.bf16.msra.mxu0 %v8996
    %9167 = vmatpush.bf16.msra.mxu0 %v8992
    %9168 = vmatpush.bf16.msra.mxu0 %v8988
    %9169 = vmatpush.bf16.msra.mxu0 %v8984
    %9170 = vmatmul.bf16.gmra.mxu0 %v8725
    %v9171 = vpop.f32.mrf.mxu0
    %v9172 = vadd.f32 %v3460, %v9171
    %v9173 = vpop.f32.mrf.mxu0
    %9174 = vdwg.mxu0
    %9175 = vmatpush.bf16.msra.mxu0 %v9044
    %9176 = vmatpush.bf16.msra.mxu0 %v9040
    %9177 = vmatpush.bf16.msra.mxu0 %v9036
    %9178 = vmatpush.bf16.msra.mxu0 %v9032
    %9179 = vmatpush.bf16.msra.mxu0 %v9028
    %9180 = vmatpush.bf16.msra.mxu0 %v9024
    %9181 = vmatpush.bf16.msra.mxu0 %v9020
    %9182 = vmatpush.bf16.msra.mxu0 %v9016
    %9183 = vmatmul.bf16.gmra.mxu0 %v7988
    %v9184 = vpop.f32.mrf.mxu0
    %v9185 = vadd.f32 %v9172, %v9184
    %v9186 = vpop.f32.mrf.mxu0
    %9187 = vdwg.mxu0
    %9188 = vmatpush.bf16.msra.mxu0 %v9013
    %9189 = vmatpush.bf16.msra.mxu0 %v9009
    %9190 = vmatpush.bf16.msra.mxu0 %v9005
    %9191 = vmatpush.bf16.msra.mxu0 %v9001
    %9192 = vmatpush.bf16.msra.mxu0 %v8997
    %9193 = vmatpush.bf16.msra.mxu0 %v8993
    %9194 = vmatpush.bf16.msra.mxu0 %v8989
    %9195 = vmatpush.bf16.msra.mxu0 %v8985
    %9196 = vmatmul.bf16.gmra.mxu0 %v8725
    %v9197 = vpop.f32.mrf.mxu0
    %v9198 = vadd.f32 %v3461, %v9197
    %v9199 = vpop.f32.mrf.mxu0
    %9200 = vdwg.mxu0
    %9201 = vmatpush.bf16.msra.mxu0 %v9045
    %9202 = vmatpush.bf16.msra.mxu0 %v9041
    %9203 = vmatpush.bf16.msra.mxu0 %v9037
    %9204 = vmatpush.bf16.msra.mxu0 %v9033
    %9205 = vmatpush.bf16.msra.mxu0 %v9029
    %9206 = vmatpush.bf16.msra.mxu0 %v9025
    %9207 = vmatpush.bf16.msra.mxu0 %v9021
    %9208 = vmatpush.bf16.msra.mxu0 %v9017
    %9209 = vmatmul.bf16.gmra.mxu0 %v7988
    %v9210 = vpop.f32.mrf.mxu0
    %v9211 = vadd.f32 %v9198, %v9210
    %v9212 = vpop.f32.mrf.mxu0
    %9213 = vdwg.mxu0
    %v9214 = vxor.u32 %v9133, 2147483648
    %v9215 = vxor.u32 %v9159, 2147483648
    %v9216 = vxor.u32 %v9185, 2147483648
    %v9217 = vmul.f32 %v9214, 1.442695
    %v9218 = vpow.pop %v9217
    %v9219 = vmul.f32 %v9215, 1.442695
    %v9220 = vpow.pop %v9219
    %v9221 = vmul.f32 %v9216, 1.442695
    %v9222 = vpow.pop %v9221
    %v9223 = vadd.f32 %v9218, 1.0
    %v9224 = vadd.f32 %v9220, 1.0
    %v9225 = vadd.f32 %v9222, 1.0
    %v9226 = vrcp.pop %v9223
    %v9227 = vmul.f32 %v9223, %v9226
    %v9228 = vsub.f32 1.0, %v9227
    %v9229 = vmul.f32 %v9226, %v9228
    %v9230 = vadd.f32 %v9226, %v9229
    %vm9231 = vweird.f32 %v9223
    %vm9232 = vweird.f32 %v9226
    %vm9233 = vmor %vm9231, %vm9232
    %v9234 = vsel %vm9233, %v9226, %v9230
    %v9235 = vand.u32 2147483647, %v9223
    %vm9236 = vcmp.eq.f32.partialorder %v9235, 8.507059e+37
    %v9237 = vand.u32 %v9223, 2147483648
    %v9238 = vor.u32 1.1754944e-38, %v9237
    %v9239 = vsel %vm9236, %v9238, %v9234
    %v9240 = vmul.f32 1.0, %v9239
    %v9241 = vrcp.pop %v9224
    %v9242 = vmul.f32 %v9224, %v9241
    %v9243 = vsub.f32 1.0, %v9242
    %v9244 = vmul.f32 %v9241, %v9243
    %v9245 = vadd.f32 %v9241, %v9244
    %vm9246 = vweird.f32 %v9224
    %vm9247 = vweird.f32 %v9241
    %vm9248 = vmor %vm9246, %vm9247
    %v9249 = vsel %vm9248, %v9241, %v9245
    %v9250 = vand.u32 2147483647, %v9224
    %vm9251 = vcmp.eq.f32.partialorder %v9250, 8.507059e+37
    %v9252 = vand.u32 %v9224, 2147483648
    %v9253 = vor.u32 1.1754944e-38, %v9252
    %v9254 = vsel %vm9251, %v9253, %v9249
    %v9255 = vmul.f32 1.0, %v9254
    %v9256 = vrcp.pop %v9225
    %v9257 = vmul.f32 %v9225, %v9256
    %v9258 = vsub.f32 1.0, %v9257
    %v9259 = vmul.f32 %v9256, %v9258
    %v9260 = vadd.f32 %v9256, %v9259
    %vm9261 = vweird.f32 %v9225
    %vm9262 = vweird.f32 %v9256
    %vm9263 = vmor %vm9261, %vm9262
    %v9264 = vsel %vm9263, %v9256, %v9260
    %v9265 = vand.u32 2147483647, %v9225
    %vm9266 = vcmp.eq.f32.partialorder %v9265, 8.507059e+37
    %v9267 = vand.u32 %v9225, 2147483648
    %v9268 = vor.u32 1.1754944e-38, %v9267
    %v9269 = vsel %vm9266, %v9268, %v9264
    %v9270 = vmul.f32 1.0, %v9269
    %v9271 = vtanh.pop %v9211
    %v9272 = vmul.f32 %v9255, %v7985
    %v9273 = vmul.f32 %v9240, %v9271
    %v9274 = vadd.f32 %v9272, %v9273
    %v9275 = vtanh.pop %v9274
    %v9276 = vmul.f32 %v9270, %v9275
    %v9277 = vpack.c.bf16 %v9276, %v9276
    %v9278 = vld [vmem:[#allocation11] sm:$0xff]
    %v9279 = vld [vmem:[#allocation11 + $0x8] sm:$0xff]
    %v9280 = vld [vmem:[#allocation11 + $0x10] sm:$0xff]
    %v9281 = vld [vmem:[#allocation11 + $0x18] sm:$0xff]
    %v9282 = vld [vmem:[#allocation11 + $0x20] sm:$0xff]
    %v9283 = vld [vmem:[#allocation11 + $0x28] sm:$0xff]
    %v9284 = vld [vmem:[#allocation11 + $0x30] sm:$0xff]
    %v9285 = vld [vmem:[#allocation11 + $0x38] sm:$0xff]
    %v9286 = vld [vmem:[#allocation11 + $0x40] sm:$0xff]
    %v9287 = vld [vmem:[#allocation11 + $0x48] sm:$0xff]
    %v9288 = vld [vmem:[#allocation11 + $0x50] sm:$0xff]
    %v9289 = vld [vmem:[#allocation11 + $0x58] sm:$0xff]
    %v9290 = vld [vmem:[#allocation11 + $0x60] sm:$0xff]
    %v9291 = vld [vmem:[#allocation11 + $0x68] sm:$0xff]
    %v9292 = vld [vmem:[#allocation11 + $0x70] sm:$0xff]
    %v9293 = vld [vmem:[#allocation11 + $0x78] sm:$0xff]
    %v9294 = vld [vmem:[#allocation11 + $0x80] sm:$0xff]
    %v9295 = vld [vmem:[#allocation11 + $0x88] sm:$0xff]
    %v9296 = vld [vmem:[#allocation11 + $0x90] sm:$0xff]
    %v9297 = vld [vmem:[#allocation11 + $0x98] sm:$0xff]
    %v9298 = vld [vmem:[#allocation11 + $0xa0] sm:$0xff]
    %v9299 = vld [vmem:[#allocation11 + $0xa8] sm:$0xff]
    %v9300 = vld [vmem:[#allocation11 + $0xb0] sm:$0xff]
    %v9301 = vld [vmem:[#allocation11 + $0xb8] sm:$0xff]
    %v9302 = vld [vmem:[#allocation11 + $0xc0] sm:$0xff]
    %v9303 = vld [vmem:[#allocation11 + $0xc8] sm:$0xff]
    %v9304 = vld [vmem:[#allocation11 + $0xd0] sm:$0xff]
    %v9305 = vld [vmem:[#allocation11 + $0xd8] sm:$0xff]
    %v9306 = vld [vmem:[#allocation11 + $0xe0] sm:$0xff]
    %v9307 = vld [vmem:[#allocation11 + $0xe8] sm:$0xff]
    %v9308 = vld [vmem:[#allocation11 + $0xf0] sm:$0xff]
    %v9309 = vld [vmem:[#allocation11 + $0xf8] sm:$0xff]
    %v9310 = vld [vmem:[#allocation11 + $0x100] sm:$0xff]
    %v9311 = vld [vmem:[#allocation11 + $0x108] sm:$0xff]
    %v9312 = vld [vmem:[#allocation11 + $0x110] sm:$0xff]
    %v9313 = vld [vmem:[#allocation11 + $0x118] sm:$0xff]
    %v9314 = vld [vmem:[#allocation11 + $0x120] sm:$0xff]
    %v9315 = vld [vmem:[#allocation11 + $0x128] sm:$0xff]
    %v9316 = vld [vmem:[#allocation11 + $0x130] sm:$0xff]
    %v9317 = vld [vmem:[#allocation11 + $0x138] sm:$0xff]
    %v9318 = vld [vmem:[#allocation11 + $0x140] sm:$0xff]
    %v9319 = vld [vmem:[#allocation11 + $0x148] sm:$0xff]
    %v9320 = vld [vmem:[#allocation11 + $0x150] sm:$0xff]
    %v9321 = vld [vmem:[#allocation11 + $0x158] sm:$0xff]
    %v9322 = vld [vmem:[#allocation11 + $0x160] sm:$0xff]
    %v9323 = vld [vmem:[#allocation11 + $0x168] sm:$0xff]
    %v9324 = vld [vmem:[#allocation11 + $0x170] sm:$0xff]
    %v9325 = vld [vmem:[#allocation11 + $0x178] sm:$0xff]
    %v9326 = vld [vmem:[#allocation11 + $0x180] sm:$0xff]
    %v9327 = vld [vmem:[#allocation11 + $0x188] sm:$0xff]
    %v9328 = vld [vmem:[#allocation11 + $0x190] sm:$0xff]
    %v9329 = vld [vmem:[#allocation11 + $0x198] sm:$0xff]
    %v9330 = vld [vmem:[#allocation11 + $0x1a0] sm:$0xff]
    %v9331 = vld [vmem:[#allocation11 + $0x1a8] sm:$0xff]
    %v9332 = vld [vmem:[#allocation11 + $0x1b0] sm:$0xff]
    %v9333 = vld [vmem:[#allocation11 + $0x1b8] sm:$0xff]
    %v9334 = vld [vmem:[#allocation11 + $0x1c0] sm:$0xff]
    %v9335 = vld [vmem:[#allocation11 + $0x1c8] sm:$0xff]
    %v9336 = vld [vmem:[#allocation11 + $0x1d0] sm:$0xff]
    %v9337 = vld [vmem:[#allocation11 + $0x1d8] sm:$0xff]
    %v9338 = vld [vmem:[#allocation11 + $0x1e0] sm:$0xff]
    %v9339 = vld [vmem:[#allocation11 + $0x1e8] sm:$0xff]
    %v9340 = vld [vmem:[#allocation11 + $0x1f0] sm:$0xff]
    %v9341 = vld [vmem:[#allocation11 + $0x1f8] sm:$0xff]
    %v9406 = vunpack.c.l.b16 %v9278
    %v9407 = vunpack.c.h.b16 %v9278
    %v9408 = vunpack.c.l.b16 %v9279
    %v9409 = vunpack.c.h.b16 %v9279
    %v9410 = vunpack.c.l.b16 %v9280
    %v9411 = vunpack.c.h.b16 %v9280
    %v9412 = vunpack.c.l.b16 %v9281
    %v9413 = vunpack.c.h.b16 %v9281
    %v9414 = vunpack.c.l.b16 %v9282
    %v9415 = vunpack.c.h.b16 %v9282
    %v9416 = vunpack.c.l.b16 %v9283
    %v9417 = vunpack.c.h.b16 %v9283
    %v9418 = vunpack.c.l.b16 %v9284
    %v9419 = vunpack.c.h.b16 %v9284
    %v9420 = vunpack.c.l.b16 %v9285
    %v9421 = vunpack.c.h.b16 %v9285
    %v9422 = vunpack.c.l.b16 %v9286
    %v9423 = vunpack.c.h.b16 %v9286
    %v9424 = vunpack.c.l.b16 %v9287
    %v9425 = vunpack.c.h.b16 %v9287
    %v9426 = vunpack.c.l.b16 %v9288
    %v9427 = vunpack.c.h.b16 %v9288
    %v9428 = vunpack.c.l.b16 %v9289
    %v9429 = vunpack.c.h.b16 %v9289
    %v9430 = vunpack.c.l.b16 %v9290
    %v9431 = vunpack.c.h.b16 %v9290
    %v9432 = vunpack.c.l.b16 %v9291
    %v9433 = vunpack.c.h.b16 %v9291
    %v9434 = vunpack.c.l.b16 %v9292
    %v9435 = vunpack.c.h.b16 %v9292
    %v9436 = vunpack.c.l.b16 %v9293
    %v9437 = vunpack.c.h.b16 %v9293
    %v9438 = vunpack.c.l.b16 %v9294
    %v9439 = vunpack.c.h.b16 %v9294
    %v9440 = vunpack.c.l.b16 %v9295
    %v9441 = vunpack.c.h.b16 %v9295
    %v9442 = vunpack.c.l.b16 %v9296
    %v9443 = vunpack.c.h.b16 %v9296
    %v9444 = vunpack.c.l.b16 %v9297
    %v9445 = vunpack.c.h.b16 %v9297
    %v9446 = vunpack.c.l.b16 %v9298
    %v9447 = vunpack.c.h.b16 %v9298
    %v9448 = vunpack.c.l.b16 %v9299
    %v9449 = vunpack.c.h.b16 %v9299
    %v9450 = vunpack.c.l.b16 %v9300
    %v9451 = vunpack.c.h.b16 %v9300
    %v9452 = vunpack.c.l.b16 %v9301
    %v9453 = vunpack.c.h.b16 %v9301
    %v9454 = vunpack.c.l.b16 %v9302
    %v9455 = vunpack.c.h.b16 %v9302
    %v9456 = vunpack.c.l.b16 %v9303
    %v9457 = vunpack.c.h.b16 %v9303
    %v9458 = vunpack.c.l.b16 %v9304
    %v9459 = vunpack.c.h.b16 %v9304
    %v9460 = vunpack.c.l.b16 %v9305
    %v9461 = vunpack.c.h.b16 %v9305
    %v9462 = vunpack.c.l.b16 %v9306
    %v9463 = vunpack.c.h.b16 %v9306
    %v9464 = vunpack.c.l.b16 %v9307
    %v9465 = vunpack.c.h.b16 %v9307
    %v9466 = vunpack.c.l.b16 %v9308
    %v9467 = vunpack.c.h.b16 %v9308
    %v9468 = vunpack.c.l.b16 %v9309
    %v9469 = vunpack.c.h.b16 %v9309
    %v9470 = vunpack.c.l.b16 %v9310
    %v9471 = vunpack.c.h.b16 %v9310
    %v9472 = vunpack.c.l.b16 %v9311
    %v9473 = vunpack.c.h.b16 %v9311
    %v9474 = vunpack.c.l.b16 %v9312
    %v9475 = vunpack.c.h.b16 %v9312
    %v9476 = vunpack.c.l.b16 %v9313
    %v9477 = vunpack.c.h.b16 %v9313
    %v9478 = vunpack.c.l.b16 %v9314
    %v9479 = vunpack.c.h.b16 %v9314
    %v9480 = vunpack.c.l.b16 %v9315
    %v9481 = vunpack.c.h.b16 %v9315
    %v9482 = vunpack.c.l.b16 %v9316
    %v9483 = vunpack.c.h.b16 %v9316
    %v9484 = vunpack.c.l.b16 %v9317
    %v9485 = vunpack.c.h.b16 %v9317
    %v9486 = vunpack.c.l.b16 %v9318
    %v9487 = vunpack.c.h.b16 %v9318
    %v9488 = vunpack.c.l.b16 %v9319
    %v9489 = vunpack.c.h.b16 %v9319
    %v9490 = vunpack.c.l.b16 %v9320
    %v9491 = vunpack.c.h.b16 %v9320
    %v9492 = vunpack.c.l.b16 %v9321
    %v9493 = vunpack.c.h.b16 %v9321
    %v9494 = vunpack.c.l.b16 %v9322
    %v9495 = vunpack.c.h.b16 %v9322
    %v9496 = vunpack.c.l.b16 %v9323
    %v9497 = vunpack.c.h.b16 %v9323
    %v9498 = vunpack.c.l.b16 %v9324
    %v9499 = vunpack.c.h.b16 %v9324
    %v9500 = vunpack.c.l.b16 %v9325
    %v9501 = vunpack.c.h.b16 %v9325
    %v9502 = vunpack.c.l.b16 %v9326
    %v9503 = vunpack.c.h.b16 %v9326
    %v9504 = vunpack.c.l.b16 %v9327
    %v9505 = vunpack.c.h.b16 %v9327
    %v9506 = vunpack.c.l.b16 %v9328
    %v9507 = vunpack.c.h.b16 %v9328
    %v9508 = vunpack.c.l.b16 %v9329
    %v9509 = vunpack.c.h.b16 %v9329
    %v9510 = vunpack.c.l.b16 %v9330
    %v9511 = vunpack.c.h.b16 %v9330
    %v9512 = vunpack.c.l.b16 %v9331
    %v9513 = vunpack.c.h.b16 %v9331
    %v9514 = vunpack.c.l.b16 %v9332
    %v9515 = vunpack.c.h.b16 %v9332
    %v9516 = vunpack.c.l.b16 %v9333
    %v9517 = vunpack.c.h.b16 %v9333
    %v9518 = vunpack.c.l.b16 %v9334
    %v9519 = vunpack.c.h.b16 %v9334
    %v9520 = vunpack.c.l.b16 %v9335
    %v9521 = vunpack.c.h.b16 %v9335
    %v9522 = vunpack.c.l.b16 %v9336
    %v9523 = vunpack.c.h.b16 %v9336
    %v9524 = vunpack.c.l.b16 %v9337
    %v9525 = vunpack.c.h.b16 %v9337
    %v9526 = vunpack.c.l.b16 %v9338
    %v9527 = vunpack.c.h.b16 %v9338
    %v9528 = vunpack.c.l.b16 %v9339
    %v9529 = vunpack.c.h.b16 %v9339
    %v9530 = vunpack.c.l.b16 %v9340
    %v9531 = vunpack.c.h.b16 %v9340
    %v9532 = vunpack.c.l.b16 %v9341
    %v9533 = vunpack.c.h.b16 %v9341
    %v9534 = vpack.c.b16 %v9410, %v9406
    %v9535 = vpack.c.b16 %v9411, %v9407
    %v9536 = vpack.c.b16 %v9412, %v9408
    %v9537 = vpack.c.b16 %v9413, %v9409
    %v9538 = vpack.c.b16 %v9418, %v9414
    %v9539 = vpack.c.b16 %v9419, %v9415
    %v9540 = vpack.c.b16 %v9420, %v9416
    %v9541 = vpack.c.b16 %v9421, %v9417
    %v9542 = vpack.c.b16 %v9426, %v9422
    %v9543 = vpack.c.b16 %v9427, %v9423
    %v9544 = vpack.c.b16 %v9428, %v9424
    %v9545 = vpack.c.b16 %v9429, %v9425
    %v9546 = vpack.c.b16 %v9434, %v9430
    %v9547 = vpack.c.b16 %v9435, %v9431
    %v9548 = vpack.c.b16 %v9436, %v9432
    %v9549 = vpack.c.b16 %v9437, %v9433
    %v9550 = vpack.c.b16 %v9442, %v9438
    %v9551 = vpack.c.b16 %v9443, %v9439
    %v9552 = vpack.c.b16 %v9444, %v9440
    %v9553 = vpack.c.b16 %v9445, %v9441
    %v9554 = vpack.c.b16 %v9450, %v9446
    %v9555 = vpack.c.b16 %v9451, %v9447
    %v9556 = vpack.c.b16 %v9452, %v9448
    %v9557 = vpack.c.b16 %v9453, %v9449
    %v9558 = vpack.c.b16 %v9458, %v9454
    %v9559 = vpack.c.b16 %v9459, %v9455
    %v9560 = vpack.c.b16 %v9460, %v9456
    %v9561 = vpack.c.b16 %v9461, %v9457
    %v9562 = vpack.c.b16 %v9466, %v9462
    %v9563 = vpack.c.b16 %v9467, %v9463
    %v9564 = vpack.c.b16 %v9468, %v9464
    %v9565 = vpack.c.b16 %v9469, %v9465
    %v9566 = vpack.c.b16 %v9474, %v9470
    %v9567 = vpack.c.b16 %v9475, %v9471
    %v9568 = vpack.c.b16 %v9476, %v9472
    %v9569 = vpack.c.b16 %v9477, %v9473
    %v9570 = vpack.c.b16 %v9482, %v9478
    %v9571 = vpack.c.b16 %v9483, %v9479
    %v9572 = vpack.c.b16 %v9484, %v9480
    %v9573 = vpack.c.b16 %v9485, %v9481
    %v9574 = vpack.c.b16 %v9490, %v9486
    %v9575 = vpack.c.b16 %v9491, %v9487
    %v9576 = vpack.c.b16 %v9492, %v9488
    %v9577 = vpack.c.b16 %v9493, %v9489
    %v9578 = vpack.c.b16 %v9498, %v9494
    %v9579 = vpack.c.b16 %v9499, %v9495
    %v9580 = vpack.c.b16 %v9500, %v9496
    %v9581 = vpack.c.b16 %v9501, %v9497
    %v9582 = vpack.c.b16 %v9506, %v9502
    %v9583 = vpack.c.b16 %v9507, %v9503
    %v9584 = vpack.c.b16 %v9508, %v9504
    %v9585 = vpack.c.b16 %v9509, %v9505
    %v9586 = vpack.c.b16 %v9514, %v9510
    %v9587 = vpack.c.b16 %v9515, %v9511
    %v9588 = vpack.c.b16 %v9516, %v9512
    %v9589 = vpack.c.b16 %v9517, %v9513
    %v9590 = vpack.c.b16 %v9522, %v9518
    %v9591 = vpack.c.b16 %v9523, %v9519
    %v9592 = vpack.c.b16 %v9524, %v9520
    %v9593 = vpack.c.b16 %v9525, %v9521
    %v9594 = vpack.c.b16 %v9530, %v9526
    %v9595 = vpack.c.b16 %v9531, %v9527
    %v9596 = vpack.c.b16 %v9532, %v9528
    %v9597 = vpack.c.b16 %v9533, %v9529
    %9662 = vmatpush.bf16.msra.mxu0 %v9562
    %9663 = vmatpush.bf16.msra.mxu0 %v9558
    %9664 = vmatpush.bf16.msra.mxu0 %v9554
    %9665 = vmatpush.bf16.msra.mxu0 %v9550
    %9666 = vmatpush.bf16.msra.mxu0 %v9546
    %9667 = vmatpush.bf16.msra.mxu0 %v9542
    %9668 = vmatpush.bf16.msra.mxu0 %v9538
    %9669 = vmatpush.bf16.msra.mxu0 %v9534
    %9670 = vmatmul.bf16.gmra.mxu0 %v9277
    %v9671 = vpop.f32.mrf.mxu0
    %v9672 = vadd.f32 %v3468, %v9671
    %v9673 = vpop.f32.mrf.mxu0
    %9674 = vdwg.mxu0
    %9675 = vmatpush.bf16.msra.mxu0 %v9594
    %9676 = vmatpush.bf16.msra.mxu0 %v9590
    %9677 = vmatpush.bf16.msra.mxu0 %v9586
    %9678 = vmatpush.bf16.msra.mxu0 %v9582
    %9679 = vmatpush.bf16.msra.mxu0 %v9578
    %9680 = vmatpush.bf16.msra.mxu0 %v9574
    %9681 = vmatpush.bf16.msra.mxu0 %v9570
    %9682 = vmatpush.bf16.msra.mxu0 %v9566
    %9683 = vmatmul.bf16.gmra.mxu0 %v8540
    %v9684 = vpop.f32.mrf.mxu0
    %v9685 = vadd.f32 %v9672, %v9684
    %v9686 = vpop.f32.mrf.mxu0
    %9687 = vdwg.mxu0
    %9688 = vmatpush.bf16.msra.mxu0 %v9563
    %9689 = vmatpush.bf16.msra.mxu0 %v9559
    %9690 = vmatpush.bf16.msra.mxu0 %v9555
    %9691 = vmatpush.bf16.msra.mxu0 %v9551
    %9692 = vmatpush.bf16.msra.mxu0 %v9547
    %9693 = vmatpush.bf16.msra.mxu0 %v9543
    %9694 = vmatpush.bf16.msra.mxu0 %v9539
    %9695 = vmatpush.bf16.msra.mxu0 %v9535
    %9696 = vmatmul.bf16.gmra.mxu0 %v9277
    %v9697 = vpop.f32.mrf.mxu0
    %v9698 = vadd.f32 %v3469, %v9697
    %v9699 = vpop.f32.mrf.mxu0
    %9700 = vdwg.mxu0
    %9701 = vmatpush.bf16.msra.mxu0 %v9595
    %9702 = vmatpush.bf16.msra.mxu0 %v9591
    %9703 = vmatpush.bf16.msra.mxu0 %v9587
    %9704 = vmatpush.bf16.msra.mxu0 %v9583
    %9705 = vmatpush.bf16.msra.mxu0 %v9579
    %9706 = vmatpush.bf16.msra.mxu0 %v9575
    %9707 = vmatpush.bf16.msra.mxu0 %v9571
    %9708 = vmatpush.bf16.msra.mxu0 %v9567
    %9709 = vmatmul.bf16.gmra.mxu0 %v8540
    %v9710 = vpop.f32.mrf.mxu0
    %v9711 = vadd.f32 %v9698, %v9710
    %v9712 = vpop.f32.mrf.mxu0
    %9713 = vdwg.mxu0
    %9714 = vmatpush.bf16.msra.mxu0 %v9564
    %9715 = vmatpush.bf16.msra.mxu0 %v9560
    %9716 = vmatpush.bf16.msra.mxu0 %v9556
    %9717 = vmatpush.bf16.msra.mxu0 %v9552
    %9718 = vmatpush.bf16.msra.mxu0 %v9548
    %9719 = vmatpush.bf16.msra.mxu0 %v9544
    %9720 = vmatpush.bf16.msra.mxu0 %v9540
    %9721 = vmatpush.bf16.msra.mxu0 %v9536
    %9722 = vmatmul.bf16.gmra.mxu0 %v9277
    %v9723 = vpop.f32.mrf.mxu0
    %v9724 = vadd.f32 %v3470, %v9723
    %v9725 = vpop.f32.mrf.mxu0
    %9726 = vdwg.mxu0
    %9727 = vmatpush.bf16.msra.mxu0 %v9596
    %9728 = vmatpush.bf16.msra.mxu0 %v9592
    %9729 = vmatpush.bf16.msra.mxu0 %v9588
    %9730 = vmatpush.bf16.msra.mxu0 %v9584
    %9731 = vmatpush.bf16.msra.mxu0 %v9580
    %9732 = vmatpush.bf16.msra.mxu0 %v9576
    %9733 = vmatpush.bf16.msra.mxu0 %v9572
    %9734 = vmatpush.bf16.msra.mxu0 %v9568
    %9735 = vmatmul.bf16.gmra.mxu0 %v8540
    %v9736 = vpop.f32.mrf.mxu0
    %v9737 = vadd.f32 %v9724, %v9736
    %v9738 = vpop.f32.mrf.mxu0
    %9739 = vdwg.mxu0
    %9740 = vmatpush.bf16.msra.mxu0 %v9565
    %9741 = vmatpush.bf16.msra.mxu0 %v9561
    %9742 = vmatpush.bf16.msra.mxu0 %v9557
    %9743 = vmatpush.bf16.msra.mxu0 %v9553
    %9744 = vmatpush.bf16.msra.mxu0 %v9549
    %9745 = vmatpush.bf16.msra.mxu0 %v9545
    %9746 = vmatpush.bf16.msra.mxu0 %v9541
    %9747 = vmatpush.bf16.msra.mxu0 %v9537
    %9748 = vmatmul.bf16.gmra.mxu0 %v9277
    %v9749 = vpop.f32.mrf.mxu0
    %v9750 = vadd.f32 %v3471, %v9749
    %v9751 = vpop.f32.mrf.mxu0
    %9752 = vdwg.mxu0
    %9753 = vmatpush.bf16.msra.mxu0 %v9597
    %9754 = vmatpush.bf16.msra.mxu0 %v9593
    %9755 = vmatpush.bf16.msra.mxu0 %v9589
    %9756 = vmatpush.bf16.msra.mxu0 %v9585
    %9757 = vmatpush.bf16.msra.mxu0 %v9581
    %9758 = vmatpush.bf16.msra.mxu0 %v9577
    %9759 = vmatpush.bf16.msra.mxu0 %v9573
    %9760 = vmatpush.bf16.msra.mxu0 %v9569
    %9761 = vmatmul.bf16.gmra.mxu0 %v8540
    %v9762 = vpop.f32.mrf.mxu0
    %v9763 = vadd.f32 %v9750, %v9762
    %v9764 = vpop.f32.mrf.mxu0
    %9765 = vdwg.mxu0
    %v9766 = vxor.u32 %v9685, 2147483648
    %v9767 = vxor.u32 %v9711, 2147483648
    %v9768 = vxor.u32 %v9737, 2147483648
    %v9769 = vmul.f32 %v9766, 1.442695
    %v9770 = vpow.pop %v9769
    %v9771 = vmul.f32 %v9767, 1.442695
    %v9772 = vpow.pop %v9771
    %v9773 = vmul.f32 %v9768, 1.442695
    %v9774 = vpow.pop %v9773
    %v9775 = vadd.f32 %v9770, 1.0
    %v9776 = vadd.f32 %v9772, 1.0
    %v9777 = vadd.f32 %v9774, 1.0
    %v9778 = vrcp.pop %v9775
    %v9779 = vmul.f32 %v9775, %v9778
    %v9780 = vsub.f32 1.0, %v9779
    %v9781 = vmul.f32 %v9778, %v9780
    %v9782 = vadd.f32 %v9778, %v9781
    %vm9783 = vweird.f32 %v9775
    %vm9784 = vweird.f32 %v9778
    %vm9785 = vmor %vm9783, %vm9784
    %v9786 = vsel %vm9785, %v9778, %v9782
    %v9787 = vand.u32 2147483647, %v9775
    %vm9788 = vcmp.eq.f32.partialorder %v9787, 8.507059e+37
    %v9789 = vand.u32 %v9775, 2147483648
    %v9790 = vor.u32 1.1754944e-38, %v9789
    %v9791 = vsel %vm9788, %v9790, %v9786
    %v9792 = vmul.f32 1.0, %v9791
    %v9793 = vrcp.pop %v9776
    %v9794 = vmul.f32 %v9776, %v9793
    %v9795 = vsub.f32 1.0, %v9794
    %v9796 = vmul.f32 %v9793, %v9795
    %v9797 = vadd.f32 %v9793, %v9796
    %vm9798 = vweird.f32 %v9776
    %vm9799 = vweird.f32 %v9793
    %vm9800 = vmor %vm9798, %vm9799
    %v9801 = vsel %vm9800, %v9793, %v9797
    %v9802 = vand.u32 2147483647, %v9776
    %vm9803 = vcmp.eq.f32.partialorder %v9802, 8.507059e+37
    %v9804 = vand.u32 %v9776, 2147483648
    %v9805 = vor.u32 1.1754944e-38, %v9804
    %v9806 = vsel %vm9803, %v9805, %v9801
    %v9807 = vmul.f32 1.0, %v9806
    %v9808 = vrcp.pop %v9777
    %v9809 = vmul.f32 %v9777, %v9808
    %v9810 = vsub.f32 1.0, %v9809
    %v9811 = vmul.f32 %v9808, %v9810
    %v9812 = vadd.f32 %v9808, %v9811
    %vm9813 = vweird.f32 %v9777
    %vm9814 = vweird.f32 %v9808
    %vm9815 = vmor %vm9813, %vm9814
    %v9816 = vsel %vm9815, %v9808, %v9812
    %v9817 = vand.u32 2147483647, %v9777
    %vm9818 = vcmp.eq.f32.partialorder %v9817, 8.507059e+37
    %v9819 = vand.u32 %v9777, 2147483648
    %v9820 = vor.u32 1.1754944e-38, %v9819
    %v9821 = vsel %vm9818, %v9820, %v9816
    %v9822 = vmul.f32 1.0, %v9821
    %v9823 = vtanh.pop %v9763
    %v9824 = vmul.f32 %v9807, %v8537
    %v9825 = vmul.f32 %v9792, %v9823
    %v9826 = vadd.f32 %v9824, %v9825
    %v9827 = vtanh.pop %v9826
    %v9828 = vmul.f32 %v9822, %v9827
    %v9829 = vpack.c.bf16 %v9828, %v9828
    %v9830 = vld [vmem:[%s13] sm:$0xf]
    %v9831 = vld [vmem:[%s13 + $0x4] sm:$0xf]
    %v9832 = vld [vmem:[%s13 + $0x8] sm:$0xf]
    %v9833 = vld [vmem:[%s13 + $0xc] sm:$0xf]
    %v9834 = vld [vmem:[%s13 + $0x10] sm:$0xf]
    %v9835 = vld [vmem:[%s13 + $0x14] sm:$0xf]
    %v9836 = vld [vmem:[%s13 + $0x18] sm:$0xf]
    %v9837 = vld [vmem:[%s13 + $0x1c] sm:$0xf]
    %v9838 = vld [vmem:[%s13 + $0x20] sm:$0xf]
    %v9839 = vld [vmem:[%s13 + $0x24] sm:$0xf]
    %v9840 = vld [vmem:[%s13 + $0x28] sm:$0xf]
    %v9841 = vld [vmem:[%s13 + $0x2c] sm:$0xf]
    %v9842 = vld [vmem:[%s13 + $0x30] sm:$0xf]
    %v9843 = vld [vmem:[%s13 + $0x34] sm:$0xf]
    %v9844 = vld [vmem:[%s13 + $0x38] sm:$0xf]
    %v9845 = vld [vmem:[%s13 + $0x3c] sm:$0xf]
    %v9862 = vunpack.c.l.b16 %v9830
    %v9863 = vunpack.c.l.b16 %v9831
    %v9864 = vunpack.c.l.b16 %v9832
    %v9865 = vunpack.c.l.b16 %v9833
    %v9866 = vunpack.c.l.b16 %v9834
    %v9867 = vunpack.c.l.b16 %v9835
    %v9868 = vunpack.c.l.b16 %v9836
    %v9869 = vunpack.c.l.b16 %v9837
    %v9870 = vunpack.c.l.b16 %v9838
    %v9871 = vunpack.c.l.b16 %v9839
    %v9872 = vunpack.c.l.b16 %v9840
    %v9873 = vunpack.c.l.b16 %v9841
    %v9874 = vunpack.c.l.b16 %v9842
    %v9875 = vunpack.c.l.b16 %v9843
    %v9876 = vunpack.c.l.b16 %v9844
    %v9877 = vunpack.c.l.b16 %v9845
    %v9878 = vpack.c.b16 %v9863, %v9862
    %v9879 = vpack.c.b16 %v9865, %v9864
    %v9880 = vpack.c.b16 %v9867, %v9866
    %v9881 = vpack.c.b16 %v9869, %v9868
    %v9882 = vpack.c.b16 %v9871, %v9870
    %v9883 = vpack.c.b16 %v9873, %v9872
    %v9884 = vpack.c.b16 %v9875, %v9874
    %v9885 = vpack.c.b16 %v9877, %v9876
    %9894 = vmatpush.bf16.msra.mxu0 %v9885
    %9895 = vmatpush.bf16.msra.mxu0 %v9884
    %9896 = vmatpush.bf16.msra.mxu0 %v9883
    %9897 = vmatpush.bf16.msra.mxu0 %v9882
    %9898 = vmatpush.bf16.msra.mxu0 %v9881
    %9899 = vmatpush.bf16.msra.mxu0 %v9880
    %9900 = vmatpush.bf16.msra.mxu0 %v9879
    %9901 = vmatpush.bf16.msra.mxu0 %v9878
    %9902 = vmatmul.bf16.gmra.mxu0 %v9829
    %v9903 = vpop.f32.mrf.mxu0
    %v9904 = vadd.f32 %v3478, %v9903
    %v9905 = vpop.f32.mrf.mxu0
    %9906 = vdwg.mxu0
    %s9907 = scalar_lea.vmem [#allocation13], 40
    %9908 = vst [vmem:[%s9907] sm:$0xff] %v9904
    // Predicated region
    $region114: #{seq2seq_forward.1} parent=1 // pred_check
      _
    $region115: #{seq2seq_forward.1} parent=1 // pred_check_branch
      %9910 = sbr.rel (0) target = $region117
    $region116: #{seq2seq_forward.1} parent=1 // pred_region
      %9912 = vsyncadd [#allocation5], 0
      %s9913 = sshll.u32 [#allocation13], 4
      %s9914 = int_to_ptr.vmem [resolvable:$true] %s9913
      %s9915 = sshll.u32 %s15, 4
      %s9916 = int_to_ptr.hbm [resolvable:$true] %s9915
      %9921 = dma.vmem_to_hbm [thread:$0]  %s9914, 768, %s9916, [#allocation5], 128, 128, 8
    $region117: #{seq2seq_forward.1} parent=1 // pred_fallthru
      _
    // Predicated region
    $region118: #{seq2seq_forward.1} parent=1 // pred_check
      _
    $region119: #{seq2seq_forward.1} parent=1 // pred_check_branch
      %9923 = sbr.rel (0) target = $region121
    $region120: #{seq2seq_forward.1} parent=1 // pred_region
      %9925 = dma.done [#allocation5], 768
    $region121: #{seq2seq_forward.1} parent=1 // pred_fallthru
      _
    %9926 = vsyncpa [#allocation4], 1
    %9927 = vsyncpa [#allocation9], 1
    %9928 = vsyncpa [#allocation12], 1
    %9929 = vsyncpa [#allocation5], 1
    %9930 = vsyncpa [#allocation6], 1

</llo_original>
